<compile_context>
chip_gen: v7x
topology: tpu7x:2x2x1
jax: 0.10.0
libtpu: 0.0.40
codegen_flags: <defaults>
</compile_context>

<pallas_src>
import jax
import jax.numpy as jnp
from jax.experimental import pallas as pl
from jax.experimental.pallas import tpu as pltpu

BN_EPS = 1e-5
LRELU_SLOPE = 0.2
TILE_B = 8           # batch tile per grid step (must be a multiple of 8)

# parity-split padded spatial grid for the conv2 input (y1):
#   padded coord p (0..17)  ->  split index (p % 2) * 9 + p // 2
#   stored grid is 18 rows x 24 cols (cols padded 18 -> 24 so the in-kernel
#   reshape (432*TB, 64) -> (18, 24, TB, 64) is a pure layout no-op).
SPLIT_R, SPLIT_C = 18, 24
P1_ROWS = SPLIT_R * SPLIT_C          # 432 conv1 "rows" per sample (incl. zeros)
P1_K = 4 * 4 * 1 + 1                 # 16 patch values + ones column for bias


def _split_index(p):
    return (p % 2) * 9 + p // 2


# ---------------------------------------------------------------------------
# Fused Pallas kernel: conv1+BN+LReLU -> conv2+BN+LReLU -> merged heads
# ---------------------------------------------------------------------------
def _disc_fused_kernel(p1_ref, w1_ref, w2_ref, b2_ref, wh_ref, out_ref):
    TB = out_ref.shape[0]

    # ---- conv1 (BN scale folded into weights, bias via ones-column) + LReLU.
    # p1_ref: (432, TB, 17) bf16, rows ordered (R, C, sample).
    p1 = p1_ref[...].reshape(P1_ROWS * TB, P1_K)
    y1 = jnp.dot(p1, w1_ref[...], preferred_element_type=jnp.float32)
    y1 = jnp.where(y1 >= 0.0, y1, LRELU_SLOPE * y1).astype(jnp.bfloat16)
    # parity-split, zero-padded y1 grid; batch = sublanes, channels = lanes.
    y1 = y1.reshape(SPLIT_R, SPLIT_C, TB, 64)

    # ---- conv2 (k4, s2, p1): 16 taps, each a contiguous leading-dim slice.
    taps = []
    for kh in range(4):
        r0 = (kh % 2) * 9 + kh // 2
        for kw in range(4):
            c0 = (kw % 2) * 9 + kw // 2
            taps.append(y1[r0:r0 + 8, c0:c0 + 8, :, :])     # (8, 8, TB, 64)
    p2 = jnp.concatenate(taps, axis=-1)                     # (8, 8, TB, 1024)
    y2 = jnp.dot(p2.reshape(8 * 8 * TB, 1024), w2_ref[...],
                 preferred_element_type=jnp.float32)        # (64*TB, 128)
    y2 = y2 + b2_ref[...]
    y2 = jnp.where(y2 >= 0.0, y2, LRELU_SLOPE * y2).astype(jnp.bfloat16)
    y2 = y2.reshape(8, 8, TB, 128)

    # ---- heads: gather the 49 real 7x7 positions into one lane-dense row
    # per sample and do a single merged (TB, 6272) @ (6272, 128) matmul.
    feat = jnp.concatenate(
        [y2[oh, ow] for oh in range(7) for ow in range(7)], axis=-1)  # (TB, 6272)
    h = jnp.dot(feat, wh_ref[...], preferred_element_type=jnp.float32)  # (TB, 128)

    # ---- epilogue: col 0 -> sigmoid (D head), cols 1..11 -> log-softmax
    # (class head) with the padded columns masked out of the LSE.
    col = jax.lax.broadcasted_iota(jnp.int32, h.shape, 1)
    is_cls = jnp.logical_and(col >= 1, col <= 11)
    masked = jnp.where(is_cls, h, jnp.float32(-1e30))
    m = jnp.max(masked, axis=1, keepdims=True)
    p = jnp.where(is_cls, jnp.exp(masked - m), 0.0)
    lse = jnp.log(jnp.sum(p, axis=1, keepdims=True)) + m
    sig = 1.0 / (1.0 + jnp.exp(-h))
    out_ref[...] = jnp.where(col == 0, sig,
                             jnp.where(is_cls, h - lse, 0.0))


# ---------------------------------------------------------------------------
# JAX glue: layout plumbing + offline weight prep (no heavy compute here)
# ---------------------------------------------------------------------------
def torch_conv_weight_to_matrix(w):
    """PyTorch conv weight (O, C, kh, kw) -> (kh*kw*C, O), (kh, kw, C) order."""
    O, C, kh, kw = w.shape
    return jnp.transpose(w, (2, 3, 1, 0)).reshape(kh * kw * C, O)


def fold_bn(w_mat, gamma, beta, mean, var, eps=BN_EPS):
    scale = gamma / jnp.sqrt(var + eps)
    bias = beta - mean * scale
    return w_mat * scale[None, :], bias


def prepare_kernel_params(raw):
    w1m = torch_conv_weight_to_matrix(raw["w1"])            # (16, 64)
    w1s, b1 = fold_bn(w1m, *raw["bn1"])
    w1aug = jnp.concatenate([w1s, b1[None, :]], axis=0)     # (17, 64)

    w2m = torch_conv_weight_to_matrix(raw["w2"])            # (1024, 128)
    w2s, b2 = fold_bn(w2m, *raw["bn2"])

    wDm = torch_conv_weight_to_matrix(raw["wD"])            # (6272, 1)
    wCm = torch_conv_weight_to_matrix(raw["wC"])            # (6272, 11)
    wh = jnp.concatenate(
        [wDm, wCm, jnp.zeros((6272, 128 - 12), jnp.float32)], axis=1)

    return {
        "w1aug": w1aug.astype(jnp.bfloat16),
        "w2s": w2s.astype(jnp.bfloat16),
        "b2": b2.reshape(1, 128).astype(jnp.float32),
        "wh": wh.astype(jnp.bfloat16),
    }


def build_conv1_patches(x_nchw, n_pad):
    """(N,1,28,28) -> (432, n_pad, 17) bf16 conv1 patches, pre-scattered into
    the parity-split zero-padded grid (so conv2's zero padding is built in)."""
    N = x_nchw.shape[0]
    x = x_nchw[:, 0, :, :].astype(jnp.float32)              # (N, 28, 28)
    if n_pad > N:
        x = jnp.pad(x, ((0, n_pad - N), (0, 0), (0, 0)))
    xp = jnp.pad(x, ((0, 0), (1, 1), (1, 1)))                # (n_pad, 30, 30)
    cols = []
    for kh in range(4):
        for kw in range(4):
            cols.append(xp[:, kh:kh + 28:2, kw:kw + 28:2])   # (n_pad, 14, 14)
    pat = jnp.stack(cols, axis=-1)                           # (n_pad, 14, 14, 16)
    ones = jnp.ones((n_pad, 14, 14, 1), jnp.float32)         # bias carrier
    pat = jnp.concatenate([pat, ones], axis=-1)              # (n_pad, 14, 14, 17)

    buf = jnp.zeros((n_pad, SPLIT_R, SPLIT_C, P1_K), jnp.float32)
    idx = _split_index(jnp.arange(14) + 1)                   # interior coords 1..14
    buf = buf.at[:, idx[:, None], idx[None, :], :].set(pat)
    # (n_pad, 18, 24, 17) -> (432, n_pad, 17): spatial leading, batch 2nd-minor
    buf = jnp.transpose(buf, (1, 2, 0, 3)).reshape(P1_ROWS, n_pad, P1_K)
    return buf.astype(jnp.bfloat16)


def discriminator_forward(x_nchw, kparams):
    N = x_nchw.shape[0]
    n_pad = ((N + TILE_B - 1) // TILE_B) * TILE_B
    p1 = build_conv1_patches(x_nchw, n_pad)                  # (432, n_pad, 17)

    flops = 2 * n_pad * (P1_ROWS * P1_K * 64 + 64 * 1024 * 128 + 6272 * 128)
    bytes_accessed = (p1.size * 2
                      + (P1_K * 64 + 1024 * 128 + 6272 * 128) * 2
                      + 128 * 4 + n_pad * 128 * 4)

    out = pl.pallas_call(
        _disc_fused_kernel,
        out_shape=jax.ShapeDtypeStruct((n_pad, 128), jnp.float32),
        grid=(n_pad // TILE_B,),
        in_specs=[
            pl.BlockSpec((P1_ROWS, TILE_B, P1_K), lambda b: (0, b, 0)),
            pl.BlockSpec((P1_K, 64), lambda b: (0, 0)),
            pl.BlockSpec((1024, 128), lambda b: (0, 0)),
            pl.BlockSpec((1, 128), lambda b: (0, 0)),
            pl.BlockSpec((6272, 128), lambda b: (0, 0)),
        ],
        out_specs=pl.BlockSpec((TILE_B, 128), lambda b: (b, 0)),
        compiler_params=pltpu.CompilerParams(
            dimension_semantics=("parallel",)),
        cost_estimate=pl.CostEstimate(
            flops=int(flops),
            transcendentals=int(n_pad * 256),
            bytes_accessed=int(bytes_accessed)),
    )(p1, kparams["w1aug"], kparams["w2s"], kparams["b2"], kparams["wh"])

    dis = out[:N, 0]          # sigmoid(D head)            (N,)
    cla = out[:N, 1:12]       # log_softmax(class head)    (N, 11)
    return dis, cla


# ---------------------------------------------------------------------------
# Pure-JAX f32 reference (eval-mode semantics) for a correctness check
# ---------------------------------------------------------------------------
def reference_forward(x_nchw, raw):
    def bn(x, gamma, beta, mean, var):
        s = gamma / jnp.sqrt(var + BN_EPS)
        return x * s[None, :, None, None] + (beta - mean * s)[None, :, None, None]

    def lrelu(x):
        return jnp.where(x >= 0, x, LRELU_SLOPE * x)

    def conv(x, w, stride, pad):
        return jax.lax.conv_general_dilated(
            x, w, (stride, stride), [(pad, pad), (pad, pad)],
            dimension_numbers=("NCHW", "OIHW", "NCHW"))

    y = lrelu(bn(conv(x_nchw, raw["w1"], 2, 1), *raw["bn1"]))
    y = lrelu(bn(conv(y, raw["w2"], 2, 1), *raw["bn2"]))
    d = conv(y, raw["wD"], 1, 0)[:, 0, 0, 0]
    c = conv(y, raw["wC"], 1, 0)[:, :, 0, 0]
    return 1.0 / (1.0 + jnp.exp(-d)), jax.nn.log_softmax(c, axis=1)


def init_raw_params(key):
    k1, k2, k3, k4 = jax.random.split(key, 4)
    return {
        "w1": jax.random.normal(k1, (64, 1, 4, 4), jnp.float32) * 0.05,
        "w2": jax.random.normal(k2, (128, 64, 4, 4), jnp.float32) * 0.05,
        "wD": jax.random.normal(k3, (1, 128, 7, 7), jnp.float32) * 0.05,
        "wC": jax.random.normal(k4, (11, 128, 7, 7), jnp.float32) * 0.05,
        # BatchNorm at PyTorch defaults (gamma, beta, running_mean, running_var)
        "bn1": (jnp.ones(64), jnp.zeros(64), jnp.zeros(64), jnp.ones(64)),
        "bn2": (jnp.ones(128), jnp.zeros(128), jnp.zeros(128), jnp.ones(128)),
    }


if __name__ == "__main__":
    key = jax.random.PRNGKey(0)
    pkey, xkey = jax.random.split(key)
    raw = init_raw_params(pkey)
    kparams = prepare_kernel_params(raw)

    # Fashion-MNIST-sized input implied by the 7x7 head convs: (N, 1, 28, 28).
    x = jax.random.normal(xkey, (2, 1, 28, 28), jnp.float32)

    fwd = jax.jit(discriminator_forward)
    dis, cla = fwd(x, kparams)
    dis, cla = jax.block_until_ready(dis), jax.block_until_ready(cla)

    assert dis.shape == (2,)
    assert cla.shape == (2, 11)
    assert bool(jnp.all(jnp.isfinite(dis)))
    assert bool(jnp.all(jnp.isfinite(cla)))
    # log_softmax rows must exponentiate-sum to ~1
    assert bool(jnp.allclose(jnp.sum(jnp.exp(cla), axis=1), 1.0, atol=1e-4))

    # Compare against pure-JAX f32 reference (bf16 matmul inputs -> loose tol).
    dis_ref, cla_ref = reference_forward(x, raw)
    assert bool(jnp.allclose(dis, dis_ref, atol=3e-2))
    assert bool(jnp.allclose(jnp.exp(cla), jnp.exp(cla_ref), atol=3e-2))

    print("KERNEL_OK")
</pallas_src>

<mosaic_0001>
module attributes {stable_mosaic.version = 11 : i64} {
  func.func @_disc_fused_kernel(%arg0: i32, %arg1: memref<432x8x17xbf16, #tpu.memory_space<vmem>>, %arg2: memref<17x64xbf16, #tpu.memory_space<vmem>>, %arg3: memref<1024x128xbf16, #tpu.memory_space<vmem>>, %arg4: memref<1x128xf32, #tpu.memory_space<vmem>>, %arg5: memref<6272x128xbf16, #tpu.memory_space<vmem>>, %arg6: memref<8x128xf32, #tpu.memory_space<vmem>>) attributes {dimension_semantics = [#tpu.dimension_semantics<parallel>], iteration_bounds = array<i64: 1>, scalar_prefetch = 0 : i64, scratch_operands = 0 : i64, tpu.core_type = #tpu.core_type<tc>, window_params = [{transform_indices = @transform_0, window_bounds = array<i64: 432, 8, 17>}, {pipeline_mode = #tpu.pipeline_mode<synchronous>, transform_indices = @transform_1, window_bounds = array<i64: 17, 64>}, {pipeline_mode = #tpu.pipeline_mode<synchronous>, transform_indices = @transform_2, window_bounds = array<i64: 1024, 128>}, {pipeline_mode = #tpu.pipeline_mode<synchronous>, transform_indices = @transform_3, window_bounds = array<i64: 1, 128>}, {pipeline_mode = #tpu.pipeline_mode<synchronous>, transform_indices = @transform_4, window_bounds = array<i64: 6272, 128>}, {transform_indices = @transform_5, window_bounds = array<i64: 8, 128>}]} {
    %c0 = arith.constant 0 : index
    %c0_0 = arith.constant 0 : index
    %c0_1 = arith.constant 0 : index
    %0 = vector.load %arg1[%c0, %c0_0, %c0_1] : memref<432x8x17xbf16, #tpu.memory_space<vmem>>, vector<432x8x17xbf16>
    %1 = vector.shape_cast %0 : vector<432x8x17xbf16> to vector<3456x17xbf16>
    %c0_2 = arith.constant 0 : index
    %c0_3 = arith.constant 0 : index
    %2 = vector.load %arg2[%c0_2, %c0_3] : memref<17x64xbf16, #tpu.memory_space<vmem>>, vector<17x64xbf16>
    %cst = arith.constant dense<0.000000e+00> : vector<3456x64xf32>
    %3 = tpu.matmul %1, %2, %cst {dimension_numbers = #tpu.dot_dimension_numbers<[1], [0], [0], [1], [0, 0, 1, 1], [], []>} : vector<3456x17xbf16>, vector<17x64xbf16>, vector<3456x64xf32> -> vector<3456x64xf32>
    %cst_4 = arith.constant 0.000000e+00 : f32
    %4 = vector.broadcast %cst_4 : f32 to vector<3456x64xf32>
    %5 = arith.cmpf oge, %3, %4 : vector<3456x64xf32>
    %cst_5 = arith.constant 2.000000e-01 : f32
    %6 = vector.broadcast %cst_5 : f32 to vector<3456x64xf32>
    %7 = arith.mulf %6, %3 : vector<3456x64xf32>
    %8 = arith.select %5, %3, %7 : vector<3456x64xi1>, vector<3456x64xf32>
    %9 = arith.truncf %8 : vector<3456x64xf32> to vector<3456x64xbf16>
    %10 = vector.shape_cast %9 : vector<3456x64xbf16> to vector<18x24x8x64xbf16>
    %11 = vector.extract_strided_slice %10 {offsets = [0, 0, 0, 0], sizes = [8, 8, 8, 64], strides = [1, 1, 1, 1]} : vector<18x24x8x64xbf16> to vector<8x8x8x64xbf16>
    %12 = vector.extract_strided_slice %10 {offsets = [0, 9, 0, 0], sizes = [8, 8, 8, 64], strides = [1, 1, 1, 1]} : vector<18x24x8x64xbf16> to vector<8x8x8x64xbf16>
    %13 = vector.extract_strided_slice %10 {offsets = [0, 1, 0, 0], sizes = [8, 8, 8, 64], strides = [1, 1, 1, 1]} : vector<18x24x8x64xbf16> to vector<8x8x8x64xbf16>
    %14 = vector.extract_strided_slice %10 {offsets = [0, 10, 0, 0], sizes = [8, 8, 8, 64], strides = [1, 1, 1, 1]} : vector<18x24x8x64xbf16> to vector<8x8x8x64xbf16>
    %15 = vector.extract_strided_slice %10 {offsets = [9, 0, 0, 0], sizes = [8, 8, 8, 64], strides = [1, 1, 1, 1]} : vector<18x24x8x64xbf16> to vector<8x8x8x64xbf16>
    %16 = vector.extract_strided_slice %10 {offsets = [9, 9, 0, 0], sizes = [8, 8, 8, 64], strides = [1, 1, 1, 1]} : vector<18x24x8x64xbf16> to vector<8x8x8x64xbf16>
    %17 = vector.extract_strided_slice %10 {offsets = [9, 1, 0, 0], sizes = [8, 8, 8, 64], strides = [1, 1, 1, 1]} : vector<18x24x8x64xbf16> to vector<8x8x8x64xbf16>
    %18 = vector.extract_strided_slice %10 {offsets = [9, 10, 0, 0], sizes = [8, 8, 8, 64], strides = [1, 1, 1, 1]} : vector<18x24x8x64xbf16> to vector<8x8x8x64xbf16>
    %19 = vector.extract_strided_slice %10 {offsets = [1, 0, 0, 0], sizes = [8, 8, 8, 64], strides = [1, 1, 1, 1]} : vector<18x24x8x64xbf16> to vector<8x8x8x64xbf16>
    %20 = vector.extract_strided_slice %10 {offsets = [1, 9, 0, 0], sizes = [8, 8, 8, 64], strides = [1, 1, 1, 1]} : vector<18x24x8x64xbf16> to vector<8x8x8x64xbf16>
    %21 = vector.extract_strided_slice %10 {offsets = [1, 1, 0, 0], sizes = [8, 8, 8, 64], strides = [1, 1, 1, 1]} : vector<18x24x8x64xbf16> to vector<8x8x8x64xbf16>
    %22 = vector.extract_strided_slice %10 {offsets = [1, 10, 0, 0], sizes = [8, 8, 8, 64], strides = [1, 1, 1, 1]} : vector<18x24x8x64xbf16> to vector<8x8x8x64xbf16>
    %23 = vector.extract_strided_slice %10 {offsets = [10, 0, 0, 0], sizes = [8, 8, 8, 64], strides = [1, 1, 1, 1]} : vector<18x24x8x64xbf16> to vector<8x8x8x64xbf16>
    %24 = vector.extract_strided_slice %10 {offsets = [10, 9, 0, 0], sizes = [8, 8, 8, 64], strides = [1, 1, 1, 1]} : vector<18x24x8x64xbf16> to vector<8x8x8x64xbf16>
    %25 = vector.extract_strided_slice %10 {offsets = [10, 1, 0, 0], sizes = [8, 8, 8, 64], strides = [1, 1, 1, 1]} : vector<18x24x8x64xbf16> to vector<8x8x8x64xbf16>
    %26 = vector.extract_strided_slice %10 {offsets = [10, 10, 0, 0], sizes = [8, 8, 8, 64], strides = [1, 1, 1, 1]} : vector<18x24x8x64xbf16> to vector<8x8x8x64xbf16>
    %27 = tpu.concatenate %11, %12, %13, %14, %15, %16, %17, %18, %19, %20, %21, %22, %23, %24, %25, %26 in 3 : vector<8x8x8x64xbf16>, vector<8x8x8x64xbf16>, vector<8x8x8x64xbf16>, vector<8x8x8x64xbf16>, vector<8x8x8x64xbf16>, vector<8x8x8x64xbf16>, vector<8x8x8x64xbf16>, vector<8x8x8x64xbf16>, vector<8x8x8x64xbf16>, vector<8x8x8x64xbf16>, vector<8x8x8x64xbf16>, vector<8x8x8x64xbf16>, vector<8x8x8x64xbf16>, vector<8x8x8x64xbf16>, vector<8x8x8x64xbf16>, vector<8x8x8x64xbf16> -> vector<8x8x8x1024xbf16>
    %28 = vector.shape_cast %27 : vector<8x8x8x1024xbf16> to vector<512x1024xbf16>
    %c0_6 = arith.constant 0 : index
    %c0_7 = arith.constant 0 : index
    %29 = vector.load %arg3[%c0_6, %c0_7] : memref<1024x128xbf16, #tpu.memory_space<vmem>>, vector<1024x128xbf16>
    %cst_8 = arith.constant dense<0.000000e+00> : vector<512x128xf32>
    %30 = tpu.matmul %28, %29, %cst_8 {dimension_numbers = #tpu.dot_dimension_numbers<[1], [0], [0], [1], [0, 0, 1, 1], [], []>} : vector<512x1024xbf16>, vector<1024x128xbf16>, vector<512x128xf32> -> vector<512x128xf32>
    %c0_9 = arith.constant 0 : index
    %c0_10 = arith.constant 0 : index
    %31 = vector.load %arg4[%c0_9, %c0_10] : memref<1x128xf32, #tpu.memory_space<vmem>>, vector<1x128xf32>
    %32 = vector.broadcast %31 : vector<1x128xf32> to vector<512x128xf32>
    %33 = arith.addf %30, %32 : vector<512x128xf32>
    %cst_11 = arith.constant 0.000000e+00 : f32
    %34 = vector.broadcast %cst_11 : f32 to vector<512x128xf32>
    %35 = arith.cmpf oge, %33, %34 : vector<512x128xf32>
    %cst_12 = arith.constant 2.000000e-01 : f32
    %36 = vector.broadcast %cst_12 : f32 to vector<512x128xf32>
    %37 = arith.mulf %36, %33 : vector<512x128xf32>
    %38 = arith.select %35, %33, %37 : vector<512x128xi1>, vector<512x128xf32>
    %39 = arith.truncf %38 : vector<512x128xf32> to vector<512x128xbf16>
    %40 = vector.shape_cast %39 : vector<512x128xbf16> to vector<8x8x8x128xbf16>
    %41 = vector.extract_strided_slice %40 {offsets = [0, 0, 0, 0], sizes = [1, 1, 8, 128], strides = [1, 1, 1, 1]} : vector<8x8x8x128xbf16> to vector<1x1x8x128xbf16>
    %42 = vector.shape_cast %41 : vector<1x1x8x128xbf16> to vector<8x128xbf16>
    %43 = vector.extract_strided_slice %40 {offsets = [0, 1, 0, 0], sizes = [1, 1, 8, 128], strides = [1, 1, 1, 1]} : vector<8x8x8x128xbf16> to vector<1x1x8x128xbf16>
    %44 = vector.shape_cast %43 : vector<1x1x8x128xbf16> to vector<8x128xbf16>
    %45 = vector.extract_strided_slice %40 {offsets = [0, 2, 0, 0], sizes = [1, 1, 8, 128], strides = [1, 1, 1, 1]} : vector<8x8x8x128xbf16> to vector<1x1x8x128xbf16>
    %46 = vector.shape_cast %45 : vector<1x1x8x128xbf16> to vector<8x128xbf16>
    %47 = vector.extract_strided_slice %40 {offsets = [0, 3, 0, 0], sizes = [1, 1, 8, 128], strides = [1, 1, 1, 1]} : vector<8x8x8x128xbf16> to vector<1x1x8x128xbf16>
    %48 = vector.shape_cast %47 : vector<1x1x8x128xbf16> to vector<8x128xbf16>
    %49 = vector.extract_strided_slice %40 {offsets = [0, 4, 0, 0], sizes = [1, 1, 8, 128], strides = [1, 1, 1, 1]} : vector<8x8x8x128xbf16> to vector<1x1x8x128xbf16>
    %50 = vector.shape_cast %49 : vector<1x1x8x128xbf16> to vector<8x128xbf16>
    %51 = vector.extract_strided_slice %40 {offsets = [0, 5, 0, 0], sizes = [1, 1, 8, 128], strides = [1, 1, 1, 1]} : vector<8x8x8x128xbf16> to vector<1x1x8x128xbf16>
    %52 = vector.shape_cast %51 : vector<1x1x8x128xbf16> to vector<8x128xbf16>
    %53 = vector.extract_strided_slice %40 {offsets = [0, 6, 0, 0], sizes = [1, 1, 8, 128], strides = [1, 1, 1, 1]} : vector<8x8x8x128xbf16> to vector<1x1x8x128xbf16>
    %54 = vector.shape_cast %53 : vector<1x1x8x128xbf16> to vector<8x128xbf16>
    %55 = vector.extract_strided_slice %40 {offsets = [1, 0, 0, 0], sizes = [1, 1, 8, 128], strides = [1, 1, 1, 1]} : vector<8x8x8x128xbf16> to vector<1x1x8x128xbf16>
    %56 = vector.shape_cast %55 : vector<1x1x8x128xbf16> to vector<8x128xbf16>
    %57 = vector.extract_strided_slice %40 {offsets = [1, 1, 0, 0], sizes = [1, 1, 8, 128], strides = [1, 1, 1, 1]} : vector<8x8x8x128xbf16> to vector<1x1x8x128xbf16>
    %58 = vector.shape_cast %57 : vector<1x1x8x128xbf16> to vector<8x128xbf16>
    %59 = vector.extract_strided_slice %40 {offsets = [1, 2, 0, 0], sizes = [1, 1, 8, 128], strides = [1, 1, 1, 1]} : vector<8x8x8x128xbf16> to vector<1x1x8x128xbf16>
    %60 = vector.shape_cast %59 : vector<1x1x8x128xbf16> to vector<8x128xbf16>
    %61 = vector.extract_strided_slice %40 {offsets = [1, 3, 0, 0], sizes = [1, 1, 8, 128], strides = [1, 1, 1, 1]} : vector<8x8x8x128xbf16> to vector<1x1x8x128xbf16>
    %62 = vector.shape_cast %61 : vector<1x1x8x128xbf16> to vector<8x128xbf16>
    %63 = vector.extract_strided_slice %40 {offsets = [1, 4, 0, 0], sizes = [1, 1, 8, 128], strides = [1, 1, 1, 1]} : vector<8x8x8x128xbf16> to vector<1x1x8x128xbf16>
    %64 = vector.shape_cast %63 : vector<1x1x8x128xbf16> to vector<8x128xbf16>
    %65 = vector.extract_strided_slice %40 {offsets = [1, 5, 0, 0], sizes = [1, 1, 8, 128], strides = [1, 1, 1, 1]} : vector<8x8x8x128xbf16> to vector<1x1x8x128xbf16>
    %66 = vector.shape_cast %65 : vector<1x1x8x128xbf16> to vector<8x128xbf16>
    %67 = vector.extract_strided_slice %40 {offsets = [1, 6, 0, 0], sizes = [1, 1, 8, 128], strides = [1, 1, 1, 1]} : vector<8x8x8x128xbf16> to vector<1x1x8x128xbf16>
    %68 = vector.shape_cast %67 : vector<1x1x8x128xbf16> to vector<8x128xbf16>
    %69 = vector.extract_strided_slice %40 {offsets = [2, 0, 0, 0], sizes = [1, 1, 8, 128], strides = [1, 1, 1, 1]} : vector<8x8x8x128xbf16> to vector<1x1x8x128xbf16>
    %70 = vector.shape_cast %69 : vector<1x1x8x128xbf16> to vector<8x128xbf16>
    %71 = vector.extract_strided_slice %40 {offsets = [2, 1, 0, 0], sizes = [1, 1, 8, 128], strides = [1, 1, 1, 1]} : vector<8x8x8x128xbf16> to vector<1x1x8x128xbf16>
    %72 = vector.shape_cast %71 : vector<1x1x8x128xbf16> to vector<8x128xbf16>
    %73 = vector.extract_strided_slice %40 {offsets = [2, 2, 0, 0], sizes = [1, 1, 8, 128], strides = [1, 1, 1, 1]} : vector<8x8x8x128xbf16> to vector<1x1x8x128xbf16>
    %74 = vector.shape_cast %73 : vector<1x1x8x128xbf16> to vector<8x128xbf16>
    %75 = vector.extract_strided_slice %40 {offsets = [2, 3, 0, 0], sizes = [1, 1, 8, 128], strides = [1, 1, 1, 1]} : vector<8x8x8x128xbf16> to vector<1x1x8x128xbf16>
    %76 = vector.shape_cast %75 : vector<1x1x8x128xbf16> to vector<8x128xbf16>
    %77 = vector.extract_strided_slice %40 {offsets = [2, 4, 0, 0], sizes = [1, 1, 8, 128], strides = [1, 1, 1, 1]} : vector<8x8x8x128xbf16> to vector<1x1x8x128xbf16>
    %78 = vector.shape_cast %77 : vector<1x1x8x128xbf16> to vector<8x128xbf16>
    %79 = vector.extract_strided_slice %40 {offsets = [2, 5, 0, 0], sizes = [1, 1, 8, 128], strides = [1, 1, 1, 1]} : vector<8x8x8x128xbf16> to vector<1x1x8x128xbf16>
    %80 = vector.shape_cast %79 : vector<1x1x8x128xbf16> to vector<8x128xbf16>
    %81 = vector.extract_strided_slice %40 {offsets = [2, 6, 0, 0], sizes = [1, 1, 8, 128], strides = [1, 1, 1, 1]} : vector<8x8x8x128xbf16> to vector<1x1x8x128xbf16>
    %82 = vector.shape_cast %81 : vector<1x1x8x128xbf16> to vector<8x128xbf16>
    %83 = vector.extract_strided_slice %40 {offsets = [3, 0, 0, 0], sizes = [1, 1, 8, 128], strides = [1, 1, 1, 1]} : vector<8x8x8x128xbf16> to vector<1x1x8x128xbf16>
    %84 = vector.shape_cast %83 : vector<1x1x8x128xbf16> to vector<8x128xbf16>
    %85 = vector.extract_strided_slice %40 {offsets = [3, 1, 0, 0], sizes = [1, 1, 8, 128], strides = [1, 1, 1, 1]} : vector<8x8x8x128xbf16> to vector<1x1x8x128xbf16>
    %86 = vector.shape_cast %85 : vector<1x1x8x128xbf16> to vector<8x128xbf16>
    %87 = vector.extract_strided_slice %40 {offsets = [3, 2, 0, 0], sizes = [1, 1, 8, 128], strides = [1, 1, 1, 1]} : vector<8x8x8x128xbf16> to vector<1x1x8x128xbf16>
    %88 = vector.shape_cast %87 : vector<1x1x8x128xbf16> to vector<8x128xbf16>
    %89 = vector.extract_strided_slice %40 {offsets = [3, 3, 0, 0], sizes = [1, 1, 8, 128], strides = [1, 1, 1, 1]} : vector<8x8x8x128xbf16> to vector<1x1x8x128xbf16>
    %90 = vector.shape_cast %89 : vector<1x1x8x128xbf16> to vector<8x128xbf16>
    %91 = vector.extract_strided_slice %40 {offsets = [3, 4, 0, 0], sizes = [1, 1, 8, 128], strides = [1, 1, 1, 1]} : vector<8x8x8x128xbf16> to vector<1x1x8x128xbf16>
    %92 = vector.shape_cast %91 : vector<1x1x8x128xbf16> to vector<8x128xbf16>
    %93 = vector.extract_strided_slice %40 {offsets = [3, 5, 0, 0], sizes = [1, 1, 8, 128], strides = [1, 1, 1, 1]} : vector<8x8x8x128xbf16> to vector<1x1x8x128xbf16>
    %94 = vector.shape_cast %93 : vector<1x1x8x128xbf16> to vector<8x128xbf16>
    %95 = vector.extract_strided_slice %40 {offsets = [3, 6, 0, 0], sizes = [1, 1, 8, 128], strides = [1, 1, 1, 1]} : vector<8x8x8x128xbf16> to vector<1x1x8x128xbf16>
    %96 = vector.shape_cast %95 : vector<1x1x8x128xbf16> to vector<8x128xbf16>
    %97 = vector.extract_strided_slice %40 {offsets = [4, 0, 0, 0], sizes = [1, 1, 8, 128], strides = [1, 1, 1, 1]} : vector<8x8x8x128xbf16> to vector<1x1x8x128xbf16>
    %98 = vector.shape_cast %97 : vector<1x1x8x128xbf16> to vector<8x128xbf16>
    %99 = vector.extract_strided_slice %40 {offsets = [4, 1, 0, 0], sizes = [1, 1, 8, 128], strides = [1, 1, 1, 1]} : vector<8x8x8x128xbf16> to vector<1x1x8x128xbf16>
    %100 = vector.shape_cast %99 : vector<1x1x8x128xbf16> to vector<8x128xbf16>
    %101 = vector.extract_strided_slice %40 {offsets = [4, 2, 0, 0], sizes = [1, 1, 8, 128], strides = [1, 1, 1, 1]} : vector<8x8x8x128xbf16> to vector<1x1x8x128xbf16>
    %102 = vector.shape_cast %101 : vector<1x1x8x128xbf16> to vector<8x128xbf16>
    %103 = vector.extract_strided_slice %40 {offsets = [4, 3, 0, 0], sizes = [1, 1, 8, 128], strides = [1, 1, 1, 1]} : vector<8x8x8x128xbf16> to vector<1x1x8x128xbf16>
    %104 = vector.shape_cast %103 : vector<1x1x8x128xbf16> to vector<8x128xbf16>
    %105 = vector.extract_strided_slice %40 {offsets = [4, 4, 0, 0], sizes = [1, 1, 8, 128], strides = [1, 1, 1, 1]} : vector<8x8x8x128xbf16> to vector<1x1x8x128xbf16>
    %106 = vector.shape_cast %105 : vector<1x1x8x128xbf16> to vector<8x128xbf16>
    %107 = vector.extract_strided_slice %40 {offsets = [4, 5, 0, 0], sizes = [1, 1, 8, 128], strides = [1, 1, 1, 1]} : vector<8x8x8x128xbf16> to vector<1x1x8x128xbf16>
    %108 = vector.shape_cast %107 : vector<1x1x8x128xbf16> to vector<8x128xbf16>
    %109 = vector.extract_strided_slice %40 {offsets = [4, 6, 0, 0], sizes = [1, 1, 8, 128], strides = [1, 1, 1, 1]} : vector<8x8x8x128xbf16> to vector<1x1x8x128xbf16>
    %110 = vector.shape_cast %109 : vector<1x1x8x128xbf16> to vector<8x128xbf16>
    %111 = vector.extract_strided_slice %40 {offsets = [5, 0, 0, 0], sizes = [1, 1, 8, 128], strides = [1, 1, 1, 1]} : vector<8x8x8x128xbf16> to vector<1x1x8x128xbf16>
    %112 = vector.shape_cast %111 : vector<1x1x8x128xbf16> to vector<8x128xbf16>
    %113 = vector.extract_strided_slice %40 {offsets = [5, 1, 0, 0], sizes = [1, 1, 8, 128], strides = [1, 1, 1, 1]} : vector<8x8x8x128xbf16> to vector<1x1x8x128xbf16>
    %114 = vector.shape_cast %113 : vector<1x1x8x128xbf16> to vector<8x128xbf16>
    %115 = vector.extract_strided_slice %40 {offsets = [5, 2, 0, 0], sizes = [1, 1, 8, 128], strides = [1, 1, 1, 1]} : vector<8x8x8x128xbf16> to vector<1x1x8x128xbf16>
    %116 = vector.shape_cast %115 : vector<1x1x8x128xbf16> to vector<8x128xbf16>
    %117 = vector.extract_strided_slice %40 {offsets = [5, 3, 0, 0], sizes = [1, 1, 8, 128], strides = [1, 1, 1, 1]} : vector<8x8x8x128xbf16> to vector<1x1x8x128xbf16>
    %118 = vector.shape_cast %117 : vector<1x1x8x128xbf16> to vector<8x128xbf16>
    %119 = vector.extract_strided_slice %40 {offsets = [5, 4, 0, 0], sizes = [1, 1, 8, 128], strides = [1, 1, 1, 1]} : vector<8x8x8x128xbf16> to vector<1x1x8x128xbf16>
    %120 = vector.shape_cast %119 : vector<1x1x8x128xbf16> to vector<8x128xbf16>
    %121 = vector.extract_strided_slice %40 {offsets = [5, 5, 0, 0], sizes = [1, 1, 8, 128], strides = [1, 1, 1, 1]} : vector<8x8x8x128xbf16> to vector<1x1x8x128xbf16>
    %122 = vector.shape_cast %121 : vector<1x1x8x128xbf16> to vector<8x128xbf16>
    %123 = vector.extract_strided_slice %40 {offsets = [5, 6, 0, 0], sizes = [1, 1, 8, 128], strides = [1, 1, 1, 1]} : vector<8x8x8x128xbf16> to vector<1x1x8x128xbf16>
    %124 = vector.shape_cast %123 : vector<1x1x8x128xbf16> to vector<8x128xbf16>
    %125 = vector.extract_strided_slice %40 {offsets = [6, 0, 0, 0], sizes = [1, 1, 8, 128], strides = [1, 1, 1, 1]} : vector<8x8x8x128xbf16> to vector<1x1x8x128xbf16>
    %126 = vector.shape_cast %125 : vector<1x1x8x128xbf16> to vector<8x128xbf16>
    %127 = vector.extract_strided_slice %40 {offsets = [6, 1, 0, 0], sizes = [1, 1, 8, 128], strides = [1, 1, 1, 1]} : vector<8x8x8x128xbf16> to vector<1x1x8x128xbf16>
    %128 = vector.shape_cast %127 : vector<1x1x8x128xbf16> to vector<8x128xbf16>
    %129 = vector.extract_strided_slice %40 {offsets = [6, 2, 0, 0], sizes = [1, 1, 8, 128], strides = [1, 1, 1, 1]} : vector<8x8x8x128xbf16> to vector<1x1x8x128xbf16>
    %130 = vector.shape_cast %129 : vector<1x1x8x128xbf16> to vector<8x128xbf16>
    %131 = vector.extract_strided_slice %40 {offsets = [6, 3, 0, 0], sizes = [1, 1, 8, 128], strides = [1, 1, 1, 1]} : vector<8x8x8x128xbf16> to vector<1x1x8x128xbf16>
    %132 = vector.shape_cast %131 : vector<1x1x8x128xbf16> to vector<8x128xbf16>
    %133 = vector.extract_strided_slice %40 {offsets = [6, 4, 0, 0], sizes = [1, 1, 8, 128], strides = [1, 1, 1, 1]} : vector<8x8x8x128xbf16> to vector<1x1x8x128xbf16>
    %134 = vector.shape_cast %133 : vector<1x1x8x128xbf16> to vector<8x128xbf16>
    %135 = vector.extract_strided_slice %40 {offsets = [6, 5, 0, 0], sizes = [1, 1, 8, 128], strides = [1, 1, 1, 1]} : vector<8x8x8x128xbf16> to vector<1x1x8x128xbf16>
    %136 = vector.shape_cast %135 : vector<1x1x8x128xbf16> to vector<8x128xbf16>
    %137 = vector.extract_strided_slice %40 {offsets = [6, 6, 0, 0], sizes = [1, 1, 8, 128], strides = [1, 1, 1, 1]} : vector<8x8x8x128xbf16> to vector<1x1x8x128xbf16>
    %138 = vector.shape_cast %137 : vector<1x1x8x128xbf16> to vector<8x128xbf16>
    %139 = tpu.concatenate %42, %44, %46, %48, %50, %52, %54, %56, %58, %60, %62, %64, %66, %68, %70, %72 in 1 : vector<8x128xbf16>, vector<8x128xbf16>, vector<8x128xbf16>, vector<8x128xbf16>, vector<8x128xbf16>, vector<8x128xbf16>, vector<8x128xbf16>, vector<8x128xbf16>, vector<8x128xbf16>, vector<8x128xbf16>, vector<8x128xbf16>, vector<8x128xbf16>, vector<8x128xbf16>, vector<8x128xbf16>, vector<8x128xbf16>, vector<8x128xbf16> -> vector<8x2048xbf16>
    %140 = tpu.concatenate %74, %76, %78, %80, %82, %84, %86, %88, %90, %92, %94, %96, %98, %100, %102, %104 in 1 : vector<8x128xbf16>, vector<8x128xbf16>, vector<8x128xbf16>, vector<8x128xbf16>, vector<8x128xbf16>, vector<8x128xbf16>, vector<8x128xbf16>, vector<8x128xbf16>, vector<8x128xbf16>, vector<8x128xbf16>, vector<8x128xbf16>, vector<8x128xbf16>, vector<8x128xbf16>, vector<8x128xbf16>, vector<8x128xbf16>, vector<8x128xbf16> -> vector<8x2048xbf16>
    %141 = tpu.concatenate %106, %108, %110, %112, %114, %116, %118, %120, %122, %124, %126, %128, %130, %132, %134, %136 in 1 : vector<8x128xbf16>, vector<8x128xbf16>, vector<8x128xbf16>, vector<8x128xbf16>, vector<8x128xbf16>, vector<8x128xbf16>, vector<8x128xbf16>, vector<8x128xbf16>, vector<8x128xbf16>, vector<8x128xbf16>, vector<8x128xbf16>, vector<8x128xbf16>, vector<8x128xbf16>, vector<8x128xbf16>, vector<8x128xbf16>, vector<8x128xbf16> -> vector<8x2048xbf16>
    %142 = tpu.concatenate %139, %140, %141, %138 in 1 : vector<8x2048xbf16>, vector<8x2048xbf16>, vector<8x2048xbf16>, vector<8x128xbf16> -> vector<8x6272xbf16>
    %c0_13 = arith.constant 0 : index
    %c0_14 = arith.constant 0 : index
    %143 = vector.load %arg5[%c0_13, %c0_14] : memref<6272x128xbf16, #tpu.memory_space<vmem>>, vector<6272x128xbf16>
    %cst_15 = arith.constant dense<0.000000e+00> : vector<8x128xf32>
    %144 = tpu.matmul %142, %143, %cst_15 {dimension_numbers = #tpu.dot_dimension_numbers<[1], [0], [0], [1], [0, 0, 1, 1], [], []>} : vector<8x6272xbf16>, vector<6272x128xbf16>, vector<8x128xf32> -> vector<8x128xf32>
    %145 = tpu.iota {dimensions = array<i32: 1>} : vector<8x128xi32>
    %c1_i32 = arith.constant 1 : i32
    %146 = vector.broadcast %c1_i32 : i32 to vector<8x128xi32>
    %147 = arith.cmpi sge, %145, %146 : vector<8x128xi32>
    %c11_i32 = arith.constant 11 : i32
    %148 = vector.broadcast %c11_i32 : i32 to vector<8x128xi32>
    %149 = arith.cmpi sle, %145, %148 : vector<8x128xi32>
    %150 = arith.andi %147, %149 : vector<8x128xi1>
    %cst_16 = arith.constant -1.000000e+30 : f32
    %151 = vector.broadcast %cst_16 : f32 to vector<8x128xf32>
    %152 = arith.select %150, %144, %151 : vector<8x128xi1>, vector<8x128xf32>
    %cst_17 = arith.constant dense<0xFF800000> : vector<8xf32>
    %153 = vector.multi_reduction <maximumf>, %152, %cst_17 [1] : vector<8x128xf32> to vector<8xf32>
    %154 = vector.shape_cast %153 : vector<8xf32> to vector<8x1xf32>
    %155 = vector.broadcast %154 : vector<8x1xf32> to vector<8x128xf32>
    %156 = arith.subf %152, %155 : vector<8x128xf32>
    %157 = math.exp %156 : vector<8x128xf32>
    %cst_18 = arith.constant 0.000000e+00 : f32
    %158 = vector.broadcast %cst_18 : f32 to vector<8x128xf32>
    %159 = arith.select %150, %157, %158 : vector<8x128xi1>, vector<8x128xf32>
    %cst_19 = arith.constant dense<0.000000e+00> : vector<8xf32>
    %160 = vector.multi_reduction <add>, %159, %cst_19 [1] : vector<8x128xf32> to vector<8xf32>
    %161 = vector.shape_cast %160 : vector<8xf32> to vector<8x1xf32>
    %162 = math.log %161 : vector<8x1xf32>
    %163 = arith.addf %162, %154 : vector<8x1xf32>
    %cst_20 = arith.constant 0.000000e+00 : f32
    %164 = vector.broadcast %cst_20 : f32 to vector<8x128xf32>
    %165 = arith.subf %164, %144 : vector<8x128xf32>
    %166 = math.exp %165 : vector<8x128xf32>
    %cst_21 = arith.constant 1.000000e+00 : f32
    %167 = vector.broadcast %cst_21 : f32 to vector<8x128xf32>
    %168 = arith.addf %167, %166 : vector<8x128xf32>
    %cst_22 = arith.constant 1.000000e+00 : f32
    %169 = vector.broadcast %cst_22 : f32 to vector<8x128xf32>
    %170 = arith.divf %169, %168 : vector<8x128xf32>
    %c0_i32 = arith.constant 0 : i32
    %171 = vector.broadcast %c0_i32 : i32 to vector<8x128xi32>
    %172 = arith.cmpi eq, %145, %171 : vector<8x128xi32>
    %173 = vector.broadcast %163 : vector<8x1xf32> to vector<8x128xf32>
    %174 = arith.subf %144, %173 : vector<8x128xf32>
    %cst_23 = arith.constant 0.000000e+00 : f32
    %175 = vector.broadcast %cst_23 : f32 to vector<8x128xf32>
    %176 = arith.select %150, %174, %175 : vector<8x128xi1>, vector<8x128xf32>
    %177 = arith.select %172, %170, %176 : vector<8x128xi1>, vector<8x128xf32>
    %c0_24 = arith.constant 0 : index
    %c0_25 = arith.constant 0 : index
    %178 = vector.load %arg6[%c0_24, %c0_25] : memref<8x128xf32, #tpu.memory_space<vmem>>, vector<8x128xf32>
    tpu.vector_store %arg6[%c0_24, %c0_25], %177 {strides = array<i32>} : memref<8x128xf32, #tpu.memory_space<vmem>>, vector<8x128xf32>,
    return
  }
  func.func @transform_0(%arg0: i32) -> (i32, i32, i32) {
    %c0_i32 = arith.constant 0 : i32
    %c0_i32_0 = arith.constant 0 : i32
    %c0_i32_1 = arith.constant 0 : i32
    return %c0_i32, %arg0, %c0_i32_0 : i32, i32, i32
  }
  func.func @transform_1(%arg0: i32) -> (i32, i32) {
    %c0_i32 = arith.constant 0 : i32
    %c0_i32_0 = arith.constant 0 : i32
    %c0_i32_1 = arith.constant 0 : i32
    return %c0_i32, %c0_i32_0 : i32, i32
  }
  func.func @transform_2(%arg0: i32) -> (i32, i32) {
    %c0_i32 = arith.constant 0 : i32
    %c0_i32_0 = arith.constant 0 : i32
    %c0_i32_1 = arith.constant 0 : i32
    return %c0_i32, %c0_i32_0 : i32, i32
  }
  func.func @transform_3(%arg0: i32) -> (i32, i32) {
    %c0_i32 = arith.constant 0 : i32
    %c0_i32_0 = arith.constant 0 : i32
    %c0_i32_1 = arith.constant 0 : i32
    return %c0_i32, %c0_i32_0 : i32, i32
  }
  func.func @transform_4(%arg0: i32) -> (i32, i32) {
    %c0_i32 = arith.constant 0 : i32
    %c0_i32_0 = arith.constant 0 : i32
    %c0_i32_1 = arith.constant 0 : i32
    return %c0_i32, %c0_i32_0 : i32, i32
  }
  func.func @transform_5(%arg0: i32) -> (i32, i32) {
    %c0_i32 = arith.constant 0 : i32
    %c0_i32_0 = arith.constant 0 : i32
    return %arg0, %c0_i32 : i32, i32
  }
}

</mosaic_0001>

<llo_original>
// kernel: discriminator_forward.1
$region0: #{discriminator_forward.1}
  #allocation0 [shape = 'u32[]', space=smem, size = 0x4, offset = 0x4, fixed_abs, tag = 'smem constant byte address 0x4 - core index']
  #allocation1 [shape = 'u32[144,128]{1,0:T(1,128)}', space=vmem, size = 0x12000, scoped, tag = 'internal scratch']
  %s0 = inlined_call_operand.vmem [shape: bf16[432,8,17], index: 0, kind: input, shape index: {}]
  %s1 = inlined_call_operand.vmem [shape: bf16[17,64], index: 1, kind: input, shape index: {}]
  %s2 = inlined_call_operand.vmem [shape: bf16[1024,128], index: 2, kind: input, shape index: {}]
  %s3 = inlined_call_operand.vmem [shape: f32[1,128], index: 3, kind: input, shape index: {}]
  %s4 = inlined_call_operand.vmem [shape: bf16[6272,128], index: 4, kind: input, shape index: {}]
  %s5 = inlined_call_operand.vmem [shape: f32[8,128], index: 5, kind: output, shape index: {}]
  %s6 = sld [smem:[#allocation0]]
  $region30: #{discriminator_forward.1} parent=0
    _
  %s8 = ssub.s32 1, %s6
  %s9 = scalar_select 0, %s8, %s6
  // Predicated region
  $region2: #{discriminator_forward.1} parent=0 // pred_check
    _
  $region3: #{discriminator_forward.1} parent=0 // pred_check_branch
    %11 = sbr.rel (0) target = $region5
  $region4: #{discriminator_forward.1} parent=0 // pred_region
    _
  $region5: #{discriminator_forward.1} parent=0 // pred_fallthru
    _
  // Predicated region
  $region6: #{discriminator_forward.1} parent=0 // pred_check
    _
  $region7: #{discriminator_forward.1} parent=0 // pred_check_branch
    %13 = sbr.rel (0) target = $region9
  $region8: #{discriminator_forward.1} parent=0 // pred_region
    _
  $region9: #{discriminator_forward.1} parent=0 // pred_fallthru
    _
  // Predicated region
  $region10: #{discriminator_forward.1} parent=0 // pred_check
    _
  $region11: #{discriminator_forward.1} parent=0 // pred_check_branch
    %15 = sbr.rel (0) target = $region13
  $region12: #{discriminator_forward.1} parent=0 // pred_region
    _
  $region13: #{discriminator_forward.1} parent=0 // pred_fallthru
    _
  // Predicated region
  $region14: #{discriminator_forward.1} parent=0 // pred_check
    _
  $region15: #{discriminator_forward.1} parent=0 // pred_check_branch
    %17 = sbr.rel (0) target = $region17
  $region16: #{discriminator_forward.1} parent=0 // pred_region
    _
  $region17: #{discriminator_forward.1} parent=0 // pred_fallthru
    _
  // Predicated region
  $region18: #{discriminator_forward.1} parent=0 // pred_check
    _
  $region19: #{discriminator_forward.1} parent=0 // pred_check_branch
    %19 = sbr.rel (0) target = $region21
  $region20: #{discriminator_forward.1} parent=0 // pred_region
    _
  $region21: #{discriminator_forward.1} parent=0 // pred_fallthru
    _
  %v21 = vld [vmem:[%s0] sm:$0xf]
  %v22 = vld [vmem:[%s0 + $0x4] sm:$0xf]
  %v23 = vld [vmem:[%s0 + $0x8] sm:$0xf]
  %v24 = vld [vmem:[%s0 + $0xc] sm:$0xf]
  %v25 = vld [vmem:[%s0 + $0x10] sm:$0xf]
  %v26 = vld [vmem:[%s0 + $0x14] sm:$0xf]
  %v27 = vld [vmem:[%s0 + $0x18] sm:$0xf]
  %v28 = vld [vmem:[%s0 + $0x1c] sm:$0xf]
  %v29 = vld [vmem:[%s0 + $0x20] sm:$0xf]
  %v30 = vld [vmem:[%s0 + $0x24] sm:$0xf]
  %v31 = vld [vmem:[%s0 + $0x28] sm:$0xf]
  %v32 = vld [vmem:[%s0 + $0x2c] sm:$0xf]
  %v33 = vld [vmem:[%s0 + $0x30] sm:$0xf]
  %v34 = vld [vmem:[%s0 + $0x34] sm:$0xf]
  %v35 = vld [vmem:[%s0 + $0x38] sm:$0xf]
  %v36 = vld [vmem:[%s0 + $0x3c] sm:$0xf]
  %v37 = vld [vmem:[%s0 + $0x40] sm:$0xf]
  %v38 = vld [vmem:[%s0 + $0x44] sm:$0xf]
  %v39 = vld [vmem:[%s0 + $0x48] sm:$0xf]
  %v40 = vld [vmem:[%s0 + $0x4c] sm:$0xf]
  %v41 = vld [vmem:[%s0 + $0x50] sm:$0xf]
  %v42 = vld [vmem:[%s0 + $0x54] sm:$0xf]
  %v43 = vld [vmem:[%s0 + $0x58] sm:$0xf]
  %v44 = vld [vmem:[%s0 + $0x5c] sm:$0xf]
  %v45 = vld [vmem:[%s0 + $0x60] sm:$0xf]
  %v46 = vld [vmem:[%s0 + $0x64] sm:$0xf]
  %v47 = vld [vmem:[%s0 + $0x68] sm:$0xf]
  %v48 = vld [vmem:[%s0 + $0x6c] sm:$0xf]
  %v49 = vld [vmem:[%s0 + $0x70] sm:$0xf]
  %v50 = vld [vmem:[%s0 + $0x74] sm:$0xf]
  %v51 = vld [vmem:[%s0 + $0x78] sm:$0xf]
  %v52 = vld [vmem:[%s0 + $0x7c] sm:$0xf]
  %v53 = vld [vmem:[%s0 + $0x80] sm:$0xf]
  %v54 = vld [vmem:[%s0 + $0x84] sm:$0xf]
  %v55 = vld [vmem:[%s0 + $0x88] sm:$0xf]
  %v56 = vld [vmem:[%s0 + $0x8c] sm:$0xf]
  %v57 = vld [vmem:[%s0 + $0x90] sm:$0xf]
  %v58 = vld [vmem:[%s0 + $0x94] sm:$0xf]
  %v59 = vld [vmem:[%s0 + $0x98] sm:$0xf]
  %v60 = vld [vmem:[%s0 + $0x9c] sm:$0xf]
  %v61 = vld [vmem:[%s0 + $0xa0] sm:$0xf]
  %v62 = vld [vmem:[%s0 + $0xa4] sm:$0xf]
  %v63 = vld [vmem:[%s0 + $0xa8] sm:$0xf]
  %v64 = vld [vmem:[%s0 + $0xac] sm:$0xf]
  %v65 = vld [vmem:[%s0 + $0xb0] sm:$0xf]
  %v66 = vld [vmem:[%s0 + $0xb4] sm:$0xf]
  %v67 = vld [vmem:[%s0 + $0xb8] sm:$0xf]
  %v68 = vld [vmem:[%s0 + $0xbc] sm:$0xf]
  %v69 = vld [vmem:[%s0 + $0xc0] sm:$0xf]
  %v70 = vld [vmem:[%s0 + $0xc4] sm:$0xf]
  %v71 = vld [vmem:[%s0 + $0xc8] sm:$0xf]
  %v72 = vld [vmem:[%s0 + $0xcc] sm:$0xf]
  %v73 = vld [vmem:[%s0 + $0xd0] sm:$0xf]
  %v74 = vld [vmem:[%s0 + $0xd4] sm:$0xf]
  %v75 = vld [vmem:[%s0 + $0xd8] sm:$0xf]
  %v76 = vld [vmem:[%s0 + $0xdc] sm:$0xf]
  %v77 = vld [vmem:[%s0 + $0xe0] sm:$0xf]
  %v78 = vld [vmem:[%s0 + $0xe4] sm:$0xf]
  %v79 = vld [vmem:[%s0 + $0xe8] sm:$0xf]
  %v80 = vld [vmem:[%s0 + $0xec] sm:$0xf]
  %v81 = vld [vmem:[%s0 + $0xf0] sm:$0xf]
  %v82 = vld [vmem:[%s0 + $0xf4] sm:$0xf]
  %v83 = vld [vmem:[%s0 + $0xf8] sm:$0xf]
  %v84 = vld [vmem:[%s0 + $0xfc] sm:$0xf]
  %v85 = vld [vmem:[%s0 + $0x100] sm:$0xf]
  %v86 = vld [vmem:[%s0 + $0x104] sm:$0xf]
  %v87 = vld [vmem:[%s0 + $0x108] sm:$0xf]
  %v88 = vld [vmem:[%s0 + $0x10c] sm:$0xf]
  %v89 = vld [vmem:[%s0 + $0x110] sm:$0xf]
  %v90 = vld [vmem:[%s0 + $0x114] sm:$0xf]
  %v91 = vld [vmem:[%s0 + $0x118] sm:$0xf]
  %v92 = vld [vmem:[%s0 + $0x11c] sm:$0xf]
  %v93 = vld [vmem:[%s0 + $0x120] sm:$0xf]
  %v94 = vld [vmem:[%s0 + $0x124] sm:$0xf]
  %v95 = vld [vmem:[%s0 + $0x128] sm:$0xf]
  %v96 = vld [vmem:[%s0 + $0x12c] sm:$0xf]
  %v97 = vld [vmem:[%s0 + $0x130] sm:$0xf]
  %v98 = vld [vmem:[%s0 + $0x134] sm:$0xf]
  %v99 = vld [vmem:[%s0 + $0x138] sm:$0xf]
  %v100 = vld [vmem:[%s0 + $0x13c] sm:$0xf]
  %v101 = vld [vmem:[%s0 + $0x140] sm:$0xf]
  %v102 = vld [vmem:[%s0 + $0x144] sm:$0xf]
  %v103 = vld [vmem:[%s0 + $0x148] sm:$0xf]
  %v104 = vld [vmem:[%s0 + $0x14c] sm:$0xf]
  %v105 = vld [vmem:[%s0 + $0x150] sm:$0xf]
  %v106 = vld [vmem:[%s0 + $0x154] sm:$0xf]
  %v107 = vld [vmem:[%s0 + $0x158] sm:$0xf]
  %v108 = vld [vmem:[%s0 + $0x15c] sm:$0xf]
  %v109 = vld [vmem:[%s0 + $0x160] sm:$0xf]
  %v110 = vld [vmem:[%s0 + $0x164] sm:$0xf]
  %v111 = vld [vmem:[%s0 + $0x168] sm:$0xf]
  %v112 = vld [vmem:[%s0 + $0x16c] sm:$0xf]
  %v113 = vld [vmem:[%s0 + $0x170] sm:$0xf]
  %v114 = vld [vmem:[%s0 + $0x174] sm:$0xf]
  %v115 = vld [vmem:[%s0 + $0x178] sm:$0xf]
  %v116 = vld [vmem:[%s0 + $0x17c] sm:$0xf]
  %v117 = vld [vmem:[%s0 + $0x180] sm:$0xf]
  %v118 = vld [vmem:[%s0 + $0x184] sm:$0xf]
  %v119 = vld [vmem:[%s0 + $0x188] sm:$0xf]
  %v120 = vld [vmem:[%s0 + $0x18c] sm:$0xf]
  %v121 = vld [vmem:[%s0 + $0x190] sm:$0xf]
  %v122 = vld [vmem:[%s0 + $0x194] sm:$0xf]
  %v123 = vld [vmem:[%s0 + $0x198] sm:$0xf]
  %v124 = vld [vmem:[%s0 + $0x19c] sm:$0xf]
  %v125 = vld [vmem:[%s0 + $0x1a0] sm:$0xf]
  %v126 = vld [vmem:[%s0 + $0x1a4] sm:$0xf]
  %v127 = vld [vmem:[%s0 + $0x1a8] sm:$0xf]
  %v128 = vld [vmem:[%s0 + $0x1ac] sm:$0xf]
  %v129 = vld [vmem:[%s0 + $0x1b0] sm:$0xf]
  %v130 = vld [vmem:[%s0 + $0x1b4] sm:$0xf]
  %v131 = vld [vmem:[%s0 + $0x1b8] sm:$0xf]
  %v132 = vld [vmem:[%s0 + $0x1bc] sm:$0xf]
  %v133 = vld [vmem:[%s0 + $0x1c0] sm:$0xf]
  %v134 = vld [vmem:[%s0 + $0x1c4] sm:$0xf]
  %v135 = vld [vmem:[%s0 + $0x1c8] sm:$0xf]
  %v136 = vld [vmem:[%s0 + $0x1cc] sm:$0xf]
  %v137 = vld [vmem:[%s0 + $0x1d0] sm:$0xf]
  %v138 = vld [vmem:[%s0 + $0x1d4] sm:$0xf]
  %v139 = vld [vmem:[%s0 + $0x1d8] sm:$0xf]
  %v140 = vld [vmem:[%s0 + $0x1dc] sm:$0xf]
  %v141 = vld [vmem:[%s0 + $0x1e0] sm:$0xf]
  %v142 = vld [vmem:[%s0 + $0x1e4] sm:$0xf]
  %v143 = vld [vmem:[%s0 + $0x1e8] sm:$0xf]
  %v144 = vld [vmem:[%s0 + $0x1ec] sm:$0xf]
  %v145 = vld [vmem:[%s0 + $0x1f0] sm:$0xf]
  %v146 = vld [vmem:[%s0 + $0x1f4] sm:$0xf]
  %v147 = vld [vmem:[%s0 + $0x1f8] sm:$0xf]
  %v148 = vld [vmem:[%s0 + $0x1fc] sm:$0xf]
  %v149 = vld [vmem:[%s0 + $0x200] sm:$0xf]
  %v150 = vld [vmem:[%s0 + $0x204] sm:$0xf]
  %v151 = vld [vmem:[%s0 + $0x208] sm:$0xf]
  %v152 = vld [vmem:[%s0 + $0x20c] sm:$0xf]
  %v153 = vld [vmem:[%s0 + $0x210] sm:$0xf]
  %v154 = vld [vmem:[%s0 + $0x214] sm:$0xf]
  %v155 = vld [vmem:[%s0 + $0x218] sm:$0xf]
  %v156 = vld [vmem:[%s0 + $0x21c] sm:$0xf]
  %v157 = vld [vmem:[%s0 + $0x220] sm:$0xf]
  %v158 = vld [vmem:[%s0 + $0x224] sm:$0xf]
  %v159 = vld [vmem:[%s0 + $0x228] sm:$0xf]
  %v160 = vld [vmem:[%s0 + $0x22c] sm:$0xf]
  %v161 = vld [vmem:[%s0 + $0x230] sm:$0xf]
  %v162 = vld [vmem:[%s0 + $0x234] sm:$0xf]
  %v163 = vld [vmem:[%s0 + $0x238] sm:$0xf]
  %v164 = vld [vmem:[%s0 + $0x23c] sm:$0xf]
  %v165 = vld [vmem:[%s0 + $0x240] sm:$0xf]
  %v166 = vld [vmem:[%s0 + $0x244] sm:$0xf]
  %v167 = vld [vmem:[%s0 + $0x248] sm:$0xf]
  %v168 = vld [vmem:[%s0 + $0x24c] sm:$0xf]
  %v169 = vld [vmem:[%s0 + $0x250] sm:$0xf]
  %v170 = vld [vmem:[%s0 + $0x254] sm:$0xf]
  %v171 = vld [vmem:[%s0 + $0x258] sm:$0xf]
  %v172 = vld [vmem:[%s0 + $0x25c] sm:$0xf]
  %v173 = vld [vmem:[%s0 + $0x260] sm:$0xf]
  %v174 = vld [vmem:[%s0 + $0x264] sm:$0xf]
  %v175 = vld [vmem:[%s0 + $0x268] sm:$0xf]
  %v176 = vld [vmem:[%s0 + $0x26c] sm:$0xf]
  %v177 = vld [vmem:[%s0 + $0x270] sm:$0xf]
  %v178 = vld [vmem:[%s0 + $0x274] sm:$0xf]
  %v179 = vld [vmem:[%s0 + $0x278] sm:$0xf]
  %v180 = vld [vmem:[%s0 + $0x27c] sm:$0xf]
  %v181 = vld [vmem:[%s0 + $0x280] sm:$0xf]
  %v182 = vld [vmem:[%s0 + $0x284] sm:$0xf]
  %v183 = vld [vmem:[%s0 + $0x288] sm:$0xf]
  %v184 = vld [vmem:[%s0 + $0x28c] sm:$0xf]
  %v185 = vld [vmem:[%s0 + $0x290] sm:$0xf]
  %v186 = vld [vmem:[%s0 + $0x294] sm:$0xf]
  %v187 = vld [vmem:[%s0 + $0x298] sm:$0xf]
  %v188 = vld [vmem:[%s0 + $0x29c] sm:$0xf]
  %v189 = vld [vmem:[%s0 + $0x2a0] sm:$0xf]
  %v190 = vld [vmem:[%s0 + $0x2a4] sm:$0xf]
  %v191 = vld [vmem:[%s0 + $0x2a8] sm:$0xf]
  %v192 = vld [vmem:[%s0 + $0x2ac] sm:$0xf]
  %v193 = vld [vmem:[%s0 + $0x2b0] sm:$0xf]
  %v194 = vld [vmem:[%s0 + $0x2b4] sm:$0xf]
  %v195 = vld [vmem:[%s0 + $0x2b8] sm:$0xf]
  %v196 = vld [vmem:[%s0 + $0x2bc] sm:$0xf]
  %v197 = vld [vmem:[%s0 + $0x2c0] sm:$0xf]
  %v198 = vld [vmem:[%s0 + $0x2c4] sm:$0xf]
  %v199 = vld [vmem:[%s0 + $0x2c8] sm:$0xf]
  %v200 = vld [vmem:[%s0 + $0x2cc] sm:$0xf]
  %v201 = vld [vmem:[%s0 + $0x2d0] sm:$0xf]
  %v202 = vld [vmem:[%s0 + $0x2d4] sm:$0xf]
  %v203 = vld [vmem:[%s0 + $0x2d8] sm:$0xf]
  %v204 = vld [vmem:[%s0 + $0x2dc] sm:$0xf]
  %v205 = vld [vmem:[%s0 + $0x2e0] sm:$0xf]
  %v206 = vld [vmem:[%s0 + $0x2e4] sm:$0xf]
  %v207 = vld [vmem:[%s0 + $0x2e8] sm:$0xf]
  %v208 = vld [vmem:[%s0 + $0x2ec] sm:$0xf]
  %v209 = vld [vmem:[%s0 + $0x2f0] sm:$0xf]
  %v210 = vld [vmem:[%s0 + $0x2f4] sm:$0xf]
  %v211 = vld [vmem:[%s0 + $0x2f8] sm:$0xf]
  %v212 = vld [vmem:[%s0 + $0x2fc] sm:$0xf]
  %v213 = vld [vmem:[%s0 + $0x300] sm:$0xf]
  %v214 = vld [vmem:[%s0 + $0x304] sm:$0xf]
  %v215 = vld [vmem:[%s0 + $0x308] sm:$0xf]
  %v216 = vld [vmem:[%s0 + $0x30c] sm:$0xf]
  %v217 = vld [vmem:[%s0 + $0x310] sm:$0xf]
  %v218 = vld [vmem:[%s0 + $0x314] sm:$0xf]
  %v219 = vld [vmem:[%s0 + $0x318] sm:$0xf]
  %v220 = vld [vmem:[%s0 + $0x31c] sm:$0xf]
  %v221 = vld [vmem:[%s0 + $0x320] sm:$0xf]
  %v222 = vld [vmem:[%s0 + $0x324] sm:$0xf]
  %v223 = vld [vmem:[%s0 + $0x328] sm:$0xf]
  %v224 = vld [vmem:[%s0 + $0x32c] sm:$0xf]
  %v225 = vld [vmem:[%s0 + $0x330] sm:$0xf]
  %v226 = vld [vmem:[%s0 + $0x334] sm:$0xf]
  %v227 = vld [vmem:[%s0 + $0x338] sm:$0xf]
  %v228 = vld [vmem:[%s0 + $0x33c] sm:$0xf]
  %v229 = vld [vmem:[%s0 + $0x340] sm:$0xf]
  %v230 = vld [vmem:[%s0 + $0x344] sm:$0xf]
  %v231 = vld [vmem:[%s0 + $0x348] sm:$0xf]
  %v232 = vld [vmem:[%s0 + $0x34c] sm:$0xf]
  %v233 = vld [vmem:[%s0 + $0x350] sm:$0xf]
  %v234 = vld [vmem:[%s0 + $0x354] sm:$0xf]
  %v235 = vld [vmem:[%s0 + $0x358] sm:$0xf]
  %v236 = vld [vmem:[%s0 + $0x35c] sm:$0xf]
  %v237 = vld [vmem:[%s0 + $0x360] sm:$0xf]
  %v238 = vld [vmem:[%s0 + $0x364] sm:$0xf]
  %v239 = vld [vmem:[%s0 + $0x368] sm:$0xf]
  %v240 = vld [vmem:[%s0 + $0x36c] sm:$0xf]
  %v241 = vld [vmem:[%s0 + $0x370] sm:$0xf]
  %v242 = vld [vmem:[%s0 + $0x374] sm:$0xf]
  %v243 = vld [vmem:[%s0 + $0x378] sm:$0xf]
  %v244 = vld [vmem:[%s0 + $0x37c] sm:$0xf]
  %v245 = vld [vmem:[%s0 + $0x380] sm:$0xf]
  %v246 = vld [vmem:[%s0 + $0x384] sm:$0xf]
  %v247 = vld [vmem:[%s0 + $0x388] sm:$0xf]
  %v248 = vld [vmem:[%s0 + $0x38c] sm:$0xf]
  %v249 = vld [vmem:[%s0 + $0x390] sm:$0xf]
  %v250 = vld [vmem:[%s0 + $0x394] sm:$0xf]
  %v251 = vld [vmem:[%s0 + $0x398] sm:$0xf]
  %v252 = vld [vmem:[%s0 + $0x39c] sm:$0xf]
  %v253 = vld [vmem:[%s0 + $0x3a0] sm:$0xf]
  %v254 = vld [vmem:[%s0 + $0x3a4] sm:$0xf]
  %v255 = vld [vmem:[%s0 + $0x3a8] sm:$0xf]
  %v256 = vld [vmem:[%s0 + $0x3ac] sm:$0xf]
  %v257 = vld [vmem:[%s0 + $0x3b0] sm:$0xf]
  %v258 = vld [vmem:[%s0 + $0x3b4] sm:$0xf]
  %v259 = vld [vmem:[%s0 + $0x3b8] sm:$0xf]
  %v260 = vld [vmem:[%s0 + $0x3bc] sm:$0xf]
  %v261 = vld [vmem:[%s0 + $0x3c0] sm:$0xf]
  %v262 = vld [vmem:[%s0 + $0x3c4] sm:$0xf]
  %v263 = vld [vmem:[%s0 + $0x3c8] sm:$0xf]
  %v264 = vld [vmem:[%s0 + $0x3cc] sm:$0xf]
  %v265 = vld [vmem:[%s0 + $0x3d0] sm:$0xf]
  %v266 = vld [vmem:[%s0 + $0x3d4] sm:$0xf]
  %v267 = vld [vmem:[%s0 + $0x3d8] sm:$0xf]
  %v268 = vld [vmem:[%s0 + $0x3dc] sm:$0xf]
  %v269 = vld [vmem:[%s0 + $0x3e0] sm:$0xf]
  %v270 = vld [vmem:[%s0 + $0x3e4] sm:$0xf]
  %v271 = vld [vmem:[%s0 + $0x3e8] sm:$0xf]
  %v272 = vld [vmem:[%s0 + $0x3ec] sm:$0xf]
  %v273 = vld [vmem:[%s0 + $0x3f0] sm:$0xf]
  %v274 = vld [vmem:[%s0 + $0x3f4] sm:$0xf]
  %v275 = vld [vmem:[%s0 + $0x3f8] sm:$0xf]
  %v276 = vld [vmem:[%s0 + $0x3fc] sm:$0xf]
  %v277 = vld [vmem:[%s0 + $0x400] sm:$0xf]
  %v278 = vld [vmem:[%s0 + $0x404] sm:$0xf]
  %v279 = vld [vmem:[%s0 + $0x408] sm:$0xf]
  %v280 = vld [vmem:[%s0 + $0x40c] sm:$0xf]
  %v281 = vld [vmem:[%s0 + $0x410] sm:$0xf]
  %v282 = vld [vmem:[%s0 + $0x414] sm:$0xf]
  %v283 = vld [vmem:[%s0 + $0x418] sm:$0xf]
  %v284 = vld [vmem:[%s0 + $0x41c] sm:$0xf]
  %v285 = vld [vmem:[%s0 + $0x420] sm:$0xf]
  %v286 = vld [vmem:[%s0 + $0x424] sm:$0xf]
  %v287 = vld [vmem:[%s0 + $0x428] sm:$0xf]
  %v288 = vld [vmem:[%s0 + $0x42c] sm:$0xf]
  %v289 = vld [vmem:[%s0 + $0x430] sm:$0xf]
  %v290 = vld [vmem:[%s0 + $0x434] sm:$0xf]
  %v291 = vld [vmem:[%s0 + $0x438] sm:$0xf]
  %v292 = vld [vmem:[%s0 + $0x43c] sm:$0xf]
  %v293 = vld [vmem:[%s0 + $0x440] sm:$0xf]
  %v294 = vld [vmem:[%s0 + $0x444] sm:$0xf]
  %v295 = vld [vmem:[%s0 + $0x448] sm:$0xf]
  %v296 = vld [vmem:[%s0 + $0x44c] sm:$0xf]
  %v297 = vld [vmem:[%s0 + $0x450] sm:$0xf]
  %v298 = vld [vmem:[%s0 + $0x454] sm:$0xf]
  %v299 = vld [vmem:[%s0 + $0x458] sm:$0xf]
  %v300 = vld [vmem:[%s0 + $0x45c] sm:$0xf]
  %v301 = vld [vmem:[%s0 + $0x460] sm:$0xf]
  %v302 = vld [vmem:[%s0 + $0x464] sm:$0xf]
  %v303 = vld [vmem:[%s0 + $0x468] sm:$0xf]
  %v304 = vld [vmem:[%s0 + $0x46c] sm:$0xf]
  %v305 = vld [vmem:[%s0 + $0x470] sm:$0xf]
  %v306 = vld [vmem:[%s0 + $0x474] sm:$0xf]
  %v307 = vld [vmem:[%s0 + $0x478] sm:$0xf]
  %v308 = vld [vmem:[%s0 + $0x47c] sm:$0xf]
  %v309 = vld [vmem:[%s0 + $0x480] sm:$0xf]
  %v310 = vld [vmem:[%s0 + $0x484] sm:$0xf]
  %v311 = vld [vmem:[%s0 + $0x488] sm:$0xf]
  %v312 = vld [vmem:[%s0 + $0x48c] sm:$0xf]
  %v313 = vld [vmem:[%s0 + $0x490] sm:$0xf]
  %v314 = vld [vmem:[%s0 + $0x494] sm:$0xf]
  %v315 = vld [vmem:[%s0 + $0x498] sm:$0xf]
  %v316 = vld [vmem:[%s0 + $0x49c] sm:$0xf]
  %v317 = vld [vmem:[%s0 + $0x4a0] sm:$0xf]
  %v318 = vld [vmem:[%s0 + $0x4a4] sm:$0xf]
  %v319 = vld [vmem:[%s0 + $0x4a8] sm:$0xf]
  %v320 = vld [vmem:[%s0 + $0x4ac] sm:$0xf]
  %v321 = vld [vmem:[%s0 + $0x4b0] sm:$0xf]
  %v322 = vld [vmem:[%s0 + $0x4b4] sm:$0xf]
  %v323 = vld [vmem:[%s0 + $0x4b8] sm:$0xf]
  %v324 = vld [vmem:[%s0 + $0x4bc] sm:$0xf]
  %v325 = vld [vmem:[%s0 + $0x4c0] sm:$0xf]
  %v326 = vld [vmem:[%s0 + $0x4c4] sm:$0xf]
  %v327 = vld [vmem:[%s0 + $0x4c8] sm:$0xf]
  %v328 = vld [vmem:[%s0 + $0x4cc] sm:$0xf]
  %v329 = vld [vmem:[%s0 + $0x4d0] sm:$0xf]
  %v330 = vld [vmem:[%s0 + $0x4d4] sm:$0xf]
  %v331 = vld [vmem:[%s0 + $0x4d8] sm:$0xf]
  %v332 = vld [vmem:[%s0 + $0x4dc] sm:$0xf]
  %v333 = vld [vmem:[%s0 + $0x4e0] sm:$0xf]
  %v334 = vld [vmem:[%s0 + $0x4e4] sm:$0xf]
  %v335 = vld [vmem:[%s0 + $0x4e8] sm:$0xf]
  %v336 = vld [vmem:[%s0 + $0x4ec] sm:$0xf]
  %v337 = vld [vmem:[%s0 + $0x4f0] sm:$0xf]
  %v338 = vld [vmem:[%s0 + $0x4f4] sm:$0xf]
  %v339 = vld [vmem:[%s0 + $0x4f8] sm:$0xf]
  %v340 = vld [vmem:[%s0 + $0x4fc] sm:$0xf]
  %v341 = vld [vmem:[%s0 + $0x500] sm:$0xf]
  %v342 = vld [vmem:[%s0 + $0x504] sm:$0xf]
  %v343 = vld [vmem:[%s0 + $0x508] sm:$0xf]
  %v344 = vld [vmem:[%s0 + $0x50c] sm:$0xf]
  %v345 = vld [vmem:[%s0 + $0x510] sm:$0xf]
  %v346 = vld [vmem:[%s0 + $0x514] sm:$0xf]
  %v347 = vld [vmem:[%s0 + $0x518] sm:$0xf]
  %v348 = vld [vmem:[%s0 + $0x51c] sm:$0xf]
  %v349 = vld [vmem:[%s0 + $0x520] sm:$0xf]
  %v350 = vld [vmem:[%s0 + $0x524] sm:$0xf]
  %v351 = vld [vmem:[%s0 + $0x528] sm:$0xf]
  %v352 = vld [vmem:[%s0 + $0x52c] sm:$0xf]
  %v353 = vld [vmem:[%s0 + $0x530] sm:$0xf]
  %v354 = vld [vmem:[%s0 + $0x534] sm:$0xf]
  %v355 = vld [vmem:[%s0 + $0x538] sm:$0xf]
  %v356 = vld [vmem:[%s0 + $0x53c] sm:$0xf]
  %v357 = vld [vmem:[%s0 + $0x540] sm:$0xf]
  %v358 = vld [vmem:[%s0 + $0x544] sm:$0xf]
  %v359 = vld [vmem:[%s0 + $0x548] sm:$0xf]
  %v360 = vld [vmem:[%s0 + $0x54c] sm:$0xf]
  %v361 = vld [vmem:[%s0 + $0x550] sm:$0xf]
  %v362 = vld [vmem:[%s0 + $0x554] sm:$0xf]
  %v363 = vld [vmem:[%s0 + $0x558] sm:$0xf]
  %v364 = vld [vmem:[%s0 + $0x55c] sm:$0xf]
  %v365 = vld [vmem:[%s0 + $0x560] sm:$0xf]
  %v366 = vld [vmem:[%s0 + $0x564] sm:$0xf]
  %v367 = vld [vmem:[%s0 + $0x568] sm:$0xf]
  %v368 = vld [vmem:[%s0 + $0x56c] sm:$0xf]
  %v369 = vld [vmem:[%s0 + $0x570] sm:$0xf]
  %v370 = vld [vmem:[%s0 + $0x574] sm:$0xf]
  %v371 = vld [vmem:[%s0 + $0x578] sm:$0xf]
  %v372 = vld [vmem:[%s0 + $0x57c] sm:$0xf]
  %v373 = vld [vmem:[%s0 + $0x580] sm:$0xf]
  %v374 = vld [vmem:[%s0 + $0x584] sm:$0xf]
  %v375 = vld [vmem:[%s0 + $0x588] sm:$0xf]
  %v376 = vld [vmem:[%s0 + $0x58c] sm:$0xf]
  %v377 = vld [vmem:[%s0 + $0x590] sm:$0xf]
  %v378 = vld [vmem:[%s0 + $0x594] sm:$0xf]
  %v379 = vld [vmem:[%s0 + $0x598] sm:$0xf]
  %v380 = vld [vmem:[%s0 + $0x59c] sm:$0xf]
  %v381 = vld [vmem:[%s0 + $0x5a0] sm:$0xf]
  %v382 = vld [vmem:[%s0 + $0x5a4] sm:$0xf]
  %v383 = vld [vmem:[%s0 + $0x5a8] sm:$0xf]
  %v384 = vld [vmem:[%s0 + $0x5ac] sm:$0xf]
  %v385 = vld [vmem:[%s0 + $0x5b0] sm:$0xf]
  %v386 = vld [vmem:[%s0 + $0x5b4] sm:$0xf]
  %v387 = vld [vmem:[%s0 + $0x5b8] sm:$0xf]
  %v388 = vld [vmem:[%s0 + $0x5bc] sm:$0xf]
  %v389 = vld [vmem:[%s0 + $0x5c0] sm:$0xf]
  %v390 = vld [vmem:[%s0 + $0x5c4] sm:$0xf]
  %v391 = vld [vmem:[%s0 + $0x5c8] sm:$0xf]
  %v392 = vld [vmem:[%s0 + $0x5cc] sm:$0xf]
  %v393 = vld [vmem:[%s0 + $0x5d0] sm:$0xf]
  %v394 = vld [vmem:[%s0 + $0x5d4] sm:$0xf]
  %v395 = vld [vmem:[%s0 + $0x5d8] sm:$0xf]
  %v396 = vld [vmem:[%s0 + $0x5dc] sm:$0xf]
  %v397 = vld [vmem:[%s0 + $0x5e0] sm:$0xf]
  %v398 = vld [vmem:[%s0 + $0x5e4] sm:$0xf]
  %v399 = vld [vmem:[%s0 + $0x5e8] sm:$0xf]
  %v400 = vld [vmem:[%s0 + $0x5ec] sm:$0xf]
  %v401 = vld [vmem:[%s0 + $0x5f0] sm:$0xf]
  %v402 = vld [vmem:[%s0 + $0x5f4] sm:$0xf]
  %v403 = vld [vmem:[%s0 + $0x5f8] sm:$0xf]
  %v404 = vld [vmem:[%s0 + $0x5fc] sm:$0xf]
  %v405 = vld [vmem:[%s0 + $0x600] sm:$0xf]
  %v406 = vld [vmem:[%s0 + $0x604] sm:$0xf]
  %v407 = vld [vmem:[%s0 + $0x608] sm:$0xf]
  %v408 = vld [vmem:[%s0 + $0x60c] sm:$0xf]
  %v409 = vld [vmem:[%s0 + $0x610] sm:$0xf]
  %v410 = vld [vmem:[%s0 + $0x614] sm:$0xf]
  %v411 = vld [vmem:[%s0 + $0x618] sm:$0xf]
  %v412 = vld [vmem:[%s0 + $0x61c] sm:$0xf]
  %v413 = vld [vmem:[%s0 + $0x620] sm:$0xf]
  %v414 = vld [vmem:[%s0 + $0x624] sm:$0xf]
  %v415 = vld [vmem:[%s0 + $0x628] sm:$0xf]
  %v416 = vld [vmem:[%s0 + $0x62c] sm:$0xf]
  %v417 = vld [vmem:[%s0 + $0x630] sm:$0xf]
  %v418 = vld [vmem:[%s0 + $0x634] sm:$0xf]
  %v419 = vld [vmem:[%s0 + $0x638] sm:$0xf]
  %v420 = vld [vmem:[%s0 + $0x63c] sm:$0xf]
  %v421 = vld [vmem:[%s0 + $0x640] sm:$0xf]
  %v422 = vld [vmem:[%s0 + $0x644] sm:$0xf]
  %v423 = vld [vmem:[%s0 + $0x648] sm:$0xf]
  %v424 = vld [vmem:[%s0 + $0x64c] sm:$0xf]
  %v425 = vld [vmem:[%s0 + $0x650] sm:$0xf]
  %v426 = vld [vmem:[%s0 + $0x654] sm:$0xf]
  %v427 = vld [vmem:[%s0 + $0x658] sm:$0xf]
  %v428 = vld [vmem:[%s0 + $0x65c] sm:$0xf]
  %v429 = vld [vmem:[%s0 + $0x660] sm:$0xf]
  %v430 = vld [vmem:[%s0 + $0x664] sm:$0xf]
  %v431 = vld [vmem:[%s0 + $0x668] sm:$0xf]
  %v432 = vld [vmem:[%s0 + $0x66c] sm:$0xf]
  %v433 = vld [vmem:[%s0 + $0x670] sm:$0xf]
  %v434 = vld [vmem:[%s0 + $0x674] sm:$0xf]
  %v435 = vld [vmem:[%s0 + $0x678] sm:$0xf]
  %v436 = vld [vmem:[%s0 + $0x67c] sm:$0xf]
  %v437 = vld [vmem:[%s0 + $0x680] sm:$0xf]
  %v438 = vld [vmem:[%s0 + $0x684] sm:$0xf]
  %v439 = vld [vmem:[%s0 + $0x688] sm:$0xf]
  %v440 = vld [vmem:[%s0 + $0x68c] sm:$0xf]
  %v441 = vld [vmem:[%s0 + $0x690] sm:$0xf]
  %v442 = vld [vmem:[%s0 + $0x694] sm:$0xf]
  %v443 = vld [vmem:[%s0 + $0x698] sm:$0xf]
  %v444 = vld [vmem:[%s0 + $0x69c] sm:$0xf]
  %v445 = vld [vmem:[%s0 + $0x6a0] sm:$0xf]
  %v446 = vld [vmem:[%s0 + $0x6a4] sm:$0xf]
  %v447 = vld [vmem:[%s0 + $0x6a8] sm:$0xf]
  %v448 = vld [vmem:[%s0 + $0x6ac] sm:$0xf]
  %v449 = vld [vmem:[%s0 + $0x6b0] sm:$0xf]
  %v450 = vld [vmem:[%s0 + $0x6b4] sm:$0xf]
  %v451 = vld [vmem:[%s0 + $0x6b8] sm:$0xf]
  %v452 = vld [vmem:[%s0 + $0x6bc] sm:$0xf]
  %v453 = vld [vmem:[%s1] sm:$0xf]
  %v454 = vld [vmem:[%s1 + $0x4] sm:$0xf]
  %v455 = vld [vmem:[%s1 + $0x8] sm:$0x1]
  %v888 = vunpack.c.l.b16 %v21
  %v889 = vunpack.c.l.b16 %v22
  %v890 = vunpack.c.l.b16 %v23
  %v891 = vunpack.c.l.b16 %v24
  %v892 = vunpack.c.l.b16 %v25
  %v893 = vunpack.c.l.b16 %v26
  %v894 = vunpack.c.l.b16 %v27
  %v895 = vunpack.c.l.b16 %v28
  %v896 = vunpack.c.l.b16 %v29
  %v897 = vunpack.c.l.b16 %v30
  %v898 = vunpack.c.l.b16 %v31
  %v899 = vunpack.c.l.b16 %v32
  %v900 = vunpack.c.l.b16 %v33
  %v901 = vunpack.c.l.b16 %v34
  %v902 = vunpack.c.l.b16 %v35
  %v903 = vunpack.c.l.b16 %v36
  %v904 = vunpack.c.l.b16 %v37
  %v905 = vunpack.c.l.b16 %v38
  %v906 = vunpack.c.l.b16 %v39
  %v907 = vunpack.c.l.b16 %v40
  %v908 = vunpack.c.l.b16 %v41
  %v909 = vunpack.c.l.b16 %v42
  %v910 = vunpack.c.l.b16 %v43
  %v911 = vunpack.c.l.b16 %v44
  %v912 = vunpack.c.l.b16 %v45
  %v913 = vunpack.c.l.b16 %v46
  %v914 = vunpack.c.l.b16 %v47
  %v915 = vunpack.c.l.b16 %v48
  %v916 = vunpack.c.l.b16 %v49
  %v917 = vunpack.c.l.b16 %v50
  %v918 = vunpack.c.l.b16 %v51
  %v919 = vunpack.c.l.b16 %v52
  %v920 = vunpack.c.l.b16 %v53
  %v921 = vunpack.c.l.b16 %v54
  %v922 = vunpack.c.l.b16 %v55
  %v923 = vunpack.c.l.b16 %v56
  %v924 = vunpack.c.l.b16 %v57
  %v925 = vunpack.c.l.b16 %v58
  %v926 = vunpack.c.l.b16 %v59
  %v927 = vunpack.c.l.b16 %v60
  %v928 = vunpack.c.l.b16 %v61
  %v929 = vunpack.c.l.b16 %v62
  %v930 = vunpack.c.l.b16 %v63
  %v931 = vunpack.c.l.b16 %v64
  %v932 = vunpack.c.l.b16 %v65
  %v933 = vunpack.c.l.b16 %v66
  %v934 = vunpack.c.l.b16 %v67
  %v935 = vunpack.c.l.b16 %v68
  %v936 = vunpack.c.l.b16 %v69
  %v937 = vunpack.c.l.b16 %v70
  %v938 = vunpack.c.l.b16 %v71
  %v939 = vunpack.c.l.b16 %v72
  %v940 = vunpack.c.l.b16 %v73
  %v941 = vunpack.c.l.b16 %v74
  %v942 = vunpack.c.l.b16 %v75
  %v943 = vunpack.c.l.b16 %v76
  %v944 = vunpack.c.l.b16 %v77
  %v945 = vunpack.c.l.b16 %v78
  %v946 = vunpack.c.l.b16 %v79
  %v947 = vunpack.c.l.b16 %v80
  %v948 = vunpack.c.l.b16 %v81
  %v949 = vunpack.c.l.b16 %v82
  %v950 = vunpack.c.l.b16 %v83
  %v951 = vunpack.c.l.b16 %v84
  %v952 = vunpack.c.l.b16 %v85
  %v953 = vunpack.c.l.b16 %v86
  %v954 = vunpack.c.l.b16 %v87
  %v955 = vunpack.c.l.b16 %v88
  %v956 = vunpack.c.l.b16 %v89
  %v957 = vunpack.c.l.b16 %v90
  %v958 = vunpack.c.l.b16 %v91
  %v959 = vunpack.c.l.b16 %v92
  %v960 = vunpack.c.l.b16 %v93
  %v961 = vunpack.c.l.b16 %v94
  %v962 = vunpack.c.l.b16 %v95
  %v963 = vunpack.c.l.b16 %v96
  %v964 = vunpack.c.l.b16 %v97
  %v965 = vunpack.c.l.b16 %v98
  %v966 = vunpack.c.l.b16 %v99
  %v967 = vunpack.c.l.b16 %v100
  %v968 = vunpack.c.l.b16 %v101
  %v969 = vunpack.c.l.b16 %v102
  %v970 = vunpack.c.l.b16 %v103
  %v971 = vunpack.c.l.b16 %v104
  %v972 = vunpack.c.l.b16 %v105
  %v973 = vunpack.c.l.b16 %v106
  %v974 = vunpack.c.l.b16 %v107
  %v975 = vunpack.c.l.b16 %v108
  %v976 = vunpack.c.l.b16 %v109
  %v977 = vunpack.c.l.b16 %v110
  %v978 = vunpack.c.l.b16 %v111
  %v979 = vunpack.c.l.b16 %v112
  %v980 = vunpack.c.l.b16 %v113
  %v981 = vunpack.c.l.b16 %v114
  %v982 = vunpack.c.l.b16 %v115
  %v983 = vunpack.c.l.b16 %v116
  %v984 = vunpack.c.l.b16 %v117
  %v985 = vunpack.c.l.b16 %v118
  %v986 = vunpack.c.l.b16 %v119
  %v987 = vunpack.c.l.b16 %v120
  %v988 = vunpack.c.l.b16 %v121
  %v989 = vunpack.c.l.b16 %v122
  %v990 = vunpack.c.l.b16 %v123
  %v991 = vunpack.c.l.b16 %v124
  %v992 = vunpack.c.l.b16 %v125
  %v993 = vunpack.c.l.b16 %v126
  %v994 = vunpack.c.l.b16 %v127
  %v995 = vunpack.c.l.b16 %v128
  %v996 = vunpack.c.l.b16 %v129
  %v997 = vunpack.c.l.b16 %v130
  %v998 = vunpack.c.l.b16 %v131
  %v999 = vunpack.c.l.b16 %v132
  %v1000 = vunpack.c.l.b16 %v133
  %v1001 = vunpack.c.l.b16 %v134
  %v1002 = vunpack.c.l.b16 %v135
  %v1003 = vunpack.c.l.b16 %v136
  %v1004 = vunpack.c.l.b16 %v137
  %v1005 = vunpack.c.l.b16 %v138
  %v1006 = vunpack.c.l.b16 %v139
  %v1007 = vunpack.c.l.b16 %v140
  %v1008 = vunpack.c.l.b16 %v141
  %v1009 = vunpack.c.l.b16 %v142
  %v1010 = vunpack.c.l.b16 %v143
  %v1011 = vunpack.c.l.b16 %v144
  %v1012 = vunpack.c.l.b16 %v145
  %v1013 = vunpack.c.l.b16 %v146
  %v1014 = vunpack.c.l.b16 %v147
  %v1015 = vunpack.c.l.b16 %v148
  %v1016 = vunpack.c.l.b16 %v149
  %v1017 = vunpack.c.l.b16 %v150
  %v1018 = vunpack.c.l.b16 %v151
  %v1019 = vunpack.c.l.b16 %v152
  %v1020 = vunpack.c.l.b16 %v153
  %v1021 = vunpack.c.l.b16 %v154
  %v1022 = vunpack.c.l.b16 %v155
  %v1023 = vunpack.c.l.b16 %v156
  %v1024 = vunpack.c.l.b16 %v157
  %v1025 = vunpack.c.l.b16 %v158
  %v1026 = vunpack.c.l.b16 %v159
  %v1027 = vunpack.c.l.b16 %v160
  %v1028 = vunpack.c.l.b16 %v161
  %v1029 = vunpack.c.l.b16 %v162
  %v1030 = vunpack.c.l.b16 %v163
  %v1031 = vunpack.c.l.b16 %v164
  %v1032 = vunpack.c.l.b16 %v165
  %v1033 = vunpack.c.l.b16 %v166
  %v1034 = vunpack.c.l.b16 %v167
  %v1035 = vunpack.c.l.b16 %v168
  %v1036 = vunpack.c.l.b16 %v169
  %v1037 = vunpack.c.l.b16 %v170
  %v1038 = vunpack.c.l.b16 %v171
  %v1039 = vunpack.c.l.b16 %v172
  %v1040 = vunpack.c.l.b16 %v173
  %v1041 = vunpack.c.l.b16 %v174
  %v1042 = vunpack.c.l.b16 %v175
  %v1043 = vunpack.c.l.b16 %v176
  %v1044 = vunpack.c.l.b16 %v177
  %v1045 = vunpack.c.l.b16 %v178
  %v1046 = vunpack.c.l.b16 %v179
  %v1047 = vunpack.c.l.b16 %v180
  %v1048 = vunpack.c.l.b16 %v181
  %v1049 = vunpack.c.l.b16 %v182
  %v1050 = vunpack.c.l.b16 %v183
  %v1051 = vunpack.c.l.b16 %v184
  %v1052 = vunpack.c.l.b16 %v185
  %v1053 = vunpack.c.l.b16 %v186
  %v1054 = vunpack.c.l.b16 %v187
  %v1055 = vunpack.c.l.b16 %v188
  %v1056 = vunpack.c.l.b16 %v189
  %v1057 = vunpack.c.l.b16 %v190
  %v1058 = vunpack.c.l.b16 %v191
  %v1059 = vunpack.c.l.b16 %v192
  %v1060 = vunpack.c.l.b16 %v193
  %v1061 = vunpack.c.l.b16 %v194
  %v1062 = vunpack.c.l.b16 %v195
  %v1063 = vunpack.c.l.b16 %v196
  %v1064 = vunpack.c.l.b16 %v197
  %v1065 = vunpack.c.l.b16 %v198
  %v1066 = vunpack.c.l.b16 %v199
  %v1067 = vunpack.c.l.b16 %v200
  %v1068 = vunpack.c.l.b16 %v201
  %v1069 = vunpack.c.l.b16 %v202
  %v1070 = vunpack.c.l.b16 %v203
  %v1071 = vunpack.c.l.b16 %v204
  %v1072 = vunpack.c.l.b16 %v205
  %v1073 = vunpack.c.l.b16 %v206
  %v1074 = vunpack.c.l.b16 %v207
  %v1075 = vunpack.c.l.b16 %v208
  %v1076 = vunpack.c.l.b16 %v209
  %v1077 = vunpack.c.l.b16 %v210
  %v1078 = vunpack.c.l.b16 %v211
  %v1079 = vunpack.c.l.b16 %v212
  %v1080 = vunpack.c.l.b16 %v213
  %v1081 = vunpack.c.l.b16 %v214
  %v1082 = vunpack.c.l.b16 %v215
  %v1083 = vunpack.c.l.b16 %v216
  %v1084 = vunpack.c.l.b16 %v217
  %v1085 = vunpack.c.l.b16 %v218
  %v1086 = vunpack.c.l.b16 %v219
  %v1087 = vunpack.c.l.b16 %v220
  %v1088 = vunpack.c.l.b16 %v221
  %v1089 = vunpack.c.l.b16 %v222
  %v1090 = vunpack.c.l.b16 %v223
  %v1091 = vunpack.c.l.b16 %v224
  %v1092 = vunpack.c.l.b16 %v225
  %v1093 = vunpack.c.l.b16 %v226
  %v1094 = vunpack.c.l.b16 %v227
  %v1095 = vunpack.c.l.b16 %v228
  %v1096 = vunpack.c.l.b16 %v229
  %v1097 = vunpack.c.l.b16 %v230
  %v1098 = vunpack.c.l.b16 %v231
  %v1099 = vunpack.c.l.b16 %v232
  %v1100 = vunpack.c.l.b16 %v233
  %v1101 = vunpack.c.l.b16 %v234
  %v1102 = vunpack.c.l.b16 %v235
  %v1103 = vunpack.c.l.b16 %v236
  %v1104 = vunpack.c.l.b16 %v237
  %v1105 = vunpack.c.l.b16 %v238
  %v1106 = vunpack.c.l.b16 %v239
  %v1107 = vunpack.c.l.b16 %v240
  %v1108 = vunpack.c.l.b16 %v241
  %v1109 = vunpack.c.l.b16 %v242
  %v1110 = vunpack.c.l.b16 %v243
  %v1111 = vunpack.c.l.b16 %v244
  %v1112 = vunpack.c.l.b16 %v245
  %v1113 = vunpack.c.l.b16 %v246
  %v1114 = vunpack.c.l.b16 %v247
  %v1115 = vunpack.c.l.b16 %v248
  %v1116 = vunpack.c.l.b16 %v249
  %v1117 = vunpack.c.l.b16 %v250
  %v1118 = vunpack.c.l.b16 %v251
  %v1119 = vunpack.c.l.b16 %v252
  %v1120 = vunpack.c.l.b16 %v253
  %v1121 = vunpack.c.l.b16 %v254
  %v1122 = vunpack.c.l.b16 %v255
  %v1123 = vunpack.c.l.b16 %v256
  %v1124 = vunpack.c.l.b16 %v257
  %v1125 = vunpack.c.l.b16 %v258
  %v1126 = vunpack.c.l.b16 %v259
  %v1127 = vunpack.c.l.b16 %v260
  %v1128 = vunpack.c.l.b16 %v261
  %v1129 = vunpack.c.l.b16 %v262
  %v1130 = vunpack.c.l.b16 %v263
  %v1131 = vunpack.c.l.b16 %v264
  %v1132 = vunpack.c.l.b16 %v265
  %v1133 = vunpack.c.l.b16 %v266
  %v1134 = vunpack.c.l.b16 %v267
  %v1135 = vunpack.c.l.b16 %v268
  %v1136 = vunpack.c.l.b16 %v269
  %v1137 = vunpack.c.l.b16 %v270
  %v1138 = vunpack.c.l.b16 %v271
  %v1139 = vunpack.c.l.b16 %v272
  %v1140 = vunpack.c.l.b16 %v273
  %v1141 = vunpack.c.l.b16 %v274
  %v1142 = vunpack.c.l.b16 %v275
  %v1143 = vunpack.c.l.b16 %v276
  %v1144 = vunpack.c.l.b16 %v277
  %v1145 = vunpack.c.l.b16 %v278
  %v1146 = vunpack.c.l.b16 %v279
  %v1147 = vunpack.c.l.b16 %v280
  %v1148 = vunpack.c.l.b16 %v281
  %v1149 = vunpack.c.l.b16 %v282
  %v1150 = vunpack.c.l.b16 %v283
  %v1151 = vunpack.c.l.b16 %v284
  %v1152 = vunpack.c.l.b16 %v285
  %v1153 = vunpack.c.l.b16 %v286
  %v1154 = vunpack.c.l.b16 %v287
  %v1155 = vunpack.c.l.b16 %v288
  %v1156 = vunpack.c.l.b16 %v289
  %v1157 = vunpack.c.l.b16 %v290
  %v1158 = vunpack.c.l.b16 %v291
  %v1159 = vunpack.c.l.b16 %v292
  %v1160 = vunpack.c.l.b16 %v293
  %v1161 = vunpack.c.l.b16 %v294
  %v1162 = vunpack.c.l.b16 %v295
  %v1163 = vunpack.c.l.b16 %v296
  %v1164 = vunpack.c.l.b16 %v297
  %v1165 = vunpack.c.l.b16 %v298
  %v1166 = vunpack.c.l.b16 %v299
  %v1167 = vunpack.c.l.b16 %v300
  %v1168 = vunpack.c.l.b16 %v301
  %v1169 = vunpack.c.l.b16 %v302
  %v1170 = vunpack.c.l.b16 %v303
  %v1171 = vunpack.c.l.b16 %v304
  %v1172 = vunpack.c.l.b16 %v305
  %v1173 = vunpack.c.l.b16 %v306
  %v1174 = vunpack.c.l.b16 %v307
  %v1175 = vunpack.c.l.b16 %v308
  %v1176 = vunpack.c.l.b16 %v309
  %v1177 = vunpack.c.l.b16 %v310
  %v1178 = vunpack.c.l.b16 %v311
  %v1179 = vunpack.c.l.b16 %v312
  %v1180 = vunpack.c.l.b16 %v313
  %v1181 = vunpack.c.l.b16 %v314
  %v1182 = vunpack.c.l.b16 %v315
  %v1183 = vunpack.c.l.b16 %v316
  %v1184 = vunpack.c.l.b16 %v317
  %v1185 = vunpack.c.l.b16 %v318
  %v1186 = vunpack.c.l.b16 %v319
  %v1187 = vunpack.c.l.b16 %v320
  %v1188 = vunpack.c.l.b16 %v321
  %v1189 = vunpack.c.l.b16 %v322
  %v1190 = vunpack.c.l.b16 %v323
  %v1191 = vunpack.c.l.b16 %v324
  %v1192 = vunpack.c.l.b16 %v325
  %v1193 = vunpack.c.l.b16 %v326
  %v1194 = vunpack.c.l.b16 %v327
  %v1195 = vunpack.c.l.b16 %v328
  %v1196 = vunpack.c.l.b16 %v329
  %v1197 = vunpack.c.l.b16 %v330
  %v1198 = vunpack.c.l.b16 %v331
  %v1199 = vunpack.c.l.b16 %v332
  %v1200 = vunpack.c.l.b16 %v333
  %v1201 = vunpack.c.l.b16 %v334
  %v1202 = vunpack.c.l.b16 %v335
  %v1203 = vunpack.c.l.b16 %v336
  %v1204 = vunpack.c.l.b16 %v337
  %v1205 = vunpack.c.l.b16 %v338
  %v1206 = vunpack.c.l.b16 %v339
  %v1207 = vunpack.c.l.b16 %v340
  %v1208 = vunpack.c.l.b16 %v341
  %v1209 = vunpack.c.l.b16 %v342
  %v1210 = vunpack.c.l.b16 %v343
  %v1211 = vunpack.c.l.b16 %v344
  %v1212 = vunpack.c.l.b16 %v345
  %v1213 = vunpack.c.l.b16 %v346
  %v1214 = vunpack.c.l.b16 %v347
  %v1215 = vunpack.c.l.b16 %v348
  %v1216 = vunpack.c.l.b16 %v349
  %v1217 = vunpack.c.l.b16 %v350
  %v1218 = vunpack.c.l.b16 %v351
  %v1219 = vunpack.c.l.b16 %v352
  %v1220 = vunpack.c.l.b16 %v353
  %v1221 = vunpack.c.l.b16 %v354
  %v1222 = vunpack.c.l.b16 %v355
  %v1223 = vunpack.c.l.b16 %v356
  %v1224 = vunpack.c.l.b16 %v357
  %v1225 = vunpack.c.l.b16 %v358
  %v1226 = vunpack.c.l.b16 %v359
  %v1227 = vunpack.c.l.b16 %v360
  %v1228 = vunpack.c.l.b16 %v361
  %v1229 = vunpack.c.l.b16 %v362
  %v1230 = vunpack.c.l.b16 %v363
  %v1231 = vunpack.c.l.b16 %v364
  %v1232 = vunpack.c.l.b16 %v365
  %v1233 = vunpack.c.l.b16 %v366
  %v1234 = vunpack.c.l.b16 %v367
  %v1235 = vunpack.c.l.b16 %v368
  %v1236 = vunpack.c.l.b16 %v369
  %v1237 = vunpack.c.l.b16 %v370
  %v1238 = vunpack.c.l.b16 %v371
  %v1239 = vunpack.c.l.b16 %v372
  %v1240 = vunpack.c.l.b16 %v373
  %v1241 = vunpack.c.l.b16 %v374
  %v1242 = vunpack.c.l.b16 %v375
  %v1243 = vunpack.c.l.b16 %v376
  %v1244 = vunpack.c.l.b16 %v377
  %v1245 = vunpack.c.l.b16 %v378
  %v1246 = vunpack.c.l.b16 %v379
  %v1247 = vunpack.c.l.b16 %v380
  %v1248 = vunpack.c.l.b16 %v381
  %v1249 = vunpack.c.l.b16 %v382
  %v1250 = vunpack.c.l.b16 %v383
  %v1251 = vunpack.c.l.b16 %v384
  %v1252 = vunpack.c.l.b16 %v385
  %v1253 = vunpack.c.l.b16 %v386
  %v1254 = vunpack.c.l.b16 %v387
  %v1255 = vunpack.c.l.b16 %v388
  %v1256 = vunpack.c.l.b16 %v389
  %v1257 = vunpack.c.l.b16 %v390
  %v1258 = vunpack.c.l.b16 %v391
  %v1259 = vunpack.c.l.b16 %v392
  %v1260 = vunpack.c.l.b16 %v393
  %v1261 = vunpack.c.l.b16 %v394
  %v1262 = vunpack.c.l.b16 %v395
  %v1263 = vunpack.c.l.b16 %v396
  %v1264 = vunpack.c.l.b16 %v397
  %v1265 = vunpack.c.l.b16 %v398
  %v1266 = vunpack.c.l.b16 %v399
  %v1267 = vunpack.c.l.b16 %v400
  %v1268 = vunpack.c.l.b16 %v401
  %v1269 = vunpack.c.l.b16 %v402
  %v1270 = vunpack.c.l.b16 %v403
  %v1271 = vunpack.c.l.b16 %v404
  %v1272 = vunpack.c.l.b16 %v405
  %v1273 = vunpack.c.l.b16 %v406
  %v1274 = vunpack.c.l.b16 %v407
  %v1275 = vunpack.c.l.b16 %v408
  %v1276 = vunpack.c.l.b16 %v409
  %v1277 = vunpack.c.l.b16 %v410
  %v1278 = vunpack.c.l.b16 %v411
  %v1279 = vunpack.c.l.b16 %v412
  %v1280 = vunpack.c.l.b16 %v413
  %v1281 = vunpack.c.l.b16 %v414
  %v1282 = vunpack.c.l.b16 %v415
  %v1283 = vunpack.c.l.b16 %v416
  %v1284 = vunpack.c.l.b16 %v417
  %v1285 = vunpack.c.l.b16 %v418
  %v1286 = vunpack.c.l.b16 %v419
  %v1287 = vunpack.c.l.b16 %v420
  %v1288 = vunpack.c.l.b16 %v421
  %v1289 = vunpack.c.l.b16 %v422
  %v1290 = vunpack.c.l.b16 %v423
  %v1291 = vunpack.c.l.b16 %v424
  %v1292 = vunpack.c.l.b16 %v425
  %v1293 = vunpack.c.l.b16 %v426
  %v1294 = vunpack.c.l.b16 %v427
  %v1295 = vunpack.c.l.b16 %v428
  %v1296 = vunpack.c.l.b16 %v429
  %v1297 = vunpack.c.l.b16 %v430
  %v1298 = vunpack.c.l.b16 %v431
  %v1299 = vunpack.c.l.b16 %v432
  %v1300 = vunpack.c.l.b16 %v433
  %v1301 = vunpack.c.l.b16 %v434
  %v1302 = vunpack.c.l.b16 %v435
  %v1303 = vunpack.c.l.b16 %v436
  %v1304 = vunpack.c.l.b16 %v437
  %v1305 = vunpack.c.l.b16 %v438
  %v1306 = vunpack.c.l.b16 %v439
  %v1307 = vunpack.c.l.b16 %v440
  %v1308 = vunpack.c.l.b16 %v441
  %v1309 = vunpack.c.l.b16 %v442
  %v1310 = vunpack.c.l.b16 %v443
  %v1311 = vunpack.c.l.b16 %v444
  %v1312 = vunpack.c.l.b16 %v445
  %v1313 = vunpack.c.l.b16 %v446
  %v1314 = vunpack.c.l.b16 %v447
  %v1315 = vunpack.c.l.b16 %v448
  %v1316 = vunpack.c.l.b16 %v449
  %v1317 = vunpack.c.l.b16 %v450
  %v1318 = vunpack.c.l.b16 %v451
  %v1319 = vunpack.c.l.b16 %v452
  %v1320 = vpack.c.b16 %v889, %v888
  %v1321 = vpack.c.b16 %v891, %v890
  %v1322 = vpack.c.b16 %v893, %v892
  %v1323 = vpack.c.b16 %v895, %v894
  %v1324 = vpack.c.b16 %v897, %v896
  %v1325 = vpack.c.b16 %v899, %v898
  %v1326 = vpack.c.b16 %v901, %v900
  %v1327 = vpack.c.b16 %v903, %v902
  %v1328 = vpack.c.b16 %v905, %v904
  %v1329 = vpack.c.b16 %v907, %v906
  %v1330 = vpack.c.b16 %v909, %v908
  %v1331 = vpack.c.b16 %v911, %v910
  %v1332 = vpack.c.b16 %v913, %v912
  %v1333 = vpack.c.b16 %v915, %v914
  %v1334 = vpack.c.b16 %v917, %v916
  %v1335 = vpack.c.b16 %v919, %v918
  %v1336 = vpack.c.b16 %v921, %v920
  %v1337 = vpack.c.b16 %v923, %v922
  %v1338 = vpack.c.b16 %v925, %v924
  %v1339 = vpack.c.b16 %v927, %v926
  %v1340 = vpack.c.b16 %v929, %v928
  %v1341 = vpack.c.b16 %v931, %v930
  %v1342 = vpack.c.b16 %v933, %v932
  %v1343 = vpack.c.b16 %v935, %v934
  %v1344 = vpack.c.b16 %v937, %v936
  %v1345 = vpack.c.b16 %v939, %v938
  %v1346 = vpack.c.b16 %v941, %v940
  %v1347 = vpack.c.b16 %v943, %v942
  %v1348 = vpack.c.b16 %v945, %v944
  %v1349 = vpack.c.b16 %v947, %v946
  %v1350 = vpack.c.b16 %v949, %v948
  %v1351 = vpack.c.b16 %v951, %v950
  %v1352 = vpack.c.b16 %v953, %v952
  %v1353 = vpack.c.b16 %v955, %v954
  %v1354 = vpack.c.b16 %v957, %v956
  %v1355 = vpack.c.b16 %v959, %v958
  %v1356 = vpack.c.b16 %v961, %v960
  %v1357 = vpack.c.b16 %v963, %v962
  %v1358 = vpack.c.b16 %v965, %v964
  %v1359 = vpack.c.b16 %v967, %v966
  %v1360 = vpack.c.b16 %v969, %v968
  %v1361 = vpack.c.b16 %v971, %v970
  %v1362 = vpack.c.b16 %v973, %v972
  %v1363 = vpack.c.b16 %v975, %v974
  %v1364 = vpack.c.b16 %v977, %v976
  %v1365 = vpack.c.b16 %v979, %v978
  %v1366 = vpack.c.b16 %v981, %v980
  %v1367 = vpack.c.b16 %v983, %v982
  %v1368 = vpack.c.b16 %v985, %v984
  %v1369 = vpack.c.b16 %v987, %v986
  %v1370 = vpack.c.b16 %v989, %v988
  %v1371 = vpack.c.b16 %v991, %v990
  %v1372 = vpack.c.b16 %v993, %v992
  %v1373 = vpack.c.b16 %v995, %v994
  %v1374 = vpack.c.b16 %v997, %v996
  %v1375 = vpack.c.b16 %v999, %v998
  %v1376 = vpack.c.b16 %v1001, %v1000
  %v1377 = vpack.c.b16 %v1003, %v1002
  %v1378 = vpack.c.b16 %v1005, %v1004
  %v1379 = vpack.c.b16 %v1007, %v1006
  %v1380 = vpack.c.b16 %v1009, %v1008
  %v1381 = vpack.c.b16 %v1011, %v1010
  %v1382 = vpack.c.b16 %v1013, %v1012
  %v1383 = vpack.c.b16 %v1015, %v1014
  %v1384 = vpack.c.b16 %v1017, %v1016
  %v1385 = vpack.c.b16 %v1019, %v1018
  %v1386 = vpack.c.b16 %v1021, %v1020
  %v1387 = vpack.c.b16 %v1023, %v1022
  %v1388 = vpack.c.b16 %v1025, %v1024
  %v1389 = vpack.c.b16 %v1027, %v1026
  %v1390 = vpack.c.b16 %v1029, %v1028
  %v1391 = vpack.c.b16 %v1031, %v1030
  %v1392 = vpack.c.b16 %v1033, %v1032
  %v1393 = vpack.c.b16 %v1035, %v1034
  %v1394 = vpack.c.b16 %v1037, %v1036
  %v1395 = vpack.c.b16 %v1039, %v1038
  %v1396 = vpack.c.b16 %v1041, %v1040
  %v1397 = vpack.c.b16 %v1043, %v1042
  %v1398 = vpack.c.b16 %v1045, %v1044
  %v1399 = vpack.c.b16 %v1047, %v1046
  %v1400 = vpack.c.b16 %v1049, %v1048
  %v1401 = vpack.c.b16 %v1051, %v1050
  %v1402 = vpack.c.b16 %v1053, %v1052
  %v1403 = vpack.c.b16 %v1055, %v1054
  %v1404 = vpack.c.b16 %v1057, %v1056
  %v1405 = vpack.c.b16 %v1059, %v1058
  %v1406 = vpack.c.b16 %v1061, %v1060
  %v1407 = vpack.c.b16 %v1063, %v1062
  %v1408 = vpack.c.b16 %v1065, %v1064
  %v1409 = vpack.c.b16 %v1067, %v1066
  %v1410 = vpack.c.b16 %v1069, %v1068
  %v1411 = vpack.c.b16 %v1071, %v1070
  %v1412 = vpack.c.b16 %v1073, %v1072
  %v1413 = vpack.c.b16 %v1075, %v1074
  %v1414 = vpack.c.b16 %v1077, %v1076
  %v1415 = vpack.c.b16 %v1079, %v1078
  %v1416 = vpack.c.b16 %v1081, %v1080
  %v1417 = vpack.c.b16 %v1083, %v1082
  %v1418 = vpack.c.b16 %v1085, %v1084
  %v1419 = vpack.c.b16 %v1087, %v1086
  %v1420 = vpack.c.b16 %v1089, %v1088
  %v1421 = vpack.c.b16 %v1091, %v1090
  %v1422 = vpack.c.b16 %v1093, %v1092
  %v1423 = vpack.c.b16 %v1095, %v1094
  %v1424 = vpack.c.b16 %v1097, %v1096
  %v1425 = vpack.c.b16 %v1099, %v1098
  %v1426 = vpack.c.b16 %v1101, %v1100
  %v1427 = vpack.c.b16 %v1103, %v1102
  %v1428 = vpack.c.b16 %v1105, %v1104
  %v1429 = vpack.c.b16 %v1107, %v1106
  %v1430 = vpack.c.b16 %v1109, %v1108
  %v1431 = vpack.c.b16 %v1111, %v1110
  %v1432 = vpack.c.b16 %v1113, %v1112
  %v1433 = vpack.c.b16 %v1115, %v1114
  %v1434 = vpack.c.b16 %v1117, %v1116
  %v1435 = vpack.c.b16 %v1119, %v1118
  %v1436 = vpack.c.b16 %v1121, %v1120
  %v1437 = vpack.c.b16 %v1123, %v1122
  %v1438 = vpack.c.b16 %v1125, %v1124
  %v1439 = vpack.c.b16 %v1127, %v1126
  %v1440 = vpack.c.b16 %v1129, %v1128
  %v1441 = vpack.c.b16 %v1131, %v1130
  %v1442 = vpack.c.b16 %v1133, %v1132
  %v1443 = vpack.c.b16 %v1135, %v1134
  %v1444 = vpack.c.b16 %v1137, %v1136
  %v1445 = vpack.c.b16 %v1139, %v1138
  %v1446 = vpack.c.b16 %v1141, %v1140
  %v1447 = vpack.c.b16 %v1143, %v1142
  %v1448 = vpack.c.b16 %v1145, %v1144
  %v1449 = vpack.c.b16 %v1147, %v1146
  %v1450 = vpack.c.b16 %v1149, %v1148
  %v1451 = vpack.c.b16 %v1151, %v1150
  %v1452 = vpack.c.b16 %v1153, %v1152
  %v1453 = vpack.c.b16 %v1155, %v1154
  %v1454 = vpack.c.b16 %v1157, %v1156
  %v1455 = vpack.c.b16 %v1159, %v1158
  %v1456 = vpack.c.b16 %v1161, %v1160
  %v1457 = vpack.c.b16 %v1163, %v1162
  %v1458 = vpack.c.b16 %v1165, %v1164
  %v1459 = vpack.c.b16 %v1167, %v1166
  %v1460 = vpack.c.b16 %v1169, %v1168
  %v1461 = vpack.c.b16 %v1171, %v1170
  %v1462 = vpack.c.b16 %v1173, %v1172
  %v1463 = vpack.c.b16 %v1175, %v1174
  %v1464 = vpack.c.b16 %v1177, %v1176
  %v1465 = vpack.c.b16 %v1179, %v1178
  %v1466 = vpack.c.b16 %v1181, %v1180
  %v1467 = vpack.c.b16 %v1183, %v1182
  %v1468 = vpack.c.b16 %v1185, %v1184
  %v1469 = vpack.c.b16 %v1187, %v1186
  %v1470 = vpack.c.b16 %v1189, %v1188
  %v1471 = vpack.c.b16 %v1191, %v1190
  %v1472 = vpack.c.b16 %v1193, %v1192
  %v1473 = vpack.c.b16 %v1195, %v1194
  %v1474 = vpack.c.b16 %v1197, %v1196
  %v1475 = vpack.c.b16 %v1199, %v1198
  %v1476 = vpack.c.b16 %v1201, %v1200
  %v1477 = vpack.c.b16 %v1203, %v1202
  %v1478 = vpack.c.b16 %v1205, %v1204
  %v1479 = vpack.c.b16 %v1207, %v1206
  %v1480 = vpack.c.b16 %v1209, %v1208
  %v1481 = vpack.c.b16 %v1211, %v1210
  %v1482 = vpack.c.b16 %v1213, %v1212
  %v1483 = vpack.c.b16 %v1215, %v1214
  %v1484 = vpack.c.b16 %v1217, %v1216
  %v1485 = vpack.c.b16 %v1219, %v1218
  %v1486 = vpack.c.b16 %v1221, %v1220
  %v1487 = vpack.c.b16 %v1223, %v1222
  %v1488 = vpack.c.b16 %v1225, %v1224
  %v1489 = vpack.c.b16 %v1227, %v1226
  %v1490 = vpack.c.b16 %v1229, %v1228
  %v1491 = vpack.c.b16 %v1231, %v1230
  %v1492 = vpack.c.b16 %v1233, %v1232
  %v1493 = vpack.c.b16 %v1235, %v1234
  %v1494 = vpack.c.b16 %v1237, %v1236
  %v1495 = vpack.c.b16 %v1239, %v1238
  %v1496 = vpack.c.b16 %v1241, %v1240
  %v1497 = vpack.c.b16 %v1243, %v1242
  %v1498 = vpack.c.b16 %v1245, %v1244
  %v1499 = vpack.c.b16 %v1247, %v1246
  %v1500 = vpack.c.b16 %v1249, %v1248
  %v1501 = vpack.c.b16 %v1251, %v1250
  %v1502 = vpack.c.b16 %v1253, %v1252
  %v1503 = vpack.c.b16 %v1255, %v1254
  %v1504 = vpack.c.b16 %v1257, %v1256
  %v1505 = vpack.c.b16 %v1259, %v1258
  %v1506 = vpack.c.b16 %v1261, %v1260
  %v1507 = vpack.c.b16 %v1263, %v1262
  %v1508 = vpack.c.b16 %v1265, %v1264
  %v1509 = vpack.c.b16 %v1267, %v1266
  %v1510 = vpack.c.b16 %v1269, %v1268
  %v1511 = vpack.c.b16 %v1271, %v1270
  %v1512 = vpack.c.b16 %v1273, %v1272
  %v1513 = vpack.c.b16 %v1275, %v1274
  %v1514 = vpack.c.b16 %v1277, %v1276
  %v1515 = vpack.c.b16 %v1279, %v1278
  %v1516 = vpack.c.b16 %v1281, %v1280
  %v1517 = vpack.c.b16 %v1283, %v1282
  %v1518 = vpack.c.b16 %v1285, %v1284
  %v1519 = vpack.c.b16 %v1287, %v1286
  %v1520 = vpack.c.b16 %v1289, %v1288
  %v1521 = vpack.c.b16 %v1291, %v1290
  %v1522 = vpack.c.b16 %v1293, %v1292
  %v1523 = vpack.c.b16 %v1295, %v1294
  %v1524 = vpack.c.b16 %v1297, %v1296
  %v1525 = vpack.c.b16 %v1299, %v1298
  %v1526 = vpack.c.b16 %v1301, %v1300
  %v1527 = vpack.c.b16 %v1303, %v1302
  %v1528 = vpack.c.b16 %v1305, %v1304
  %v1529 = vpack.c.b16 %v1307, %v1306
  %v1530 = vpack.c.b16 %v1309, %v1308
  %v1531 = vpack.c.b16 %v1311, %v1310
  %v1532 = vpack.c.b16 %v1313, %v1312
  %v1533 = vpack.c.b16 %v1315, %v1314
  %v1534 = vpack.c.b16 %v1317, %v1316
  %v1535 = vpack.c.b16 %v1319, %v1318
  %v1539 = vunpack.c.l.b16 %v453
  %v1540 = vunpack.c.l.b16 %v454
  %v1541 = vunpack.c.l.b16 %v455
  %v1542 = vpack.c.b16 %v1540, %v1539
  %v1543 = vpack.c.b16 %v1541, %v1541
  %vm1545 = vcmask 138240
  %v1547 = vsel %vm1545, %v1320, 0
  %v1550 = vsel %vm1545, %v1321, 0
  %v1553 = vsel %vm1545, %v1322, 0
  %v1556 = vsel %vm1545, %v1323, 0
  %v1559 = vsel %vm1545, %v1324, 0
  %v1562 = vsel %vm1545, %v1325, 0
  %v1565 = vsel %vm1545, %v1326, 0
  %v1568 = vsel %vm1545, %v1327, 0
  %v1571 = vsel %vm1545, %v1328, 0
  %v1574 = vsel %vm1545, %v1329, 0
  %v1577 = vsel %vm1545, %v1330, 0
  %v1580 = vsel %vm1545, %v1331, 0
  %v1583 = vsel %vm1545, %v1332, 0
  %v1586 = vsel %vm1545, %v1333, 0
  %v1589 = vsel %vm1545, %v1334, 0
  %v1592 = vsel %vm1545, %v1335, 0
  %v1595 = vsel %vm1545, %v1336, 0
  %v1598 = vsel %vm1545, %v1337, 0
  %v1601 = vsel %vm1545, %v1338, 0
  %v1604 = vsel %vm1545, %v1339, 0
  %v1607 = vsel %vm1545, %v1340, 0
  %v1610 = vsel %vm1545, %v1341, 0
  %v1613 = vsel %vm1545, %v1342, 0
  %v1616 = vsel %vm1545, %v1343, 0
  %v1619 = vsel %vm1545, %v1344, 0
  %v1622 = vsel %vm1545, %v1345, 0
  %v1625 = vsel %vm1545, %v1346, 0
  %v1628 = vsel %vm1545, %v1347, 0
  %v1631 = vsel %vm1545, %v1348, 0
  %v1634 = vsel %vm1545, %v1349, 0
  %v1637 = vsel %vm1545, %v1350, 0
  %v1640 = vsel %vm1545, %v1351, 0
  %v1643 = vsel %vm1545, %v1352, 0
  %v1646 = vsel %vm1545, %v1353, 0
  %v1649 = vsel %vm1545, %v1354, 0
  %v1652 = vsel %vm1545, %v1355, 0
  %v1655 = vsel %vm1545, %v1356, 0
  %v1658 = vsel %vm1545, %v1357, 0
  %v1661 = vsel %vm1545, %v1358, 0
  %v1664 = vsel %vm1545, %v1359, 0
  %v1667 = vsel %vm1545, %v1360, 0
  %v1670 = vsel %vm1545, %v1361, 0
  %v1673 = vsel %vm1545, %v1362, 0
  %v1676 = vsel %vm1545, %v1363, 0
  %v1679 = vsel %vm1545, %v1364, 0
  %v1682 = vsel %vm1545, %v1365, 0
  %v1685 = vsel %vm1545, %v1366, 0
  %v1688 = vsel %vm1545, %v1367, 0
  %v1691 = vsel %vm1545, %v1368, 0
  %v1694 = vsel %vm1545, %v1369, 0
  %v1697 = vsel %vm1545, %v1370, 0
  %v1700 = vsel %vm1545, %v1371, 0
  %v1703 = vsel %vm1545, %v1372, 0
  %v1706 = vsel %vm1545, %v1373, 0
  %v1709 = vsel %vm1545, %v1374, 0
  %v1712 = vsel %vm1545, %v1375, 0
  %v1715 = vsel %vm1545, %v1376, 0
  %v1718 = vsel %vm1545, %v1377, 0
  %v1721 = vsel %vm1545, %v1378, 0
  %v1724 = vsel %vm1545, %v1379, 0
  %v1727 = vsel %vm1545, %v1380, 0
  %v1730 = vsel %vm1545, %v1381, 0
  %v1733 = vsel %vm1545, %v1382, 0
  %v1736 = vsel %vm1545, %v1383, 0
  %v1739 = vsel %vm1545, %v1384, 0
  %v1742 = vsel %vm1545, %v1385, 0
  %v1745 = vsel %vm1545, %v1386, 0
  %v1748 = vsel %vm1545, %v1387, 0
  %v1751 = vsel %vm1545, %v1388, 0
  %v1754 = vsel %vm1545, %v1389, 0
  %v1757 = vsel %vm1545, %v1390, 0
  %v1760 = vsel %vm1545, %v1391, 0
  %v1763 = vsel %vm1545, %v1392, 0
  %v1766 = vsel %vm1545, %v1393, 0
  %v1769 = vsel %vm1545, %v1394, 0
  %v1772 = vsel %vm1545, %v1395, 0
  %v1775 = vsel %vm1545, %v1396, 0
  %v1778 = vsel %vm1545, %v1397, 0
  %v1781 = vsel %vm1545, %v1398, 0
  %v1784 = vsel %vm1545, %v1399, 0
  %v1787 = vsel %vm1545, %v1400, 0
  %v1790 = vsel %vm1545, %v1401, 0
  %v1793 = vsel %vm1545, %v1402, 0
  %v1796 = vsel %vm1545, %v1403, 0
  %v1799 = vsel %vm1545, %v1404, 0
  %v1802 = vsel %vm1545, %v1405, 0
  %v1805 = vsel %vm1545, %v1406, 0
  %v1808 = vsel %vm1545, %v1407, 0
  %v1811 = vsel %vm1545, %v1408, 0
  %v1814 = vsel %vm1545, %v1409, 0
  %v1817 = vsel %vm1545, %v1410, 0
  %v1820 = vsel %vm1545, %v1411, 0
  %v1823 = vsel %vm1545, %v1412, 0
  %v1826 = vsel %vm1545, %v1413, 0
  %v1829 = vsel %vm1545, %v1414, 0
  %v1832 = vsel %vm1545, %v1415, 0
  %v1835 = vsel %vm1545, %v1416, 0
  %v1838 = vsel %vm1545, %v1417, 0
  %v1841 = vsel %vm1545, %v1418, 0
  %v1844 = vsel %vm1545, %v1419, 0
  %v1847 = vsel %vm1545, %v1420, 0
  %v1850 = vsel %vm1545, %v1421, 0
  %v1853 = vsel %vm1545, %v1422, 0
  %v1856 = vsel %vm1545, %v1423, 0
  %v1859 = vsel %vm1545, %v1424, 0
  %v1862 = vsel %vm1545, %v1425, 0
  %v1865 = vsel %vm1545, %v1426, 0
  %v1868 = vsel %vm1545, %v1427, 0
  %v1871 = vsel %vm1545, %v1428, 0
  %v1874 = vsel %vm1545, %v1429, 0
  %v1877 = vsel %vm1545, %v1430, 0
  %v1880 = vsel %vm1545, %v1431, 0
  %v1883 = vsel %vm1545, %v1432, 0
  %v1886 = vsel %vm1545, %v1433, 0
  %v1889 = vsel %vm1545, %v1434, 0
  %v1892 = vsel %vm1545, %v1435, 0
  %v1895 = vsel %vm1545, %v1436, 0
  %v1898 = vsel %vm1545, %v1437, 0
  %v1901 = vsel %vm1545, %v1438, 0
  %v1904 = vsel %vm1545, %v1439, 0
  %v1907 = vsel %vm1545, %v1440, 0
  %v1910 = vsel %vm1545, %v1441, 0
  %v1913 = vsel %vm1545, %v1442, 0
  %v1916 = vsel %vm1545, %v1443, 0
  %v1919 = vsel %vm1545, %v1444, 0
  %v1922 = vsel %vm1545, %v1445, 0
  %v1925 = vsel %vm1545, %v1446, 0
  %v1928 = vsel %vm1545, %v1447, 0
  %v1931 = vsel %vm1545, %v1448, 0
  %v1934 = vsel %vm1545, %v1449, 0
  %v1937 = vsel %vm1545, %v1450, 0
  %v1940 = vsel %vm1545, %v1451, 0
  %v1943 = vsel %vm1545, %v1452, 0
  %v1946 = vsel %vm1545, %v1453, 0
  %v1949 = vsel %vm1545, %v1454, 0
  %v1952 = vsel %vm1545, %v1455, 0
  %v1955 = vsel %vm1545, %v1456, 0
  %v1958 = vsel %vm1545, %v1457, 0
  %v1961 = vsel %vm1545, %v1458, 0
  %v1964 = vsel %vm1545, %v1459, 0
  %v1967 = vsel %vm1545, %v1460, 0
  %v1970 = vsel %vm1545, %v1461, 0
  %v1973 = vsel %vm1545, %v1462, 0
  %v1976 = vsel %vm1545, %v1463, 0
  %v1979 = vsel %vm1545, %v1464, 0
  %v1982 = vsel %vm1545, %v1465, 0
  %v1985 = vsel %vm1545, %v1466, 0
  %v1988 = vsel %vm1545, %v1467, 0
  %v1991 = vsel %vm1545, %v1468, 0
  %v1994 = vsel %vm1545, %v1469, 0
  %v1997 = vsel %vm1545, %v1470, 0
  %v2000 = vsel %vm1545, %v1471, 0
  %v2003 = vsel %vm1545, %v1472, 0
  %v2006 = vsel %vm1545, %v1473, 0
  %v2009 = vsel %vm1545, %v1474, 0
  %v2012 = vsel %vm1545, %v1475, 0
  %v2015 = vsel %vm1545, %v1476, 0
  %v2018 = vsel %vm1545, %v1477, 0
  %v2021 = vsel %vm1545, %v1478, 0
  %v2024 = vsel %vm1545, %v1479, 0
  %v2027 = vsel %vm1545, %v1480, 0
  %v2030 = vsel %vm1545, %v1481, 0
  %v2033 = vsel %vm1545, %v1482, 0
  %v2036 = vsel %vm1545, %v1483, 0
  %v2039 = vsel %vm1545, %v1484, 0
  %v2042 = vsel %vm1545, %v1485, 0
  %v2045 = vsel %vm1545, %v1486, 0
  %v2048 = vsel %vm1545, %v1487, 0
  %v2051 = vsel %vm1545, %v1488, 0
  %v2054 = vsel %vm1545, %v1489, 0
  %v2057 = vsel %vm1545, %v1490, 0
  %v2060 = vsel %vm1545, %v1491, 0
  %v2063 = vsel %vm1545, %v1492, 0
  %v2066 = vsel %vm1545, %v1493, 0
  %v2069 = vsel %vm1545, %v1494, 0
  %v2072 = vsel %vm1545, %v1495, 0
  %v2075 = vsel %vm1545, %v1496, 0
  %v2078 = vsel %vm1545, %v1497, 0
  %v2081 = vsel %vm1545, %v1498, 0
  %v2084 = vsel %vm1545, %v1499, 0
  %v2087 = vsel %vm1545, %v1500, 0
  %v2090 = vsel %vm1545, %v1501, 0
  %v2093 = vsel %vm1545, %v1502, 0
  %v2096 = vsel %vm1545, %v1503, 0
  %v2099 = vsel %vm1545, %v1504, 0
  %v2102 = vsel %vm1545, %v1505, 0
  %v2105 = vsel %vm1545, %v1506, 0
  %v2108 = vsel %vm1545, %v1507, 0
  %v2111 = vsel %vm1545, %v1508, 0
  %v2114 = vsel %vm1545, %v1509, 0
  %v2117 = vsel %vm1545, %v1510, 0
  %v2120 = vsel %vm1545, %v1511, 0
  %v2123 = vsel %vm1545, %v1512, 0
  %v2126 = vsel %vm1545, %v1513, 0
  %v2129 = vsel %vm1545, %v1514, 0
  %v2132 = vsel %vm1545, %v1515, 0
  %v2135 = vsel %vm1545, %v1516, 0
  %v2138 = vsel %vm1545, %v1517, 0
  %v2141 = vsel %vm1545, %v1518, 0
  %v2144 = vsel %vm1545, %v1519, 0
  %v2147 = vsel %vm1545, %v1520, 0
  %v2150 = vsel %vm1545, %v1521, 0
  %v2153 = vsel %vm1545, %v1522, 0
  %v2156 = vsel %vm1545, %v1523, 0
  %v2159 = vsel %vm1545, %v1524, 0
  %v2162 = vsel %vm1545, %v1525, 0
  %v2165 = vsel %vm1545, %v1526, 0
  %v2168 = vsel %vm1545, %v1527, 0
  %v2171 = vsel %vm1545, %v1528, 0
  %v2174 = vsel %vm1545, %v1529, 0
  %v2177 = vsel %vm1545, %v1530, 0
  %v2180 = vsel %vm1545, %v1531, 0
  %v2183 = vsel %vm1545, %v1532, 0
  %v2186 = vsel %vm1545, %v1533, 0
  %v2189 = vsel %vm1545, %v1534, 0
  %v2192 = vsel %vm1545, %v1535, 0
  %vm2194 = vcmask 1040384
  %v2195 = vsel 0, 4294967295, 65535
  %v2196 = vsel %vm2194, %v2195, 0
  %v2198 = vand.u32 %v1543, %v2196
  %2200 = vmatprep.subr.bf16.mxu0 0
  %2201 = vmatpush1.bf16.msra.mxu0 %v1542
  %2202 = vmatprep.subr.bf16.mxu0 0
  %2203 = vmatpush1.bf16.msra.mxu0 %v2198
  %2204 = vmatprep.subr.bf16.mxu0 0
  %2205 = vmatpush1.bf16.msra.mxu0 0
  %2206 = vmatprep.subr.bf16.mxu0 0
  %2207 = vmatpush1.bf16.msra.mxu0 0
  %2208 = vmatprep.subr.bf16.mxu0 0
  %2209 = vmatpush1.bf16.msra.mxu0 0
  %2210 = vmatprep.subr.bf16.mxu0 0
  %2211 = vmatpush1.bf16.msra.mxu0 0
  %2212 = vmatprep.subr.bf16.mxu0 0
  %2213 = vmatpush1.bf16.msra.mxu0 0
  %2214 = vmatprep.subr.bf16.mxu0 0
  %2215 = vmatpush1.bf16.msra.mxu0 0
  %2216 = vmatprep.subr.bf16.mxu0 0
  %2217 = vmatpush1.bf16.msra.mxu0 0
  %2218 = vmatprep.subr.bf16.mxu0 0
  %2219 = vmatpush1.bf16.msra.mxu0 0
  %2220 = vmatprep.subr.bf16.mxu0 0
  %2221 = vmatpush1.bf16.msra.mxu0 0
  %2222 = vmatprep.subr.bf16.mxu0 0
  %2223 = vmatpush1.bf16.msra.mxu0 0
  %2224 = vmatprep.subr.bf16.mxu0 0
  %2225 = vmatpush1.bf16.msra.mxu0 0
  %2226 = vmatprep.subr.bf16.mxu0 0
  %2227 = vmatpush1.bf16.msra.mxu0 0
  %2228 = vmatprep.subr.bf16.mxu0 0
  %2229 = vmatpush1.bf16.msra.mxu0 0
  %2230 = vmatprep.subr.bf16.mxu0 0
  %2231 = vmatpush1.bf16.msra.mxu0 0
  %2232 = vmatprep.mubr.bf16.mxu0 0
  %2233 = vmatmul.mubr.bf16.gmra.mrb[0].mxu0 %v1547
  %v2234 = vpop.f32.mrb[0].mxu0
  %v2235 = vadd.f32 0.0, %v2234
  %v2236 = vpop.f32.mrb[0].mxu0
  %v2237 = vpop.f32.mrb[0].mxu0
  %v2238 = vadd.f32 0.0, %v2237
  %v2239 = vpop.f32.mrb[0].mxu0
  %2240 = vmatprep.mubr.bf16.mxu0 0
  %2241 = vmatmul.mubr.bf16.gmra.mrb[0].mxu0 %v1550
  %v2242 = vpop.f32.mrb[0].mxu0
  %v2243 = vadd.f32 0.0, %v2242
  %v2244 = vpop.f32.mrb[0].mxu0
  %v2245 = vpop.f32.mrb[0].mxu0
  %v2246 = vadd.f32 0.0, %v2245
  %v2247 = vpop.f32.mrb[0].mxu0
  %2248 = vmatprep.mubr.bf16.mxu0 0
  %2249 = vmatmul.mubr.bf16.gmra.mrb[0].mxu0 %v1553
  %v2250 = vpop.f32.mrb[0].mxu0
  %v2251 = vadd.f32 0.0, %v2250
  %v2252 = vpop.f32.mrb[0].mxu0
  %v2253 = vpop.f32.mrb[0].mxu0
  %v2254 = vadd.f32 0.0, %v2253
  %v2255 = vpop.f32.mrb[0].mxu0
  %2256 = vmatprep.mubr.bf16.mxu0 0
  %2257 = vmatmul.mubr.bf16.gmra.mrb[0].mxu0 %v1556
  %v2258 = vpop.f32.mrb[0].mxu0
  %v2259 = vadd.f32 0.0, %v2258
  %v2260 = vpop.f32.mrb[0].mxu0
  %v2261 = vpop.f32.mrb[0].mxu0
  %v2262 = vadd.f32 0.0, %v2261
  %v2263 = vpop.f32.mrb[0].mxu0
  %2264 = vmatprep.mubr.bf16.mxu0 0
  %2265 = vmatmul.mubr.bf16.gmra.mrb[0].mxu0 %v1559
  %v2266 = vpop.f32.mrb[0].mxu0
  %v2267 = vadd.f32 0.0, %v2266
  %v2268 = vpop.f32.mrb[0].mxu0
  %v2269 = vpop.f32.mrb[0].mxu0
  %v2270 = vadd.f32 0.0, %v2269
  %v2271 = vpop.f32.mrb[0].mxu0
  %2272 = vmatprep.mubr.bf16.mxu0 0
  %2273 = vmatmul.mubr.bf16.gmra.mrb[0].mxu0 %v1562
  %v2274 = vpop.f32.mrb[0].mxu0
  %v2275 = vadd.f32 0.0, %v2274
  %v2276 = vpop.f32.mrb[0].mxu0
  %v2277 = vpop.f32.mrb[0].mxu0
  %v2278 = vadd.f32 0.0, %v2277
  %v2279 = vpop.f32.mrb[0].mxu0
  %2280 = vmatprep.mubr.bf16.mxu0 0
  %2281 = vmatmul.mubr.bf16.gmra.mrb[0].mxu0 %v1565
  %v2282 = vpop.f32.mrb[0].mxu0
  %v2283 = vadd.f32 0.0, %v2282
  %v2284 = vpop.f32.mrb[0].mxu0
  %v2285 = vpop.f32.mrb[0].mxu0
  %v2286 = vadd.f32 0.0, %v2285
  %v2287 = vpop.f32.mrb[0].mxu0
  %2288 = vmatprep.mubr.bf16.mxu0 0
  %2289 = vmatmul.mubr.bf16.gmra.mrb[0].mxu0 %v1568
  %v2290 = vpop.f32.mrb[0].mxu0
  %v2291 = vadd.f32 0.0, %v2290
  %v2292 = vpop.f32.mrb[0].mxu0
  %v2293 = vpop.f32.mrb[0].mxu0
  %v2294 = vadd.f32 0.0, %v2293
  %v2295 = vpop.f32.mrb[0].mxu0
  %2296 = vmatprep.mubr.bf16.mxu0 0
  %2297 = vmatmul.mubr.bf16.gmra.mrb[0].mxu0 %v1571
  %v2298 = vpop.f32.mrb[0].mxu0
  %v2299 = vadd.f32 0.0, %v2298
  %v2300 = vpop.f32.mrb[0].mxu0
  %v2301 = vpop.f32.mrb[0].mxu0
  %v2302 = vadd.f32 0.0, %v2301
  %v2303 = vpop.f32.mrb[0].mxu0
  %2304 = vmatprep.mubr.bf16.mxu0 0
  %2305 = vmatmul.mubr.bf16.gmra.mrb[0].mxu0 %v1574
  %v2306 = vpop.f32.mrb[0].mxu0
  %v2307 = vpop.f32.mrb[0].mxu0
  %v2308 = vpop.f32.mrb[0].mxu0
  %v2309 = vpop.f32.mrb[0].mxu0
  %2310 = vmatprep.mubr.bf16.mxu0 0
  %2311 = vmatmul.mubr.bf16.gmra.mrb[0].mxu0 %v1577
  %v2312 = vpop.f32.mrb[0].mxu0
  %v2313 = vpop.f32.mrb[0].mxu0
  %v2314 = vpop.f32.mrb[0].mxu0
  %v2315 = vpop.f32.mrb[0].mxu0
  %2316 = vmatprep.mubr.bf16.mxu0 0
  %2317 = vmatmul.mubr.bf16.gmra.mrb[0].mxu0 %v1580
  %v2318 = vpop.f32.mrb[0].mxu0
  %v2319 = vpop.f32.mrb[0].mxu0
  %v2320 = vpop.f32.mrb[0].mxu0
  %v2321 = vpop.f32.mrb[0].mxu0
  %2322 = vmatprep.mubr.bf16.mxu0 0
  %2323 = vmatmul.mubr.bf16.gmra.mrb[0].mxu0 %v1583
  %v2324 = vpop.f32.mrb[0].mxu0
  %v2325 = vadd.f32 0.0, %v2324
  %v2326 = vpop.f32.mrb[0].mxu0
  %v2327 = vpop.f32.mrb[0].mxu0
  %v2328 = vadd.f32 0.0, %v2327
  %v2329 = vpop.f32.mrb[0].mxu0
  %2330 = vmatprep.mubr.bf16.mxu0 0
  %2331 = vmatmul.mubr.bf16.gmra.mrb[0].mxu0 %v1586
  %v2332 = vpop.f32.mrb[0].mxu0
  %v2333 = vadd.f32 0.0, %v2332
  %v2334 = vpop.f32.mrb[0].mxu0
  %v2335 = vpop.f32.mrb[0].mxu0
  %v2336 = vadd.f32 0.0, %v2335
  %v2337 = vpop.f32.mrb[0].mxu0
  %2338 = vmatprep.mubr.bf16.mxu0 0
  %2339 = vmatmul.mubr.bf16.gmra.mrb[0].mxu0 %v1589
  %v2340 = vpop.f32.mrb[0].mxu0
  %v2341 = vadd.f32 0.0, %v2340
  %v2342 = vpop.f32.mrb[0].mxu0
  %v2343 = vpop.f32.mrb[0].mxu0
  %v2344 = vadd.f32 0.0, %v2343
  %v2345 = vpop.f32.mrb[0].mxu0
  %2346 = vmatprep.mubr.bf16.mxu0 0
  %2347 = vmatmul.mubr.bf16.gmra.mrb[0].mxu0 %v1592
  %v2348 = vpop.f32.mrb[0].mxu0
  %v2349 = vadd.f32 0.0, %v2348
  %v2350 = vpop.f32.mrb[0].mxu0
  %v2351 = vpop.f32.mrb[0].mxu0
  %v2352 = vadd.f32 0.0, %v2351
  %v2353 = vpop.f32.mrb[0].mxu0
  %2354 = vmatprep.mubr.bf16.mxu0 0
  %2355 = vmatmul.mubr.bf16.gmra.mrb[0].mxu0 %v1595
  %v2356 = vpop.f32.mrb[0].mxu0
  %v2357 = vadd.f32 0.0, %v2356
  %v2358 = vpop.f32.mrb[0].mxu0
  %v2359 = vpop.f32.mrb[0].mxu0
  %v2360 = vadd.f32 0.0, %v2359
  %v2361 = vpop.f32.mrb[0].mxu0
  %2362 = vmatprep.mubr.bf16.mxu0 0
  %2363 = vmatmul.mubr.bf16.gmra.mrb[0].mxu0 %v1598
  %v2364 = vpop.f32.mrb[0].mxu0
  %v2365 = vadd.f32 0.0, %v2364
  %v2366 = vpop.f32.mrb[0].mxu0
  %v2367 = vpop.f32.mrb[0].mxu0
  %v2368 = vadd.f32 0.0, %v2367
  %v2369 = vpop.f32.mrb[0].mxu0
  %2370 = vmatprep.mubr.bf16.mxu0 0
  %2371 = vmatmul.mubr.bf16.gmra.mrb[0].mxu0 %v1601
  %v2372 = vpop.f32.mrb[0].mxu0
  %v2373 = vadd.f32 0.0, %v2372
  %v2374 = vpop.f32.mrb[0].mxu0
  %v2375 = vpop.f32.mrb[0].mxu0
  %v2376 = vadd.f32 0.0, %v2375
  %v2377 = vpop.f32.mrb[0].mxu0
  %2378 = vmatprep.mubr.bf16.mxu0 0
  %2379 = vmatmul.mubr.bf16.gmra.mrb[0].mxu0 %v1604
  %v2380 = vpop.f32.mrb[0].mxu0
  %v2381 = vadd.f32 0.0, %v2380
  %v2382 = vpop.f32.mrb[0].mxu0
  %v2383 = vpop.f32.mrb[0].mxu0
  %v2384 = vadd.f32 0.0, %v2383
  %v2385 = vpop.f32.mrb[0].mxu0
  %2386 = vmatprep.mubr.bf16.mxu0 0
  %2387 = vmatmul.mubr.bf16.gmra.mrb[0].mxu0 %v1607
  %v2388 = vpop.f32.mrb[0].mxu0
  %v2389 = vadd.f32 0.0, %v2388
  %v2390 = vpop.f32.mrb[0].mxu0
  %v2391 = vpop.f32.mrb[0].mxu0
  %v2392 = vadd.f32 0.0, %v2391
  %v2393 = vpop.f32.mrb[0].mxu0
  %2394 = vmatprep.mubr.bf16.mxu0 0
  %2395 = vmatmul.mubr.bf16.gmra.mrb[0].mxu0 %v1610
  %v2396 = vpop.f32.mrb[0].mxu0
  %v2397 = vpop.f32.mrb[0].mxu0
  %v2398 = vpop.f32.mrb[0].mxu0
  %v2399 = vpop.f32.mrb[0].mxu0
  %2400 = vmatprep.mubr.bf16.mxu0 0
  %2401 = vmatmul.mubr.bf16.gmra.mrb[0].mxu0 %v1613
  %v2402 = vpop.f32.mrb[0].mxu0
  %v2403 = vpop.f32.mrb[0].mxu0
  %v2404 = vpop.f32.mrb[0].mxu0
  %v2405 = vpop.f32.mrb[0].mxu0
  %2406 = vmatprep.mubr.bf16.mxu0 0
  %2407 = vmatmul.mubr.bf16.gmra.mrb[0].mxu0 %v1616
  %v2408 = vpop.f32.mrb[0].mxu0
  %v2409 = vpop.f32.mrb[0].mxu0
  %v2410 = vpop.f32.mrb[0].mxu0
  %v2411 = vpop.f32.mrb[0].mxu0
  %2412 = vmatprep.mubr.bf16.mxu0 0
  %2413 = vmatmul.mubr.bf16.gmra.mrb[0].mxu0 %v1619
  %v2414 = vpop.f32.mrb[0].mxu0
  %v2415 = vadd.f32 0.0, %v2414
  %v2416 = vpop.f32.mrb[0].mxu0
  %v2417 = vpop.f32.mrb[0].mxu0
  %v2418 = vadd.f32 0.0, %v2417
  %v2419 = vpop.f32.mrb[0].mxu0
  %2420 = vmatprep.mubr.bf16.mxu0 0
  %2421 = vmatmul.mubr.bf16.gmra.mrb[0].mxu0 %v1622
  %v2422 = vpop.f32.mrb[0].mxu0
  %v2423 = vadd.f32 0.0, %v2422
  %v2424 = vpop.f32.mrb[0].mxu0
  %v2425 = vpop.f32.mrb[0].mxu0
  %v2426 = vadd.f32 0.0, %v2425
  %v2427 = vpop.f32.mrb[0].mxu0
  %2428 = vmatprep.mubr.bf16.mxu0 0
  %2429 = vmatmul.mubr.bf16.gmra.mrb[0].mxu0 %v1625
  %v2430 = vpop.f32.mrb[0].mxu0
  %v2431 = vadd.f32 0.0, %v2430
  %v2432 = vpop.f32.mrb[0].mxu0
  %v2433 = vpop.f32.mrb[0].mxu0
  %v2434 = vadd.f32 0.0, %v2433
  %v2435 = vpop.f32.mrb[0].mxu0
  %2436 = vmatprep.mubr.bf16.mxu0 0
  %2437 = vmatmul.mubr.bf16.gmra.mrb[0].mxu0 %v1628
  %v2438 = vpop.f32.mrb[0].mxu0
  %v2439 = vadd.f32 0.0, %v2438
  %v2440 = vpop.f32.mrb[0].mxu0
  %v2441 = vpop.f32.mrb[0].mxu0
  %v2442 = vadd.f32 0.0, %v2441
  %v2443 = vpop.f32.mrb[0].mxu0
  %2444 = vmatprep.mubr.bf16.mxu0 0
  %2445 = vmatmul.mubr.bf16.gmra.mrb[0].mxu0 %v1631
  %v2446 = vpop.f32.mrb[0].mxu0
  %v2447 = vadd.f32 0.0, %v2446
  %v2448 = vpop.f32.mrb[0].mxu0
  %v2449 = vpop.f32.mrb[0].mxu0
  %v2450 = vadd.f32 0.0, %v2449
  %v2451 = vpop.f32.mrb[0].mxu0
  %2452 = vmatprep.mubr.bf16.mxu0 0
  %2453 = vmatmul.mubr.bf16.gmra.mrb[0].mxu0 %v1634
  %v2454 = vpop.f32.mrb[0].mxu0
  %v2455 = vadd.f32 0.0, %v2454
  %v2456 = vpop.f32.mrb[0].mxu0
  %v2457 = vpop.f32.mrb[0].mxu0
  %v2458 = vadd.f32 0.0, %v2457
  %v2459 = vpop.f32.mrb[0].mxu0
  %2460 = vmatprep.mubr.bf16.mxu0 0
  %2461 = vmatmul.mubr.bf16.gmra.mrb[0].mxu0 %v1637
  %v2462 = vpop.f32.mrb[0].mxu0
  %v2463 = vadd.f32 0.0, %v2462
  %v2464 = vpop.f32.mrb[0].mxu0
  %v2465 = vpop.f32.mrb[0].mxu0
  %v2466 = vadd.f32 0.0, %v2465
  %v2467 = vpop.f32.mrb[0].mxu0
  %2468 = vmatprep.mubr.bf16.mxu0 0
  %2469 = vmatmul.mubr.bf16.gmra.mrb[0].mxu0 %v1640
  %v2470 = vpop.f32.mrb[0].mxu0
  %v2471 = vadd.f32 0.0, %v2470
  %v2472 = vpop.f32.mrb[0].mxu0
  %v2473 = vpop.f32.mrb[0].mxu0
  %v2474 = vadd.f32 0.0, %v2473
  %v2475 = vpop.f32.mrb[0].mxu0
  %2476 = vmatprep.mubr.bf16.mxu0 0
  %2477 = vmatmul.mubr.bf16.gmra.mrb[0].mxu0 %v1643
  %v2478 = vpop.f32.mrb[0].mxu0
  %v2479 = vadd.f32 0.0, %v2478
  %v2480 = vpop.f32.mrb[0].mxu0
  %v2481 = vpop.f32.mrb[0].mxu0
  %v2482 = vadd.f32 0.0, %v2481
  %v2483 = vpop.f32.mrb[0].mxu0
  %2484 = vmatprep.mubr.bf16.mxu0 0
  %2485 = vmatmul.mubr.bf16.gmra.mrb[0].mxu0 %v1646
  %v2486 = vpop.f32.mrb[0].mxu0
  %v2487 = vpop.f32.mrb[0].mxu0
  %v2488 = vpop.f32.mrb[0].mxu0
  %v2489 = vpop.f32.mrb[0].mxu0
  %2490 = vmatprep.mubr.bf16.mxu0 0
  %2491 = vmatmul.mubr.bf16.gmra.mrb[0].mxu0 %v1649
  %v2492 = vpop.f32.mrb[0].mxu0
  %v2493 = vpop.f32.mrb[0].mxu0
  %v2494 = vpop.f32.mrb[0].mxu0
  %v2495 = vpop.f32.mrb[0].mxu0
  %2496 = vmatprep.mubr.bf16.mxu0 0
  %2497 = vmatmul.mubr.bf16.gmra.mrb[0].mxu0 %v1652
  %v2498 = vpop.f32.mrb[0].mxu0
  %v2499 = vpop.f32.mrb[0].mxu0
  %v2500 = vpop.f32.mrb[0].mxu0
  %v2501 = vpop.f32.mrb[0].mxu0
  %2502 = vmatprep.mubr.bf16.mxu0 0
  %2503 = vmatmul.mubr.bf16.gmra.mrb[0].mxu0 %v1655
  %v2504 = vpop.f32.mrb[0].mxu0
  %v2505 = vadd.f32 0.0, %v2504
  %v2506 = vpop.f32.mrb[0].mxu0
  %v2507 = vpop.f32.mrb[0].mxu0
  %v2508 = vadd.f32 0.0, %v2507
  %v2509 = vpop.f32.mrb[0].mxu0
  %2510 = vmatprep.mubr.bf16.mxu0 0
  %2511 = vmatmul.mubr.bf16.gmra.mrb[0].mxu0 %v1658
  %v2512 = vpop.f32.mrb[0].mxu0
  %v2513 = vadd.f32 0.0, %v2512
  %v2514 = vpop.f32.mrb[0].mxu0
  %v2515 = vpop.f32.mrb[0].mxu0
  %v2516 = vadd.f32 0.0, %v2515
  %v2517 = vpop.f32.mrb[0].mxu0
  %2518 = vmatprep.mubr.bf16.mxu0 0
  %2519 = vmatmul.mubr.bf16.gmra.mrb[0].mxu0 %v1661
  %v2520 = vpop.f32.mrb[0].mxu0
  %v2521 = vadd.f32 0.0, %v2520
  %v2522 = vpop.f32.mrb[0].mxu0
  %v2523 = vpop.f32.mrb[0].mxu0
  %v2524 = vadd.f32 0.0, %v2523
  %v2525 = vpop.f32.mrb[0].mxu0
  %2526 = vmatprep.mubr.bf16.mxu0 0
  %2527 = vmatmul.mubr.bf16.gmra.mrb[0].mxu0 %v1664
  %v2528 = vpop.f32.mrb[0].mxu0
  %v2529 = vadd.f32 0.0, %v2528
  %v2530 = vpop.f32.mrb[0].mxu0
  %v2531 = vpop.f32.mrb[0].mxu0
  %v2532 = vadd.f32 0.0, %v2531
  %v2533 = vpop.f32.mrb[0].mxu0
  %2534 = vmatprep.mubr.bf16.mxu0 0
  %2535 = vmatmul.mubr.bf16.gmra.mrb[0].mxu0 %v1667
  %v2536 = vpop.f32.mrb[0].mxu0
  %v2537 = vadd.f32 0.0, %v2536
  %v2538 = vpop.f32.mrb[0].mxu0
  %v2539 = vpop.f32.mrb[0].mxu0
  %v2540 = vadd.f32 0.0, %v2539
  %v2541 = vpop.f32.mrb[0].mxu0
  %2542 = vmatprep.mubr.bf16.mxu0 0
  %2543 = vmatmul.mubr.bf16.gmra.mrb[0].mxu0 %v1670
  %v2544 = vpop.f32.mrb[0].mxu0
  %v2545 = vadd.f32 0.0, %v2544
  %v2546 = vpop.f32.mrb[0].mxu0
  %v2547 = vpop.f32.mrb[0].mxu0
  %v2548 = vadd.f32 0.0, %v2547
  %v2549 = vpop.f32.mrb[0].mxu0
  %2550 = vmatprep.mubr.bf16.mxu0 0
  %2551 = vmatmul.mubr.bf16.gmra.mrb[0].mxu0 %v1673
  %v2552 = vpop.f32.mrb[0].mxu0
  %v2553 = vadd.f32 0.0, %v2552
  %v2554 = vpop.f32.mrb[0].mxu0
  %v2555 = vpop.f32.mrb[0].mxu0
  %v2556 = vadd.f32 0.0, %v2555
  %v2557 = vpop.f32.mrb[0].mxu0
  %2558 = vmatprep.mubr.bf16.mxu0 0
  %2559 = vmatmul.mubr.bf16.gmra.mrb[0].mxu0 %v1676
  %v2560 = vpop.f32.mrb[0].mxu0
  %v2561 = vadd.f32 0.0, %v2560
  %v2562 = vpop.f32.mrb[0].mxu0
  %v2563 = vpop.f32.mrb[0].mxu0
  %v2564 = vadd.f32 0.0, %v2563
  %v2565 = vpop.f32.mrb[0].mxu0
  %2566 = vmatprep.mubr.bf16.mxu0 0
  %2567 = vmatmul.mubr.bf16.gmra.mrb[0].mxu0 %v1679
  %v2568 = vpop.f32.mrb[0].mxu0
  %v2569 = vadd.f32 0.0, %v2568
  %v2570 = vpop.f32.mrb[0].mxu0
  %v2571 = vpop.f32.mrb[0].mxu0
  %v2572 = vadd.f32 0.0, %v2571
  %v2573 = vpop.f32.mrb[0].mxu0
  %2574 = vmatprep.mubr.bf16.mxu0 0
  %2575 = vmatmul.mubr.bf16.gmra.mrb[0].mxu0 %v1682
  %v2576 = vpop.f32.mrb[0].mxu0
  %v2577 = vpop.f32.mrb[0].mxu0
  %v2578 = vpop.f32.mrb[0].mxu0
  %v2579 = vpop.f32.mrb[0].mxu0
  %2580 = vmatprep.mubr.bf16.mxu0 0
  %2581 = vmatmul.mubr.bf16.gmra.mrb[0].mxu0 %v1685
  %v2582 = vpop.f32.mrb[0].mxu0
  %v2583 = vpop.f32.mrb[0].mxu0
  %v2584 = vpop.f32.mrb[0].mxu0
  %v2585 = vpop.f32.mrb[0].mxu0
  %2586 = vmatprep.mubr.bf16.mxu0 0
  %2587 = vmatmul.mubr.bf16.gmra.mrb[0].mxu0 %v1688
  %v2588 = vpop.f32.mrb[0].mxu0
  %v2589 = vpop.f32.mrb[0].mxu0
  %v2590 = vpop.f32.mrb[0].mxu0
  %v2591 = vpop.f32.mrb[0].mxu0
  %2592 = vmatprep.mubr.bf16.mxu0 0
  %2593 = vmatmul.mubr.bf16.gmra.mrb[0].mxu0 %v1691
  %v2594 = vpop.f32.mrb[0].mxu0
  %v2595 = vadd.f32 0.0, %v2594
  %v2596 = vpop.f32.mrb[0].mxu0
  %v2597 = vpop.f32.mrb[0].mxu0
  %v2598 = vadd.f32 0.0, %v2597
  %v2599 = vpop.f32.mrb[0].mxu0
  %2600 = vmatprep.mubr.bf16.mxu0 0
  %2601 = vmatmul.mubr.bf16.gmra.mrb[0].mxu0 %v1694
  %v2602 = vpop.f32.mrb[0].mxu0
  %v2603 = vadd.f32 0.0, %v2602
  %v2604 = vpop.f32.mrb[0].mxu0
  %v2605 = vpop.f32.mrb[0].mxu0
  %v2606 = vadd.f32 0.0, %v2605
  %v2607 = vpop.f32.mrb[0].mxu0
  %2608 = vmatprep.mubr.bf16.mxu0 0
  %2609 = vmatmul.mubr.bf16.gmra.mrb[0].mxu0 %v1697
  %v2610 = vpop.f32.mrb[0].mxu0
  %v2611 = vadd.f32 0.0, %v2610
  %v2612 = vpop.f32.mrb[0].mxu0
  %v2613 = vpop.f32.mrb[0].mxu0
  %v2614 = vadd.f32 0.0, %v2613
  %v2615 = vpop.f32.mrb[0].mxu0
  %2616 = vmatprep.mubr.bf16.mxu0 0
  %2617 = vmatmul.mubr.bf16.gmra.mrb[0].mxu0 %v1700
  %v2618 = vpop.f32.mrb[0].mxu0
  %v2619 = vadd.f32 0.0, %v2618
  %v2620 = vpop.f32.mrb[0].mxu0
  %v2621 = vpop.f32.mrb[0].mxu0
  %v2622 = vadd.f32 0.0, %v2621
  %v2623 = vpop.f32.mrb[0].mxu0
  %2624 = vmatprep.mubr.bf16.mxu0 0
  %2625 = vmatmul.mubr.bf16.gmra.mrb[0].mxu0 %v1703
  %v2626 = vpop.f32.mrb[0].mxu0
  %v2627 = vadd.f32 0.0, %v2626
  %v2628 = vpop.f32.mrb[0].mxu0
  %v2629 = vpop.f32.mrb[0].mxu0
  %v2630 = vadd.f32 0.0, %v2629
  %v2631 = vpop.f32.mrb[0].mxu0
  %2632 = vmatprep.mubr.bf16.mxu0 0
  %2633 = vmatmul.mubr.bf16.gmra.mrb[0].mxu0 %v1706
  %v2634 = vpop.f32.mrb[0].mxu0
  %v2635 = vadd.f32 0.0, %v2634
  %v2636 = vpop.f32.mrb[0].mxu0
  %v2637 = vpop.f32.mrb[0].mxu0
  %v2638 = vadd.f32 0.0, %v2637
  %v2639 = vpop.f32.mrb[0].mxu0
  %2640 = vmatprep.mubr.bf16.mxu0 0
  %2641 = vmatmul.mubr.bf16.gmra.mrb[0].mxu0 %v1709
  %v2642 = vpop.f32.mrb[0].mxu0
  %v2643 = vadd.f32 0.0, %v2642
  %v2644 = vpop.f32.mrb[0].mxu0
  %v2645 = vpop.f32.mrb[0].mxu0
  %v2646 = vadd.f32 0.0, %v2645
  %v2647 = vpop.f32.mrb[0].mxu0
  %2648 = vmatprep.mubr.bf16.mxu0 0
  %2649 = vmatmul.mubr.bf16.gmra.mrb[0].mxu0 %v1712
  %v2650 = vpop.f32.mrb[0].mxu0
  %v2651 = vadd.f32 0.0, %v2650
  %v2652 = vpop.f32.mrb[0].mxu0
  %v2653 = vpop.f32.mrb[0].mxu0
  %v2654 = vadd.f32 0.0, %v2653
  %v2655 = vpop.f32.mrb[0].mxu0
  %2656 = vmatprep.mubr.bf16.mxu0 0
  %2657 = vmatmul.mubr.bf16.gmra.mrb[0].mxu0 %v1715
  %v2658 = vpop.f32.mrb[0].mxu0
  %v2659 = vadd.f32 0.0, %v2658
  %v2660 = vpop.f32.mrb[0].mxu0
  %v2661 = vpop.f32.mrb[0].mxu0
  %v2662 = vadd.f32 0.0, %v2661
  %v2663 = vpop.f32.mrb[0].mxu0
  %2664 = vmatprep.mubr.bf16.mxu0 0
  %2665 = vmatmul.mubr.bf16.gmra.mrb[0].mxu0 %v1718
  %v2666 = vpop.f32.mrb[0].mxu0
  %v2667 = vpop.f32.mrb[0].mxu0
  %v2668 = vpop.f32.mrb[0].mxu0
  %v2669 = vpop.f32.mrb[0].mxu0
  %2670 = vmatprep.mubr.bf16.mxu0 0
  %2671 = vmatmul.mubr.bf16.gmra.mrb[0].mxu0 %v1721
  %v2672 = vpop.f32.mrb[0].mxu0
  %v2673 = vpop.f32.mrb[0].mxu0
  %v2674 = vpop.f32.mrb[0].mxu0
  %v2675 = vpop.f32.mrb[0].mxu0
  %2676 = vmatprep.mubr.bf16.mxu0 0
  %2677 = vmatmul.mubr.bf16.gmra.mrb[0].mxu0 %v1724
  %v2678 = vpop.f32.mrb[0].mxu0
  %v2679 = vpop.f32.mrb[0].mxu0
  %v2680 = vpop.f32.mrb[0].mxu0
  %v2681 = vpop.f32.mrb[0].mxu0
  %2682 = vmatprep.mubr.bf16.mxu0 0
  %2683 = vmatmul.mubr.bf16.gmra.mrb[0].mxu0 %v1727
  %v2684 = vpop.f32.mrb[0].mxu0
  %v2685 = vadd.f32 0.0, %v2684
  %v2686 = vpop.f32.mrb[0].mxu0
  %v2687 = vpop.f32.mrb[0].mxu0
  %v2688 = vadd.f32 0.0, %v2687
  %v2689 = vpop.f32.mrb[0].mxu0
  %2690 = vmatprep.mubr.bf16.mxu0 0
  %2691 = vmatmul.mubr.bf16.gmra.mrb[0].mxu0 %v1730
  %v2692 = vpop.f32.mrb[0].mxu0
  %v2693 = vadd.f32 0.0, %v2692
  %v2694 = vpop.f32.mrb[0].mxu0
  %v2695 = vpop.f32.mrb[0].mxu0
  %v2696 = vadd.f32 0.0, %v2695
  %v2697 = vpop.f32.mrb[0].mxu0
  %2698 = vmatprep.mubr.bf16.mxu0 0
  %2699 = vmatmul.mubr.bf16.gmra.mrb[0].mxu0 %v1733
  %v2700 = vpop.f32.mrb[0].mxu0
  %v2701 = vadd.f32 0.0, %v2700
  %v2702 = vpop.f32.mrb[0].mxu0
  %v2703 = vpop.f32.mrb[0].mxu0
  %v2704 = vadd.f32 0.0, %v2703
  %v2705 = vpop.f32.mrb[0].mxu0
  %2706 = vmatprep.mubr.bf16.mxu0 0
  %2707 = vmatmul.mubr.bf16.gmra.mrb[0].mxu0 %v1736
  %v2708 = vpop.f32.mrb[0].mxu0
  %v2709 = vadd.f32 0.0, %v2708
  %v2710 = vpop.f32.mrb[0].mxu0
  %v2711 = vpop.f32.mrb[0].mxu0
  %v2712 = vadd.f32 0.0, %v2711
  %v2713 = vpop.f32.mrb[0].mxu0
  %2714 = vmatprep.mubr.bf16.mxu0 0
  %2715 = vmatmul.mubr.bf16.gmra.mrb[0].mxu0 %v1739
  %v2716 = vpop.f32.mrb[0].mxu0
  %v2717 = vadd.f32 0.0, %v2716
  %v2718 = vpop.f32.mrb[0].mxu0
  %v2719 = vpop.f32.mrb[0].mxu0
  %v2720 = vadd.f32 0.0, %v2719
  %v2721 = vpop.f32.mrb[0].mxu0
  %2722 = vmatprep.mubr.bf16.mxu0 0
  %2723 = vmatmul.mubr.bf16.gmra.mrb[0].mxu0 %v1742
  %v2724 = vpop.f32.mrb[0].mxu0
  %v2725 = vadd.f32 0.0, %v2724
  %v2726 = vpop.f32.mrb[0].mxu0
  %v2727 = vpop.f32.mrb[0].mxu0
  %v2728 = vadd.f32 0.0, %v2727
  %v2729 = vpop.f32.mrb[0].mxu0
  %2730 = vmatprep.mubr.bf16.mxu0 0
  %2731 = vmatmul.mubr.bf16.gmra.mrb[0].mxu0 %v1745
  %v2732 = vpop.f32.mrb[0].mxu0
  %v2733 = vadd.f32 0.0, %v2732
  %v2734 = vpop.f32.mrb[0].mxu0
  %v2735 = vpop.f32.mrb[0].mxu0
  %v2736 = vadd.f32 0.0, %v2735
  %v2737 = vpop.f32.mrb[0].mxu0
  %2738 = vmatprep.mubr.bf16.mxu0 0
  %2739 = vmatmul.mubr.bf16.gmra.mrb[0].mxu0 %v1748
  %v2740 = vpop.f32.mrb[0].mxu0
  %v2741 = vadd.f32 0.0, %v2740
  %v2742 = vpop.f32.mrb[0].mxu0
  %v2743 = vpop.f32.mrb[0].mxu0
  %v2744 = vadd.f32 0.0, %v2743
  %v2745 = vpop.f32.mrb[0].mxu0
  %2746 = vmatprep.mubr.bf16.mxu0 0
  %2747 = vmatmul.mubr.bf16.gmra.mrb[0].mxu0 %v1751
  %v2748 = vpop.f32.mrb[0].mxu0
  %v2749 = vadd.f32 0.0, %v2748
  %v2750 = vpop.f32.mrb[0].mxu0
  %v2751 = vpop.f32.mrb[0].mxu0
  %v2752 = vadd.f32 0.0, %v2751
  %v2753 = vpop.f32.mrb[0].mxu0
  %2754 = vmatprep.mubr.bf16.mxu0 0
  %2755 = vmatmul.mubr.bf16.gmra.mrb[0].mxu0 %v1754
  %v2756 = vpop.f32.mrb[0].mxu0
  %v2757 = vpop.f32.mrb[0].mxu0
  %v2758 = vpop.f32.mrb[0].mxu0
  %v2759 = vpop.f32.mrb[0].mxu0
  %2760 = vmatprep.mubr.bf16.mxu0 0
  %2761 = vmatmul.mubr.bf16.gmra.mrb[0].mxu0 %v1757
  %v2762 = vpop.f32.mrb[0].mxu0
  %v2763 = vpop.f32.mrb[0].mxu0
  %v2764 = vpop.f32.mrb[0].mxu0
  %v2765 = vpop.f32.mrb[0].mxu0
  %2766 = vmatprep.mubr.bf16.mxu0 0
  %2767 = vmatmul.mubr.bf16.gmra.mrb[0].mxu0 %v1760
  %v2768 = vpop.f32.mrb[0].mxu0
  %v2769 = vpop.f32.mrb[0].mxu0
  %v2770 = vpop.f32.mrb[0].mxu0
  %v2771 = vpop.f32.mrb[0].mxu0
  %2772 = vmatprep.mubr.bf16.mxu0 0
  %2773 = vmatmul.mubr.bf16.gmra.mrb[0].mxu0 %v1763
  %v2774 = vpop.f32.mrb[0].mxu0
  %v2775 = vadd.f32 0.0, %v2774
  %v2776 = vpop.f32.mrb[0].mxu0
  %v2777 = vpop.f32.mrb[0].mxu0
  %v2778 = vadd.f32 0.0, %v2777
  %v2779 = vpop.f32.mrb[0].mxu0
  %2780 = vmatprep.mubr.bf16.mxu0 0
  %2781 = vmatmul.mubr.bf16.gmra.mrb[0].mxu0 %v1766
  %v2782 = vpop.f32.mrb[0].mxu0
  %v2783 = vadd.f32 0.0, %v2782
  %v2784 = vpop.f32.mrb[0].mxu0
  %v2785 = vpop.f32.mrb[0].mxu0
  %v2786 = vadd.f32 0.0, %v2785
  %v2787 = vpop.f32.mrb[0].mxu0
  %2788 = vmatprep.mubr.bf16.mxu0 0
  %2789 = vmatmul.mubr.bf16.gmra.mrb[0].mxu0 %v1769
  %v2790 = vpop.f32.mrb[0].mxu0
  %v2791 = vadd.f32 0.0, %v2790
  %v2792 = vpop.f32.mrb[0].mxu0
  %v2793 = vpop.f32.mrb[0].mxu0
  %v2794 = vadd.f32 0.0, %v2793
  %v2795 = vpop.f32.mrb[0].mxu0
  %2796 = vmatprep.mubr.bf16.mxu0 0
  %2797 = vmatmul.mubr.bf16.gmra.mrb[0].mxu0 %v1772
  %v2798 = vpop.f32.mrb[0].mxu0
  %v2799 = vadd.f32 0.0, %v2798
  %v2800 = vpop.f32.mrb[0].mxu0
  %v2801 = vpop.f32.mrb[0].mxu0
  %v2802 = vadd.f32 0.0, %v2801
  %v2803 = vpop.f32.mrb[0].mxu0
  %2804 = vmatprep.mubr.bf16.mxu0 0
  %2805 = vmatmul.mubr.bf16.gmra.mrb[0].mxu0 %v1775
  %v2806 = vpop.f32.mrb[0].mxu0
  %v2807 = vadd.f32 0.0, %v2806
  %v2808 = vpop.f32.mrb[0].mxu0
  %v2809 = vpop.f32.mrb[0].mxu0
  %v2810 = vadd.f32 0.0, %v2809
  %v2811 = vpop.f32.mrb[0].mxu0
  %2812 = vmatprep.mubr.bf16.mxu0 0
  %2813 = vmatmul.mubr.bf16.gmra.mrb[0].mxu0 %v1778
  %v2814 = vpop.f32.mrb[0].mxu0
  %v2815 = vadd.f32 0.0, %v2814
  %v2816 = vpop.f32.mrb[0].mxu0
  %v2817 = vpop.f32.mrb[0].mxu0
  %v2818 = vadd.f32 0.0, %v2817
  %v2819 = vpop.f32.mrb[0].mxu0
  %2820 = vmatprep.mubr.bf16.mxu0 0
  %2821 = vmatmul.mubr.bf16.gmra.mrb[0].mxu0 %v1781
  %v2822 = vpop.f32.mrb[0].mxu0
  %v2823 = vadd.f32 0.0, %v2822
  %v2824 = vpop.f32.mrb[0].mxu0
  %v2825 = vpop.f32.mrb[0].mxu0
  %v2826 = vadd.f32 0.0, %v2825
  %v2827 = vpop.f32.mrb[0].mxu0
  %2828 = vmatprep.mubr.bf16.mxu0 0
  %2829 = vmatmul.mubr.bf16.gmra.mrb[0].mxu0 %v1784
  %v2830 = vpop.f32.mrb[0].mxu0
  %v2831 = vadd.f32 0.0, %v2830
  %v2832 = vpop.f32.mrb[0].mxu0
  %v2833 = vpop.f32.mrb[0].mxu0
  %v2834 = vadd.f32 0.0, %v2833
  %v2835 = vpop.f32.mrb[0].mxu0
  %2836 = vmatprep.mubr.bf16.mxu0 0
  %2837 = vmatmul.mubr.bf16.gmra.mrb[0].mxu0 %v1787
  %v2838 = vpop.f32.mrb[0].mxu0
  %v2839 = vadd.f32 0.0, %v2838
  %v2840 = vpop.f32.mrb[0].mxu0
  %v2841 = vpop.f32.mrb[0].mxu0
  %v2842 = vadd.f32 0.0, %v2841
  %v2843 = vpop.f32.mrb[0].mxu0
  %2844 = vmatprep.mubr.bf16.mxu0 0
  %2845 = vmatmul.mubr.bf16.gmra.mrb[0].mxu0 %v1790
  %v2846 = vpop.f32.mrb[0].mxu0
  %v2847 = vpop.f32.mrb[0].mxu0
  %v2848 = vpop.f32.mrb[0].mxu0
  %v2849 = vpop.f32.mrb[0].mxu0
  %2850 = vmatprep.mubr.bf16.mxu0 0
  %2851 = vmatmul.mubr.bf16.gmra.mrb[0].mxu0 %v1793
  %v2852 = vpop.f32.mrb[0].mxu0
  %v2853 = vpop.f32.mrb[0].mxu0
  %v2854 = vpop.f32.mrb[0].mxu0
  %v2855 = vpop.f32.mrb[0].mxu0
  %2856 = vmatprep.mubr.bf16.mxu0 0
  %2857 = vmatmul.mubr.bf16.gmra.mrb[0].mxu0 %v1796
  %v2858 = vpop.f32.mrb[0].mxu0
  %v2859 = vpop.f32.mrb[0].mxu0
  %v2860 = vpop.f32.mrb[0].mxu0
  %v2861 = vpop.f32.mrb[0].mxu0
  %2862 = vmatprep.mubr.bf16.mxu0 0
  %2863 = vmatmul.mubr.bf16.gmra.mrb[0].mxu0 %v1799
  %v2864 = vpop.f32.mrb[0].mxu0
  %v2865 = vadd.f32 0.0, %v2864
  %v2866 = vpop.f32.mrb[0].mxu0
  %v2867 = vpop.f32.mrb[0].mxu0
  %v2868 = vadd.f32 0.0, %v2867
  %v2869 = vpop.f32.mrb[0].mxu0
  %2870 = vmatprep.mubr.bf16.mxu0 0
  %2871 = vmatmul.mubr.bf16.gmra.mrb[0].mxu0 %v1802
  %v2872 = vpop.f32.mrb[0].mxu0
  %v2873 = vadd.f32 0.0, %v2872
  %v2874 = vpop.f32.mrb[0].mxu0
  %v2875 = vpop.f32.mrb[0].mxu0
  %v2876 = vadd.f32 0.0, %v2875
  %v2877 = vpop.f32.mrb[0].mxu0
  %2878 = vmatprep.mubr.bf16.mxu0 0
  %2879 = vmatmul.mubr.bf16.gmra.mrb[0].mxu0 %v1805
  %v2880 = vpop.f32.mrb[0].mxu0
  %v2881 = vadd.f32 0.0, %v2880
  %v2882 = vpop.f32.mrb[0].mxu0
  %v2883 = vpop.f32.mrb[0].mxu0
  %v2884 = vadd.f32 0.0, %v2883
  %v2885 = vpop.f32.mrb[0].mxu0
  %2886 = vmatprep.mubr.bf16.mxu0 0
  %2887 = vmatmul.mubr.bf16.gmra.mrb[0].mxu0 %v1808
  %v2888 = vpop.f32.mrb[0].mxu0
  %v2889 = vadd.f32 0.0, %v2888
  %v2890 = vpop.f32.mrb[0].mxu0
  %v2891 = vpop.f32.mrb[0].mxu0
  %v2892 = vadd.f32 0.0, %v2891
  %v2893 = vpop.f32.mrb[0].mxu0
  %2894 = vmatprep.mubr.bf16.mxu0 0
  %2895 = vmatmul.mubr.bf16.gmra.mrb[0].mxu0 %v1811
  %v2896 = vpop.f32.mrb[0].mxu0
  %v2897 = vadd.f32 0.0, %v2896
  %v2898 = vpop.f32.mrb[0].mxu0
  %v2899 = vpop.f32.mrb[0].mxu0
  %v2900 = vadd.f32 0.0, %v2899
  %v2901 = vpop.f32.mrb[0].mxu0
  %2902 = vmatprep.mubr.bf16.mxu0 0
  %2903 = vmatmul.mubr.bf16.gmra.mrb[0].mxu0 %v1814
  %v2904 = vpop.f32.mrb[0].mxu0
  %v2905 = vadd.f32 0.0, %v2904
  %v2906 = vpop.f32.mrb[0].mxu0
  %v2907 = vpop.f32.mrb[0].mxu0
  %v2908 = vadd.f32 0.0, %v2907
  %v2909 = vpop.f32.mrb[0].mxu0
  %2910 = vmatprep.mubr.bf16.mxu0 0
  %2911 = vmatmul.mubr.bf16.gmra.mrb[0].mxu0 %v1817
  %v2912 = vpop.f32.mrb[0].mxu0
  %v2913 = vadd.f32 0.0, %v2912
  %v2914 = vpop.f32.mrb[0].mxu0
  %v2915 = vpop.f32.mrb[0].mxu0
  %v2916 = vadd.f32 0.0, %v2915
  %v2917 = vpop.f32.mrb[0].mxu0
  %2918 = vmatprep.mubr.bf16.mxu0 0
  %2919 = vmatmul.mubr.bf16.gmra.mrb[0].mxu0 %v1820
  %v2920 = vpop.f32.mrb[0].mxu0
  %v2921 = vadd.f32 0.0, %v2920
  %v2922 = vpop.f32.mrb[0].mxu0
  %v2923 = vpop.f32.mrb[0].mxu0
  %v2924 = vadd.f32 0.0, %v2923
  %v2925 = vpop.f32.mrb[0].mxu0
  %2926 = vmatprep.mubr.bf16.mxu0 0
  %2927 = vmatmul.mubr.bf16.gmra.mrb[0].mxu0 %v1823
  %v2928 = vpop.f32.mrb[0].mxu0
  %v2929 = vadd.f32 0.0, %v2928
  %v2930 = vpop.f32.mrb[0].mxu0
  %v2931 = vpop.f32.mrb[0].mxu0
  %v2932 = vadd.f32 0.0, %v2931
  %v2933 = vpop.f32.mrb[0].mxu0
  %2934 = vmatprep.mubr.bf16.mxu0 0
  %2935 = vmatmul.mubr.bf16.gmra.mrb[0].mxu0 %v1826
  %v2936 = vpop.f32.mrb[0].mxu0
  %v2937 = vpop.f32.mrb[0].mxu0
  %v2938 = vpop.f32.mrb[0].mxu0
  %v2939 = vpop.f32.mrb[0].mxu0
  %2940 = vmatprep.mubr.bf16.mxu0 0
  %2941 = vmatmul.mubr.bf16.gmra.mrb[0].mxu0 %v1829
  %v2942 = vpop.f32.mrb[0].mxu0
  %v2943 = vpop.f32.mrb[0].mxu0
  %v2944 = vpop.f32.mrb[0].mxu0
  %v2945 = vpop.f32.mrb[0].mxu0
  %2946 = vmatprep.mubr.bf16.mxu0 0
  %2947 = vmatmul.mubr.bf16.gmra.mrb[0].mxu0 %v1832
  %v2948 = vpop.f32.mrb[0].mxu0
  %v2949 = vpop.f32.mrb[0].mxu0
  %v2950 = vpop.f32.mrb[0].mxu0
  %v2951 = vpop.f32.mrb[0].mxu0
  %2952 = vmatprep.mubr.bf16.mxu0 0
  %2953 = vmatmul.mubr.bf16.gmra.mrb[0].mxu0 %v1835
  %v2954 = vpop.f32.mrb[0].mxu0
  %v2955 = vadd.f32 0.0, %v2954
  %v2956 = vpop.f32.mrb[0].mxu0
  %v2957 = vpop.f32.mrb[0].mxu0
  %v2958 = vadd.f32 0.0, %v2957
  %v2959 = vpop.f32.mrb[0].mxu0
  %2960 = vmatprep.mubr.bf16.mxu0 0
  %2961 = vmatmul.mubr.bf16.gmra.mrb[0].mxu0 %v1838
  %v2962 = vpop.f32.mrb[0].mxu0
  %v2963 = vadd.f32 0.0, %v2962
  %v2964 = vpop.f32.mrb[0].mxu0
  %v2965 = vpop.f32.mrb[0].mxu0
  %v2966 = vadd.f32 0.0, %v2965
  %v2967 = vpop.f32.mrb[0].mxu0
  %2968 = vmatprep.mubr.bf16.mxu0 0
  %2969 = vmatmul.mubr.bf16.gmra.mrb[0].mxu0 %v1841
  %v2970 = vpop.f32.mrb[0].mxu0
  %v2971 = vadd.f32 0.0, %v2970
  %v2972 = vpop.f32.mrb[0].mxu0
  %v2973 = vpop.f32.mrb[0].mxu0
  %v2974 = vadd.f32 0.0, %v2973
  %v2975 = vpop.f32.mrb[0].mxu0
  %2976 = vmatprep.mubr.bf16.mxu0 0
  %2977 = vmatmul.mubr.bf16.gmra.mrb[0].mxu0 %v1844
  %v2978 = vpop.f32.mrb[0].mxu0
  %v2979 = vadd.f32 0.0, %v2978
  %v2980 = vpop.f32.mrb[0].mxu0
  %v2981 = vpop.f32.mrb[0].mxu0
  %v2982 = vadd.f32 0.0, %v2981
  %v2983 = vpop.f32.mrb[0].mxu0
  %2984 = vmatprep.mubr.bf16.mxu0 0
  %2985 = vmatmul.mubr.bf16.gmra.mrb[0].mxu0 %v1847
  %v2986 = vpop.f32.mrb[0].mxu0
  %v2987 = vadd.f32 0.0, %v2986
  %v2988 = vpop.f32.mrb[0].mxu0
  %v2989 = vpop.f32.mrb[0].mxu0
  %v2990 = vadd.f32 0.0, %v2989
  %v2991 = vpop.f32.mrb[0].mxu0
  %2992 = vmatprep.mubr.bf16.mxu0 0
  %2993 = vmatmul.mubr.bf16.gmra.mrb[0].mxu0 %v1850
  %v2994 = vpop.f32.mrb[0].mxu0
  %v2995 = vadd.f32 0.0, %v2994
  %v2996 = vpop.f32.mrb[0].mxu0
  %v2997 = vpop.f32.mrb[0].mxu0
  %v2998 = vadd.f32 0.0, %v2997
  %v2999 = vpop.f32.mrb[0].mxu0
  %3000 = vmatprep.mubr.bf16.mxu0 0
  %3001 = vmatmul.mubr.bf16.gmra.mrb[0].mxu0 %v1853
  %v3002 = vpop.f32.mrb[0].mxu0
  %v3003 = vadd.f32 0.0, %v3002
  %v3004 = vpop.f32.mrb[0].mxu0
  %v3005 = vpop.f32.mrb[0].mxu0
  %v3006 = vadd.f32 0.0, %v3005
  %v3007 = vpop.f32.mrb[0].mxu0
  %3008 = vmatprep.mubr.bf16.mxu0 0
  %3009 = vmatmul.mubr.bf16.gmra.mrb[0].mxu0 %v1856
  %v3010 = vpop.f32.mrb[0].mxu0
  %v3011 = vadd.f32 0.0, %v3010
  %v3012 = vpop.f32.mrb[0].mxu0
  %v3013 = vpop.f32.mrb[0].mxu0
  %v3014 = vadd.f32 0.0, %v3013
  %v3015 = vpop.f32.mrb[0].mxu0
  %3016 = vmatprep.mubr.bf16.mxu0 0
  %3017 = vmatmul.mubr.bf16.gmra.mrb[0].mxu0 %v1859
  %v3018 = vpop.f32.mrb[0].mxu0
  %v3019 = vadd.f32 0.0, %v3018
  %v3020 = vpop.f32.mrb[0].mxu0
  %v3021 = vpop.f32.mrb[0].mxu0
  %v3022 = vadd.f32 0.0, %v3021
  %v3023 = vpop.f32.mrb[0].mxu0
  %3024 = vmatprep.mubr.bf16.mxu0 0
  %3025 = vmatmul.mubr.bf16.gmra.mrb[0].mxu0 %v1862
  %v3026 = vpop.f32.mrb[0].mxu0
  %v3027 = vpop.f32.mrb[0].mxu0
  %v3028 = vpop.f32.mrb[0].mxu0
  %v3029 = vpop.f32.mrb[0].mxu0
  %3030 = vmatprep.mubr.bf16.mxu0 0
  %3031 = vmatmul.mubr.bf16.gmra.mrb[0].mxu0 %v1865
  %v3032 = vpop.f32.mrb[0].mxu0
  %v3033 = vpop.f32.mrb[0].mxu0
  %v3034 = vpop.f32.mrb[0].mxu0
  %v3035 = vpop.f32.mrb[0].mxu0
  %3036 = vmatprep.mubr.bf16.mxu0 0
  %3037 = vmatmul.mubr.bf16.gmra.mrb[0].mxu0 %v1868
  %v3038 = vpop.f32.mrb[0].mxu0
  %v3039 = vpop.f32.mrb[0].mxu0
  %v3040 = vpop.f32.mrb[0].mxu0
  %v3041 = vpop.f32.mrb[0].mxu0
  %3042 = vmatprep.mubr.bf16.mxu0 0
  %3043 = vmatmul.mubr.bf16.gmra.mrb[0].mxu0 %v1871
  %v3044 = vpop.f32.mrb[0].mxu0
  %v3045 = vadd.f32 0.0, %v3044
  %v3046 = vpop.f32.mrb[0].mxu0
  %v3047 = vpop.f32.mrb[0].mxu0
  %v3048 = vadd.f32 0.0, %v3047
  %v3049 = vpop.f32.mrb[0].mxu0
  %3050 = vmatprep.mubr.bf16.mxu0 0
  %3051 = vmatmul.mubr.bf16.gmra.mrb[0].mxu0 %v1874
  %v3052 = vpop.f32.mrb[0].mxu0
  %v3053 = vadd.f32 0.0, %v3052
  %v3054 = vpop.f32.mrb[0].mxu0
  %v3055 = vpop.f32.mrb[0].mxu0
  %v3056 = vadd.f32 0.0, %v3055
  %v3057 = vpop.f32.mrb[0].mxu0
  %3058 = vmatprep.mubr.bf16.mxu0 0
  %3059 = vmatmul.mubr.bf16.gmra.mrb[0].mxu0 %v1877
  %v3060 = vpop.f32.mrb[0].mxu0
  %v3061 = vadd.f32 0.0, %v3060
  %v3062 = vpop.f32.mrb[0].mxu0
  %v3063 = vpop.f32.mrb[0].mxu0
  %v3064 = vadd.f32 0.0, %v3063
  %v3065 = vpop.f32.mrb[0].mxu0
  %3066 = vmatprep.mubr.bf16.mxu0 0
  %3067 = vmatmul.mubr.bf16.gmra.mrb[0].mxu0 %v1880
  %v3068 = vpop.f32.mrb[0].mxu0
  %v3069 = vadd.f32 0.0, %v3068
  %v3070 = vpop.f32.mrb[0].mxu0
  %v3071 = vpop.f32.mrb[0].mxu0
  %v3072 = vadd.f32 0.0, %v3071
  %v3073 = vpop.f32.mrb[0].mxu0
  %3074 = vmatprep.mubr.bf16.mxu0 0
  %3075 = vmatmul.mubr.bf16.gmra.mrb[0].mxu0 %v1883
  %v3076 = vpop.f32.mrb[0].mxu0
  %v3077 = vadd.f32 0.0, %v3076
  %v3078 = vpop.f32.mrb[0].mxu0
  %v3079 = vpop.f32.mrb[0].mxu0
  %v3080 = vadd.f32 0.0, %v3079
  %v3081 = vpop.f32.mrb[0].mxu0
  %3082 = vmatprep.mubr.bf16.mxu0 0
  %3083 = vmatmul.mubr.bf16.gmra.mrb[0].mxu0 %v1886
  %v3084 = vpop.f32.mrb[0].mxu0
  %v3085 = vadd.f32 0.0, %v3084
  %v3086 = vpop.f32.mrb[0].mxu0
  %v3087 = vpop.f32.mrb[0].mxu0
  %v3088 = vadd.f32 0.0, %v3087
  %v3089 = vpop.f32.mrb[0].mxu0
  %3090 = vmatprep.mubr.bf16.mxu0 0
  %3091 = vmatmul.mubr.bf16.gmra.mrb[0].mxu0 %v1889
  %v3092 = vpop.f32.mrb[0].mxu0
  %v3093 = vadd.f32 0.0, %v3092
  %v3094 = vpop.f32.mrb[0].mxu0
  %v3095 = vpop.f32.mrb[0].mxu0
  %v3096 = vadd.f32 0.0, %v3095
  %v3097 = vpop.f32.mrb[0].mxu0
  %3098 = vmatprep.mubr.bf16.mxu0 0
  %3099 = vmatmul.mubr.bf16.gmra.mrb[0].mxu0 %v1892
  %v3100 = vpop.f32.mrb[0].mxu0
  %v3101 = vadd.f32 0.0, %v3100
  %v3102 = vpop.f32.mrb[0].mxu0
  %v3103 = vpop.f32.mrb[0].mxu0
  %v3104 = vadd.f32 0.0, %v3103
  %v3105 = vpop.f32.mrb[0].mxu0
  %3106 = vmatprep.mubr.bf16.mxu0 0
  %3107 = vmatmul.mubr.bf16.gmra.mrb[0].mxu0 %v1895
  %v3108 = vpop.f32.mrb[0].mxu0
  %v3109 = vadd.f32 0.0, %v3108
  %v3110 = vpop.f32.mrb[0].mxu0
  %v3111 = vpop.f32.mrb[0].mxu0
  %v3112 = vadd.f32 0.0, %v3111
  %v3113 = vpop.f32.mrb[0].mxu0
  %3114 = vmatprep.mubr.bf16.mxu0 0
  %3115 = vmatmul.mubr.bf16.gmra.mrb[0].mxu0 %v1898
  %v3116 = vpop.f32.mrb[0].mxu0
  %v3117 = vpop.f32.mrb[0].mxu0
  %v3118 = vpop.f32.mrb[0].mxu0
  %v3119 = vpop.f32.mrb[0].mxu0
  %3120 = vmatprep.mubr.bf16.mxu0 0
  %3121 = vmatmul.mubr.bf16.gmra.mrb[0].mxu0 %v1901
  %v3122 = vpop.f32.mrb[0].mxu0
  %v3123 = vpop.f32.mrb[0].mxu0
  %v3124 = vpop.f32.mrb[0].mxu0
  %v3125 = vpop.f32.mrb[0].mxu0
  %3126 = vmatprep.mubr.bf16.mxu0 0
  %3127 = vmatmul.mubr.bf16.gmra.mrb[0].mxu0 %v1904
  %v3128 = vpop.f32.mrb[0].mxu0
  %v3129 = vpop.f32.mrb[0].mxu0
  %v3130 = vpop.f32.mrb[0].mxu0
  %v3131 = vpop.f32.mrb[0].mxu0
  %3132 = vmatprep.mubr.bf16.mxu0 0
  %3133 = vmatmul.mubr.bf16.gmra.mrb[0].mxu0 %v1907
  %v3134 = vpop.f32.mrb[0].mxu0
  %v3135 = vadd.f32 0.0, %v3134
  %v3136 = vpop.f32.mrb[0].mxu0
  %v3137 = vpop.f32.mrb[0].mxu0
  %v3138 = vadd.f32 0.0, %v3137
  %v3139 = vpop.f32.mrb[0].mxu0
  %3140 = vmatprep.mubr.bf16.mxu0 0
  %3141 = vmatmul.mubr.bf16.gmra.mrb[0].mxu0 %v1910
  %v3142 = vpop.f32.mrb[0].mxu0
  %v3143 = vadd.f32 0.0, %v3142
  %v3144 = vpop.f32.mrb[0].mxu0
  %v3145 = vpop.f32.mrb[0].mxu0
  %v3146 = vadd.f32 0.0, %v3145
  %v3147 = vpop.f32.mrb[0].mxu0
  %3148 = vmatprep.mubr.bf16.mxu0 0
  %3149 = vmatmul.mubr.bf16.gmra.mrb[0].mxu0 %v1913
  %v3150 = vpop.f32.mrb[0].mxu0
  %v3151 = vadd.f32 0.0, %v3150
  %v3152 = vpop.f32.mrb[0].mxu0
  %v3153 = vpop.f32.mrb[0].mxu0
  %v3154 = vadd.f32 0.0, %v3153
  %v3155 = vpop.f32.mrb[0].mxu0
  %3156 = vmatprep.mubr.bf16.mxu0 0
  %3157 = vmatmul.mubr.bf16.gmra.mrb[0].mxu0 %v1916
  %v3158 = vpop.f32.mrb[0].mxu0
  %v3159 = vadd.f32 0.0, %v3158
  %v3160 = vpop.f32.mrb[0].mxu0
  %v3161 = vpop.f32.mrb[0].mxu0
  %v3162 = vadd.f32 0.0, %v3161
  %v3163 = vpop.f32.mrb[0].mxu0
  %3164 = vmatprep.mubr.bf16.mxu0 0
  %3165 = vmatmul.mubr.bf16.gmra.mrb[0].mxu0 %v1919
  %v3166 = vpop.f32.mrb[0].mxu0
  %v3167 = vadd.f32 0.0, %v3166
  %v3168 = vpop.f32.mrb[0].mxu0
  %v3169 = vpop.f32.mrb[0].mxu0
  %v3170 = vadd.f32 0.0, %v3169
  %v3171 = vpop.f32.mrb[0].mxu0
  %3172 = vmatprep.mubr.bf16.mxu0 0
  %3173 = vmatmul.mubr.bf16.gmra.mrb[0].mxu0 %v1922
  %v3174 = vpop.f32.mrb[0].mxu0
  %v3175 = vadd.f32 0.0, %v3174
  %v3176 = vpop.f32.mrb[0].mxu0
  %v3177 = vpop.f32.mrb[0].mxu0
  %v3178 = vadd.f32 0.0, %v3177
  %v3179 = vpop.f32.mrb[0].mxu0
  %3180 = vmatprep.mubr.bf16.mxu0 0
  %3181 = vmatmul.mubr.bf16.gmra.mrb[0].mxu0 %v1925
  %v3182 = vpop.f32.mrb[0].mxu0
  %v3183 = vadd.f32 0.0, %v3182
  %v3184 = vpop.f32.mrb[0].mxu0
  %v3185 = vpop.f32.mrb[0].mxu0
  %v3186 = vadd.f32 0.0, %v3185
  %v3187 = vpop.f32.mrb[0].mxu0
  %3188 = vmatprep.mubr.bf16.mxu0 0
  %3189 = vmatmul.mubr.bf16.gmra.mrb[0].mxu0 %v1928
  %v3190 = vpop.f32.mrb[0].mxu0
  %v3191 = vadd.f32 0.0, %v3190
  %v3192 = vpop.f32.mrb[0].mxu0
  %v3193 = vpop.f32.mrb[0].mxu0
  %v3194 = vadd.f32 0.0, %v3193
  %v3195 = vpop.f32.mrb[0].mxu0
  %3196 = vmatprep.mubr.bf16.mxu0 0
  %3197 = vmatmul.mubr.bf16.gmra.mrb[0].mxu0 %v1931
  %v3198 = vpop.f32.mrb[0].mxu0
  %v3199 = vadd.f32 0.0, %v3198
  %v3200 = vpop.f32.mrb[0].mxu0
  %v3201 = vpop.f32.mrb[0].mxu0
  %v3202 = vadd.f32 0.0, %v3201
  %v3203 = vpop.f32.mrb[0].mxu0
  %3204 = vmatprep.mubr.bf16.mxu0 0
  %3205 = vmatmul.mubr.bf16.gmra.mrb[0].mxu0 %v1934
  %v3206 = vpop.f32.mrb[0].mxu0
  %v3207 = vpop.f32.mrb[0].mxu0
  %v3208 = vpop.f32.mrb[0].mxu0
  %v3209 = vpop.f32.mrb[0].mxu0
  %3210 = vmatprep.mubr.bf16.mxu0 0
  %3211 = vmatmul.mubr.bf16.gmra.mrb[0].mxu0 %v1937
  %v3212 = vpop.f32.mrb[0].mxu0
  %v3213 = vpop.f32.mrb[0].mxu0
  %v3214 = vpop.f32.mrb[0].mxu0
  %v3215 = vpop.f32.mrb[0].mxu0
  %3216 = vmatprep.mubr.bf16.mxu0 0
  %3217 = vmatmul.mubr.bf16.gmra.mrb[0].mxu0 %v1940
  %v3218 = vpop.f32.mrb[0].mxu0
  %v3219 = vpop.f32.mrb[0].mxu0
  %v3220 = vpop.f32.mrb[0].mxu0
  %v3221 = vpop.f32.mrb[0].mxu0
  %3222 = vmatprep.mubr.bf16.mxu0 0
  %3223 = vmatmul.mubr.bf16.gmra.mrb[0].mxu0 %v1943
  %v3224 = vpop.f32.mrb[0].mxu0
  %v3225 = vadd.f32 0.0, %v3224
  %v3226 = vpop.f32.mrb[0].mxu0
  %v3227 = vpop.f32.mrb[0].mxu0
  %v3228 = vadd.f32 0.0, %v3227
  %v3229 = vpop.f32.mrb[0].mxu0
  %3230 = vmatprep.mubr.bf16.mxu0 0
  %3231 = vmatmul.mubr.bf16.gmra.mrb[0].mxu0 %v1946
  %v3232 = vpop.f32.mrb[0].mxu0
  %v3233 = vadd.f32 0.0, %v3232
  %v3234 = vpop.f32.mrb[0].mxu0
  %v3235 = vpop.f32.mrb[0].mxu0
  %v3236 = vadd.f32 0.0, %v3235
  %v3237 = vpop.f32.mrb[0].mxu0
  %3238 = vmatprep.mubr.bf16.mxu0 0
  %3239 = vmatmul.mubr.bf16.gmra.mrb[0].mxu0 %v1949
  %v3240 = vpop.f32.mrb[0].mxu0
  %v3241 = vadd.f32 0.0, %v3240
  %v3242 = vpop.f32.mrb[0].mxu0
  %v3243 = vpop.f32.mrb[0].mxu0
  %v3244 = vadd.f32 0.0, %v3243
  %v3245 = vpop.f32.mrb[0].mxu0
  %3246 = vmatprep.mubr.bf16.mxu0 0
  %3247 = vmatmul.mubr.bf16.gmra.mrb[0].mxu0 %v1952
  %v3248 = vpop.f32.mrb[0].mxu0
  %v3249 = vadd.f32 0.0, %v3248
  %v3250 = vpop.f32.mrb[0].mxu0
  %v3251 = vpop.f32.mrb[0].mxu0
  %v3252 = vadd.f32 0.0, %v3251
  %v3253 = vpop.f32.mrb[0].mxu0
  %3254 = vmatprep.mubr.bf16.mxu0 0
  %3255 = vmatmul.mubr.bf16.gmra.mrb[0].mxu0 %v1955
  %v3256 = vpop.f32.mrb[0].mxu0
  %v3257 = vadd.f32 0.0, %v3256
  %v3258 = vpop.f32.mrb[0].mxu0
  %v3259 = vpop.f32.mrb[0].mxu0
  %v3260 = vadd.f32 0.0, %v3259
  %v3261 = vpop.f32.mrb[0].mxu0
  %3262 = vmatprep.mubr.bf16.mxu0 0
  %3263 = vmatmul.mubr.bf16.gmra.mrb[0].mxu0 %v1958
  %v3264 = vpop.f32.mrb[0].mxu0
  %v3265 = vadd.f32 0.0, %v3264
  %v3266 = vpop.f32.mrb[0].mxu0
  %v3267 = vpop.f32.mrb[0].mxu0
  %v3268 = vadd.f32 0.0, %v3267
  %v3269 = vpop.f32.mrb[0].mxu0
  %3270 = vmatprep.mubr.bf16.mxu0 0
  %3271 = vmatmul.mubr.bf16.gmra.mrb[0].mxu0 %v1961
  %v3272 = vpop.f32.mrb[0].mxu0
  %v3273 = vadd.f32 0.0, %v3272
  %v3274 = vpop.f32.mrb[0].mxu0
  %v3275 = vpop.f32.mrb[0].mxu0
  %v3276 = vadd.f32 0.0, %v3275
  %v3277 = vpop.f32.mrb[0].mxu0
  %3278 = vmatprep.mubr.bf16.mxu0 0
  %3279 = vmatmul.mubr.bf16.gmra.mrb[0].mxu0 %v1964
  %v3280 = vpop.f32.mrb[0].mxu0
  %v3281 = vadd.f32 0.0, %v3280
  %v3282 = vpop.f32.mrb[0].mxu0
  %v3283 = vpop.f32.mrb[0].mxu0
  %v3284 = vadd.f32 0.0, %v3283
  %v3285 = vpop.f32.mrb[0].mxu0
  %3286 = vmatprep.mubr.bf16.mxu0 0
  %3287 = vmatmul.mubr.bf16.gmra.mrb[0].mxu0 %v1967
  %v3288 = vpop.f32.mrb[0].mxu0
  %v3289 = vadd.f32 0.0, %v3288
  %v3290 = vpop.f32.mrb[0].mxu0
  %v3291 = vpop.f32.mrb[0].mxu0
  %v3292 = vadd.f32 0.0, %v3291
  %v3293 = vpop.f32.mrb[0].mxu0
  %3294 = vmatprep.mubr.bf16.mxu0 0
  %3295 = vmatmul.mubr.bf16.gmra.mrb[0].mxu0 %v1970
  %v3296 = vpop.f32.mrb[0].mxu0
  %v3297 = vpop.f32.mrb[0].mxu0
  %v3298 = vpop.f32.mrb[0].mxu0
  %v3299 = vpop.f32.mrb[0].mxu0
  %3300 = vmatprep.mubr.bf16.mxu0 0
  %3301 = vmatmul.mubr.bf16.gmra.mrb[0].mxu0 %v1973
  %v3302 = vpop.f32.mrb[0].mxu0
  %v3303 = vpop.f32.mrb[0].mxu0
  %v3304 = vpop.f32.mrb[0].mxu0
  %v3305 = vpop.f32.mrb[0].mxu0
  %3306 = vmatprep.mubr.bf16.mxu0 0
  %3307 = vmatmul.mubr.bf16.gmra.mrb[0].mxu0 %v1976
  %v3308 = vpop.f32.mrb[0].mxu0
  %v3309 = vpop.f32.mrb[0].mxu0
  %v3310 = vpop.f32.mrb[0].mxu0
  %v3311 = vpop.f32.mrb[0].mxu0
  %3312 = vmatprep.mubr.bf16.mxu0 0
  %3313 = vmatmul.mubr.bf16.gmra.mrb[0].mxu0 %v1979
  %v3314 = vpop.f32.mrb[0].mxu0
  %v3315 = vadd.f32 0.0, %v3314
  %v3316 = vpop.f32.mrb[0].mxu0
  %v3317 = vpop.f32.mrb[0].mxu0
  %v3318 = vadd.f32 0.0, %v3317
  %v3319 = vpop.f32.mrb[0].mxu0
  %3320 = vmatprep.mubr.bf16.mxu0 0
  %3321 = vmatmul.mubr.bf16.gmra.mrb[0].mxu0 %v1982
  %v3322 = vpop.f32.mrb[0].mxu0
  %v3323 = vadd.f32 0.0, %v3322
  %v3324 = vpop.f32.mrb[0].mxu0
  %v3325 = vpop.f32.mrb[0].mxu0
  %v3326 = vadd.f32 0.0, %v3325
  %v3327 = vpop.f32.mrb[0].mxu0
  %3328 = vmatprep.mubr.bf16.mxu0 0
  %3329 = vmatmul.mubr.bf16.gmra.mrb[0].mxu0 %v1985
  %v3330 = vpop.f32.mrb[0].mxu0
  %v3331 = vadd.f32 0.0, %v3330
  %v3332 = vpop.f32.mrb[0].mxu0
  %v3333 = vpop.f32.mrb[0].mxu0
  %v3334 = vadd.f32 0.0, %v3333
  %v3335 = vpop.f32.mrb[0].mxu0
  %3336 = vmatprep.mubr.bf16.mxu0 0
  %3337 = vmatmul.mubr.bf16.gmra.mrb[0].mxu0 %v1988
  %v3338 = vpop.f32.mrb[0].mxu0
  %v3339 = vadd.f32 0.0, %v3338
  %v3340 = vpop.f32.mrb[0].mxu0
  %v3341 = vpop.f32.mrb[0].mxu0
  %v3342 = vadd.f32 0.0, %v3341
  %v3343 = vpop.f32.mrb[0].mxu0
  %3344 = vmatprep.mubr.bf16.mxu0 0
  %3345 = vmatmul.mubr.bf16.gmra.mrb[0].mxu0 %v1991
  %v3346 = vpop.f32.mrb[0].mxu0
  %v3347 = vadd.f32 0.0, %v3346
  %v3348 = vpop.f32.mrb[0].mxu0
  %v3349 = vpop.f32.mrb[0].mxu0
  %v3350 = vadd.f32 0.0, %v3349
  %v3351 = vpop.f32.mrb[0].mxu0
  %3352 = vmatprep.mubr.bf16.mxu0 0
  %3353 = vmatmul.mubr.bf16.gmra.mrb[0].mxu0 %v1994
  %v3354 = vpop.f32.mrb[0].mxu0
  %v3355 = vadd.f32 0.0, %v3354
  %v3356 = vpop.f32.mrb[0].mxu0
  %v3357 = vpop.f32.mrb[0].mxu0
  %v3358 = vadd.f32 0.0, %v3357
  %v3359 = vpop.f32.mrb[0].mxu0
  %3360 = vmatprep.mubr.bf16.mxu0 0
  %3361 = vmatmul.mubr.bf16.gmra.mrb[0].mxu0 %v1997
  %v3362 = vpop.f32.mrb[0].mxu0
  %v3363 = vadd.f32 0.0, %v3362
  %v3364 = vpop.f32.mrb[0].mxu0
  %v3365 = vpop.f32.mrb[0].mxu0
  %v3366 = vadd.f32 0.0, %v3365
  %v3367 = vpop.f32.mrb[0].mxu0
  %3368 = vmatprep.mubr.bf16.mxu0 0
  %3369 = vmatmul.mubr.bf16.gmra.mrb[0].mxu0 %v2000
  %v3370 = vpop.f32.mrb[0].mxu0
  %v3371 = vadd.f32 0.0, %v3370
  %v3372 = vpop.f32.mrb[0].mxu0
  %v3373 = vpop.f32.mrb[0].mxu0
  %v3374 = vadd.f32 0.0, %v3373
  %v3375 = vpop.f32.mrb[0].mxu0
  %3376 = vmatprep.mubr.bf16.mxu0 0
  %3377 = vmatmul.mubr.bf16.gmra.mrb[0].mxu0 %v2003
  %v3378 = vpop.f32.mrb[0].mxu0
  %v3379 = vadd.f32 0.0, %v3378
  %v3380 = vpop.f32.mrb[0].mxu0
  %v3381 = vpop.f32.mrb[0].mxu0
  %v3382 = vadd.f32 0.0, %v3381
  %v3383 = vpop.f32.mrb[0].mxu0
  %3384 = vmatprep.mubr.bf16.mxu0 0
  %3385 = vmatmul.mubr.bf16.gmra.mrb[0].mxu0 %v2006
  %v3386 = vpop.f32.mrb[0].mxu0
  %v3387 = vpop.f32.mrb[0].mxu0
  %v3388 = vpop.f32.mrb[0].mxu0
  %v3389 = vpop.f32.mrb[0].mxu0
  %3390 = vmatprep.mubr.bf16.mxu0 0
  %3391 = vmatmul.mubr.bf16.gmra.mrb[0].mxu0 %v2009
  %v3392 = vpop.f32.mrb[0].mxu0
  %v3393 = vpop.f32.mrb[0].mxu0
  %v3394 = vpop.f32.mrb[0].mxu0
  %v3395 = vpop.f32.mrb[0].mxu0
  %3396 = vmatprep.mubr.bf16.mxu0 0
  %3397 = vmatmul.mubr.bf16.gmra.mrb[0].mxu0 %v2012
  %v3398 = vpop.f32.mrb[0].mxu0
  %v3399 = vpop.f32.mrb[0].mxu0
  %v3400 = vpop.f32.mrb[0].mxu0
  %v3401 = vpop.f32.mrb[0].mxu0
  %3402 = vmatprep.mubr.bf16.mxu0 0
  %3403 = vmatmul.mubr.bf16.gmra.mrb[0].mxu0 %v2015
  %v3404 = vpop.f32.mrb[0].mxu0
  %v3405 = vadd.f32 0.0, %v3404
  %v3406 = vpop.f32.mrb[0].mxu0
  %v3407 = vpop.f32.mrb[0].mxu0
  %v3408 = vadd.f32 0.0, %v3407
  %v3409 = vpop.f32.mrb[0].mxu0
  %3410 = vmatprep.mubr.bf16.mxu0 0
  %3411 = vmatmul.mubr.bf16.gmra.mrb[0].mxu0 %v2018
  %v3412 = vpop.f32.mrb[0].mxu0
  %v3413 = vadd.f32 0.0, %v3412
  %v3414 = vpop.f32.mrb[0].mxu0
  %v3415 = vpop.f32.mrb[0].mxu0
  %v3416 = vadd.f32 0.0, %v3415
  %v3417 = vpop.f32.mrb[0].mxu0
  %3418 = vmatprep.mubr.bf16.mxu0 0
  %3419 = vmatmul.mubr.bf16.gmra.mrb[0].mxu0 %v2021
  %v3420 = vpop.f32.mrb[0].mxu0
  %v3421 = vadd.f32 0.0, %v3420
  %v3422 = vpop.f32.mrb[0].mxu0
  %v3423 = vpop.f32.mrb[0].mxu0
  %v3424 = vadd.f32 0.0, %v3423
  %v3425 = vpop.f32.mrb[0].mxu0
  %3426 = vmatprep.mubr.bf16.mxu0 0
  %3427 = vmatmul.mubr.bf16.gmra.mrb[0].mxu0 %v2024
  %v3428 = vpop.f32.mrb[0].mxu0
  %v3429 = vadd.f32 0.0, %v3428
  %v3430 = vpop.f32.mrb[0].mxu0
  %v3431 = vpop.f32.mrb[0].mxu0
  %v3432 = vadd.f32 0.0, %v3431
  %v3433 = vpop.f32.mrb[0].mxu0
  %3434 = vmatprep.mubr.bf16.mxu0 0
  %3435 = vmatmul.mubr.bf16.gmra.mrb[0].mxu0 %v2027
  %v3436 = vpop.f32.mrb[0].mxu0
  %v3437 = vadd.f32 0.0, %v3436
  %v3438 = vpop.f32.mrb[0].mxu0
  %v3439 = vpop.f32.mrb[0].mxu0
  %v3440 = vadd.f32 0.0, %v3439
  %v3441 = vpop.f32.mrb[0].mxu0
  %3442 = vmatprep.mubr.bf16.mxu0 0
  %3443 = vmatmul.mubr.bf16.gmra.mrb[0].mxu0 %v2030
  %v3444 = vpop.f32.mrb[0].mxu0
  %v3445 = vadd.f32 0.0, %v3444
  %v3446 = vpop.f32.mrb[0].mxu0
  %v3447 = vpop.f32.mrb[0].mxu0
  %v3448 = vadd.f32 0.0, %v3447
  %v3449 = vpop.f32.mrb[0].mxu0
  %3450 = vmatprep.mubr.bf16.mxu0 0
  %3451 = vmatmul.mubr.bf16.gmra.mrb[0].mxu0 %v2033
  %v3452 = vpop.f32.mrb[0].mxu0
  %v3453 = vadd.f32 0.0, %v3452
  %v3454 = vpop.f32.mrb[0].mxu0
  %v3455 = vpop.f32.mrb[0].mxu0
  %v3456 = vadd.f32 0.0, %v3455
  %v3457 = vpop.f32.mrb[0].mxu0
  %3458 = vmatprep.mubr.bf16.mxu0 0
  %3459 = vmatmul.mubr.bf16.gmra.mrb[0].mxu0 %v2036
  %v3460 = vpop.f32.mrb[0].mxu0
  %v3461 = vadd.f32 0.0, %v3460
  %v3462 = vpop.f32.mrb[0].mxu0
  %v3463 = vpop.f32.mrb[0].mxu0
  %v3464 = vadd.f32 0.0, %v3463
  %v3465 = vpop.f32.mrb[0].mxu0
  %3466 = vmatprep.mubr.bf16.mxu0 0
  %3467 = vmatmul.mubr.bf16.gmra.mrb[0].mxu0 %v2039
  %v3468 = vpop.f32.mrb[0].mxu0
  %v3469 = vadd.f32 0.0, %v3468
  %v3470 = vpop.f32.mrb[0].mxu0
  %v3471 = vpop.f32.mrb[0].mxu0
  %v3472 = vadd.f32 0.0, %v3471
  %v3473 = vpop.f32.mrb[0].mxu0
  %3474 = vmatprep.mubr.bf16.mxu0 0
  %3475 = vmatmul.mubr.bf16.gmra.mrb[0].mxu0 %v2042
  %v3476 = vpop.f32.mrb[0].mxu0
  %v3477 = vpop.f32.mrb[0].mxu0
  %v3478 = vpop.f32.mrb[0].mxu0
  %v3479 = vpop.f32.mrb[0].mxu0
  %3480 = vmatprep.mubr.bf16.mxu0 0
  %3481 = vmatmul.mubr.bf16.gmra.mrb[0].mxu0 %v2045
  %v3482 = vpop.f32.mrb[0].mxu0
  %v3483 = vpop.f32.mrb[0].mxu0
  %v3484 = vpop.f32.mrb[0].mxu0
  %v3485 = vpop.f32.mrb[0].mxu0
  %3486 = vmatprep.mubr.bf16.mxu0 0
  %3487 = vmatmul.mubr.bf16.gmra.mrb[0].mxu0 %v2048
  %v3488 = vpop.f32.mrb[0].mxu0
  %v3489 = vpop.f32.mrb[0].mxu0
  %v3490 = vpop.f32.mrb[0].mxu0
  %v3491 = vpop.f32.mrb[0].mxu0
  %3492 = vmatprep.mubr.bf16.mxu0 0
  %3493 = vmatmul.mubr.bf16.gmra.mrb[0].mxu0 %v2051
  %v3494 = vpop.f32.mrb[0].mxu0
  %v3495 = vadd.f32 0.0, %v3494
  %v3496 = vpop.f32.mrb[0].mxu0
  %v3497 = vpop.f32.mrb[0].mxu0
  %v3498 = vadd.f32 0.0, %v3497
  %v3499 = vpop.f32.mrb[0].mxu0
  %3500 = vmatprep.mubr.bf16.mxu0 0
  %3501 = vmatmul.mubr.bf16.gmra.mrb[0].mxu0 %v2054
  %v3502 = vpop.f32.mrb[0].mxu0
  %v3503 = vadd.f32 0.0, %v3502
  %v3504 = vpop.f32.mrb[0].mxu0
  %v3505 = vpop.f32.mrb[0].mxu0
  %v3506 = vadd.f32 0.0, %v3505
  %v3507 = vpop.f32.mrb[0].mxu0
  %3508 = vmatprep.mubr.bf16.mxu0 0
  %3509 = vmatmul.mubr.bf16.gmra.mrb[0].mxu0 %v2057
  %v3510 = vpop.f32.mrb[0].mxu0
  %v3511 = vadd.f32 0.0, %v3510
  %v3512 = vpop.f32.mrb[0].mxu0
  %v3513 = vpop.f32.mrb[0].mxu0
  %v3514 = vadd.f32 0.0, %v3513
  %v3515 = vpop.f32.mrb[0].mxu0
  %3516 = vmatprep.mubr.bf16.mxu0 0
  %3517 = vmatmul.mubr.bf16.gmra.mrb[0].mxu0 %v2060
  %v3518 = vpop.f32.mrb[0].mxu0
  %v3519 = vadd.f32 0.0, %v3518
  %v3520 = vpop.f32.mrb[0].mxu0
  %v3521 = vpop.f32.mrb[0].mxu0
  %v3522 = vadd.f32 0.0, %v3521
  %v3523 = vpop.f32.mrb[0].mxu0
  %3524 = vmatprep.mubr.bf16.mxu0 0
  %3525 = vmatmul.mubr.bf16.gmra.mrb[0].mxu0 %v2063
  %v3526 = vpop.f32.mrb[0].mxu0
  %v3527 = vadd.f32 0.0, %v3526
  %v3528 = vpop.f32.mrb[0].mxu0
  %v3529 = vpop.f32.mrb[0].mxu0
  %v3530 = vadd.f32 0.0, %v3529
  %v3531 = vpop.f32.mrb[0].mxu0
  %3532 = vmatprep.mubr.bf16.mxu0 0
  %3533 = vmatmul.mubr.bf16.gmra.mrb[0].mxu0 %v2066
  %v3534 = vpop.f32.mrb[0].mxu0
  %v3535 = vadd.f32 0.0, %v3534
  %v3536 = vpop.f32.mrb[0].mxu0
  %v3537 = vpop.f32.mrb[0].mxu0
  %v3538 = vadd.f32 0.0, %v3537
  %v3539 = vpop.f32.mrb[0].mxu0
  %3540 = vmatprep.mubr.bf16.mxu0 0
  %3541 = vmatmul.mubr.bf16.gmra.mrb[0].mxu0 %v2069
  %v3542 = vpop.f32.mrb[0].mxu0
  %v3543 = vadd.f32 0.0, %v3542
  %v3544 = vpop.f32.mrb[0].mxu0
  %v3545 = vpop.f32.mrb[0].mxu0
  %v3546 = vadd.f32 0.0, %v3545
  %v3547 = vpop.f32.mrb[0].mxu0
  %3548 = vmatprep.mubr.bf16.mxu0 0
  %3549 = vmatmul.mubr.bf16.gmra.mrb[0].mxu0 %v2072
  %v3550 = vpop.f32.mrb[0].mxu0
  %v3551 = vadd.f32 0.0, %v3550
  %v3552 = vpop.f32.mrb[0].mxu0
  %v3553 = vpop.f32.mrb[0].mxu0
  %v3554 = vadd.f32 0.0, %v3553
  %v3555 = vpop.f32.mrb[0].mxu0
  %3556 = vmatprep.mubr.bf16.mxu0 0
  %3557 = vmatmul.mubr.bf16.gmra.mrb[0].mxu0 %v2075
  %v3558 = vpop.f32.mrb[0].mxu0
  %v3559 = vadd.f32 0.0, %v3558
  %v3560 = vpop.f32.mrb[0].mxu0
  %v3561 = vpop.f32.mrb[0].mxu0
  %v3562 = vadd.f32 0.0, %v3561
  %v3563 = vpop.f32.mrb[0].mxu0
  %3564 = vmatprep.mubr.bf16.mxu0 0
  %3565 = vmatmul.mubr.bf16.gmra.mrb[0].mxu0 %v2078
  %v3566 = vpop.f32.mrb[0].mxu0
  %v3567 = vpop.f32.mrb[0].mxu0
  %v3568 = vpop.f32.mrb[0].mxu0
  %v3569 = vpop.f32.mrb[0].mxu0
  %3570 = vmatprep.mubr.bf16.mxu0 0
  %3571 = vmatmul.mubr.bf16.gmra.mrb[0].mxu0 %v2081
  %v3572 = vpop.f32.mrb[0].mxu0
  %v3573 = vpop.f32.mrb[0].mxu0
  %v3574 = vpop.f32.mrb[0].mxu0
  %v3575 = vpop.f32.mrb[0].mxu0
  %3576 = vmatprep.mubr.bf16.mxu0 0
  %3577 = vmatmul.mubr.bf16.gmra.mrb[0].mxu0 %v2084
  %v3578 = vpop.f32.mrb[0].mxu0
  %v3579 = vpop.f32.mrb[0].mxu0
  %v3580 = vpop.f32.mrb[0].mxu0
  %v3581 = vpop.f32.mrb[0].mxu0
  %3582 = vmatprep.mubr.bf16.mxu0 0
  %3583 = vmatmul.mubr.bf16.gmra.mrb[0].mxu0 %v2087
  %v3584 = vpop.f32.mrb[0].mxu0
  %v3585 = vadd.f32 0.0, %v3584
  %v3586 = vpop.f32.mrb[0].mxu0
  %v3587 = vpop.f32.mrb[0].mxu0
  %v3588 = vadd.f32 0.0, %v3587
  %v3589 = vpop.f32.mrb[0].mxu0
  %3590 = vmatprep.mubr.bf16.mxu0 0
  %3591 = vmatmul.mubr.bf16.gmra.mrb[0].mxu0 %v2090
  %v3592 = vpop.f32.mrb[0].mxu0
  %v3593 = vadd.f32 0.0, %v3592
  %v3594 = vpop.f32.mrb[0].mxu0
  %v3595 = vpop.f32.mrb[0].mxu0
  %v3596 = vadd.f32 0.0, %v3595
  %v3597 = vpop.f32.mrb[0].mxu0
  %3598 = vmatprep.mubr.bf16.mxu0 0
  %3599 = vmatmul.mubr.bf16.gmra.mrb[0].mxu0 %v2093
  %v3600 = vpop.f32.mrb[0].mxu0
  %v3601 = vadd.f32 0.0, %v3600
  %v3602 = vpop.f32.mrb[0].mxu0
  %v3603 = vpop.f32.mrb[0].mxu0
  %v3604 = vadd.f32 0.0, %v3603
  %v3605 = vpop.f32.mrb[0].mxu0
  %3606 = vmatprep.mubr.bf16.mxu0 0
  %3607 = vmatmul.mubr.bf16.gmra.mrb[0].mxu0 %v2096
  %v3608 = vpop.f32.mrb[0].mxu0
  %v3609 = vadd.f32 0.0, %v3608
  %v3610 = vpop.f32.mrb[0].mxu0
  %v3611 = vpop.f32.mrb[0].mxu0
  %v3612 = vadd.f32 0.0, %v3611
  %v3613 = vpop.f32.mrb[0].mxu0
  %3614 = vmatprep.mubr.bf16.mxu0 0
  %3615 = vmatmul.mubr.bf16.gmra.mrb[0].mxu0 %v2099
  %v3616 = vpop.f32.mrb[0].mxu0
  %v3617 = vadd.f32 0.0, %v3616
  %v3618 = vpop.f32.mrb[0].mxu0
  %v3619 = vpop.f32.mrb[0].mxu0
  %v3620 = vadd.f32 0.0, %v3619
  %v3621 = vpop.f32.mrb[0].mxu0
  %3622 = vmatprep.mubr.bf16.mxu0 0
  %3623 = vmatmul.mubr.bf16.gmra.mrb[0].mxu0 %v2102
  %v3624 = vpop.f32.mrb[0].mxu0
  %v3625 = vadd.f32 0.0, %v3624
  %v3626 = vpop.f32.mrb[0].mxu0
  %v3627 = vpop.f32.mrb[0].mxu0
  %v3628 = vadd.f32 0.0, %v3627
  %v3629 = vpop.f32.mrb[0].mxu0
  %3630 = vmatprep.mubr.bf16.mxu0 0
  %3631 = vmatmul.mubr.bf16.gmra.mrb[0].mxu0 %v2105
  %v3632 = vpop.f32.mrb[0].mxu0
  %v3633 = vadd.f32 0.0, %v3632
  %v3634 = vpop.f32.mrb[0].mxu0
  %v3635 = vpop.f32.mrb[0].mxu0
  %v3636 = vadd.f32 0.0, %v3635
  %v3637 = vpop.f32.mrb[0].mxu0
  %3638 = vmatprep.mubr.bf16.mxu0 0
  %3639 = vmatmul.mubr.bf16.gmra.mrb[0].mxu0 %v2108
  %v3640 = vpop.f32.mrb[0].mxu0
  %v3641 = vadd.f32 0.0, %v3640
  %v3642 = vpop.f32.mrb[0].mxu0
  %v3643 = vpop.f32.mrb[0].mxu0
  %v3644 = vadd.f32 0.0, %v3643
  %v3645 = vpop.f32.mrb[0].mxu0
  %3646 = vmatprep.mubr.bf16.mxu0 0
  %3647 = vmatmul.mubr.bf16.gmra.mrb[0].mxu0 %v2111
  %v3648 = vpop.f32.mrb[0].mxu0
  %v3649 = vadd.f32 0.0, %v3648
  %v3650 = vpop.f32.mrb[0].mxu0
  %v3651 = vpop.f32.mrb[0].mxu0
  %v3652 = vadd.f32 0.0, %v3651
  %v3653 = vpop.f32.mrb[0].mxu0
  %3654 = vmatprep.mubr.bf16.mxu0 0
  %3655 = vmatmul.mubr.bf16.gmra.mrb[0].mxu0 %v2114
  %v3656 = vpop.f32.mrb[0].mxu0
  %v3657 = vpop.f32.mrb[0].mxu0
  %v3658 = vpop.f32.mrb[0].mxu0
  %v3659 = vpop.f32.mrb[0].mxu0
  %3660 = vmatprep.mubr.bf16.mxu0 0
  %3661 = vmatmul.mubr.bf16.gmra.mrb[0].mxu0 %v2117
  %v3662 = vpop.f32.mrb[0].mxu0
  %v3663 = vpop.f32.mrb[0].mxu0
  %v3664 = vpop.f32.mrb[0].mxu0
  %v3665 = vpop.f32.mrb[0].mxu0
  %3666 = vmatprep.mubr.bf16.mxu0 0
  %3667 = vmatmul.mubr.bf16.gmra.mrb[0].mxu0 %v2120
  %v3668 = vpop.f32.mrb[0].mxu0
  %v3669 = vpop.f32.mrb[0].mxu0
  %v3670 = vpop.f32.mrb[0].mxu0
  %v3671 = vpop.f32.mrb[0].mxu0
  %3672 = vmatprep.mubr.bf16.mxu0 0
  %3673 = vmatmul.mubr.bf16.gmra.mrb[0].mxu0 %v2123
  %v3674 = vpop.f32.mrb[0].mxu0
  %v3675 = vadd.f32 0.0, %v3674
  %v3676 = vpop.f32.mrb[0].mxu0
  %v3677 = vpop.f32.mrb[0].mxu0
  %v3678 = vadd.f32 0.0, %v3677
  %v3679 = vpop.f32.mrb[0].mxu0
  %3680 = vmatprep.mubr.bf16.mxu0 0
  %3681 = vmatmul.mubr.bf16.gmra.mrb[0].mxu0 %v2126
  %v3682 = vpop.f32.mrb[0].mxu0
  %v3683 = vadd.f32 0.0, %v3682
  %v3684 = vpop.f32.mrb[0].mxu0
  %v3685 = vpop.f32.mrb[0].mxu0
  %v3686 = vadd.f32 0.0, %v3685
  %v3687 = vpop.f32.mrb[0].mxu0
  %3688 = vmatprep.mubr.bf16.mxu0 0
  %3689 = vmatmul.mubr.bf16.gmra.mrb[0].mxu0 %v2129
  %v3690 = vpop.f32.mrb[0].mxu0
  %v3691 = vadd.f32 0.0, %v3690
  %v3692 = vpop.f32.mrb[0].mxu0
  %v3693 = vpop.f32.mrb[0].mxu0
  %v3694 = vadd.f32 0.0, %v3693
  %v3695 = vpop.f32.mrb[0].mxu0
  %3696 = vmatprep.mubr.bf16.mxu0 0
  %3697 = vmatmul.mubr.bf16.gmra.mrb[0].mxu0 %v2132
  %v3698 = vpop.f32.mrb[0].mxu0
  %v3699 = vadd.f32 0.0, %v3698
  %v3700 = vpop.f32.mrb[0].mxu0
  %v3701 = vpop.f32.mrb[0].mxu0
  %v3702 = vadd.f32 0.0, %v3701
  %v3703 = vpop.f32.mrb[0].mxu0
  %3704 = vmatprep.mubr.bf16.mxu0 0
  %3705 = vmatmul.mubr.bf16.gmra.mrb[0].mxu0 %v2135
  %v3706 = vpop.f32.mrb[0].mxu0
  %v3707 = vadd.f32 0.0, %v3706
  %v3708 = vpop.f32.mrb[0].mxu0
  %v3709 = vpop.f32.mrb[0].mxu0
  %v3710 = vadd.f32 0.0, %v3709
  %v3711 = vpop.f32.mrb[0].mxu0
  %3712 = vmatprep.mubr.bf16.mxu0 0
  %3713 = vmatmul.mubr.bf16.gmra.mrb[0].mxu0 %v2138
  %v3714 = vpop.f32.mrb[0].mxu0
  %v3715 = vadd.f32 0.0, %v3714
  %v3716 = vpop.f32.mrb[0].mxu0
  %v3717 = vpop.f32.mrb[0].mxu0
  %v3718 = vadd.f32 0.0, %v3717
  %v3719 = vpop.f32.mrb[0].mxu0
  %3720 = vmatprep.mubr.bf16.mxu0 0
  %3721 = vmatmul.mubr.bf16.gmra.mrb[0].mxu0 %v2141
  %v3722 = vpop.f32.mrb[0].mxu0
  %v3723 = vadd.f32 0.0, %v3722
  %v3724 = vpop.f32.mrb[0].mxu0
  %v3725 = vpop.f32.mrb[0].mxu0
  %v3726 = vadd.f32 0.0, %v3725
  %v3727 = vpop.f32.mrb[0].mxu0
  %3728 = vmatprep.mubr.bf16.mxu0 0
  %3729 = vmatmul.mubr.bf16.gmra.mrb[0].mxu0 %v2144
  %v3730 = vpop.f32.mrb[0].mxu0
  %v3731 = vadd.f32 0.0, %v3730
  %v3732 = vpop.f32.mrb[0].mxu0
  %v3733 = vpop.f32.mrb[0].mxu0
  %v3734 = vadd.f32 0.0, %v3733
  %v3735 = vpop.f32.mrb[0].mxu0
  %3736 = vmatprep.mubr.bf16.mxu0 0
  %3737 = vmatmul.mubr.bf16.gmra.mrb[0].mxu0 %v2147
  %v3738 = vpop.f32.mrb[0].mxu0
  %v3739 = vadd.f32 0.0, %v3738
  %v3740 = vpop.f32.mrb[0].mxu0
  %v3741 = vpop.f32.mrb[0].mxu0
  %v3742 = vadd.f32 0.0, %v3741
  %v3743 = vpop.f32.mrb[0].mxu0
  %3744 = vmatprep.mubr.bf16.mxu0 0
  %3745 = vmatmul.mubr.bf16.gmra.mrb[0].mxu0 %v2150
  %v3746 = vpop.f32.mrb[0].mxu0
  %v3747 = vpop.f32.mrb[0].mxu0
  %v3748 = vpop.f32.mrb[0].mxu0
  %v3749 = vpop.f32.mrb[0].mxu0
  %3750 = vmatprep.mubr.bf16.mxu0 0
  %3751 = vmatmul.mubr.bf16.gmra.mrb[0].mxu0 %v2153
  %v3752 = vpop.f32.mrb[0].mxu0
  %v3753 = vpop.f32.mrb[0].mxu0
  %v3754 = vpop.f32.mrb[0].mxu0
  %v3755 = vpop.f32.mrb[0].mxu0
  %3756 = vmatprep.mubr.bf16.mxu0 0
  %3757 = vmatmul.mubr.bf16.gmra.mrb[0].mxu0 %v2156
  %v3758 = vpop.f32.mrb[0].mxu0
  %v3759 = vpop.f32.mrb[0].mxu0
  %v3760 = vpop.f32.mrb[0].mxu0
  %v3761 = vpop.f32.mrb[0].mxu0
  %3762 = vmatprep.mubr.bf16.mxu0 0
  %3763 = vmatmul.mubr.bf16.gmra.mrb[0].mxu0 %v2159
  %v3764 = vpop.f32.mrb[0].mxu0
  %v3765 = vadd.f32 0.0, %v3764
  %v3766 = vpop.f32.mrb[0].mxu0
  %v3767 = vpop.f32.mrb[0].mxu0
  %v3768 = vadd.f32 0.0, %v3767
  %v3769 = vpop.f32.mrb[0].mxu0
  %3770 = vmatprep.mubr.bf16.mxu0 0
  %3771 = vmatmul.mubr.bf16.gmra.mrb[0].mxu0 %v2162
  %v3772 = vpop.f32.mrb[0].mxu0
  %v3773 = vadd.f32 0.0, %v3772
  %v3774 = vpop.f32.mrb[0].mxu0
  %v3775 = vpop.f32.mrb[0].mxu0
  %v3776 = vadd.f32 0.0, %v3775
  %v3777 = vpop.f32.mrb[0].mxu0
  %3778 = vmatprep.mubr.bf16.mxu0 0
  %3779 = vmatmul.mubr.bf16.gmra.mrb[0].mxu0 %v2165
  %v3780 = vpop.f32.mrb[0].mxu0
  %v3781 = vadd.f32 0.0, %v3780
  %v3782 = vpop.f32.mrb[0].mxu0
  %v3783 = vpop.f32.mrb[0].mxu0
  %v3784 = vadd.f32 0.0, %v3783
  %v3785 = vpop.f32.mrb[0].mxu0
  %3786 = vmatprep.mubr.bf16.mxu0 0
  %3787 = vmatmul.mubr.bf16.gmra.mrb[0].mxu0 %v2168
  %v3788 = vpop.f32.mrb[0].mxu0
  %v3789 = vadd.f32 0.0, %v3788
  %v3790 = vpop.f32.mrb[0].mxu0
  %v3791 = vpop.f32.mrb[0].mxu0
  %v3792 = vadd.f32 0.0, %v3791
  %v3793 = vpop.f32.mrb[0].mxu0
  %3794 = vmatprep.mubr.bf16.mxu0 0
  %3795 = vmatmul.mubr.bf16.gmra.mrb[0].mxu0 %v2171
  %v3796 = vpop.f32.mrb[0].mxu0
  %v3797 = vadd.f32 0.0, %v3796
  %v3798 = vpop.f32.mrb[0].mxu0
  %v3799 = vpop.f32.mrb[0].mxu0
  %v3800 = vadd.f32 0.0, %v3799
  %v3801 = vpop.f32.mrb[0].mxu0
  %3802 = vmatprep.mubr.bf16.mxu0 0
  %3803 = vmatmul.mubr.bf16.gmra.mrb[0].mxu0 %v2174
  %v3804 = vpop.f32.mrb[0].mxu0
  %v3805 = vadd.f32 0.0, %v3804
  %v3806 = vpop.f32.mrb[0].mxu0
  %v3807 = vpop.f32.mrb[0].mxu0
  %v3808 = vadd.f32 0.0, %v3807
  %v3809 = vpop.f32.mrb[0].mxu0
  %3810 = vmatprep.mubr.bf16.mxu0 0
  %3811 = vmatmul.mubr.bf16.gmra.mrb[0].mxu0 %v2177
  %v3812 = vpop.f32.mrb[0].mxu0
  %v3813 = vadd.f32 0.0, %v3812
  %v3814 = vpop.f32.mrb[0].mxu0
  %v3815 = vpop.f32.mrb[0].mxu0
  %v3816 = vadd.f32 0.0, %v3815
  %v3817 = vpop.f32.mrb[0].mxu0
  %3818 = vmatprep.mubr.bf16.mxu0 0
  %3819 = vmatmul.mubr.bf16.gmra.mrb[0].mxu0 %v2180
  %v3820 = vpop.f32.mrb[0].mxu0
  %v3821 = vadd.f32 0.0, %v3820
  %v3822 = vpop.f32.mrb[0].mxu0
  %v3823 = vpop.f32.mrb[0].mxu0
  %v3824 = vadd.f32 0.0, %v3823
  %v3825 = vpop.f32.mrb[0].mxu0
  %3826 = vmatprep.mubr.bf16.mxu0 0
  %3827 = vmatmul.mubr.bf16.gmra.mrb[0].mxu0 %v2183
  %v3828 = vpop.f32.mrb[0].mxu0
  %v3829 = vadd.f32 0.0, %v3828
  %v3830 = vpop.f32.mrb[0].mxu0
  %v3831 = vpop.f32.mrb[0].mxu0
  %v3832 = vadd.f32 0.0, %v3831
  %v3833 = vpop.f32.mrb[0].mxu0
  %3834 = vmatprep.mubr.bf16.mxu0 0
  %3835 = vmatmul.mubr.bf16.gmra.mrb[0].mxu0 %v2186
  %v3836 = vpop.f32.mrb[0].mxu0
  %v3837 = vpop.f32.mrb[0].mxu0
  %v3838 = vpop.f32.mrb[0].mxu0
  %v3839 = vpop.f32.mrb[0].mxu0
  %3840 = vmatprep.mubr.bf16.mxu0 0
  %3841 = vmatmul.mubr.bf16.gmra.mrb[0].mxu0 %v2189
  %v3842 = vpop.f32.mrb[0].mxu0
  %v3843 = vpop.f32.mrb[0].mxu0
  %v3844 = vpop.f32.mrb[0].mxu0
  %v3845 = vpop.f32.mrb[0].mxu0
  %3846 = vmatprep.mubr.bf16.mxu0 0
  %3847 = vmatmul.mubr.bf16.gmra.mrb[0].mxu0 %v2192
  %v3848 = vpop.f32.mrb[0].mxu0
  %v3849 = vpop.f32.mrb[0].mxu0
  %v3850 = vpop.f32.mrb[0].mxu0
  %v3851 = vpop.f32.mrb[0].mxu0
  %3852 = vdwg.mxu0
  %vm3853 = vcmp.ge.f32.partialorder %v2235, 0.0
  %vm3854 = vcmp.ge.f32.partialorder %v2238, 0.0
  %vm3855 = vcmp.ge.f32.partialorder %v2243, 0.0
  %vm3856 = vcmp.ge.f32.partialorder %v2246, 0.0
  %vm3857 = vcmp.ge.f32.partialorder %v2251, 0.0
  %vm3858 = vcmp.ge.f32.partialorder %v2254, 0.0
  %vm3859 = vcmp.ge.f32.partialorder %v2259, 0.0
  %vm3860 = vcmp.ge.f32.partialorder %v2262, 0.0
  %vm3861 = vcmp.ge.f32.partialorder %v2267, 0.0
  %vm3862 = vcmp.ge.f32.partialorder %v2270, 0.0
  %vm3863 = vcmp.ge.f32.partialorder %v2275, 0.0
  %vm3864 = vcmp.ge.f32.partialorder %v2278, 0.0
  %vm3865 = vcmp.ge.f32.partialorder %v2283, 0.0
  %vm3866 = vcmp.ge.f32.partialorder %v2286, 0.0
  %vm3867 = vcmp.ge.f32.partialorder %v2291, 0.0
  %vm3868 = vcmp.ge.f32.partialorder %v2294, 0.0
  %vm3869 = vcmp.ge.f32.partialorder %v2299, 0.0
  %vm3870 = vcmp.ge.f32.partialorder %v2302, 0.0
  %vm3871 = vcmp.ge.f32.partialorder %v2325, 0.0
  %vm3872 = vcmp.ge.f32.partialorder %v2328, 0.0
  %vm3873 = vcmp.ge.f32.partialorder %v2333, 0.0
  %vm3874 = vcmp.ge.f32.partialorder %v2336, 0.0
  %vm3875 = vcmp.ge.f32.partialorder %v2341, 0.0
  %vm3876 = vcmp.ge.f32.partialorder %v2344, 0.0
  %vm3877 = vcmp.ge.f32.partialorder %v2349, 0.0
  %vm3878 = vcmp.ge.f32.partialorder %v2352, 0.0
  %vm3879 = vcmp.ge.f32.partialorder %v2357, 0.0
  %vm3880 = vcmp.ge.f32.partialorder %v2360, 0.0
  %vm3881 = vcmp.ge.f32.partialorder %v2365, 0.0
  %vm3882 = vcmp.ge.f32.partialorder %v2368, 0.0
  %vm3883 = vcmp.ge.f32.partialorder %v2373, 0.0
  %vm3884 = vcmp.ge.f32.partialorder %v2376, 0.0
  %vm3885 = vcmp.ge.f32.partialorder %v2381, 0.0
  %vm3886 = vcmp.ge.f32.partialorder %v2384, 0.0
  %vm3887 = vcmp.ge.f32.partialorder %v2389, 0.0
  %vm3888 = vcmp.ge.f32.partialorder %v2392, 0.0
  %vm3889 = vcmp.ge.f32.partialorder %v2415, 0.0
  %vm3890 = vcmp.ge.f32.partialorder %v2418, 0.0
  %vm3891 = vcmp.ge.f32.partialorder %v2423, 0.0
  %vm3892 = vcmp.ge.f32.partialorder %v2426, 0.0
  %vm3893 = vcmp.ge.f32.partialorder %v2431, 0.0
  %vm3894 = vcmp.ge.f32.partialorder %v2434, 0.0
  %vm3895 = vcmp.ge.f32.partialorder %v2439, 0.0
  %vm3896 = vcmp.ge.f32.partialorder %v2442, 0.0
  %vm3897 = vcmp.ge.f32.partialorder %v2447, 0.0
  %vm3898 = vcmp.ge.f32.partialorder %v2450, 0.0
  %vm3899 = vcmp.ge.f32.partialorder %v2455, 0.0
  %vm3900 = vcmp.ge.f32.partialorder %v2458, 0.0
  %vm3901 = vcmp.ge.f32.partialorder %v2463, 0.0
  %vm3902 = vcmp.ge.f32.partialorder %v2466, 0.0
  %vm3903 = vcmp.ge.f32.partialorder %v2471, 0.0
  %vm3904 = vcmp.ge.f32.partialorder %v2474, 0.0
  %vm3905 = vcmp.ge.f32.partialorder %v2479, 0.0
  %vm3906 = vcmp.ge.f32.partialorder %v2482, 0.0
  %vm3907 = vcmp.ge.f32.partialorder %v2505, 0.0
  %vm3908 = vcmp.ge.f32.partialorder %v2508, 0.0
  %vm3909 = vcmp.ge.f32.partialorder %v2513, 0.0
  %vm3910 = vcmp.ge.f32.partialorder %v2516, 0.0
  %vm3911 = vcmp.ge.f32.partialorder %v2521, 0.0
  %vm3912 = vcmp.ge.f32.partialorder %v2524, 0.0
  %vm3913 = vcmp.ge.f32.partialorder %v2529, 0.0
  %vm3914 = vcmp.ge.f32.partialorder %v2532, 0.0
  %vm3915 = vcmp.ge.f32.partialorder %v2537, 0.0
  %vm3916 = vcmp.ge.f32.partialorder %v2540, 0.0
  %vm3917 = vcmp.ge.f32.partialorder %v2545, 0.0
  %vm3918 = vcmp.ge.f32.partialorder %v2548, 0.0
  %vm3919 = vcmp.ge.f32.partialorder %v2553, 0.0
  %vm3920 = vcmp.ge.f32.partialorder %v2556, 0.0
  %vm3921 = vcmp.ge.f32.partialorder %v2561, 0.0
  %vm3922 = vcmp.ge.f32.partialorder %v2564, 0.0
  %vm3923 = vcmp.ge.f32.partialorder %v2569, 0.0
  %vm3924 = vcmp.ge.f32.partialorder %v2572, 0.0
  %vm3925 = vcmp.ge.f32.partialorder %v2595, 0.0
  %vm3926 = vcmp.ge.f32.partialorder %v2598, 0.0
  %vm3927 = vcmp.ge.f32.partialorder %v2603, 0.0
  %vm3928 = vcmp.ge.f32.partialorder %v2606, 0.0
  %vm3929 = vcmp.ge.f32.partialorder %v2611, 0.0
  %vm3930 = vcmp.ge.f32.partialorder %v2614, 0.0
  %vm3931 = vcmp.ge.f32.partialorder %v2619, 0.0
  %vm3932 = vcmp.ge.f32.partialorder %v2622, 0.0
  %vm3933 = vcmp.ge.f32.partialorder %v2627, 0.0
  %vm3934 = vcmp.ge.f32.partialorder %v2630, 0.0
  %vm3935 = vcmp.ge.f32.partialorder %v2635, 0.0
  %vm3936 = vcmp.ge.f32.partialorder %v2638, 0.0
  %vm3937 = vcmp.ge.f32.partialorder %v2643, 0.0
  %vm3938 = vcmp.ge.f32.partialorder %v2646, 0.0
  %vm3939 = vcmp.ge.f32.partialorder %v2651, 0.0
  %vm3940 = vcmp.ge.f32.partialorder %v2654, 0.0
  %vm3941 = vcmp.ge.f32.partialorder %v2659, 0.0
  %vm3942 = vcmp.ge.f32.partialorder %v2662, 0.0
  %vm3943 = vcmp.ge.f32.partialorder %v2685, 0.0
  %vm3944 = vcmp.ge.f32.partialorder %v2688, 0.0
  %vm3945 = vcmp.ge.f32.partialorder %v2693, 0.0
  %vm3946 = vcmp.ge.f32.partialorder %v2696, 0.0
  %vm3947 = vcmp.ge.f32.partialorder %v2701, 0.0
  %vm3948 = vcmp.ge.f32.partialorder %v2704, 0.0
  %vm3949 = vcmp.ge.f32.partialorder %v2709, 0.0
  %vm3950 = vcmp.ge.f32.partialorder %v2712, 0.0
  %vm3951 = vcmp.ge.f32.partialorder %v2717, 0.0
  %vm3952 = vcmp.ge.f32.partialorder %v2720, 0.0
  %vm3953 = vcmp.ge.f32.partialorder %v2725, 0.0
  %vm3954 = vcmp.ge.f32.partialorder %v2728, 0.0
  %vm3955 = vcmp.ge.f32.partialorder %v2733, 0.0
  %vm3956 = vcmp.ge.f32.partialorder %v2736, 0.0
  %vm3957 = vcmp.ge.f32.partialorder %v2741, 0.0
  %vm3958 = vcmp.ge.f32.partialorder %v2744, 0.0
  %vm3959 = vcmp.ge.f32.partialorder %v2749, 0.0
  %vm3960 = vcmp.ge.f32.partialorder %v2752, 0.0
  %vm3961 = vcmp.ge.f32.partialorder %v2775, 0.0
  %vm3962 = vcmp.ge.f32.partialorder %v2778, 0.0
  %vm3963 = vcmp.ge.f32.partialorder %v2783, 0.0
  %vm3964 = vcmp.ge.f32.partialorder %v2786, 0.0
  %vm3965 = vcmp.ge.f32.partialorder %v2791, 0.0
  %vm3966 = vcmp.ge.f32.partialorder %v2794, 0.0
  %vm3967 = vcmp.ge.f32.partialorder %v2799, 0.0
  %vm3968 = vcmp.ge.f32.partialorder %v2802, 0.0
  %vm3969 = vcmp.ge.f32.partialorder %v2807, 0.0
  %vm3970 = vcmp.ge.f32.partialorder %v2810, 0.0
  %vm3971 = vcmp.ge.f32.partialorder %v2815, 0.0
  %vm3972 = vcmp.ge.f32.partialorder %v2818, 0.0
  %vm3973 = vcmp.ge.f32.partialorder %v2823, 0.0
  %vm3974 = vcmp.ge.f32.partialorder %v2826, 0.0
  %vm3975 = vcmp.ge.f32.partialorder %v2831, 0.0
  %vm3976 = vcmp.ge.f32.partialorder %v2834, 0.0
  %vm3977 = vcmp.ge.f32.partialorder %v2839, 0.0
  %vm3978 = vcmp.ge.f32.partialorder %v2842, 0.0
  %vm3979 = vcmp.ge.f32.partialorder %v2865, 0.0
  %vm3980 = vcmp.ge.f32.partialorder %v2868, 0.0
  %vm3981 = vcmp.ge.f32.partialorder %v2873, 0.0
  %vm3982 = vcmp.ge.f32.partialorder %v2876, 0.0
  %vm3983 = vcmp.ge.f32.partialorder %v2881, 0.0
  %vm3984 = vcmp.ge.f32.partialorder %v2884, 0.0
  %vm3985 = vcmp.ge.f32.partialorder %v2889, 0.0
  %vm3986 = vcmp.ge.f32.partialorder %v2892, 0.0
  %vm3987 = vcmp.ge.f32.partialorder %v2897, 0.0
  %vm3988 = vcmp.ge.f32.partialorder %v2900, 0.0
  %vm3989 = vcmp.ge.f32.partialorder %v2905, 0.0
  %vm3990 = vcmp.ge.f32.partialorder %v2908, 0.0
  %vm3991 = vcmp.ge.f32.partialorder %v2913, 0.0
  %vm3992 = vcmp.ge.f32.partialorder %v2916, 0.0
  %vm3993 = vcmp.ge.f32.partialorder %v2921, 0.0
  %vm3994 = vcmp.ge.f32.partialorder %v2924, 0.0
  %vm3995 = vcmp.ge.f32.partialorder %v2929, 0.0
  %vm3996 = vcmp.ge.f32.partialorder %v2932, 0.0
  %vm3997 = vcmp.ge.f32.partialorder %v2955, 0.0
  %vm3998 = vcmp.ge.f32.partialorder %v2958, 0.0
  %vm3999 = vcmp.ge.f32.partialorder %v2963, 0.0
  %vm4000 = vcmp.ge.f32.partialorder %v2966, 0.0
  %vm4001 = vcmp.ge.f32.partialorder %v2971, 0.0
  %vm4002 = vcmp.ge.f32.partialorder %v2974, 0.0
  %vm4003 = vcmp.ge.f32.partialorder %v2979, 0.0
  %vm4004 = vcmp.ge.f32.partialorder %v2982, 0.0
  %vm4005 = vcmp.ge.f32.partialorder %v2987, 0.0
  %vm4006 = vcmp.ge.f32.partialorder %v2990, 0.0
  %vm4007 = vcmp.ge.f32.partialorder %v2995, 0.0
  %vm4008 = vcmp.ge.f32.partialorder %v2998, 0.0
  %vm4009 = vcmp.ge.f32.partialorder %v3003, 0.0
  %vm4010 = vcmp.ge.f32.partialorder %v3006, 0.0
  %vm4011 = vcmp.ge.f32.partialorder %v3011, 0.0
  %vm4012 = vcmp.ge.f32.partialorder %v3014, 0.0
  %vm4013 = vcmp.ge.f32.partialorder %v3019, 0.0
  %vm4014 = vcmp.ge.f32.partialorder %v3022, 0.0
  %vm4015 = vcmp.ge.f32.partialorder %v3045, 0.0
  %vm4016 = vcmp.ge.f32.partialorder %v3048, 0.0
  %vm4017 = vcmp.ge.f32.partialorder %v3053, 0.0
  %vm4018 = vcmp.ge.f32.partialorder %v3056, 0.0
  %vm4019 = vcmp.ge.f32.partialorder %v3061, 0.0
  %vm4020 = vcmp.ge.f32.partialorder %v3064, 0.0
  %vm4021 = vcmp.ge.f32.partialorder %v3069, 0.0
  %vm4022 = vcmp.ge.f32.partialorder %v3072, 0.0
  %vm4023 = vcmp.ge.f32.partialorder %v3077, 0.0
  %vm4024 = vcmp.ge.f32.partialorder %v3080, 0.0
  %vm4025 = vcmp.ge.f32.partialorder %v3085, 0.0
  %vm4026 = vcmp.ge.f32.partialorder %v3088, 0.0
  %vm4027 = vcmp.ge.f32.partialorder %v3093, 0.0
  %vm4028 = vcmp.ge.f32.partialorder %v3096, 0.0
  %vm4029 = vcmp.ge.f32.partialorder %v3101, 0.0
  %vm4030 = vcmp.ge.f32.partialorder %v3104, 0.0
  %vm4031 = vcmp.ge.f32.partialorder %v3109, 0.0
  %vm4032 = vcmp.ge.f32.partialorder %v3112, 0.0
  %vm4033 = vcmp.ge.f32.partialorder %v3135, 0.0
  %vm4034 = vcmp.ge.f32.partialorder %v3138, 0.0
  %vm4035 = vcmp.ge.f32.partialorder %v3143, 0.0
  %vm4036 = vcmp.ge.f32.partialorder %v3146, 0.0
  %vm4037 = vcmp.ge.f32.partialorder %v3151, 0.0
  %vm4038 = vcmp.ge.f32.partialorder %v3154, 0.0
  %vm4039 = vcmp.ge.f32.partialorder %v3159, 0.0
  %vm4040 = vcmp.ge.f32.partialorder %v3162, 0.0
  %vm4041 = vcmp.ge.f32.partialorder %v3167, 0.0
  %vm4042 = vcmp.ge.f32.partialorder %v3170, 0.0
  %vm4043 = vcmp.ge.f32.partialorder %v3175, 0.0
  %vm4044 = vcmp.ge.f32.partialorder %v3178, 0.0
  %vm4045 = vcmp.ge.f32.partialorder %v3183, 0.0
  %vm4046 = vcmp.ge.f32.partialorder %v3186, 0.0
  %vm4047 = vcmp.ge.f32.partialorder %v3191, 0.0
  %vm4048 = vcmp.ge.f32.partialorder %v3194, 0.0
  %vm4049 = vcmp.ge.f32.partialorder %v3199, 0.0
  %vm4050 = vcmp.ge.f32.partialorder %v3202, 0.0
  %vm4051 = vcmp.ge.f32.partialorder %v3225, 0.0
  %vm4052 = vcmp.ge.f32.partialorder %v3228, 0.0
  %vm4053 = vcmp.ge.f32.partialorder %v3233, 0.0
  %vm4054 = vcmp.ge.f32.partialorder %v3236, 0.0
  %vm4055 = vcmp.ge.f32.partialorder %v3241, 0.0
  %vm4056 = vcmp.ge.f32.partialorder %v3244, 0.0
  %vm4057 = vcmp.ge.f32.partialorder %v3249, 0.0
  %vm4058 = vcmp.ge.f32.partialorder %v3252, 0.0
  %vm4059 = vcmp.ge.f32.partialorder %v3257, 0.0
  %vm4060 = vcmp.ge.f32.partialorder %v3260, 0.0
  %vm4061 = vcmp.ge.f32.partialorder %v3265, 0.0
  %vm4062 = vcmp.ge.f32.partialorder %v3268, 0.0
  %vm4063 = vcmp.ge.f32.partialorder %v3273, 0.0
  %vm4064 = vcmp.ge.f32.partialorder %v3276, 0.0
  %vm4065 = vcmp.ge.f32.partialorder %v3281, 0.0
  %vm4066 = vcmp.ge.f32.partialorder %v3284, 0.0
  %vm4067 = vcmp.ge.f32.partialorder %v3289, 0.0
  %vm4068 = vcmp.ge.f32.partialorder %v3292, 0.0
  %vm4069 = vcmp.ge.f32.partialorder %v3315, 0.0
  %vm4070 = vcmp.ge.f32.partialorder %v3318, 0.0
  %vm4071 = vcmp.ge.f32.partialorder %v3323, 0.0
  %vm4072 = vcmp.ge.f32.partialorder %v3326, 0.0
  %vm4073 = vcmp.ge.f32.partialorder %v3331, 0.0
  %vm4074 = vcmp.ge.f32.partialorder %v3334, 0.0
  %vm4075 = vcmp.ge.f32.partialorder %v3339, 0.0
  %vm4076 = vcmp.ge.f32.partialorder %v3342, 0.0
  %vm4077 = vcmp.ge.f32.partialorder %v3347, 0.0
  %vm4078 = vcmp.ge.f32.partialorder %v3350, 0.0
  %vm4079 = vcmp.ge.f32.partialorder %v3355, 0.0
  %vm4080 = vcmp.ge.f32.partialorder %v3358, 0.0
  %vm4081 = vcmp.ge.f32.partialorder %v3363, 0.0
  %vm4082 = vcmp.ge.f32.partialorder %v3366, 0.0
  %vm4083 = vcmp.ge.f32.partialorder %v3371, 0.0
  %vm4084 = vcmp.ge.f32.partialorder %v3374, 0.0
  %vm4085 = vcmp.ge.f32.partialorder %v3379, 0.0
  %vm4086 = vcmp.ge.f32.partialorder %v3382, 0.0
  %vm4087 = vcmp.ge.f32.partialorder %v3405, 0.0
  %vm4088 = vcmp.ge.f32.partialorder %v3408, 0.0
  %vm4089 = vcmp.ge.f32.partialorder %v3413, 0.0
  %vm4090 = vcmp.ge.f32.partialorder %v3416, 0.0
  %vm4091 = vcmp.ge.f32.partialorder %v3421, 0.0
  %vm4092 = vcmp.ge.f32.partialorder %v3424, 0.0
  %vm4093 = vcmp.ge.f32.partialorder %v3429, 0.0
  %vm4094 = vcmp.ge.f32.partialorder %v3432, 0.0
  %vm4095 = vcmp.ge.f32.partialorder %v3437, 0.0
  %vm4096 = vcmp.ge.f32.partialorder %v3440, 0.0
  %vm4097 = vcmp.ge.f32.partialorder %v3445, 0.0
  %vm4098 = vcmp.ge.f32.partialorder %v3448, 0.0
  %vm4099 = vcmp.ge.f32.partialorder %v3453, 0.0
  %vm4100 = vcmp.ge.f32.partialorder %v3456, 0.0
  %vm4101 = vcmp.ge.f32.partialorder %v3461, 0.0
  %vm4102 = vcmp.ge.f32.partialorder %v3464, 0.0
  %vm4103 = vcmp.ge.f32.partialorder %v3469, 0.0
  %vm4104 = vcmp.ge.f32.partialorder %v3472, 0.0
  %vm4105 = vcmp.ge.f32.partialorder %v3495, 0.0
  %vm4106 = vcmp.ge.f32.partialorder %v3498, 0.0
  %vm4107 = vcmp.ge.f32.partialorder %v3503, 0.0
  %vm4108 = vcmp.ge.f32.partialorder %v3506, 0.0
  %vm4109 = vcmp.ge.f32.partialorder %v3511, 0.0
  %vm4110 = vcmp.ge.f32.partialorder %v3514, 0.0
  %vm4111 = vcmp.ge.f32.partialorder %v3519, 0.0
  %vm4112 = vcmp.ge.f32.partialorder %v3522, 0.0
  %vm4113 = vcmp.ge.f32.partialorder %v3527, 0.0
  %vm4114 = vcmp.ge.f32.partialorder %v3530, 0.0
  %vm4115 = vcmp.ge.f32.partialorder %v3535, 0.0
  %vm4116 = vcmp.ge.f32.partialorder %v3538, 0.0
  %vm4117 = vcmp.ge.f32.partialorder %v3543, 0.0
  %vm4118 = vcmp.ge.f32.partialorder %v3546, 0.0
  %vm4119 = vcmp.ge.f32.partialorder %v3551, 0.0
  %vm4120 = vcmp.ge.f32.partialorder %v3554, 0.0
  %vm4121 = vcmp.ge.f32.partialorder %v3559, 0.0
  %vm4122 = vcmp.ge.f32.partialorder %v3562, 0.0
  %vm4123 = vcmp.ge.f32.partialorder %v3585, 0.0
  %vm4124 = vcmp.ge.f32.partialorder %v3588, 0.0
  %vm4125 = vcmp.ge.f32.partialorder %v3593, 0.0
  %vm4126 = vcmp.ge.f32.partialorder %v3596, 0.0
  %vm4127 = vcmp.ge.f32.partialorder %v3601, 0.0
  %vm4128 = vcmp.ge.f32.partialorder %v3604, 0.0
  %vm4129 = vcmp.ge.f32.partialorder %v3609, 0.0
  %vm4130 = vcmp.ge.f32.partialorder %v3612, 0.0
  %vm4131 = vcmp.ge.f32.partialorder %v3617, 0.0
  %vm4132 = vcmp.ge.f32.partialorder %v3620, 0.0
  %vm4133 = vcmp.ge.f32.partialorder %v3625, 0.0
  %vm4134 = vcmp.ge.f32.partialorder %v3628, 0.0
  %vm4135 = vcmp.ge.f32.partialorder %v3633, 0.0
  %vm4136 = vcmp.ge.f32.partialorder %v3636, 0.0
  %vm4137 = vcmp.ge.f32.partialorder %v3641, 0.0
  %vm4138 = vcmp.ge.f32.partialorder %v3644, 0.0
  %vm4139 = vcmp.ge.f32.partialorder %v3649, 0.0
  %vm4140 = vcmp.ge.f32.partialorder %v3652, 0.0
  %vm4141 = vcmp.ge.f32.partialorder %v3675, 0.0
  %vm4142 = vcmp.ge.f32.partialorder %v3678, 0.0
  %vm4143 = vcmp.ge.f32.partialorder %v3683, 0.0
  %vm4144 = vcmp.ge.f32.partialorder %v3686, 0.0
  %vm4145 = vcmp.ge.f32.partialorder %v3691, 0.0
  %vm4146 = vcmp.ge.f32.partialorder %v3694, 0.0
  %vm4147 = vcmp.ge.f32.partialorder %v3699, 0.0
  %vm4148 = vcmp.ge.f32.partialorder %v3702, 0.0
  %vm4149 = vcmp.ge.f32.partialorder %v3707, 0.0
  %vm4150 = vcmp.ge.f32.partialorder %v3710, 0.0
  %vm4151 = vcmp.ge.f32.partialorder %v3715, 0.0
  %vm4152 = vcmp.ge.f32.partialorder %v3718, 0.0
  %vm4153 = vcmp.ge.f32.partialorder %v3723, 0.0
  %vm4154 = vcmp.ge.f32.partialorder %v3726, 0.0
  %vm4155 = vcmp.ge.f32.partialorder %v3731, 0.0
  %vm4156 = vcmp.ge.f32.partialorder %v3734, 0.0
  %vm4157 = vcmp.ge.f32.partialorder %v3739, 0.0
  %vm4158 = vcmp.ge.f32.partialorder %v3742, 0.0
  %vm4159 = vcmp.ge.f32.partialorder %v3765, 0.0
  %vm4160 = vcmp.ge.f32.partialorder %v3768, 0.0
  %vm4161 = vcmp.ge.f32.partialorder %v3773, 0.0
  %vm4162 = vcmp.ge.f32.partialorder %v3776, 0.0
  %vm4163 = vcmp.ge.f32.partialorder %v3781, 0.0
  %vm4164 = vcmp.ge.f32.partialorder %v3784, 0.0
  %vm4165 = vcmp.ge.f32.partialorder %v3789, 0.0
  %vm4166 = vcmp.ge.f32.partialorder %v3792, 0.0
  %vm4167 = vcmp.ge.f32.partialorder %v3797, 0.0
  %vm4168 = vcmp.ge.f32.partialorder %v3800, 0.0
  %vm4169 = vcmp.ge.f32.partialorder %v3805, 0.0
  %vm4170 = vcmp.ge.f32.partialorder %v3808, 0.0
  %vm4171 = vcmp.ge.f32.partialorder %v3813, 0.0
  %vm4172 = vcmp.ge.f32.partialorder %v3816, 0.0
  %vm4173 = vcmp.ge.f32.partialorder %v3821, 0.0
  %vm4174 = vcmp.ge.f32.partialorder %v3824, 0.0
  %vm4175 = vcmp.ge.f32.partialorder %v3829, 0.0
  %vm4176 = vcmp.ge.f32.partialorder %v3832, 0.0
  %v4177 = vmul.f32 %v2235, 0.2
  %v4178 = vmul.f32 %v2238, 0.2
  %v4179 = vmul.f32 %v2243, 0.2
  %v4180 = vmul.f32 %v2246, 0.2
  %v4181 = vmul.f32 %v2251, 0.2
  %v4182 = vmul.f32 %v2254, 0.2
  %v4183 = vmul.f32 %v2259, 0.2
  %v4184 = vmul.f32 %v2262, 0.2
  %v4185 = vmul.f32 %v2267, 0.2
  %v4186 = vmul.f32 %v2270, 0.2
  %v4187 = vmul.f32 %v2275, 0.2
  %v4188 = vmul.f32 %v2278, 0.2
  %v4189 = vmul.f32 %v2283, 0.2
  %v4190 = vmul.f32 %v2286, 0.2
  %v4191 = vmul.f32 %v2291, 0.2
  %v4192 = vmul.f32 %v2294, 0.2
  %v4193 = vmul.f32 %v2299, 0.2
  %v4194 = vmul.f32 %v2302, 0.2
  %v4195 = vmul.f32 %v2325, 0.2
  %v4196 = vmul.f32 %v2328, 0.2
  %v4197 = vmul.f32 %v2333, 0.2
  %v4198 = vmul.f32 %v2336, 0.2
  %v4199 = vmul.f32 %v2341, 0.2
  %v4200 = vmul.f32 %v2344, 0.2
  %v4201 = vmul.f32 %v2349, 0.2
  %v4202 = vmul.f32 %v2352, 0.2
  %v4203 = vmul.f32 %v2357, 0.2
  %v4204 = vmul.f32 %v2360, 0.2
  %v4205 = vmul.f32 %v2365, 0.2
  %v4206 = vmul.f32 %v2368, 0.2
  %v4207 = vmul.f32 %v2373, 0.2
  %v4208 = vmul.f32 %v2376, 0.2
  %v4209 = vmul.f32 %v2381, 0.2
  %v4210 = vmul.f32 %v2384, 0.2
  %v4211 = vmul.f32 %v2389, 0.2
  %v4212 = vmul.f32 %v2392, 0.2
  %v4213 = vmul.f32 %v2415, 0.2
  %v4214 = vmul.f32 %v2418, 0.2
  %v4215 = vmul.f32 %v2423, 0.2
  %v4216 = vmul.f32 %v2426, 0.2
  %v4217 = vmul.f32 %v2431, 0.2
  %v4218 = vmul.f32 %v2434, 0.2
  %v4219 = vmul.f32 %v2439, 0.2
  %v4220 = vmul.f32 %v2442, 0.2
  %v4221 = vmul.f32 %v2447, 0.2
  %v4222 = vmul.f32 %v2450, 0.2
  %v4223 = vmul.f32 %v2455, 0.2
  %v4224 = vmul.f32 %v2458, 0.2
  %v4225 = vmul.f32 %v2463, 0.2
  %v4226 = vmul.f32 %v2466, 0.2
  %v4227 = vmul.f32 %v2471, 0.2
  %v4228 = vmul.f32 %v2474, 0.2
  %v4229 = vmul.f32 %v2479, 0.2
  %v4230 = vmul.f32 %v2482, 0.2
  %v4231 = vmul.f32 %v2505, 0.2
  %v4232 = vmul.f32 %v2508, 0.2
  %v4233 = vmul.f32 %v2513, 0.2
  %v4234 = vmul.f32 %v2516, 0.2
  %v4235 = vmul.f32 %v2521, 0.2
  %v4236 = vmul.f32 %v2524, 0.2
  %v4237 = vmul.f32 %v2529, 0.2
  %v4238 = vmul.f32 %v2532, 0.2
  %v4239 = vmul.f32 %v2537, 0.2
  %v4240 = vmul.f32 %v2540, 0.2
  %v4241 = vmul.f32 %v2545, 0.2
  %v4242 = vmul.f32 %v2548, 0.2
  %v4243 = vmul.f32 %v2553, 0.2
  %v4244 = vmul.f32 %v2556, 0.2
  %v4245 = vmul.f32 %v2561, 0.2
  %v4246 = vmul.f32 %v2564, 0.2
  %v4247 = vmul.f32 %v2569, 0.2
  %v4248 = vmul.f32 %v2572, 0.2
  %v4249 = vmul.f32 %v2595, 0.2
  %v4250 = vmul.f32 %v2598, 0.2
  %v4251 = vmul.f32 %v2603, 0.2
  %v4252 = vmul.f32 %v2606, 0.2
  %v4253 = vmul.f32 %v2611, 0.2
  %v4254 = vmul.f32 %v2614, 0.2
  %v4255 = vmul.f32 %v2619, 0.2
  %v4256 = vmul.f32 %v2622, 0.2
  %v4257 = vmul.f32 %v2627, 0.2
  %v4258 = vmul.f32 %v2630, 0.2
  %v4259 = vmul.f32 %v2635, 0.2
  %v4260 = vmul.f32 %v2638, 0.2
  %v4261 = vmul.f32 %v2643, 0.2
  %v4262 = vmul.f32 %v2646, 0.2
  %v4263 = vmul.f32 %v2651, 0.2
  %v4264 = vmul.f32 %v2654, 0.2
  %v4265 = vmul.f32 %v2659, 0.2
  %v4266 = vmul.f32 %v2662, 0.2
  %v4267 = vmul.f32 %v2685, 0.2
  %v4268 = vmul.f32 %v2688, 0.2
  %v4269 = vmul.f32 %v2693, 0.2
  %v4270 = vmul.f32 %v2696, 0.2
  %v4271 = vmul.f32 %v2701, 0.2
  %v4272 = vmul.f32 %v2704, 0.2
  %v4273 = vmul.f32 %v2709, 0.2
  %v4274 = vmul.f32 %v2712, 0.2
  %v4275 = vmul.f32 %v2717, 0.2
  %v4276 = vmul.f32 %v2720, 0.2
  %v4277 = vmul.f32 %v2725, 0.2
  %v4278 = vmul.f32 %v2728, 0.2
  %v4279 = vmul.f32 %v2733, 0.2
  %v4280 = vmul.f32 %v2736, 0.2
  %v4281 = vmul.f32 %v2741, 0.2
  %v4282 = vmul.f32 %v2744, 0.2
  %v4283 = vmul.f32 %v2749, 0.2
  %v4284 = vmul.f32 %v2752, 0.2
  %v4285 = vmul.f32 %v2775, 0.2
  %v4286 = vmul.f32 %v2778, 0.2
  %v4287 = vmul.f32 %v2783, 0.2
  %v4288 = vmul.f32 %v2786, 0.2
  %v4289 = vmul.f32 %v2791, 0.2
  %v4290 = vmul.f32 %v2794, 0.2
  %v4291 = vmul.f32 %v2799, 0.2
  %v4292 = vmul.f32 %v2802, 0.2
  %v4293 = vmul.f32 %v2807, 0.2
  %v4294 = vmul.f32 %v2810, 0.2
  %v4295 = vmul.f32 %v2815, 0.2
  %v4296 = vmul.f32 %v2818, 0.2
  %v4297 = vmul.f32 %v2823, 0.2
  %v4298 = vmul.f32 %v2826, 0.2
  %v4299 = vmul.f32 %v2831, 0.2
  %v4300 = vmul.f32 %v2834, 0.2
  %v4301 = vmul.f32 %v2839, 0.2
  %v4302 = vmul.f32 %v2842, 0.2
  %v4303 = vmul.f32 %v2865, 0.2
  %v4304 = vmul.f32 %v2868, 0.2
  %v4305 = vmul.f32 %v2873, 0.2
  %v4306 = vmul.f32 %v2876, 0.2
  %v4307 = vmul.f32 %v2881, 0.2
  %v4308 = vmul.f32 %v2884, 0.2
  %v4309 = vmul.f32 %v2889, 0.2
  %v4310 = vmul.f32 %v2892, 0.2
  %v4311 = vmul.f32 %v2897, 0.2
  %v4312 = vmul.f32 %v2900, 0.2
  %v4313 = vmul.f32 %v2905, 0.2
  %v4314 = vmul.f32 %v2908, 0.2
  %v4315 = vmul.f32 %v2913, 0.2
  %v4316 = vmul.f32 %v2916, 0.2
  %v4317 = vmul.f32 %v2921, 0.2
  %v4318 = vmul.f32 %v2924, 0.2
  %v4319 = vmul.f32 %v2929, 0.2
  %v4320 = vmul.f32 %v2932, 0.2
  %v4321 = vmul.f32 %v2955, 0.2
  %v4322 = vmul.f32 %v2958, 0.2
  %v4323 = vmul.f32 %v2963, 0.2
  %v4324 = vmul.f32 %v2966, 0.2
  %v4325 = vmul.f32 %v2971, 0.2
  %v4326 = vmul.f32 %v2974, 0.2
  %v4327 = vmul.f32 %v2979, 0.2
  %v4328 = vmul.f32 %v2982, 0.2
  %v4329 = vmul.f32 %v2987, 0.2
  %v4330 = vmul.f32 %v2990, 0.2
  %v4331 = vmul.f32 %v2995, 0.2
  %v4332 = vmul.f32 %v2998, 0.2
  %v4333 = vmul.f32 %v3003, 0.2
  %v4334 = vmul.f32 %v3006, 0.2
  %v4335 = vmul.f32 %v3011, 0.2
  %v4336 = vmul.f32 %v3014, 0.2
  %v4337 = vmul.f32 %v3019, 0.2
  %v4338 = vmul.f32 %v3022, 0.2
  %v4339 = vmul.f32 %v3045, 0.2
  %v4340 = vmul.f32 %v3048, 0.2
  %v4341 = vmul.f32 %v3053, 0.2
  %v4342 = vmul.f32 %v3056, 0.2
  %v4343 = vmul.f32 %v3061, 0.2
  %v4344 = vmul.f32 %v3064, 0.2
  %v4345 = vmul.f32 %v3069, 0.2
  %v4346 = vmul.f32 %v3072, 0.2
  %v4347 = vmul.f32 %v3077, 0.2
  %v4348 = vmul.f32 %v3080, 0.2
  %v4349 = vmul.f32 %v3085, 0.2
  %v4350 = vmul.f32 %v3088, 0.2
  %v4351 = vmul.f32 %v3093, 0.2
  %v4352 = vmul.f32 %v3096, 0.2
  %v4353 = vmul.f32 %v3101, 0.2
  %v4354 = vmul.f32 %v3104, 0.2
  %v4355 = vmul.f32 %v3109, 0.2
  %v4356 = vmul.f32 %v3112, 0.2
  %v4357 = vmul.f32 %v3135, 0.2
  %v4358 = vmul.f32 %v3138, 0.2
  %v4359 = vmul.f32 %v3143, 0.2
  %v4360 = vmul.f32 %v3146, 0.2
  %v4361 = vmul.f32 %v3151, 0.2
  %v4362 = vmul.f32 %v3154, 0.2
  %v4363 = vmul.f32 %v3159, 0.2
  %v4364 = vmul.f32 %v3162, 0.2
  %v4365 = vmul.f32 %v3167, 0.2
  %v4366 = vmul.f32 %v3170, 0.2
  %v4367 = vmul.f32 %v3175, 0.2
  %v4368 = vmul.f32 %v3178, 0.2
  %v4369 = vmul.f32 %v3183, 0.2
  %v4370 = vmul.f32 %v3186, 0.2
  %v4371 = vmul.f32 %v3191, 0.2
  %v4372 = vmul.f32 %v3194, 0.2
  %v4373 = vmul.f32 %v3199, 0.2
  %v4374 = vmul.f32 %v3202, 0.2
  %v4375 = vmul.f32 %v3225, 0.2
  %v4376 = vmul.f32 %v3228, 0.2
  %v4377 = vmul.f32 %v3233, 0.2
  %v4378 = vmul.f32 %v3236, 0.2
  %v4379 = vmul.f32 %v3241, 0.2
  %v4380 = vmul.f32 %v3244, 0.2
  %v4381 = vmul.f32 %v3249, 0.2
  %v4382 = vmul.f32 %v3252, 0.2
  %v4383 = vmul.f32 %v3257, 0.2
  %v4384 = vmul.f32 %v3260, 0.2
  %v4385 = vmul.f32 %v3265, 0.2
  %v4386 = vmul.f32 %v3268, 0.2
  %v4387 = vmul.f32 %v3273, 0.2
  %v4388 = vmul.f32 %v3276, 0.2
  %v4389 = vmul.f32 %v3281, 0.2
  %v4390 = vmul.f32 %v3284, 0.2
  %v4391 = vmul.f32 %v3289, 0.2
  %v4392 = vmul.f32 %v3292, 0.2
  %v4393 = vmul.f32 %v3315, 0.2
  %v4394 = vmul.f32 %v3318, 0.2
  %v4395 = vmul.f32 %v3323, 0.2
  %v4396 = vmul.f32 %v3326, 0.2
  %v4397 = vmul.f32 %v3331, 0.2
  %v4398 = vmul.f32 %v3334, 0.2
  %v4399 = vmul.f32 %v3339, 0.2
  %v4400 = vmul.f32 %v3342, 0.2
  %v4401 = vmul.f32 %v3347, 0.2
  %v4402 = vmul.f32 %v3350, 0.2
  %v4403 = vmul.f32 %v3355, 0.2
  %v4404 = vmul.f32 %v3358, 0.2
  %v4405 = vmul.f32 %v3363, 0.2
  %v4406 = vmul.f32 %v3366, 0.2
  %v4407 = vmul.f32 %v3371, 0.2
  %v4408 = vmul.f32 %v3374, 0.2
  %v4409 = vmul.f32 %v3379, 0.2
  %v4410 = vmul.f32 %v3382, 0.2
  %v4411 = vmul.f32 %v3405, 0.2
  %v4412 = vmul.f32 %v3408, 0.2
  %v4413 = vmul.f32 %v3413, 0.2
  %v4414 = vmul.f32 %v3416, 0.2
  %v4415 = vmul.f32 %v3421, 0.2
  %v4416 = vmul.f32 %v3424, 0.2
  %v4417 = vmul.f32 %v3429, 0.2
  %v4418 = vmul.f32 %v3432, 0.2
  %v4419 = vmul.f32 %v3437, 0.2
  %v4420 = vmul.f32 %v3440, 0.2
  %v4421 = vmul.f32 %v3445, 0.2
  %v4422 = vmul.f32 %v3448, 0.2
  %v4423 = vmul.f32 %v3453, 0.2
  %v4424 = vmul.f32 %v3456, 0.2
  %v4425 = vmul.f32 %v3461, 0.2
  %v4426 = vmul.f32 %v3464, 0.2
  %v4427 = vmul.f32 %v3469, 0.2
  %v4428 = vmul.f32 %v3472, 0.2
  %v4429 = vmul.f32 %v3495, 0.2
  %v4430 = vmul.f32 %v3498, 0.2
  %v4431 = vmul.f32 %v3503, 0.2
  %v4432 = vmul.f32 %v3506, 0.2
  %v4433 = vmul.f32 %v3511, 0.2
  %v4434 = vmul.f32 %v3514, 0.2
  %v4435 = vmul.f32 %v3519, 0.2
  %v4436 = vmul.f32 %v3522, 0.2
  %v4437 = vmul.f32 %v3527, 0.2
  %v4438 = vmul.f32 %v3530, 0.2
  %v4439 = vmul.f32 %v3535, 0.2
  %v4440 = vmul.f32 %v3538, 0.2
  %v4441 = vmul.f32 %v3543, 0.2
  %v4442 = vmul.f32 %v3546, 0.2
  %v4443 = vmul.f32 %v3551, 0.2
  %v4444 = vmul.f32 %v3554, 0.2
  %v4445 = vmul.f32 %v3559, 0.2
  %v4446 = vmul.f32 %v3562, 0.2
  %v4447 = vmul.f32 %v3585, 0.2
  %v4448 = vmul.f32 %v3588, 0.2
  %v4449 = vmul.f32 %v3593, 0.2
  %v4450 = vmul.f32 %v3596, 0.2
  %v4451 = vmul.f32 %v3601, 0.2
  %v4452 = vmul.f32 %v3604, 0.2
  %v4453 = vmul.f32 %v3609, 0.2
  %v4454 = vmul.f32 %v3612, 0.2
  %v4455 = vmul.f32 %v3617, 0.2
  %v4456 = vmul.f32 %v3620, 0.2
  %v4457 = vmul.f32 %v3625, 0.2
  %v4458 = vmul.f32 %v3628, 0.2
  %v4459 = vmul.f32 %v3633, 0.2
  %v4460 = vmul.f32 %v3636, 0.2
  %v4461 = vmul.f32 %v3641, 0.2
  %v4462 = vmul.f32 %v3644, 0.2
  %v4463 = vmul.f32 %v3649, 0.2
  %v4464 = vmul.f32 %v3652, 0.2
  %v4465 = vmul.f32 %v3675, 0.2
  %v4466 = vmul.f32 %v3678, 0.2
  %v4467 = vmul.f32 %v3683, 0.2
  %v4468 = vmul.f32 %v3686, 0.2
  %v4469 = vmul.f32 %v3691, 0.2
  %v4470 = vmul.f32 %v3694, 0.2
  %v4471 = vmul.f32 %v3699, 0.2
  %v4472 = vmul.f32 %v3702, 0.2
  %v4473 = vmul.f32 %v3707, 0.2
  %v4474 = vmul.f32 %v3710, 0.2
  %v4475 = vmul.f32 %v3715, 0.2
  %v4476 = vmul.f32 %v3718, 0.2
  %v4477 = vmul.f32 %v3723, 0.2
  %v4478 = vmul.f32 %v3726, 0.2
  %v4479 = vmul.f32 %v3731, 0.2
  %v4480 = vmul.f32 %v3734, 0.2
  %v4481 = vmul.f32 %v3739, 0.2
  %v4482 = vmul.f32 %v3742, 0.2
  %v4483 = vmul.f32 %v3765, 0.2
  %v4484 = vmul.f32 %v3768, 0.2
  %v4485 = vmul.f32 %v3773, 0.2
  %v4486 = vmul.f32 %v3776, 0.2
  %v4487 = vmul.f32 %v3781, 0.2
  %v4488 = vmul.f32 %v3784, 0.2
  %v4489 = vmul.f32 %v3789, 0.2
  %v4490 = vmul.f32 %v3792, 0.2
  %v4491 = vmul.f32 %v3797, 0.2
  %v4492 = vmul.f32 %v3800, 0.2
  %v4493 = vmul.f32 %v3805, 0.2
  %v4494 = vmul.f32 %v3808, 0.2
  %v4495 = vmul.f32 %v3813, 0.2
  %v4496 = vmul.f32 %v3816, 0.2
  %v4497 = vmul.f32 %v3821, 0.2
  %v4498 = vmul.f32 %v3824, 0.2
  %v4499 = vmul.f32 %v3829, 0.2
  %v4500 = vmul.f32 %v3832, 0.2
  %v4501 = vsel %vm3853, %v2235, %v4177
  %v4502 = vsel %vm3854, %v2238, %v4178
  %v4503 = vsel %vm3855, %v2243, %v4179
  %v4504 = vsel %vm3856, %v2246, %v4180
  %v4505 = vsel %vm3857, %v2251, %v4181
  %v4506 = vsel %vm3858, %v2254, %v4182
  %v4507 = vsel %vm3859, %v2259, %v4183
  %v4508 = vsel %vm3860, %v2262, %v4184
  %v4509 = vsel %vm3861, %v2267, %v4185
  %v4510 = vsel %vm3862, %v2270, %v4186
  %v4511 = vsel %vm3863, %v2275, %v4187
  %v4512 = vsel %vm3864, %v2278, %v4188
  %v4513 = vsel %vm3865, %v2283, %v4189
  %v4514 = vsel %vm3866, %v2286, %v4190
  %v4515 = vsel %vm3867, %v2291, %v4191
  %v4516 = vsel %vm3868, %v2294, %v4192
  %v4517 = vsel %vm3869, %v2299, %v4193
  %v4518 = vsel %vm3870, %v2302, %v4194
  %v4519 = vsel %vm3871, %v2325, %v4195
  %v4520 = vsel %vm3872, %v2328, %v4196
  %v4521 = vsel %vm3873, %v2333, %v4197
  %v4522 = vsel %vm3874, %v2336, %v4198
  %v4523 = vsel %vm3875, %v2341, %v4199
  %v4524 = vsel %vm3876, %v2344, %v4200
  %v4525 = vsel %vm3877, %v2349, %v4201
  %v4526 = vsel %vm3878, %v2352, %v4202
  %v4527 = vsel %vm3879, %v2357, %v4203
  %v4528 = vsel %vm3880, %v2360, %v4204
  %v4529 = vsel %vm3881, %v2365, %v4205
  %v4530 = vsel %vm3882, %v2368, %v4206
  %v4531 = vsel %vm3883, %v2373, %v4207
  %v4532 = vsel %vm3884, %v2376, %v4208
  %v4533 = vsel %vm3885, %v2381, %v4209
  %v4534 = vsel %vm3886, %v2384, %v4210
  %v4535 = vsel %vm3887, %v2389, %v4211
  %v4536 = vsel %vm3888, %v2392, %v4212
  %v4537 = vsel %vm3889, %v2415, %v4213
  %v4538 = vsel %vm3890, %v2418, %v4214
  %v4539 = vsel %vm3891, %v2423, %v4215
  %v4540 = vsel %vm3892, %v2426, %v4216
  %v4541 = vsel %vm3893, %v2431, %v4217
  %v4542 = vsel %vm3894, %v2434, %v4218
  %v4543 = vsel %vm3895, %v2439, %v4219
  %v4544 = vsel %vm3896, %v2442, %v4220
  %v4545 = vsel %vm3897, %v2447, %v4221
  %v4546 = vsel %vm3898, %v2450, %v4222
  %v4547 = vsel %vm3899, %v2455, %v4223
  %v4548 = vsel %vm3900, %v2458, %v4224
  %v4549 = vsel %vm3901, %v2463, %v4225
  %v4550 = vsel %vm3902, %v2466, %v4226
  %v4551 = vsel %vm3903, %v2471, %v4227
  %v4552 = vsel %vm3904, %v2474, %v4228
  %v4553 = vsel %vm3905, %v2479, %v4229
  %v4554 = vsel %vm3906, %v2482, %v4230
  %v4555 = vsel %vm3907, %v2505, %v4231
  %v4556 = vsel %vm3908, %v2508, %v4232
  %v4557 = vsel %vm3909, %v2513, %v4233
  %v4558 = vsel %vm3910, %v2516, %v4234
  %v4559 = vsel %vm3911, %v2521, %v4235
  %v4560 = vsel %vm3912, %v2524, %v4236
  %v4561 = vsel %vm3913, %v2529, %v4237
  %v4562 = vsel %vm3914, %v2532, %v4238
  %v4563 = vsel %vm3915, %v2537, %v4239
  %v4564 = vsel %vm3916, %v2540, %v4240
  %v4565 = vsel %vm3917, %v2545, %v4241
  %v4566 = vsel %vm3918, %v2548, %v4242
  %v4567 = vsel %vm3919, %v2553, %v4243
  %v4568 = vsel %vm3920, %v2556, %v4244
  %v4569 = vsel %vm3921, %v2561, %v4245
  %v4570 = vsel %vm3922, %v2564, %v4246
  %v4571 = vsel %vm3923, %v2569, %v4247
  %v4572 = vsel %vm3924, %v2572, %v4248
  %v4573 = vsel %vm3925, %v2595, %v4249
  %v4574 = vsel %vm3926, %v2598, %v4250
  %v4575 = vsel %vm3927, %v2603, %v4251
  %v4576 = vsel %vm3928, %v2606, %v4252
  %v4577 = vsel %vm3929, %v2611, %v4253
  %v4578 = vsel %vm3930, %v2614, %v4254
  %v4579 = vsel %vm3931, %v2619, %v4255
  %v4580 = vsel %vm3932, %v2622, %v4256
  %v4581 = vsel %vm3933, %v2627, %v4257
  %v4582 = vsel %vm3934, %v2630, %v4258
  %v4583 = vsel %vm3935, %v2635, %v4259
  %v4584 = vsel %vm3936, %v2638, %v4260
  %v4585 = vsel %vm3937, %v2643, %v4261
  %v4586 = vsel %vm3938, %v2646, %v4262
  %v4587 = vsel %vm3939, %v2651, %v4263
  %v4588 = vsel %vm3940, %v2654, %v4264
  %v4589 = vsel %vm3941, %v2659, %v4265
  %v4590 = vsel %vm3942, %v2662, %v4266
  %v4591 = vsel %vm3943, %v2685, %v4267
  %v4592 = vsel %vm3944, %v2688, %v4268
  %v4593 = vsel %vm3945, %v2693, %v4269
  %v4594 = vsel %vm3946, %v2696, %v4270
  %v4595 = vsel %vm3947, %v2701, %v4271
  %v4596 = vsel %vm3948, %v2704, %v4272
  %v4597 = vsel %vm3949, %v2709, %v4273
  %v4598 = vsel %vm3950, %v2712, %v4274
  %v4599 = vsel %vm3951, %v2717, %v4275
  %v4600 = vsel %vm3952, %v2720, %v4276
  %v4601 = vsel %vm3953, %v2725, %v4277
  %v4602 = vsel %vm3954, %v2728, %v4278
  %v4603 = vsel %vm3955, %v2733, %v4279
  %v4604 = vsel %vm3956, %v2736, %v4280
  %v4605 = vsel %vm3957, %v2741, %v4281
  %v4606 = vsel %vm3958, %v2744, %v4282
  %v4607 = vsel %vm3959, %v2749, %v4283
  %v4608 = vsel %vm3960, %v2752, %v4284
  %v4609 = vsel %vm3961, %v2775, %v4285
  %v4610 = vsel %vm3962, %v2778, %v4286
  %v4611 = vsel %vm3963, %v2783, %v4287
  %v4612 = vsel %vm3964, %v2786, %v4288
  %v4613 = vsel %vm3965, %v2791, %v4289
  %v4614 = vsel %vm3966, %v2794, %v4290
  %v4615 = vsel %vm3967, %v2799, %v4291
  %v4616 = vsel %vm3968, %v2802, %v4292
  %v4617 = vsel %vm3969, %v2807, %v4293
  %v4618 = vsel %vm3970, %v2810, %v4294
  %v4619 = vsel %vm3971, %v2815, %v4295
  %v4620 = vsel %vm3972, %v2818, %v4296
  %v4621 = vsel %vm3973, %v2823, %v4297
  %v4622 = vsel %vm3974, %v2826, %v4298
  %v4623 = vsel %vm3975, %v2831, %v4299
  %v4624 = vsel %vm3976, %v2834, %v4300
  %v4625 = vsel %vm3977, %v2839, %v4301
  %v4626 = vsel %vm3978, %v2842, %v4302
  %v4627 = vsel %vm3979, %v2865, %v4303
  %v4628 = vsel %vm3980, %v2868, %v4304
  %v4629 = vsel %vm3981, %v2873, %v4305
  %v4630 = vsel %vm3982, %v2876, %v4306
  %v4631 = vsel %vm3983, %v2881, %v4307
  %v4632 = vsel %vm3984, %v2884, %v4308
  %v4633 = vsel %vm3985, %v2889, %v4309
  %v4634 = vsel %vm3986, %v2892, %v4310
  %v4635 = vsel %vm3987, %v2897, %v4311
  %v4636 = vsel %vm3988, %v2900, %v4312
  %v4637 = vsel %vm3989, %v2905, %v4313
  %v4638 = vsel %vm3990, %v2908, %v4314
  %v4639 = vsel %vm3991, %v2913, %v4315
  %v4640 = vsel %vm3992, %v2916, %v4316
  %v4641 = vsel %vm3993, %v2921, %v4317
  %v4642 = vsel %vm3994, %v2924, %v4318
  %v4643 = vsel %vm3995, %v2929, %v4319
  %v4644 = vsel %vm3996, %v2932, %v4320
  %v4645 = vsel %vm3997, %v2955, %v4321
  %v4646 = vsel %vm3998, %v2958, %v4322
  %v4647 = vsel %vm3999, %v2963, %v4323
  %v4648 = vsel %vm4000, %v2966, %v4324
  %v4649 = vsel %vm4001, %v2971, %v4325
  %v4650 = vsel %vm4002, %v2974, %v4326
  %v4651 = vsel %vm4003, %v2979, %v4327
  %v4652 = vsel %vm4004, %v2982, %v4328
  %v4653 = vsel %vm4005, %v2987, %v4329
  %v4654 = vsel %vm4006, %v2990, %v4330
  %v4655 = vsel %vm4007, %v2995, %v4331
  %v4656 = vsel %vm4008, %v2998, %v4332
  %v4657 = vsel %vm4009, %v3003, %v4333
  %v4658 = vsel %vm4010, %v3006, %v4334
  %v4659 = vsel %vm4011, %v3011, %v4335
  %v4660 = vsel %vm4012, %v3014, %v4336
  %v4661 = vsel %vm4013, %v3019, %v4337
  %v4662 = vsel %vm4014, %v3022, %v4338
  %v4663 = vsel %vm4015, %v3045, %v4339
  %v4664 = vsel %vm4016, %v3048, %v4340
  %v4665 = vsel %vm4017, %v3053, %v4341
  %v4666 = vsel %vm4018, %v3056, %v4342
  %v4667 = vsel %vm4019, %v3061, %v4343
  %v4668 = vsel %vm4020, %v3064, %v4344
  %v4669 = vsel %vm4021, %v3069, %v4345
  %v4670 = vsel %vm4022, %v3072, %v4346
  %v4671 = vsel %vm4023, %v3077, %v4347
  %v4672 = vsel %vm4024, %v3080, %v4348
  %v4673 = vsel %vm4025, %v3085, %v4349
  %v4674 = vsel %vm4026, %v3088, %v4350
  %v4675 = vsel %vm4027, %v3093, %v4351
  %v4676 = vsel %vm4028, %v3096, %v4352
  %v4677 = vsel %vm4029, %v3101, %v4353
  %v4678 = vsel %vm4030, %v3104, %v4354
  %v4679 = vsel %vm4031, %v3109, %v4355
  %v4680 = vsel %vm4032, %v3112, %v4356
  %v4681 = vsel %vm4033, %v3135, %v4357
  %v4682 = vsel %vm4034, %v3138, %v4358
  %v4683 = vsel %vm4035, %v3143, %v4359
  %v4684 = vsel %vm4036, %v3146, %v4360
  %v4685 = vsel %vm4037, %v3151, %v4361
  %v4686 = vsel %vm4038, %v3154, %v4362
  %v4687 = vsel %vm4039, %v3159, %v4363
  %v4688 = vsel %vm4040, %v3162, %v4364
  %v4689 = vsel %vm4041, %v3167, %v4365
  %v4690 = vsel %vm4042, %v3170, %v4366
  %v4691 = vsel %vm4043, %v3175, %v4367
  %v4692 = vsel %vm4044, %v3178, %v4368
  %v4693 = vsel %vm4045, %v3183, %v4369
  %v4694 = vsel %vm4046, %v3186, %v4370
  %v4695 = vsel %vm4047, %v3191, %v4371
  %v4696 = vsel %vm4048, %v3194, %v4372
  %v4697 = vsel %vm4049, %v3199, %v4373
  %v4698 = vsel %vm4050, %v3202, %v4374
  %v4699 = vsel %vm4051, %v3225, %v4375
  %v4700 = vsel %vm4052, %v3228, %v4376
  %v4701 = vsel %vm4053, %v3233, %v4377
  %v4702 = vsel %vm4054, %v3236, %v4378
  %v4703 = vsel %vm4055, %v3241, %v4379
  %v4704 = vsel %vm4056, %v3244, %v4380
  %v4705 = vsel %vm4057, %v3249, %v4381
  %v4706 = vsel %vm4058, %v3252, %v4382
  %v4707 = vsel %vm4059, %v3257, %v4383
  %v4708 = vsel %vm4060, %v3260, %v4384
  %v4709 = vsel %vm4061, %v3265, %v4385
  %v4710 = vsel %vm4062, %v3268, %v4386
  %v4711 = vsel %vm4063, %v3273, %v4387
  %v4712 = vsel %vm4064, %v3276, %v4388
  %v4713 = vsel %vm4065, %v3281, %v4389
  %v4714 = vsel %vm4066, %v3284, %v4390
  %v4715 = vsel %vm4067, %v3289, %v4391
  %v4716 = vsel %vm4068, %v3292, %v4392
  %v4717 = vsel %vm4069, %v3315, %v4393
  %v4718 = vsel %vm4070, %v3318, %v4394
  %v4719 = vsel %vm4071, %v3323, %v4395
  %v4720 = vsel %vm4072, %v3326, %v4396
  %v4721 = vsel %vm4073, %v3331, %v4397
  %v4722 = vsel %vm4074, %v3334, %v4398
  %v4723 = vsel %vm4075, %v3339, %v4399
  %v4724 = vsel %vm4076, %v3342, %v4400
  %v4725 = vsel %vm4077, %v3347, %v4401
  %v4726 = vsel %vm4078, %v3350, %v4402
  %v4727 = vsel %vm4079, %v3355, %v4403
  %v4728 = vsel %vm4080, %v3358, %v4404
  %v4729 = vsel %vm4081, %v3363, %v4405
  %v4730 = vsel %vm4082, %v3366, %v4406
  %v4731 = vsel %vm4083, %v3371, %v4407
  %v4732 = vsel %vm4084, %v3374, %v4408
  %v4733 = vsel %vm4085, %v3379, %v4409
  %v4734 = vsel %vm4086, %v3382, %v4410
  %v4735 = vsel %vm4087, %v3405, %v4411
  %v4736 = vsel %vm4088, %v3408, %v4412
  %v4737 = vsel %vm4089, %v3413, %v4413
  %v4738 = vsel %vm4090, %v3416, %v4414
  %v4739 = vsel %vm4091, %v3421, %v4415
  %v4740 = vsel %vm4092, %v3424, %v4416
  %v4741 = vsel %vm4093, %v3429, %v4417
  %v4742 = vsel %vm4094, %v3432, %v4418
  %v4743 = vsel %vm4095, %v3437, %v4419
  %v4744 = vsel %vm4096, %v3440, %v4420
  %v4745 = vsel %vm4097, %v3445, %v4421
  %v4746 = vsel %vm4098, %v3448, %v4422
  %v4747 = vsel %vm4099, %v3453, %v4423
  %v4748 = vsel %vm4100, %v3456, %v4424
  %v4749 = vsel %vm4101, %v3461, %v4425
  %v4750 = vsel %vm4102, %v3464, %v4426
  %v4751 = vsel %vm4103, %v3469, %v4427
  %v4752 = vsel %vm4104, %v3472, %v4428
  %v4753 = vsel %vm4105, %v3495, %v4429
  %v4754 = vsel %vm4106, %v3498, %v4430
  %v4755 = vsel %vm4107, %v3503, %v4431
  %v4756 = vsel %vm4108, %v3506, %v4432
  %v4757 = vsel %vm4109, %v3511, %v4433
  %v4758 = vsel %vm4110, %v3514, %v4434
  %v4759 = vsel %vm4111, %v3519, %v4435
  %v4760 = vsel %vm4112, %v3522, %v4436
  %v4761 = vsel %vm4113, %v3527, %v4437
  %v4762 = vsel %vm4114, %v3530, %v4438
  %v4763 = vsel %vm4115, %v3535, %v4439
  %v4764 = vsel %vm4116, %v3538, %v4440
  %v4765 = vsel %vm4117, %v3543, %v4441
  %v4766 = vsel %vm4118, %v3546, %v4442
  %v4767 = vsel %vm4119, %v3551, %v4443
  %v4768 = vsel %vm4120, %v3554, %v4444
  %v4769 = vsel %vm4121, %v3559, %v4445
  %v4770 = vsel %vm4122, %v3562, %v4446
  %v4771 = vsel %vm4123, %v3585, %v4447
  %v4772 = vsel %vm4124, %v3588, %v4448
  %v4773 = vsel %vm4125, %v3593, %v4449
  %v4774 = vsel %vm4126, %v3596, %v4450
  %v4775 = vsel %vm4127, %v3601, %v4451
  %v4776 = vsel %vm4128, %v3604, %v4452
  %v4777 = vsel %vm4129, %v3609, %v4453
  %v4778 = vsel %vm4130, %v3612, %v4454
  %v4779 = vsel %vm4131, %v3617, %v4455
  %v4780 = vsel %vm4132, %v3620, %v4456
  %v4781 = vsel %vm4133, %v3625, %v4457
  %v4782 = vsel %vm4134, %v3628, %v4458
  %v4783 = vsel %vm4135, %v3633, %v4459
  %v4784 = vsel %vm4136, %v3636, %v4460
  %v4785 = vsel %vm4137, %v3641, %v4461
  %v4786 = vsel %vm4138, %v3644, %v4462
  %v4787 = vsel %vm4139, %v3649, %v4463
  %v4788 = vsel %vm4140, %v3652, %v4464
  %v4789 = vsel %vm4141, %v3675, %v4465
  %v4790 = vsel %vm4142, %v3678, %v4466
  %v4791 = vsel %vm4143, %v3683, %v4467
  %v4792 = vsel %vm4144, %v3686, %v4468
  %v4793 = vsel %vm4145, %v3691, %v4469
  %v4794 = vsel %vm4146, %v3694, %v4470
  %v4795 = vsel %vm4147, %v3699, %v4471
  %v4796 = vsel %vm4148, %v3702, %v4472
  %v4797 = vsel %vm4149, %v3707, %v4473
  %v4798 = vsel %vm4150, %v3710, %v4474
  %v4799 = vsel %vm4151, %v3715, %v4475
  %v4800 = vsel %vm4152, %v3718, %v4476
  %v4801 = vsel %vm4153, %v3723, %v4477
  %v4802 = vsel %vm4154, %v3726, %v4478
  %v4803 = vsel %vm4155, %v3731, %v4479
  %v4804 = vsel %vm4156, %v3734, %v4480
  %v4805 = vsel %vm4157, %v3739, %v4481
  %v4806 = vsel %vm4158, %v3742, %v4482
  %v4807 = vsel %vm4159, %v3765, %v4483
  %v4808 = vsel %vm4160, %v3768, %v4484
  %v4809 = vsel %vm4161, %v3773, %v4485
  %v4810 = vsel %vm4162, %v3776, %v4486
  %v4811 = vsel %vm4163, %v3781, %v4487
  %v4812 = vsel %vm4164, %v3784, %v4488
  %v4813 = vsel %vm4165, %v3789, %v4489
  %v4814 = vsel %vm4166, %v3792, %v4490
  %v4815 = vsel %vm4167, %v3797, %v4491
  %v4816 = vsel %vm4168, %v3800, %v4492
  %v4817 = vsel %vm4169, %v3805, %v4493
  %v4818 = vsel %vm4170, %v3808, %v4494
  %v4819 = vsel %vm4171, %v3813, %v4495
  %v4820 = vsel %vm4172, %v3816, %v4496
  %v4821 = vsel %vm4173, %v3821, %v4497
  %v4822 = vsel %vm4174, %v3824, %v4498
  %v4823 = vsel %vm4175, %v3829, %v4499
  %v4824 = vsel %vm4176, %v3832, %v4500
  %v4825 = vpack.c.bf16 %v4502, %v4501
  %v4826 = vpack.c.bf16 %v4504, %v4503
  %v4827 = vpack.c.bf16 %v4506, %v4505
  %v4828 = vpack.c.bf16 %v4508, %v4507
  %v4829 = vpack.c.bf16 %v4510, %v4509
  %v4830 = vpack.c.bf16 %v4512, %v4511
  %v4831 = vpack.c.bf16 %v4514, %v4513
  %v4832 = vpack.c.bf16 %v4516, %v4515
  %v4833 = vpack.c.bf16 %v4518, %v4517
  %v4834 = vpack.c.bf16 %v4520, %v4519
  %v4835 = vpack.c.bf16 %v4522, %v4521
  %v4836 = vpack.c.bf16 %v4524, %v4523
  %v4837 = vpack.c.bf16 %v4526, %v4525
  %v4838 = vpack.c.bf16 %v4528, %v4527
  %v4839 = vpack.c.bf16 %v4530, %v4529
  %v4840 = vpack.c.bf16 %v4532, %v4531
  %v4841 = vpack.c.bf16 %v4534, %v4533
  %v4842 = vpack.c.bf16 %v4536, %v4535
  %v4843 = vpack.c.bf16 %v4538, %v4537
  %v4844 = vpack.c.bf16 %v4540, %v4539
  %v4845 = vpack.c.bf16 %v4542, %v4541
  %v4846 = vpack.c.bf16 %v4544, %v4543
  %v4847 = vpack.c.bf16 %v4546, %v4545
  %v4848 = vpack.c.bf16 %v4548, %v4547
  %v4849 = vpack.c.bf16 %v4550, %v4549
  %v4850 = vpack.c.bf16 %v4552, %v4551
  %v4851 = vpack.c.bf16 %v4554, %v4553
  %v4852 = vpack.c.bf16 %v4556, %v4555
  %v4853 = vpack.c.bf16 %v4558, %v4557
  %v4854 = vpack.c.bf16 %v4560, %v4559
  %v4855 = vpack.c.bf16 %v4562, %v4561
  %v4856 = vpack.c.bf16 %v4564, %v4563
  %v4857 = vpack.c.bf16 %v4566, %v4565
  %v4858 = vpack.c.bf16 %v4568, %v4567
  %v4859 = vpack.c.bf16 %v4570, %v4569
  %v4860 = vpack.c.bf16 %v4572, %v4571
  %v4861 = vpack.c.bf16 %v4574, %v4573
  %v4862 = vpack.c.bf16 %v4576, %v4575
  %v4863 = vpack.c.bf16 %v4578, %v4577
  %v4864 = vpack.c.bf16 %v4580, %v4579
  %v4865 = vpack.c.bf16 %v4582, %v4581
  %v4866 = vpack.c.bf16 %v4584, %v4583
  %v4867 = vpack.c.bf16 %v4586, %v4585
  %v4868 = vpack.c.bf16 %v4588, %v4587
  %v4869 = vpack.c.bf16 %v4590, %v4589
  %v4870 = vpack.c.bf16 %v4592, %v4591
  %v4871 = vpack.c.bf16 %v4594, %v4593
  %v4872 = vpack.c.bf16 %v4596, %v4595
  %v4873 = vpack.c.bf16 %v4598, %v4597
  %v4874 = vpack.c.bf16 %v4600, %v4599
  %v4875 = vpack.c.bf16 %v4602, %v4601
  %v4876 = vpack.c.bf16 %v4604, %v4603
  %v4877 = vpack.c.bf16 %v4606, %v4605
  %v4878 = vpack.c.bf16 %v4608, %v4607
  %v4879 = vpack.c.bf16 %v4610, %v4609
  %v4880 = vpack.c.bf16 %v4612, %v4611
  %v4881 = vpack.c.bf16 %v4614, %v4613
  %v4882 = vpack.c.bf16 %v4616, %v4615
  %v4883 = vpack.c.bf16 %v4618, %v4617
  %v4884 = vpack.c.bf16 %v4620, %v4619
  %v4885 = vpack.c.bf16 %v4622, %v4621
  %v4886 = vpack.c.bf16 %v4624, %v4623
  %v4887 = vpack.c.bf16 %v4626, %v4625
  %v4888 = vpack.c.bf16 %v4628, %v4627
  %v4889 = vpack.c.bf16 %v4630, %v4629
  %v4890 = vpack.c.bf16 %v4632, %v4631
  %v4891 = vpack.c.bf16 %v4634, %v4633
  %v4892 = vpack.c.bf16 %v4636, %v4635
  %v4893 = vpack.c.bf16 %v4638, %v4637
  %v4894 = vpack.c.bf16 %v4640, %v4639
  %v4895 = vpack.c.bf16 %v4642, %v4641
  %v4896 = vpack.c.bf16 %v4644, %v4643
  %v4897 = vpack.c.bf16 %v4646, %v4645
  %v4898 = vpack.c.bf16 %v4648, %v4647
  %v4899 = vpack.c.bf16 %v4650, %v4649
  %v4900 = vpack.c.bf16 %v4652, %v4651
  %v4901 = vpack.c.bf16 %v4654, %v4653
  %v4902 = vpack.c.bf16 %v4656, %v4655
  %v4903 = vpack.c.bf16 %v4658, %v4657
  %v4904 = vpack.c.bf16 %v4660, %v4659
  %v4905 = vpack.c.bf16 %v4662, %v4661
  %v4906 = vpack.c.bf16 %v4664, %v4663
  %v4907 = vpack.c.bf16 %v4666, %v4665
  %v4908 = vpack.c.bf16 %v4668, %v4667
  %v4909 = vpack.c.bf16 %v4670, %v4669
  %v4910 = vpack.c.bf16 %v4672, %v4671
  %v4911 = vpack.c.bf16 %v4674, %v4673
  %v4912 = vpack.c.bf16 %v4676, %v4675
  %v4913 = vpack.c.bf16 %v4678, %v4677
  %v4914 = vpack.c.bf16 %v4680, %v4679
  %v4915 = vpack.c.bf16 %v4682, %v4681
  %v4916 = vpack.c.bf16 %v4684, %v4683
  %v4917 = vpack.c.bf16 %v4686, %v4685
  %v4918 = vpack.c.bf16 %v4688, %v4687
  %v4919 = vpack.c.bf16 %v4690, %v4689
  %v4920 = vpack.c.bf16 %v4692, %v4691
  %v4921 = vpack.c.bf16 %v4694, %v4693
  %v4922 = vpack.c.bf16 %v4696, %v4695
  %v4923 = vpack.c.bf16 %v4698, %v4697
  %v4924 = vpack.c.bf16 %v4700, %v4699
  %v4925 = vpack.c.bf16 %v4702, %v4701
  %v4926 = vpack.c.bf16 %v4704, %v4703
  %v4927 = vpack.c.bf16 %v4706, %v4705
  %v4928 = vpack.c.bf16 %v4708, %v4707
  %v4929 = vpack.c.bf16 %v4710, %v4709
  %v4930 = vpack.c.bf16 %v4712, %v4711
  %v4931 = vpack.c.bf16 %v4714, %v4713
  %v4932 = vpack.c.bf16 %v4716, %v4715
  %v4933 = vpack.c.bf16 %v4718, %v4717
  %v4934 = vpack.c.bf16 %v4720, %v4719
  %v4935 = vpack.c.bf16 %v4722, %v4721
  %v4936 = vpack.c.bf16 %v4724, %v4723
  %v4937 = vpack.c.bf16 %v4726, %v4725
  %v4938 = vpack.c.bf16 %v4728, %v4727
  %v4939 = vpack.c.bf16 %v4730, %v4729
  %v4940 = vpack.c.bf16 %v4732, %v4731
  %v4941 = vpack.c.bf16 %v4734, %v4733
  %v4942 = vpack.c.bf16 %v4736, %v4735
  %v4943 = vpack.c.bf16 %v4738, %v4737
  %v4944 = vpack.c.bf16 %v4740, %v4739
  %v4945 = vpack.c.bf16 %v4742, %v4741
  %v4946 = vpack.c.bf16 %v4744, %v4743
  %v4947 = vpack.c.bf16 %v4746, %v4745
  %v4948 = vpack.c.bf16 %v4748, %v4747
  %v4949 = vpack.c.bf16 %v4750, %v4749
  %v4950 = vpack.c.bf16 %v4752, %v4751
  %v4951 = vpack.c.bf16 %v4754, %v4753
  %v4952 = vpack.c.bf16 %v4756, %v4755
  %v4953 = vpack.c.bf16 %v4758, %v4757
  %v4954 = vpack.c.bf16 %v4760, %v4759
  %v4955 = vpack.c.bf16 %v4762, %v4761
  %v4956 = vpack.c.bf16 %v4764, %v4763
  %v4957 = vpack.c.bf16 %v4766, %v4765
  %v4958 = vpack.c.bf16 %v4768, %v4767
  %v4959 = vpack.c.bf16 %v4770, %v4769
  %v4960 = vpack.c.bf16 %v4772, %v4771
  %v4961 = vpack.c.bf16 %v4774, %v4773
  %v4962 = vpack.c.bf16 %v4776, %v4775
  %v4963 = vpack.c.bf16 %v4778, %v4777
  %v4964 = vpack.c.bf16 %v4780, %v4779
  %v4965 = vpack.c.bf16 %v4782, %v4781
  %v4966 = vpack.c.bf16 %v4784, %v4783
  %v4967 = vpack.c.bf16 %v4786, %v4785
  %v4968 = vpack.c.bf16 %v4788, %v4787
  %v4969 = vpack.c.bf16 %v4790, %v4789
  %v4970 = vpack.c.bf16 %v4792, %v4791
  %v4971 = vpack.c.bf16 %v4794, %v4793
  %v4972 = vpack.c.bf16 %v4796, %v4795
  %v4973 = vpack.c.bf16 %v4798, %v4797
  %v4974 = vpack.c.bf16 %v4800, %v4799
  %v4975 = vpack.c.bf16 %v4802, %v4801
  %v4976 = vpack.c.bf16 %v4804, %v4803
  %v4977 = vpack.c.bf16 %v4806, %v4805
  %v4978 = vpack.c.bf16 %v4808, %v4807
  %v4979 = vpack.c.bf16 %v4810, %v4809
  %v4980 = vpack.c.bf16 %v4812, %v4811
  %v4981 = vpack.c.bf16 %v4814, %v4813
  %v4982 = vpack.c.bf16 %v4816, %v4815
  %v4983 = vpack.c.bf16 %v4818, %v4817
  %v4984 = vpack.c.bf16 %v4820, %v4819
  %v4985 = vpack.c.bf16 %v4822, %v4821
  %v4986 = vpack.c.bf16 %v4824, %v4823
  %v5149 = vunpack.c.l.b16 %v4825
  %v5150 = vunpack.c.h.b16 %v4825
  %v5151 = vunpack.c.l.b16 %v4826
  %v5152 = vunpack.c.h.b16 %v4826
  %v5153 = vunpack.c.l.b16 %v4827
  %v5154 = vunpack.c.h.b16 %v4827
  %v5155 = vunpack.c.l.b16 %v4828
  %v5156 = vunpack.c.h.b16 %v4828
  %v5157 = vunpack.c.l.b16 %v4829
  %v5158 = vunpack.c.h.b16 %v4829
  %v5159 = vunpack.c.l.b16 %v4830
  %v5160 = vunpack.c.h.b16 %v4830
  %v5161 = vunpack.c.l.b16 %v4831
  %v5162 = vunpack.c.h.b16 %v4831
  %v5163 = vunpack.c.l.b16 %v4832
  %v5164 = vunpack.c.h.b16 %v4832
  %v5165 = vunpack.c.l.b16 %v4833
  %v5166 = vunpack.c.h.b16 %v4833
  %v5167 = vunpack.c.l.b16 %v4834
  %v5168 = vunpack.c.h.b16 %v4834
  %v5169 = vunpack.c.l.b16 %v4835
  %v5170 = vunpack.c.h.b16 %v4835
  %v5171 = vunpack.c.l.b16 %v4836
  %v5172 = vunpack.c.h.b16 %v4836
  %v5173 = vunpack.c.l.b16 %v4837
  %v5174 = vunpack.c.h.b16 %v4837
  %v5175 = vunpack.c.l.b16 %v4838
  %v5176 = vunpack.c.h.b16 %v4838
  %v5177 = vunpack.c.l.b16 %v4839
  %v5178 = vunpack.c.h.b16 %v4839
  %v5179 = vunpack.c.l.b16 %v4840
  %v5180 = vunpack.c.h.b16 %v4840
  %v5181 = vunpack.c.l.b16 %v4841
  %v5182 = vunpack.c.h.b16 %v4841
  %v5183 = vunpack.c.l.b16 %v4842
  %v5184 = vunpack.c.h.b16 %v4842
  %v5185 = vunpack.c.l.b16 %v4843
  %v5186 = vunpack.c.h.b16 %v4843
  %v5187 = vunpack.c.l.b16 %v4844
  %v5188 = vunpack.c.h.b16 %v4844
  %v5189 = vunpack.c.l.b16 %v4845
  %v5190 = vunpack.c.h.b16 %v4845
  %v5191 = vunpack.c.l.b16 %v4846
  %v5192 = vunpack.c.h.b16 %v4846
  %v5193 = vunpack.c.l.b16 %v4847
  %v5194 = vunpack.c.h.b16 %v4847
  %v5195 = vunpack.c.l.b16 %v4848
  %v5196 = vunpack.c.h.b16 %v4848
  %v5197 = vunpack.c.l.b16 %v4849
  %v5198 = vunpack.c.h.b16 %v4849
  %v5199 = vunpack.c.l.b16 %v4850
  %v5200 = vunpack.c.h.b16 %v4850
  %v5201 = vunpack.c.l.b16 %v4851
  %v5202 = vunpack.c.h.b16 %v4851
  %v5203 = vunpack.c.l.b16 %v4852
  %v5204 = vunpack.c.h.b16 %v4852
  %v5205 = vunpack.c.l.b16 %v4853
  %v5206 = vunpack.c.h.b16 %v4853
  %v5207 = vunpack.c.l.b16 %v4854
  %v5208 = vunpack.c.h.b16 %v4854
  %v5209 = vunpack.c.l.b16 %v4855
  %v5210 = vunpack.c.h.b16 %v4855
  %v5211 = vunpack.c.l.b16 %v4856
  %v5212 = vunpack.c.h.b16 %v4856
  %v5213 = vunpack.c.l.b16 %v4857
  %v5214 = vunpack.c.h.b16 %v4857
  %v5215 = vunpack.c.l.b16 %v4858
  %v5216 = vunpack.c.h.b16 %v4858
  %v5217 = vunpack.c.l.b16 %v4859
  %v5218 = vunpack.c.h.b16 %v4859
  %v5219 = vunpack.c.l.b16 %v4860
  %v5220 = vunpack.c.h.b16 %v4860
  %v5221 = vunpack.c.l.b16 %v4861
  %v5222 = vunpack.c.h.b16 %v4861
  %v5223 = vunpack.c.l.b16 %v4862
  %v5224 = vunpack.c.h.b16 %v4862
  %v5225 = vunpack.c.l.b16 %v4863
  %v5226 = vunpack.c.h.b16 %v4863
  %v5227 = vunpack.c.l.b16 %v4864
  %v5228 = vunpack.c.h.b16 %v4864
  %v5229 = vunpack.c.l.b16 %v4865
  %v5230 = vunpack.c.h.b16 %v4865
  %v5231 = vunpack.c.l.b16 %v4866
  %v5232 = vunpack.c.h.b16 %v4866
  %v5233 = vunpack.c.l.b16 %v4867
  %v5234 = vunpack.c.h.b16 %v4867
  %v5235 = vunpack.c.l.b16 %v4868
  %v5236 = vunpack.c.h.b16 %v4868
  %v5237 = vunpack.c.l.b16 %v4869
  %v5238 = vunpack.c.h.b16 %v4869
  %v5239 = vunpack.c.l.b16 %v4870
  %v5240 = vunpack.c.h.b16 %v4870
  %v5241 = vunpack.c.l.b16 %v4871
  %v5242 = vunpack.c.h.b16 %v4871
  %v5243 = vunpack.c.l.b16 %v4872
  %v5244 = vunpack.c.h.b16 %v4872
  %v5245 = vunpack.c.l.b16 %v4873
  %v5246 = vunpack.c.h.b16 %v4873
  %v5247 = vunpack.c.l.b16 %v4874
  %v5248 = vunpack.c.h.b16 %v4874
  %v5249 = vunpack.c.l.b16 %v4875
  %v5250 = vunpack.c.h.b16 %v4875
  %v5251 = vunpack.c.l.b16 %v4876
  %v5252 = vunpack.c.h.b16 %v4876
  %v5253 = vunpack.c.l.b16 %v4877
  %v5254 = vunpack.c.h.b16 %v4877
  %v5255 = vunpack.c.l.b16 %v4878
  %v5256 = vunpack.c.h.b16 %v4878
  %v5257 = vunpack.c.l.b16 %v4879
  %v5258 = vunpack.c.h.b16 %v4879
  %v5259 = vunpack.c.l.b16 %v4880
  %v5260 = vunpack.c.h.b16 %v4880
  %v5261 = vunpack.c.l.b16 %v4881
  %v5262 = vunpack.c.h.b16 %v4881
  %v5263 = vunpack.c.l.b16 %v4882
  %v5264 = vunpack.c.h.b16 %v4882
  %v5265 = vunpack.c.l.b16 %v4883
  %v5266 = vunpack.c.h.b16 %v4883
  %v5267 = vunpack.c.l.b16 %v4884
  %v5268 = vunpack.c.h.b16 %v4884
  %v5269 = vunpack.c.l.b16 %v4885
  %v5270 = vunpack.c.h.b16 %v4885
  %v5271 = vunpack.c.l.b16 %v4886
  %v5272 = vunpack.c.h.b16 %v4886
  %v5273 = vunpack.c.l.b16 %v4887
  %v5274 = vunpack.c.h.b16 %v4887
  %v5275 = vunpack.c.l.b16 %v4888
  %v5276 = vunpack.c.h.b16 %v4888
  %v5277 = vunpack.c.l.b16 %v4889
  %v5278 = vunpack.c.h.b16 %v4889
  %v5279 = vunpack.c.l.b16 %v4890
  %v5280 = vunpack.c.h.b16 %v4890
  %v5281 = vunpack.c.l.b16 %v4891
  %v5282 = vunpack.c.h.b16 %v4891
  %v5283 = vunpack.c.l.b16 %v4892
  %v5284 = vunpack.c.h.b16 %v4892
  %v5285 = vunpack.c.l.b16 %v4893
  %v5286 = vunpack.c.h.b16 %v4893
  %v5287 = vunpack.c.l.b16 %v4894
  %v5288 = vunpack.c.h.b16 %v4894
  %v5289 = vunpack.c.l.b16 %v4895
  %v5290 = vunpack.c.h.b16 %v4895
  %v5291 = vunpack.c.l.b16 %v4896
  %v5292 = vunpack.c.h.b16 %v4896
  %v5293 = vunpack.c.l.b16 %v4897
  %v5294 = vunpack.c.h.b16 %v4897
  %v5295 = vunpack.c.l.b16 %v4898
  %v5296 = vunpack.c.h.b16 %v4898
  %v5297 = vunpack.c.l.b16 %v4899
  %v5298 = vunpack.c.h.b16 %v4899
  %v5299 = vunpack.c.l.b16 %v4900
  %v5300 = vunpack.c.h.b16 %v4900
  %v5301 = vunpack.c.l.b16 %v4901
  %v5302 = vunpack.c.h.b16 %v4901
  %v5303 = vunpack.c.l.b16 %v4902
  %v5304 = vunpack.c.h.b16 %v4902
  %v5305 = vunpack.c.l.b16 %v4903
  %v5306 = vunpack.c.h.b16 %v4903
  %v5307 = vunpack.c.l.b16 %v4904
  %v5308 = vunpack.c.h.b16 %v4904
  %v5309 = vunpack.c.l.b16 %v4905
  %v5310 = vunpack.c.h.b16 %v4905
  %v5311 = vunpack.c.l.b16 %v4906
  %v5312 = vunpack.c.h.b16 %v4906
  %v5313 = vunpack.c.l.b16 %v4907
  %v5314 = vunpack.c.h.b16 %v4907
  %v5315 = vunpack.c.l.b16 %v4908
  %v5316 = vunpack.c.h.b16 %v4908
  %v5317 = vunpack.c.l.b16 %v4909
  %v5318 = vunpack.c.h.b16 %v4909
  %v5319 = vunpack.c.l.b16 %v4910
  %v5320 = vunpack.c.h.b16 %v4910
  %v5321 = vunpack.c.l.b16 %v4911
  %v5322 = vunpack.c.h.b16 %v4911
  %v5323 = vunpack.c.l.b16 %v4912
  %v5324 = vunpack.c.h.b16 %v4912
  %v5325 = vunpack.c.l.b16 %v4913
  %v5326 = vunpack.c.h.b16 %v4913
  %v5327 = vunpack.c.l.b16 %v4914
  %v5328 = vunpack.c.h.b16 %v4914
  %v5329 = vunpack.c.l.b16 %v4915
  %v5330 = vunpack.c.h.b16 %v4915
  %v5331 = vunpack.c.l.b16 %v4916
  %v5332 = vunpack.c.h.b16 %v4916
  %v5333 = vunpack.c.l.b16 %v4917
  %v5334 = vunpack.c.h.b16 %v4917
  %v5335 = vunpack.c.l.b16 %v4918
  %v5336 = vunpack.c.h.b16 %v4918
  %v5337 = vunpack.c.l.b16 %v4919
  %v5338 = vunpack.c.h.b16 %v4919
  %v5339 = vunpack.c.l.b16 %v4920
  %v5340 = vunpack.c.h.b16 %v4920
  %v5341 = vunpack.c.l.b16 %v4921
  %v5342 = vunpack.c.h.b16 %v4921
  %v5343 = vunpack.c.l.b16 %v4922
  %v5344 = vunpack.c.h.b16 %v4922
  %v5345 = vunpack.c.l.b16 %v4923
  %v5346 = vunpack.c.h.b16 %v4923
  %v5347 = vunpack.c.l.b16 %v4924
  %v5348 = vunpack.c.h.b16 %v4924
  %v5349 = vunpack.c.l.b16 %v4925
  %v5350 = vunpack.c.h.b16 %v4925
  %v5351 = vunpack.c.l.b16 %v4926
  %v5352 = vunpack.c.h.b16 %v4926
  %v5353 = vunpack.c.l.b16 %v4927
  %v5354 = vunpack.c.h.b16 %v4927
  %v5355 = vunpack.c.l.b16 %v4928
  %v5356 = vunpack.c.h.b16 %v4928
  %v5357 = vunpack.c.l.b16 %v4929
  %v5358 = vunpack.c.h.b16 %v4929
  %v5359 = vunpack.c.l.b16 %v4930
  %v5360 = vunpack.c.h.b16 %v4930
  %v5361 = vunpack.c.l.b16 %v4931
  %v5362 = vunpack.c.h.b16 %v4931
  %v5363 = vunpack.c.l.b16 %v4932
  %v5364 = vunpack.c.h.b16 %v4932
  %v5365 = vunpack.c.l.b16 %v4933
  %v5366 = vunpack.c.h.b16 %v4933
  %v5367 = vunpack.c.l.b16 %v4934
  %v5368 = vunpack.c.h.b16 %v4934
  %v5369 = vunpack.c.l.b16 %v4935
  %v5370 = vunpack.c.h.b16 %v4935
  %v5371 = vunpack.c.l.b16 %v4936
  %v5372 = vunpack.c.h.b16 %v4936
  %v5373 = vunpack.c.l.b16 %v4937
  %v5374 = vunpack.c.h.b16 %v4937
  %v5375 = vunpack.c.l.b16 %v4938
  %v5376 = vunpack.c.h.b16 %v4938
  %v5377 = vunpack.c.l.b16 %v4939
  %v5378 = vunpack.c.h.b16 %v4939
  %v5379 = vunpack.c.l.b16 %v4940
  %v5380 = vunpack.c.h.b16 %v4940
  %v5381 = vunpack.c.l.b16 %v4941
  %v5382 = vunpack.c.h.b16 %v4941
  %v5383 = vunpack.c.l.b16 %v4942
  %v5384 = vunpack.c.h.b16 %v4942
  %v5385 = vunpack.c.l.b16 %v4943
  %v5386 = vunpack.c.h.b16 %v4943
  %v5387 = vunpack.c.l.b16 %v4944
  %v5388 = vunpack.c.h.b16 %v4944
  %v5389 = vunpack.c.l.b16 %v4945
  %v5390 = vunpack.c.h.b16 %v4945
  %v5391 = vunpack.c.l.b16 %v4946
  %v5392 = vunpack.c.h.b16 %v4946
  %v5393 = vunpack.c.l.b16 %v4947
  %v5394 = vunpack.c.h.b16 %v4947
  %v5395 = vunpack.c.l.b16 %v4948
  %v5396 = vunpack.c.h.b16 %v4948
  %v5397 = vunpack.c.l.b16 %v4949
  %v5398 = vunpack.c.h.b16 %v4949
  %v5399 = vunpack.c.l.b16 %v4950
  %v5400 = vunpack.c.h.b16 %v4950
  %v5401 = vunpack.c.l.b16 %v4951
  %v5402 = vunpack.c.h.b16 %v4951
  %v5403 = vunpack.c.l.b16 %v4952
  %v5404 = vunpack.c.h.b16 %v4952
  %v5405 = vunpack.c.l.b16 %v4953
  %v5406 = vunpack.c.h.b16 %v4953
  %v5407 = vunpack.c.l.b16 %v4954
  %v5408 = vunpack.c.h.b16 %v4954
  %v5409 = vunpack.c.l.b16 %v4955
  %v5410 = vunpack.c.h.b16 %v4955
  %v5411 = vunpack.c.l.b16 %v4956
  %v5412 = vunpack.c.h.b16 %v4956
  %v5413 = vunpack.c.l.b16 %v4957
  %v5414 = vunpack.c.h.b16 %v4957
  %v5415 = vunpack.c.l.b16 %v4958
  %v5416 = vunpack.c.h.b16 %v4958
  %v5417 = vunpack.c.l.b16 %v4959
  %v5418 = vunpack.c.h.b16 %v4959
  %v5419 = vunpack.c.l.b16 %v4960
  %v5420 = vunpack.c.h.b16 %v4960
  %v5421 = vunpack.c.l.b16 %v4961
  %v5422 = vunpack.c.h.b16 %v4961
  %v5423 = vunpack.c.l.b16 %v4962
  %v5424 = vunpack.c.h.b16 %v4962
  %v5425 = vunpack.c.l.b16 %v4963
  %v5426 = vunpack.c.h.b16 %v4963
  %v5427 = vunpack.c.l.b16 %v4964
  %v5428 = vunpack.c.h.b16 %v4964
  %v5429 = vunpack.c.l.b16 %v4965
  %v5430 = vunpack.c.h.b16 %v4965
  %v5431 = vunpack.c.l.b16 %v4966
  %v5432 = vunpack.c.h.b16 %v4966
  %v5433 = vunpack.c.l.b16 %v4967
  %v5434 = vunpack.c.h.b16 %v4967
  %v5435 = vunpack.c.l.b16 %v4968
  %v5436 = vunpack.c.h.b16 %v4968
  %v5437 = vunpack.c.l.b16 %v4969
  %v5438 = vunpack.c.h.b16 %v4969
  %v5439 = vunpack.c.l.b16 %v4970
  %v5440 = vunpack.c.h.b16 %v4970
  %v5441 = vunpack.c.l.b16 %v4971
  %v5442 = vunpack.c.h.b16 %v4971
  %v5443 = vunpack.c.l.b16 %v4972
  %v5444 = vunpack.c.h.b16 %v4972
  %v5445 = vunpack.c.l.b16 %v4973
  %v5446 = vunpack.c.h.b16 %v4973
  %v5447 = vunpack.c.l.b16 %v4974
  %v5448 = vunpack.c.h.b16 %v4974
  %v5449 = vunpack.c.l.b16 %v4975
  %v5450 = vunpack.c.h.b16 %v4975
  %v5451 = vunpack.c.l.b16 %v4976
  %v5452 = vunpack.c.h.b16 %v4976
  %v5453 = vunpack.c.l.b16 %v4977
  %v5454 = vunpack.c.h.b16 %v4977
  %v5455 = vunpack.c.l.b16 %v4978
  %v5456 = vunpack.c.h.b16 %v4978
  %v5457 = vunpack.c.l.b16 %v4979
  %v5458 = vunpack.c.h.b16 %v4979
  %v5459 = vunpack.c.l.b16 %v4980
  %v5460 = vunpack.c.h.b16 %v4980
  %v5461 = vunpack.c.l.b16 %v4981
  %v5462 = vunpack.c.h.b16 %v4981
  %v5463 = vunpack.c.l.b16 %v4982
  %v5464 = vunpack.c.h.b16 %v4982
  %v5465 = vunpack.c.l.b16 %v4983
  %v5466 = vunpack.c.h.b16 %v4983
  %v5467 = vunpack.c.l.b16 %v4984
  %v5468 = vunpack.c.h.b16 %v4984
  %v5469 = vunpack.c.l.b16 %v4985
  %v5470 = vunpack.c.h.b16 %v4985
  %v5471 = vunpack.c.l.b16 %v4986
  %v5472 = vunpack.c.h.b16 %v4986
  %v5473 = vpack.c.b16 %v5149, %v5149
  %v5474 = vpack.c.b16 %v5150, %v5150
  %v5475 = vpack.c.b16 %v5151, %v5151
  %v5476 = vpack.c.b16 %v5152, %v5152
  %v5477 = vpack.c.b16 %v5153, %v5153
  %v5478 = vpack.c.b16 %v5154, %v5154
  %v5479 = vpack.c.b16 %v5155, %v5155
  %v5480 = vpack.c.b16 %v5156, %v5156
  %v5481 = vpack.c.b16 %v5157, %v5157
  %v5482 = vpack.c.b16 %v5167, %v5167
  %v5483 = vpack.c.b16 %v5168, %v5168
  %v5484 = vpack.c.b16 %v5169, %v5169
  %v5485 = vpack.c.b16 %v5170, %v5170
  %v5486 = vpack.c.b16 %v5171, %v5171
  %v5487 = vpack.c.b16 %v5172, %v5172
  %v5488 = vpack.c.b16 %v5173, %v5173
  %v5489 = vpack.c.b16 %v5174, %v5174
  %v5490 = vpack.c.b16 %v5175, %v5175
  %v5491 = vpack.c.b16 %v5185, %v5185
  %v5492 = vpack.c.b16 %v5186, %v5186
  %v5493 = vpack.c.b16 %v5187, %v5187
  %v5494 = vpack.c.b16 %v5188, %v5188
  %v5495 = vpack.c.b16 %v5189, %v5189
  %v5496 = vpack.c.b16 %v5190, %v5190
  %v5497 = vpack.c.b16 %v5191, %v5191
  %v5498 = vpack.c.b16 %v5192, %v5192
  %v5499 = vpack.c.b16 %v5193, %v5193
  %v5500 = vpack.c.b16 %v5203, %v5203
  %v5501 = vpack.c.b16 %v5204, %v5204
  %v5502 = vpack.c.b16 %v5205, %v5205
  %v5503 = vpack.c.b16 %v5206, %v5206
  %v5504 = vpack.c.b16 %v5207, %v5207
  %v5505 = vpack.c.b16 %v5208, %v5208
  %v5506 = vpack.c.b16 %v5209, %v5209
  %v5507 = vpack.c.b16 %v5210, %v5210
  %v5508 = vpack.c.b16 %v5211, %v5211
  %v5509 = vpack.c.b16 %v5221, %v5221
  %v5510 = vpack.c.b16 %v5222, %v5222
  %v5511 = vpack.c.b16 %v5223, %v5223
  %v5512 = vpack.c.b16 %v5224, %v5224
  %v5513 = vpack.c.b16 %v5225, %v5225
  %v5514 = vpack.c.b16 %v5226, %v5226
  %v5515 = vpack.c.b16 %v5227, %v5227
  %v5516 = vpack.c.b16 %v5228, %v5228
  %v5517 = vpack.c.b16 %v5229, %v5229
  %v5518 = vpack.c.b16 %v5239, %v5239
  %v5519 = vpack.c.b16 %v5240, %v5240
  %v5520 = vpack.c.b16 %v5241, %v5241
  %v5521 = vpack.c.b16 %v5242, %v5242
  %v5522 = vpack.c.b16 %v5243, %v5243
  %v5523 = vpack.c.b16 %v5244, %v5244
  %v5524 = vpack.c.b16 %v5245, %v5245
  %v5525 = vpack.c.b16 %v5246, %v5246
  %v5526 = vpack.c.b16 %v5247, %v5247
  %v5527 = vpack.c.b16 %v5257, %v5257
  %v5528 = vpack.c.b16 %v5258, %v5258
  %v5529 = vpack.c.b16 %v5259, %v5259
  %v5530 = vpack.c.b16 %v5260, %v5260
  %v5531 = vpack.c.b16 %v5261, %v5261
  %v5532 = vpack.c.b16 %v5262, %v5262
  %v5533 = vpack.c.b16 %v5263, %v5263
  %v5534 = vpack.c.b16 %v5264, %v5264
  %v5535 = vpack.c.b16 %v5265, %v5265
  %v5536 = vpack.c.b16 %v5275, %v5275
  %v5537 = vpack.c.b16 %v5276, %v5276
  %v5538 = vpack.c.b16 %v5277, %v5277
  %v5539 = vpack.c.b16 %v5278, %v5278
  %v5540 = vpack.c.b16 %v5279, %v5279
  %v5541 = vpack.c.b16 %v5280, %v5280
  %v5542 = vpack.c.b16 %v5281, %v5281
  %v5543 = vpack.c.b16 %v5282, %v5282
  %v5544 = vpack.c.b16 %v5283, %v5283
  %v5545 = vpack.c.b16 %v5293, %v5293
  %v5546 = vpack.c.b16 %v5294, %v5294
  %v5547 = vpack.c.b16 %v5295, %v5295
  %v5548 = vpack.c.b16 %v5296, %v5296
  %v5549 = vpack.c.b16 %v5297, %v5297
  %v5550 = vpack.c.b16 %v5298, %v5298
  %v5551 = vpack.c.b16 %v5299, %v5299
  %v5552 = vpack.c.b16 %v5300, %v5300
  %v5553 = vpack.c.b16 %v5301, %v5301
  %v5554 = vpack.c.b16 %v5311, %v5311
  %v5555 = vpack.c.b16 %v5312, %v5312
  %v5556 = vpack.c.b16 %v5313, %v5313
  %v5557 = vpack.c.b16 %v5314, %v5314
  %v5558 = vpack.c.b16 %v5315, %v5315
  %v5559 = vpack.c.b16 %v5316, %v5316
  %v5560 = vpack.c.b16 %v5317, %v5317
  %v5561 = vpack.c.b16 %v5318, %v5318
  %v5562 = vpack.c.b16 %v5319, %v5319
  %v5563 = vpack.c.b16 %v5329, %v5329
  %v5564 = vpack.c.b16 %v5330, %v5330
  %v5565 = vpack.c.b16 %v5331, %v5331
  %v5566 = vpack.c.b16 %v5332, %v5332
  %v5567 = vpack.c.b16 %v5333, %v5333
  %v5568 = vpack.c.b16 %v5334, %v5334
  %v5569 = vpack.c.b16 %v5335, %v5335
  %v5570 = vpack.c.b16 %v5336, %v5336
  %v5571 = vpack.c.b16 %v5337, %v5337
  %v5572 = vpack.c.b16 %v5347, %v5347
  %v5573 = vpack.c.b16 %v5348, %v5348
  %v5574 = vpack.c.b16 %v5349, %v5349
  %v5575 = vpack.c.b16 %v5350, %v5350
  %v5576 = vpack.c.b16 %v5351, %v5351
  %v5577 = vpack.c.b16 %v5352, %v5352
  %v5578 = vpack.c.b16 %v5353, %v5353
  %v5579 = vpack.c.b16 %v5354, %v5354
  %v5580 = vpack.c.b16 %v5355, %v5355
  %v5581 = vpack.c.b16 %v5365, %v5365
  %v5582 = vpack.c.b16 %v5366, %v5366
  %v5583 = vpack.c.b16 %v5367, %v5367
  %v5584 = vpack.c.b16 %v5368, %v5368
  %v5585 = vpack.c.b16 %v5369, %v5369
  %v5586 = vpack.c.b16 %v5370, %v5370
  %v5587 = vpack.c.b16 %v5371, %v5371
  %v5588 = vpack.c.b16 %v5372, %v5372
  %v5589 = vpack.c.b16 %v5373, %v5373
  %v5590 = vpack.c.b16 %v5383, %v5383
  %v5591 = vpack.c.b16 %v5384, %v5384
  %v5592 = vpack.c.b16 %v5385, %v5385
  %v5593 = vpack.c.b16 %v5386, %v5386
  %v5594 = vpack.c.b16 %v5387, %v5387
  %v5595 = vpack.c.b16 %v5388, %v5388
  %v5596 = vpack.c.b16 %v5389, %v5389
  %v5597 = vpack.c.b16 %v5390, %v5390
  %v5598 = vpack.c.b16 %v5391, %v5391
  %v5599 = vpack.c.b16 %v5401, %v5401
  %v5600 = vpack.c.b16 %v5402, %v5402
  %v5601 = vpack.c.b16 %v5403, %v5403
  %v5602 = vpack.c.b16 %v5404, %v5404
  %v5603 = vpack.c.b16 %v5405, %v5405
  %v5604 = vpack.c.b16 %v5406, %v5406
  %v5605 = vpack.c.b16 %v5407, %v5407
  %v5606 = vpack.c.b16 %v5408, %v5408
  %v5607 = vpack.c.b16 %v5409, %v5409
  %v5608 = vpack.c.b16 %v5419, %v5419
  %v5609 = vpack.c.b16 %v5420, %v5420
  %v5610 = vpack.c.b16 %v5421, %v5421
  %v5611 = vpack.c.b16 %v5422, %v5422
  %v5612 = vpack.c.b16 %v5423, %v5423
  %v5613 = vpack.c.b16 %v5424, %v5424
  %v5614 = vpack.c.b16 %v5425, %v5425
  %v5615 = vpack.c.b16 %v5426, %v5426
  %v5616 = vpack.c.b16 %v5427, %v5427
  %v5617 = vpack.c.b16 %v5437, %v5437
  %v5618 = vpack.c.b16 %v5438, %v5438
  %v5619 = vpack.c.b16 %v5439, %v5439
  %v5620 = vpack.c.b16 %v5440, %v5440
  %v5621 = vpack.c.b16 %v5441, %v5441
  %v5622 = vpack.c.b16 %v5442, %v5442
  %v5623 = vpack.c.b16 %v5443, %v5443
  %v5624 = vpack.c.b16 %v5444, %v5444
  %v5625 = vpack.c.b16 %v5445, %v5445
  %v5626 = vpack.c.b16 %v5455, %v5455
  %v5627 = vpack.c.b16 %v5456, %v5456
  %v5628 = vpack.c.b16 %v5457, %v5457
  %v5629 = vpack.c.b16 %v5458, %v5458
  %v5630 = vpack.c.b16 %v5459, %v5459
  %v5631 = vpack.c.b16 %v5460, %v5460
  %v5632 = vpack.c.b16 %v5461, %v5461
  %v5633 = vpack.c.b16 %v5462, %v5462
  %v5634 = vpack.c.b16 %v5463, %v5463
  %v5635 = vpack.c.b16 %v5158, %v5158
  %v5636 = vpack.c.b16 %v5159, %v5159
  %v5637 = vpack.c.b16 %v5160, %v5160
  %v5638 = vpack.c.b16 %v5161, %v5161
  %v5639 = vpack.c.b16 %v5162, %v5162
  %v5640 = vpack.c.b16 %v5163, %v5163
  %v5641 = vpack.c.b16 %v5164, %v5164
  %v5642 = vpack.c.b16 %v5165, %v5165
  %v5643 = vpack.c.b16 %v5176, %v5176
  %v5644 = vpack.c.b16 %v5177, %v5177
  %v5645 = vpack.c.b16 %v5178, %v5178
  %v5646 = vpack.c.b16 %v5179, %v5179
  %v5647 = vpack.c.b16 %v5180, %v5180
  %v5648 = vpack.c.b16 %v5181, %v5181
  %v5649 = vpack.c.b16 %v5182, %v5182
  %v5650 = vpack.c.b16 %v5183, %v5183
  %v5651 = vpack.c.b16 %v5194, %v5194
  %v5652 = vpack.c.b16 %v5195, %v5195
  %v5653 = vpack.c.b16 %v5196, %v5196
  %v5654 = vpack.c.b16 %v5197, %v5197
  %v5655 = vpack.c.b16 %v5198, %v5198
  %v5656 = vpack.c.b16 %v5199, %v5199
  %v5657 = vpack.c.b16 %v5200, %v5200
  %v5658 = vpack.c.b16 %v5201, %v5201
  %v5659 = vpack.c.b16 %v5212, %v5212
  %v5660 = vpack.c.b16 %v5213, %v5213
  %v5661 = vpack.c.b16 %v5214, %v5214
  %v5662 = vpack.c.b16 %v5215, %v5215
  %v5663 = vpack.c.b16 %v5216, %v5216
  %v5664 = vpack.c.b16 %v5217, %v5217
  %v5665 = vpack.c.b16 %v5218, %v5218
  %v5666 = vpack.c.b16 %v5219, %v5219
  %v5667 = vpack.c.b16 %v5230, %v5230
  %v5668 = vpack.c.b16 %v5231, %v5231
  %v5669 = vpack.c.b16 %v5232, %v5232
  %v5670 = vpack.c.b16 %v5233, %v5233
  %v5671 = vpack.c.b16 %v5234, %v5234
  %v5672 = vpack.c.b16 %v5235, %v5235
  %v5673 = vpack.c.b16 %v5236, %v5236
  %v5674 = vpack.c.b16 %v5237, %v5237
  %v5675 = vpack.c.b16 %v5248, %v5248
  %v5676 = vpack.c.b16 %v5249, %v5249
  %v5677 = vpack.c.b16 %v5250, %v5250
  %v5678 = vpack.c.b16 %v5251, %v5251
  %v5679 = vpack.c.b16 %v5252, %v5252
  %v5680 = vpack.c.b16 %v5253, %v5253
  %v5681 = vpack.c.b16 %v5254, %v5254
  %v5682 = vpack.c.b16 %v5255, %v5255
  %v5683 = vpack.c.b16 %v5266, %v5266
  %v5684 = vpack.c.b16 %v5267, %v5267
  %v5685 = vpack.c.b16 %v5268, %v5268
  %v5686 = vpack.c.b16 %v5269, %v5269
  %v5687 = vpack.c.b16 %v5270, %v5270
  %v5688 = vpack.c.b16 %v5271, %v5271
  %v5689 = vpack.c.b16 %v5272, %v5272
  %v5690 = vpack.c.b16 %v5273, %v5273
  %v5691 = vpack.c.b16 %v5284, %v5284
  %v5692 = vpack.c.b16 %v5285, %v5285
  %v5693 = vpack.c.b16 %v5286, %v5286
  %v5694 = vpack.c.b16 %v5287, %v5287
  %v5695 = vpack.c.b16 %v5288, %v5288
  %v5696 = vpack.c.b16 %v5289, %v5289
  %v5697 = vpack.c.b16 %v5290, %v5290
  %v5698 = vpack.c.b16 %v5291, %v5291
  %5699 = vrot.lane.b32.xlu0 %v5635, 64
  %v5700 = vpop.permute.xlu0 %5699
  %5701 = vrot.lane.b32.xlu0 %v5636, 64
  %v5702 = vpop.permute.xlu0 %5701
  %5703 = vrot.lane.b32.xlu0 %v5637, 64
  %v5704 = vpop.permute.xlu0 %5703
  %5705 = vrot.lane.b32.xlu0 %v5638, 64
  %v5706 = vpop.permute.xlu0 %5705
  %5707 = vrot.lane.b32.xlu0 %v5639, 64
  %v5708 = vpop.permute.xlu0 %5707
  %5709 = vrot.lane.b32.xlu0 %v5640, 64
  %v5710 = vpop.permute.xlu0 %5709
  %5711 = vrot.lane.b32.xlu0 %v5641, 64
  %v5712 = vpop.permute.xlu0 %5711
  %5713 = vrot.lane.b32.xlu0 %v5642, 64
  %v5714 = vpop.permute.xlu0 %5713
  %5715 = vrot.lane.b32.xlu0 %v5643, 64
  %v5716 = vpop.permute.xlu0 %5715
  %5717 = vrot.lane.b32.xlu0 %v5644, 64
  %v5718 = vpop.permute.xlu0 %5717
  %5719 = vrot.lane.b32.xlu0 %v5645, 64
  %v5720 = vpop.permute.xlu0 %5719
  %5721 = vrot.lane.b32.xlu0 %v5646, 64
  %v5722 = vpop.permute.xlu0 %5721
  %5723 = vrot.lane.b32.xlu0 %v5647, 64
  %v5724 = vpop.permute.xlu0 %5723
  %5725 = vrot.lane.b32.xlu0 %v5648, 64
  %v5726 = vpop.permute.xlu0 %5725
  %5727 = vrot.lane.b32.xlu0 %v5649, 64
  %v5728 = vpop.permute.xlu0 %5727
  %5729 = vrot.lane.b32.xlu0 %v5650, 64
  %v5730 = vpop.permute.xlu0 %5729
  %5731 = vrot.lane.b32.xlu0 %v5651, 64
  %v5732 = vpop.permute.xlu0 %5731
  %5733 = vrot.lane.b32.xlu0 %v5652, 64
  %v5734 = vpop.permute.xlu0 %5733
  %5735 = vrot.lane.b32.xlu0 %v5653, 64
  %v5736 = vpop.permute.xlu0 %5735
  %5737 = vrot.lane.b32.xlu0 %v5654, 64
  %v5738 = vpop.permute.xlu0 %5737
  %5739 = vrot.lane.b32.xlu0 %v5655, 64
  %v5740 = vpop.permute.xlu0 %5739
  %5741 = vrot.lane.b32.xlu0 %v5656, 64
  %v5742 = vpop.permute.xlu0 %5741
  %5743 = vrot.lane.b32.xlu0 %v5657, 64
  %v5744 = vpop.permute.xlu0 %5743
  %5745 = vrot.lane.b32.xlu0 %v5658, 64
  %v5746 = vpop.permute.xlu0 %5745
  %5747 = vrot.lane.b32.xlu0 %v5659, 64
  %v5748 = vpop.permute.xlu0 %5747
  %5749 = vrot.lane.b32.xlu0 %v5660, 64
  %v5750 = vpop.permute.xlu0 %5749
  %5751 = vrot.lane.b32.xlu0 %v5661, 64
  %v5752 = vpop.permute.xlu0 %5751
  %5753 = vrot.lane.b32.xlu0 %v5662, 64
  %v5754 = vpop.permute.xlu0 %5753
  %5755 = vrot.lane.b32.xlu0 %v5663, 64
  %v5756 = vpop.permute.xlu0 %5755
  %5757 = vrot.lane.b32.xlu0 %v5664, 64
  %v5758 = vpop.permute.xlu0 %5757
  %5759 = vrot.lane.b32.xlu0 %v5665, 64
  %v5760 = vpop.permute.xlu0 %5759
  %5761 = vrot.lane.b32.xlu0 %v5666, 64
  %v5762 = vpop.permute.xlu0 %5761
  %5763 = vrot.lane.b32.xlu0 %v5667, 64
  %v5764 = vpop.permute.xlu0 %5763
  %5765 = vrot.lane.b32.xlu0 %v5668, 64
  %v5766 = vpop.permute.xlu0 %5765
  %5767 = vrot.lane.b32.xlu0 %v5669, 64
  %v5768 = vpop.permute.xlu0 %5767
  %5769 = vrot.lane.b32.xlu0 %v5670, 64
  %v5770 = vpop.permute.xlu0 %5769
  %5771 = vrot.lane.b32.xlu0 %v5671, 64
  %v5772 = vpop.permute.xlu0 %5771
  %5773 = vrot.lane.b32.xlu0 %v5672, 64
  %v5774 = vpop.permute.xlu0 %5773
  %5775 = vrot.lane.b32.xlu0 %v5673, 64
  %v5776 = vpop.permute.xlu0 %5775
  %5777 = vrot.lane.b32.xlu0 %v5674, 64
  %v5778 = vpop.permute.xlu0 %5777
  %5779 = vrot.lane.b32.xlu0 %v5675, 64
  %v5780 = vpop.permute.xlu0 %5779
  %5781 = vrot.lane.b32.xlu0 %v5676, 64
  %v5782 = vpop.permute.xlu0 %5781
  %5783 = vrot.lane.b32.xlu0 %v5677, 64
  %v5784 = vpop.permute.xlu0 %5783
  %5785 = vrot.lane.b32.xlu0 %v5678, 64
  %v5786 = vpop.permute.xlu0 %5785
  %5787 = vrot.lane.b32.xlu0 %v5679, 64
  %v5788 = vpop.permute.xlu0 %5787
  %5789 = vrot.lane.b32.xlu0 %v5680, 64
  %v5790 = vpop.permute.xlu0 %5789
  %5791 = vrot.lane.b32.xlu0 %v5681, 64
  %v5792 = vpop.permute.xlu0 %5791
  %5793 = vrot.lane.b32.xlu0 %v5682, 64
  %v5794 = vpop.permute.xlu0 %5793
  %5795 = vrot.lane.b32.xlu0 %v5683, 64
  %v5796 = vpop.permute.xlu0 %5795
  %5797 = vrot.lane.b32.xlu0 %v5684, 64
  %v5798 = vpop.permute.xlu0 %5797
  %5799 = vrot.lane.b32.xlu0 %v5685, 64
  %v5800 = vpop.permute.xlu0 %5799
  %5801 = vrot.lane.b32.xlu0 %v5686, 64
  %v5802 = vpop.permute.xlu0 %5801
  %5803 = vrot.lane.b32.xlu0 %v5687, 64
  %v5804 = vpop.permute.xlu0 %5803
  %5805 = vrot.lane.b32.xlu0 %v5688, 64
  %v5806 = vpop.permute.xlu0 %5805
  %5807 = vrot.lane.b32.xlu0 %v5689, 64
  %v5808 = vpop.permute.xlu0 %5807
  %5809 = vrot.lane.b32.xlu0 %v5690, 64
  %v5810 = vpop.permute.xlu0 %5809
  %5811 = vrot.lane.b32.xlu0 %v5691, 64
  %v5812 = vpop.permute.xlu0 %5811
  %5813 = vrot.lane.b32.xlu0 %v5692, 64
  %v5814 = vpop.permute.xlu0 %5813
  %5815 = vrot.lane.b32.xlu0 %v5693, 64
  %v5816 = vpop.permute.xlu0 %5815
  %5817 = vrot.lane.b32.xlu0 %v5694, 64
  %v5818 = vpop.permute.xlu0 %5817
  %5819 = vrot.lane.b32.xlu0 %v5695, 64
  %v5820 = vpop.permute.xlu0 %5819
  %5821 = vrot.lane.b32.xlu0 %v5696, 64
  %v5822 = vpop.permute.xlu0 %5821
  %5823 = vrot.lane.b32.xlu0 %v5697, 64
  %v5824 = vpop.permute.xlu0 %5823
  %5825 = vrot.lane.b32.xlu0 %v5698, 64
  %v5826 = vpop.permute.xlu0 %5825
  %v5827 = vpack.c.b16 %v5166, %v5166
  %v5828 = vpack.c.b16 %v5184, %v5184
  %v5829 = vpack.c.b16 %v5202, %v5202
  %v5830 = vpack.c.b16 %v5220, %v5220
  %v5831 = vpack.c.b16 %v5238, %v5238
  %v5832 = vpack.c.b16 %v5256, %v5256
  %v5833 = vpack.c.b16 %v5274, %v5274
  %v5834 = vpack.c.b16 %v5292, %v5292
  %5835 = vrot.lane.b32.xlu0 %v5827, 64
  %v5836 = vpop.permute.xlu0 %5835
  %5837 = vrot.lane.b32.xlu0 %v5828, 64
  %v5838 = vpop.permute.xlu0 %5837
  %5839 = vrot.lane.b32.xlu0 %v5829, 64
  %v5840 = vpop.permute.xlu0 %5839
  %5841 = vrot.lane.b32.xlu0 %v5830, 64
  %v5842 = vpop.permute.xlu0 %5841
  %5843 = vrot.lane.b32.xlu0 %v5831, 64
  %v5844 = vpop.permute.xlu0 %5843
  %5845 = vrot.lane.b32.xlu0 %v5832, 64
  %v5846 = vpop.permute.xlu0 %5845
  %5847 = vrot.lane.b32.xlu0 %v5833, 64
  %v5848 = vpop.permute.xlu0 %5847
  %5849 = vrot.lane.b32.xlu0 %v5834, 64
  %v5850 = vpop.permute.xlu0 %5849
  %v5851 = vpack.c.b16 %v5320, %v5320
  %v5852 = vpack.c.b16 %v5321, %v5321
  %v5853 = vpack.c.b16 %v5322, %v5322
  %v5854 = vpack.c.b16 %v5323, %v5323
  %v5855 = vpack.c.b16 %v5324, %v5324
  %v5856 = vpack.c.b16 %v5325, %v5325
  %v5857 = vpack.c.b16 %v5326, %v5326
  %v5858 = vpack.c.b16 %v5327, %v5327
  %v5859 = vpack.c.b16 %v5338, %v5338
  %v5860 = vpack.c.b16 %v5339, %v5339
  %v5861 = vpack.c.b16 %v5340, %v5340
  %v5862 = vpack.c.b16 %v5341, %v5341
  %v5863 = vpack.c.b16 %v5342, %v5342
  %v5864 = vpack.c.b16 %v5343, %v5343
  %v5865 = vpack.c.b16 %v5344, %v5344
  %v5866 = vpack.c.b16 %v5345, %v5345
  %v5867 = vpack.c.b16 %v5356, %v5356
  %v5868 = vpack.c.b16 %v5357, %v5357
  %v5869 = vpack.c.b16 %v5358, %v5358
  %v5870 = vpack.c.b16 %v5359, %v5359
  %v5871 = vpack.c.b16 %v5360, %v5360
  %v5872 = vpack.c.b16 %v5361, %v5361
  %v5873 = vpack.c.b16 %v5362, %v5362
  %v5874 = vpack.c.b16 %v5363, %v5363
  %v5875 = vpack.c.b16 %v5374, %v5374
  %v5876 = vpack.c.b16 %v5375, %v5375
  %v5877 = vpack.c.b16 %v5376, %v5376
  %v5878 = vpack.c.b16 %v5377, %v5377
  %v5879 = vpack.c.b16 %v5378, %v5378
  %v5880 = vpack.c.b16 %v5379, %v5379
  %v5881 = vpack.c.b16 %v5380, %v5380
  %v5882 = vpack.c.b16 %v5381, %v5381
  %v5883 = vpack.c.b16 %v5392, %v5392
  %v5884 = vpack.c.b16 %v5393, %v5393
  %v5885 = vpack.c.b16 %v5394, %v5394
  %v5886 = vpack.c.b16 %v5395, %v5395
  %v5887 = vpack.c.b16 %v5396, %v5396
  %v5888 = vpack.c.b16 %v5397, %v5397
  %v5889 = vpack.c.b16 %v5398, %v5398
  %v5890 = vpack.c.b16 %v5399, %v5399
  %v5891 = vpack.c.b16 %v5410, %v5410
  %v5892 = vpack.c.b16 %v5411, %v5411
  %v5893 = vpack.c.b16 %v5412, %v5412
  %v5894 = vpack.c.b16 %v5413, %v5413
  %v5895 = vpack.c.b16 %v5414, %v5414
  %v5896 = vpack.c.b16 %v5415, %v5415
  %v5897 = vpack.c.b16 %v5416, %v5416
  %v5898 = vpack.c.b16 %v5417, %v5417
  %v5899 = vpack.c.b16 %v5428, %v5428
  %v5900 = vpack.c.b16 %v5429, %v5429
  %v5901 = vpack.c.b16 %v5430, %v5430
  %v5902 = vpack.c.b16 %v5431, %v5431
  %v5903 = vpack.c.b16 %v5432, %v5432
  %v5904 = vpack.c.b16 %v5433, %v5433
  %v5905 = vpack.c.b16 %v5434, %v5434
  %v5906 = vpack.c.b16 %v5435, %v5435
  %v5907 = vpack.c.b16 %v5446, %v5446
  %v5908 = vpack.c.b16 %v5447, %v5447
  %v5909 = vpack.c.b16 %v5448, %v5448
  %v5910 = vpack.c.b16 %v5449, %v5449
  %v5911 = vpack.c.b16 %v5450, %v5450
  %v5912 = vpack.c.b16 %v5451, %v5451
  %v5913 = vpack.c.b16 %v5452, %v5452
  %v5914 = vpack.c.b16 %v5453, %v5453
  %5915 = vrot.lane.b32.xlu0 %v5851, 64
  %v5916 = vpop.permute.xlu0 %5915
  %5917 = vrot.lane.b32.xlu0 %v5852, 64
  %v5918 = vpop.permute.xlu0 %5917
  %5919 = vrot.lane.b32.xlu0 %v5853, 64
  %v5920 = vpop.permute.xlu0 %5919
  %5921 = vrot.lane.b32.xlu0 %v5854, 64
  %v5922 = vpop.permute.xlu0 %5921
  %5923 = vrot.lane.b32.xlu0 %v5855, 64
  %v5924 = vpop.permute.xlu0 %5923
  %5925 = vrot.lane.b32.xlu0 %v5856, 64
  %v5926 = vpop.permute.xlu0 %5925
  %5927 = vrot.lane.b32.xlu0 %v5857, 64
  %v5928 = vpop.permute.xlu0 %5927
  %5929 = vrot.lane.b32.xlu0 %v5858, 64
  %v5930 = vpop.permute.xlu0 %5929
  %5931 = vrot.lane.b32.xlu0 %v5859, 64
  %v5932 = vpop.permute.xlu0 %5931
  %5933 = vrot.lane.b32.xlu0 %v5860, 64
  %v5934 = vpop.permute.xlu0 %5933
  %5935 = vrot.lane.b32.xlu0 %v5861, 64
  %v5936 = vpop.permute.xlu0 %5935
  %5937 = vrot.lane.b32.xlu0 %v5862, 64
  %v5938 = vpop.permute.xlu0 %5937
  %5939 = vrot.lane.b32.xlu0 %v5863, 64
  %v5940 = vpop.permute.xlu0 %5939
  %5941 = vrot.lane.b32.xlu0 %v5864, 64
  %v5942 = vpop.permute.xlu0 %5941
  %5943 = vrot.lane.b32.xlu0 %v5865, 64
  %v5944 = vpop.permute.xlu0 %5943
  %5945 = vrot.lane.b32.xlu0 %v5866, 64
  %v5946 = vpop.permute.xlu0 %5945
  %5947 = vrot.lane.b32.xlu0 %v5867, 64
  %v5948 = vpop.permute.xlu0 %5947
  %5949 = vrot.lane.b32.xlu0 %v5868, 64
  %v5950 = vpop.permute.xlu0 %5949
  %5951 = vrot.lane.b32.xlu0 %v5869, 64
  %v5952 = vpop.permute.xlu0 %5951
  %5953 = vrot.lane.b32.xlu0 %v5870, 64
  %v5954 = vpop.permute.xlu0 %5953
  %5955 = vrot.lane.b32.xlu0 %v5871, 64
  %v5956 = vpop.permute.xlu0 %5955
  %5957 = vrot.lane.b32.xlu0 %v5872, 64
  %v5958 = vpop.permute.xlu0 %5957
  %5959 = vrot.lane.b32.xlu0 %v5873, 64
  %v5960 = vpop.permute.xlu0 %5959
  %5961 = vrot.lane.b32.xlu0 %v5874, 64
  %v5962 = vpop.permute.xlu0 %5961
  %5963 = vrot.lane.b32.xlu0 %v5875, 64
  %v5964 = vpop.permute.xlu0 %5963
  %5965 = vrot.lane.b32.xlu0 %v5876, 64
  %v5966 = vpop.permute.xlu0 %5965
  %5967 = vrot.lane.b32.xlu0 %v5877, 64
  %v5968 = vpop.permute.xlu0 %5967
  %5969 = vrot.lane.b32.xlu0 %v5878, 64
  %v5970 = vpop.permute.xlu0 %5969
  %5971 = vrot.lane.b32.xlu0 %v5879, 64
  %v5972 = vpop.permute.xlu0 %5971
  %5973 = vrot.lane.b32.xlu0 %v5880, 64
  %v5974 = vpop.permute.xlu0 %5973
  %5975 = vrot.lane.b32.xlu0 %v5881, 64
  %v5976 = vpop.permute.xlu0 %5975
  %5977 = vrot.lane.b32.xlu0 %v5882, 64
  %v5978 = vpop.permute.xlu0 %5977
  %5979 = vrot.lane.b32.xlu0 %v5883, 64
  %v5980 = vpop.permute.xlu0 %5979
  %5981 = vrot.lane.b32.xlu0 %v5884, 64
  %v5982 = vpop.permute.xlu0 %5981
  %5983 = vrot.lane.b32.xlu0 %v5885, 64
  %v5984 = vpop.permute.xlu0 %5983
  %5985 = vrot.lane.b32.xlu0 %v5886, 64
  %v5986 = vpop.permute.xlu0 %5985
  %5987 = vrot.lane.b32.xlu0 %v5887, 64
  %v5988 = vpop.permute.xlu0 %5987
  %5989 = vrot.lane.b32.xlu0 %v5888, 64
  %v5990 = vpop.permute.xlu0 %5989
  %5991 = vrot.lane.b32.xlu0 %v5889, 64
  %v5992 = vpop.permute.xlu0 %5991
  %5993 = vrot.lane.b32.xlu0 %v5890, 64
  %v5994 = vpop.permute.xlu0 %5993
  %5995 = vrot.lane.b32.xlu0 %v5891, 64
  %v5996 = vpop.permute.xlu0 %5995
  %5997 = vrot.lane.b32.xlu0 %v5892, 64
  %v5998 = vpop.permute.xlu0 %5997
  %5999 = vrot.lane.b32.xlu0 %v5893, 64
  %v6000 = vpop.permute.xlu0 %5999
  %6001 = vrot.lane.b32.xlu0 %v5894, 64
  %v6002 = vpop.permute.xlu0 %6001
  %6003 = vrot.lane.b32.xlu0 %v5895, 64
  %v6004 = vpop.permute.xlu0 %6003
  %6005 = vrot.lane.b32.xlu0 %v5896, 64
  %v6006 = vpop.permute.xlu0 %6005
  %6007 = vrot.lane.b32.xlu0 %v5897, 64
  %v6008 = vpop.permute.xlu0 %6007
  %6009 = vrot.lane.b32.xlu0 %v5898, 64
  %v6010 = vpop.permute.xlu0 %6009
  %6011 = vrot.lane.b32.xlu0 %v5899, 64
  %v6012 = vpop.permute.xlu0 %6011
  %6013 = vrot.lane.b32.xlu0 %v5900, 64
  %v6014 = vpop.permute.xlu0 %6013
  %6015 = vrot.lane.b32.xlu0 %v5901, 64
  %v6016 = vpop.permute.xlu0 %6015
  %6017 = vrot.lane.b32.xlu0 %v5902, 64
  %v6018 = vpop.permute.xlu0 %6017
  %6019 = vrot.lane.b32.xlu0 %v5903, 64
  %v6020 = vpop.permute.xlu0 %6019
  %6021 = vrot.lane.b32.xlu0 %v5904, 64
  %v6022 = vpop.permute.xlu0 %6021
  %6023 = vrot.lane.b32.xlu0 %v5905, 64
  %v6024 = vpop.permute.xlu0 %6023
  %6025 = vrot.lane.b32.xlu0 %v5906, 64
  %v6026 = vpop.permute.xlu0 %6025
  %6027 = vrot.lane.b32.xlu0 %v5907, 64
  %v6028 = vpop.permute.xlu0 %6027
  %6029 = vrot.lane.b32.xlu0 %v5908, 64
  %v6030 = vpop.permute.xlu0 %6029
  %6031 = vrot.lane.b32.xlu0 %v5909, 64
  %v6032 = vpop.permute.xlu0 %6031
  %6033 = vrot.lane.b32.xlu0 %v5910, 64
  %v6034 = vpop.permute.xlu0 %6033
  %6035 = vrot.lane.b32.xlu0 %v5911, 64
  %v6036 = vpop.permute.xlu0 %6035
  %6037 = vrot.lane.b32.xlu0 %v5912, 64
  %v6038 = vpop.permute.xlu0 %6037
  %6039 = vrot.lane.b32.xlu0 %v5913, 64
  %v6040 = vpop.permute.xlu0 %6039
  %6041 = vrot.lane.b32.xlu0 %v5914, 64
  %v6042 = vpop.permute.xlu0 %6041
  %v6043 = vpack.c.b16 %v5328, %v5328
  %v6044 = vpack.c.b16 %v5346, %v5346
  %v6045 = vpack.c.b16 %v5364, %v5364
  %v6046 = vpack.c.b16 %v5382, %v5382
  %v6047 = vpack.c.b16 %v5400, %v5400
  %v6048 = vpack.c.b16 %v5418, %v5418
  %v6049 = vpack.c.b16 %v5436, %v5436
  %v6050 = vpack.c.b16 %v5454, %v5454
  %6051 = vrot.lane.b32.xlu0 %v6043, 64
  %v6052 = vpop.permute.xlu0 %6051
  %6053 = vrot.lane.b32.xlu0 %v6044, 64
  %v6054 = vpop.permute.xlu0 %6053
  %6055 = vrot.lane.b32.xlu0 %v6045, 64
  %v6056 = vpop.permute.xlu0 %6055
  %6057 = vrot.lane.b32.xlu0 %v6046, 64
  %v6058 = vpop.permute.xlu0 %6057
  %6059 = vrot.lane.b32.xlu0 %v6047, 64
  %v6060 = vpop.permute.xlu0 %6059
  %6061 = vrot.lane.b32.xlu0 %v6048, 64
  %v6062 = vpop.permute.xlu0 %6061
  %6063 = vrot.lane.b32.xlu0 %v6049, 64
  %v6064 = vpop.permute.xlu0 %6063
  %6065 = vrot.lane.b32.xlu0 %v6050, 64
  %v6066 = vpop.permute.xlu0 %6065
  %v6067 = vpack.c.b16 %v5302, %v5302
  %v6068 = vpack.c.b16 %v5303, %v5303
  %v6069 = vpack.c.b16 %v5304, %v5304
  %v6070 = vpack.c.b16 %v5305, %v5305
  %v6071 = vpack.c.b16 %v5306, %v5306
  %v6072 = vpack.c.b16 %v5307, %v5307
  %v6073 = vpack.c.b16 %v5308, %v5308
  %v6074 = vpack.c.b16 %v5309, %v5309
  %6075 = vrot.lane.b32.xlu0 %v6067, 64
  %v6076 = vpop.permute.xlu0 %6075
  %6077 = vrot.lane.b32.xlu0 %v6068, 64
  %v6078 = vpop.permute.xlu0 %6077
  %6079 = vrot.lane.b32.xlu0 %v6069, 64
  %v6080 = vpop.permute.xlu0 %6079
  %6081 = vrot.lane.b32.xlu0 %v6070, 64
  %v6082 = vpop.permute.xlu0 %6081
  %6083 = vrot.lane.b32.xlu0 %v6071, 64
  %v6084 = vpop.permute.xlu0 %6083
  %6085 = vrot.lane.b32.xlu0 %v6072, 64
  %v6086 = vpop.permute.xlu0 %6085
  %6087 = vrot.lane.b32.xlu0 %v6073, 64
  %v6088 = vpop.permute.xlu0 %6087
  %6089 = vrot.lane.b32.xlu0 %v6074, 64
  %v6090 = vpop.permute.xlu0 %6089
  %v6091 = vpack.c.b16 %v5310, %v5310
  %6092 = vrot.lane.b32.xlu0 %v6091, 64
  %v6093 = vpop.permute.xlu0 %6092
  %v6094 = vpack.c.b16 %v5464, %v5464
  %v6095 = vpack.c.b16 %v5465, %v5465
  %v6096 = vpack.c.b16 %v5466, %v5466
  %v6097 = vpack.c.b16 %v5467, %v5467
  %v6098 = vpack.c.b16 %v5468, %v5468
  %v6099 = vpack.c.b16 %v5469, %v5469
  %v6100 = vpack.c.b16 %v5470, %v5470
  %v6101 = vpack.c.b16 %v5471, %v5471
  %6102 = vrot.lane.b32.xlu0 %v6094, 64
  %v6103 = vpop.permute.xlu0 %6102
  %6104 = vrot.lane.b32.xlu0 %v6095, 64
  %v6105 = vpop.permute.xlu0 %6104
  %6106 = vrot.lane.b32.xlu0 %v6096, 64
  %v6107 = vpop.permute.xlu0 %6106
  %6108 = vrot.lane.b32.xlu0 %v6097, 64
  %v6109 = vpop.permute.xlu0 %6108
  %6110 = vrot.lane.b32.xlu0 %v6098, 64
  %v6111 = vpop.permute.xlu0 %6110
  %6112 = vrot.lane.b32.xlu0 %v6099, 64
  %v6113 = vpop.permute.xlu0 %6112
  %6114 = vrot.lane.b32.xlu0 %v6100, 64
  %v6115 = vpop.permute.xlu0 %6114
  %6116 = vrot.lane.b32.xlu0 %v6101, 64
  %v6117 = vpop.permute.xlu0 %6116
  %v6118 = vpack.c.b16 %v5472, %v5472
  %6119 = vrot.lane.b32.xlu0 %v6118, 64
  %v6120 = vpop.permute.xlu0 %6119
  %vm6121 = vcmask 523264
  %v6124 = vsel %vm6121, %v5473, %v5700
  %v6127 = vsel %vm6121, %v5474, %v5702
  %v6130 = vsel %vm6121, %v5475, %v5704
  %v6133 = vsel %vm6121, %v5476, %v5706
  %v6136 = vsel %vm6121, %v5477, %v5708
  %v6139 = vsel %vm6121, %v5478, %v5710
  %v6142 = vsel %vm6121, %v5479, %v5712
  %v6145 = vsel %vm6121, %v5480, %v5714
  %v6148 = vsel %vm6121, %v5482, %v5716
  %v6151 = vsel %vm6121, %v5483, %v5718
  %v6154 = vsel %vm6121, %v5484, %v5720
  %v6157 = vsel %vm6121, %v5485, %v5722
  %v6160 = vsel %vm6121, %v5486, %v5724
  %v6163 = vsel %vm6121, %v5487, %v5726
  %v6166 = vsel %vm6121, %v5488, %v5728
  %v6169 = vsel %vm6121, %v5489, %v5730
  %v6172 = vsel %vm6121, %v5491, %v5732
  %v6175 = vsel %vm6121, %v5492, %v5734
  %v6178 = vsel %vm6121, %v5493, %v5736
  %v6181 = vsel %vm6121, %v5494, %v5738
  %v6184 = vsel %vm6121, %v5495, %v5740
  %v6187 = vsel %vm6121, %v5496, %v5742
  %v6190 = vsel %vm6121, %v5497, %v5744
  %v6193 = vsel %vm6121, %v5498, %v5746
  %v6196 = vsel %vm6121, %v5500, %v5748
  %v6199 = vsel %vm6121, %v5501, %v5750
  %v6202 = vsel %vm6121, %v5502, %v5752
  %v6205 = vsel %vm6121, %v5503, %v5754
  %v6208 = vsel %vm6121, %v5504, %v5756
  %v6211 = vsel %vm6121, %v5505, %v5758
  %v6214 = vsel %vm6121, %v5506, %v5760
  %v6217 = vsel %vm6121, %v5507, %v5762
  %v6220 = vsel %vm6121, %v5509, %v5764
  %v6223 = vsel %vm6121, %v5510, %v5766
  %v6226 = vsel %vm6121, %v5511, %v5768
  %v6229 = vsel %vm6121, %v5512, %v5770
  %v6232 = vsel %vm6121, %v5513, %v5772
  %v6235 = vsel %vm6121, %v5514, %v5774
  %v6238 = vsel %vm6121, %v5515, %v5776
  %v6241 = vsel %vm6121, %v5516, %v5778
  %v6244 = vsel %vm6121, %v5518, %v5780
  %v6247 = vsel %vm6121, %v5519, %v5782
  %v6250 = vsel %vm6121, %v5520, %v5784
  %v6253 = vsel %vm6121, %v5521, %v5786
  %v6256 = vsel %vm6121, %v5522, %v5788
  %v6259 = vsel %vm6121, %v5523, %v5790
  %v6262 = vsel %vm6121, %v5524, %v5792
  %v6265 = vsel %vm6121, %v5525, %v5794
  %v6268 = vsel %vm6121, %v5527, %v5796
  %v6271 = vsel %vm6121, %v5528, %v5798
  %v6274 = vsel %vm6121, %v5529, %v5800
  %v6277 = vsel %vm6121, %v5530, %v5802
  %v6280 = vsel %vm6121, %v5531, %v5804
  %v6283 = vsel %vm6121, %v5532, %v5806
  %v6286 = vsel %vm6121, %v5533, %v5808
  %v6289 = vsel %vm6121, %v5534, %v5810
  %v6292 = vsel %vm6121, %v5536, %v5812
  %v6295 = vsel %vm6121, %v5537, %v5814
  %v6298 = vsel %vm6121, %v5538, %v5816
  %v6301 = vsel %vm6121, %v5539, %v5818
  %v6304 = vsel %vm6121, %v5540, %v5820
  %v6307 = vsel %vm6121, %v5541, %v5822
  %v6310 = vsel %vm6121, %v5542, %v5824
  %v6313 = vsel %vm6121, %v5543, %v5826
  %v6316 = vsel %vm6121, %v5481, %v5836
  %v6319 = vsel %vm6121, %v5490, %v5838
  %v6322 = vsel %vm6121, %v5499, %v5840
  %v6325 = vsel %vm6121, %v5508, %v5842
  %v6328 = vsel %vm6121, %v5517, %v5844
  %v6331 = vsel %vm6121, %v5526, %v5846
  %v6334 = vsel %vm6121, %v5535, %v5848
  %v6337 = vsel %vm6121, %v5544, %v5850
  %v6340 = vsel %vm6121, %v5554, %v5916
  %v6343 = vsel %vm6121, %v5555, %v5918
  %v6346 = vsel %vm6121, %v5556, %v5920
  %v6349 = vsel %vm6121, %v5557, %v5922
  %v6352 = vsel %vm6121, %v5558, %v5924
  %v6355 = vsel %vm6121, %v5559, %v5926
  %v6358 = vsel %vm6121, %v5560, %v5928
  %v6361 = vsel %vm6121, %v5561, %v5930
  %v6364 = vsel %vm6121, %v5563, %v5932
  %v6367 = vsel %vm6121, %v5564, %v5934
  %v6370 = vsel %vm6121, %v5565, %v5936
  %v6373 = vsel %vm6121, %v5566, %v5938
  %v6376 = vsel %vm6121, %v5567, %v5940
  %v6379 = vsel %vm6121, %v5568, %v5942
  %v6382 = vsel %vm6121, %v5569, %v5944
  %v6385 = vsel %vm6121, %v5570, %v5946
  %v6388 = vsel %vm6121, %v5572, %v5948
  %v6391 = vsel %vm6121, %v5573, %v5950
  %v6394 = vsel %vm6121, %v5574, %v5952
  %v6397 = vsel %vm6121, %v5575, %v5954
  %v6400 = vsel %vm6121, %v5576, %v5956
  %v6403 = vsel %vm6121, %v5577, %v5958
  %v6406 = vsel %vm6121, %v5578, %v5960
  %v6409 = vsel %vm6121, %v5579, %v5962
  %v6412 = vsel %vm6121, %v5581, %v5964
  %v6415 = vsel %vm6121, %v5582, %v5966
  %v6418 = vsel %vm6121, %v5583, %v5968
  %v6421 = vsel %vm6121, %v5584, %v5970
  %v6424 = vsel %vm6121, %v5585, %v5972
  %v6427 = vsel %vm6121, %v5586, %v5974
  %v6430 = vsel %vm6121, %v5587, %v5976
  %v6433 = vsel %vm6121, %v5588, %v5978
  %v6436 = vsel %vm6121, %v5590, %v5980
  %v6439 = vsel %vm6121, %v5591, %v5982
  %v6442 = vsel %vm6121, %v5592, %v5984
  %v6445 = vsel %vm6121, %v5593, %v5986
  %v6448 = vsel %vm6121, %v5594, %v5988
  %v6451 = vsel %vm6121, %v5595, %v5990
  %v6454 = vsel %vm6121, %v5596, %v5992
  %v6457 = vsel %vm6121, %v5597, %v5994
  %v6460 = vsel %vm6121, %v5599, %v5996
  %v6463 = vsel %vm6121, %v5600, %v5998
  %v6466 = vsel %vm6121, %v5601, %v6000
  %v6469 = vsel %vm6121, %v5602, %v6002
  %v6472 = vsel %vm6121, %v5603, %v6004
  %v6475 = vsel %vm6121, %v5604, %v6006
  %v6478 = vsel %vm6121, %v5605, %v6008
  %v6481 = vsel %vm6121, %v5606, %v6010
  %v6484 = vsel %vm6121, %v5608, %v6012
  %v6487 = vsel %vm6121, %v5609, %v6014
  %v6490 = vsel %vm6121, %v5610, %v6016
  %v6493 = vsel %vm6121, %v5611, %v6018
  %v6496 = vsel %vm6121, %v5612, %v6020
  %v6499 = vsel %vm6121, %v5613, %v6022
  %v6502 = vsel %vm6121, %v5614, %v6024
  %v6505 = vsel %vm6121, %v5615, %v6026
  %v6508 = vsel %vm6121, %v5617, %v6028
  %v6511 = vsel %vm6121, %v5618, %v6030
  %v6514 = vsel %vm6121, %v5619, %v6032
  %v6517 = vsel %vm6121, %v5620, %v6034
  %v6520 = vsel %vm6121, %v5621, %v6036
  %v6523 = vsel %vm6121, %v5622, %v6038
  %v6526 = vsel %vm6121, %v5623, %v6040
  %v6529 = vsel %vm6121, %v5624, %v6042
  %v6532 = vsel %vm6121, %v5562, %v6052
  %v6535 = vsel %vm6121, %v5571, %v6054
  %v6538 = vsel %vm6121, %v5580, %v6056
  %v6541 = vsel %vm6121, %v5589, %v6058
  %v6544 = vsel %vm6121, %v5598, %v6060
  %v6547 = vsel %vm6121, %v5607, %v6062
  %v6550 = vsel %vm6121, %v5616, %v6064
  %v6553 = vsel %vm6121, %v5625, %v6066
  %v6556 = vsel %vm6121, %v5545, %v6076
  %v6559 = vsel %vm6121, %v5546, %v6078
  %v6562 = vsel %vm6121, %v5547, %v6080
  %v6565 = vsel %vm6121, %v5548, %v6082
  %v6568 = vsel %vm6121, %v5549, %v6084
  %v6571 = vsel %vm6121, %v5550, %v6086
  %v6574 = vsel %vm6121, %v5551, %v6088
  %v6577 = vsel %vm6121, %v5552, %v6090
  %v6580 = vsel %vm6121, %v5553, %v6093
  %v6583 = vsel %vm6121, %v5626, %v6103
  %v6586 = vsel %vm6121, %v5627, %v6105
  %v6589 = vsel %vm6121, %v5628, %v6107
  %v6592 = vsel %vm6121, %v5629, %v6109
  %v6595 = vsel %vm6121, %v5630, %v6111
  %v6598 = vsel %vm6121, %v5631, %v6113
  %v6601 = vsel %vm6121, %v5632, %v6115
  %v6604 = vsel %vm6121, %v5633, %v6117
  %v6607 = vsel %vm6121, %v5634, %v6120
  %v6770 = vunpack.c.l.b16 %v6124
  %v6771 = vunpack.c.l.b16 %v6127
  %v6772 = vunpack.c.l.b16 %v6340
  %v6773 = vunpack.c.l.b16 %v6343
  %v6774 = vunpack.c.l.b16 %v6148
  %v6775 = vunpack.c.l.b16 %v6151
  %v6776 = vunpack.c.l.b16 %v6364
  %v6777 = vunpack.c.l.b16 %v6367
  %v6778 = vunpack.c.l.b16 %v6130
  %v6779 = vunpack.c.l.b16 %v6346
  %v6780 = vunpack.c.l.b16 %v6154
  %v6781 = vunpack.c.l.b16 %v6370
  %v6782 = vunpack.c.l.b16 %v6133
  %v6783 = vunpack.c.l.b16 %v6349
  %v6784 = vunpack.c.l.b16 %v6157
  %v6785 = vunpack.c.l.b16 %v6373
  %v6786 = vunpack.c.l.b16 %v6136
  %v6787 = vunpack.c.l.b16 %v6352
  %v6788 = vunpack.c.l.b16 %v6160
  %v6789 = vunpack.c.l.b16 %v6376
  %v6790 = vunpack.c.l.b16 %v6139
  %v6791 = vunpack.c.l.b16 %v6355
  %v6792 = vunpack.c.l.b16 %v6163
  %v6793 = vunpack.c.l.b16 %v6379
  %v6794 = vunpack.c.l.b16 %v6142
  %v6795 = vunpack.c.l.b16 %v6358
  %v6796 = vunpack.c.l.b16 %v6166
  %v6797 = vunpack.c.l.b16 %v6382
  %v6798 = vunpack.c.l.b16 %v6145
  %v6799 = vunpack.c.l.b16 %v6361
  %v6800 = vunpack.c.l.b16 %v6169
  %v6801 = vunpack.c.l.b16 %v6385
  %v6802 = vunpack.c.l.b16 %v6316
  %v6803 = vunpack.c.l.b16 %v6532
  %v6804 = vunpack.c.l.b16 %v6319
  %v6805 = vunpack.c.l.b16 %v6535
  %v6806 = vunpack.c.l.b16 %v6172
  %v6807 = vunpack.c.l.b16 %v6175
  %v6808 = vunpack.c.l.b16 %v6388
  %v6809 = vunpack.c.l.b16 %v6391
  %v6810 = vunpack.c.l.b16 %v6178
  %v6811 = vunpack.c.l.b16 %v6394
  %v6812 = vunpack.c.l.b16 %v6181
  %v6813 = vunpack.c.l.b16 %v6397
  %v6814 = vunpack.c.l.b16 %v6184
  %v6815 = vunpack.c.l.b16 %v6400
  %v6816 = vunpack.c.l.b16 %v6187
  %v6817 = vunpack.c.l.b16 %v6403
  %v6818 = vunpack.c.l.b16 %v6190
  %v6819 = vunpack.c.l.b16 %v6406
  %v6820 = vunpack.c.l.b16 %v6193
  %v6821 = vunpack.c.l.b16 %v6409
  %v6822 = vunpack.c.l.b16 %v6322
  %v6823 = vunpack.c.l.b16 %v6538
  %v6824 = vunpack.c.l.b16 %v6196
  %v6825 = vunpack.c.l.b16 %v6199
  %v6826 = vunpack.c.l.b16 %v6412
  %v6827 = vunpack.c.l.b16 %v6415
  %v6828 = vunpack.c.l.b16 %v6202
  %v6829 = vunpack.c.l.b16 %v6418
  %v6830 = vunpack.c.l.b16 %v6205
  %v6831 = vunpack.c.l.b16 %v6421
  %v6832 = vunpack.c.l.b16 %v6208
  %v6833 = vunpack.c.l.b16 %v6424
  %v6834 = vunpack.c.l.b16 %v6211
  %v6835 = vunpack.c.l.b16 %v6427
  %v6836 = vunpack.c.l.b16 %v6214
  %v6837 = vunpack.c.l.b16 %v6430
  %v6838 = vunpack.c.l.b16 %v6217
  %v6839 = vunpack.c.l.b16 %v6433
  %v6840 = vunpack.c.l.b16 %v6325
  %v6841 = vunpack.c.l.b16 %v6541
  %v6842 = vunpack.c.l.b16 %v6220
  %v6843 = vunpack.c.l.b16 %v6223
  %v6844 = vunpack.c.l.b16 %v6436
  %v6845 = vunpack.c.l.b16 %v6439
  %v6846 = vunpack.c.l.b16 %v6226
  %v6847 = vunpack.c.l.b16 %v6442
  %v6848 = vunpack.c.l.b16 %v6229
  %v6849 = vunpack.c.l.b16 %v6445
  %v6850 = vunpack.c.l.b16 %v6232
  %v6851 = vunpack.c.l.b16 %v6448
  %v6852 = vunpack.c.l.b16 %v6235
  %v6853 = vunpack.c.l.b16 %v6451
  %v6854 = vunpack.c.l.b16 %v6238
  %v6855 = vunpack.c.l.b16 %v6454
  %v6856 = vunpack.c.l.b16 %v6241
  %v6857 = vunpack.c.l.b16 %v6457
  %v6858 = vunpack.c.l.b16 %v6328
  %v6859 = vunpack.c.l.b16 %v6544
  %v6860 = vunpack.c.l.b16 %v6244
  %v6861 = vunpack.c.l.b16 %v6247
  %v6862 = vunpack.c.l.b16 %v6460
  %v6863 = vunpack.c.l.b16 %v6463
  %v6864 = vunpack.c.l.b16 %v6250
  %v6865 = vunpack.c.l.b16 %v6466
  %v6866 = vunpack.c.l.b16 %v6253
  %v6867 = vunpack.c.l.b16 %v6469
  %v6868 = vunpack.c.l.b16 %v6256
  %v6869 = vunpack.c.l.b16 %v6472
  %v6870 = vunpack.c.l.b16 %v6259
  %v6871 = vunpack.c.l.b16 %v6475
  %v6872 = vunpack.c.l.b16 %v6262
  %v6873 = vunpack.c.l.b16 %v6478
  %v6874 = vunpack.c.l.b16 %v6265
  %v6875 = vunpack.c.l.b16 %v6481
  %v6876 = vunpack.c.l.b16 %v6331
  %v6877 = vunpack.c.l.b16 %v6547
  %v6878 = vunpack.c.l.b16 %v6268
  %v6879 = vunpack.c.l.b16 %v6271
  %v6880 = vunpack.c.l.b16 %v6484
  %v6881 = vunpack.c.l.b16 %v6487
  %v6882 = vunpack.c.l.b16 %v6274
  %v6883 = vunpack.c.l.b16 %v6490
  %v6884 = vunpack.c.l.b16 %v6277
  %v6885 = vunpack.c.l.b16 %v6493
  %v6886 = vunpack.c.l.b16 %v6280
  %v6887 = vunpack.c.l.b16 %v6496
  %v6888 = vunpack.c.l.b16 %v6283
  %v6889 = vunpack.c.l.b16 %v6499
  %v6890 = vunpack.c.l.b16 %v6286
  %v6891 = vunpack.c.l.b16 %v6502
  %v6892 = vunpack.c.l.b16 %v6289
  %v6893 = vunpack.c.l.b16 %v6505
  %v6894 = vunpack.c.l.b16 %v6334
  %v6895 = vunpack.c.l.b16 %v6550
  %v6896 = vunpack.c.l.b16 %v6292
  %v6897 = vunpack.c.l.b16 %v6295
  %v6898 = vunpack.c.l.b16 %v6508
  %v6899 = vunpack.c.l.b16 %v6511
  %v6900 = vunpack.c.l.b16 %v6298
  %v6901 = vunpack.c.l.b16 %v6514
  %v6902 = vunpack.c.l.b16 %v6301
  %v6903 = vunpack.c.l.b16 %v6517
  %v6904 = vunpack.c.l.b16 %v6304
  %v6905 = vunpack.c.l.b16 %v6520
  %v6906 = vunpack.c.l.b16 %v6307
  %v6907 = vunpack.c.l.b16 %v6523
  %v6908 = vunpack.c.l.b16 %v6310
  %v6909 = vunpack.c.l.b16 %v6526
  %v6910 = vunpack.c.l.b16 %v6313
  %v6911 = vunpack.c.l.b16 %v6529
  %v6912 = vunpack.c.l.b16 %v6337
  %v6913 = vunpack.c.l.b16 %v6553
  %v6914 = vunpack.c.l.b16 %v6556
  %v6915 = vunpack.c.l.b16 %v6559
  %v6916 = vunpack.c.l.b16 %v6583
  %v6917 = vunpack.c.l.b16 %v6586
  %v6918 = vunpack.c.l.b16 %v6562
  %v6919 = vunpack.c.l.b16 %v6589
  %v6920 = vunpack.c.l.b16 %v6565
  %v6921 = vunpack.c.l.b16 %v6592
  %v6922 = vunpack.c.l.b16 %v6568
  %v6923 = vunpack.c.l.b16 %v6595
  %v6924 = vunpack.c.l.b16 %v6571
  %v6925 = vunpack.c.l.b16 %v6598
  %v6926 = vunpack.c.l.b16 %v6574
  %v6927 = vunpack.c.l.b16 %v6601
  %v6928 = vunpack.c.l.b16 %v6577
  %v6929 = vunpack.c.l.b16 %v6604
  %v6930 = vunpack.c.l.b16 %v6580
  %v6931 = vunpack.c.l.b16 %v6607
  %v6932 = vld [vmem:[%s2] sm:$0xf]
  %v6933 = vld [vmem:[%s2 + $0x4] sm:$0xf]
  %v6934 = vld [vmem:[%s2 + $0x8] sm:$0xf]
  %v6935 = vld [vmem:[%s2 + $0xc] sm:$0xf]
  %v6936 = vld [vmem:[%s2 + $0x10] sm:$0xf]
  %v6937 = vld [vmem:[%s2 + $0x14] sm:$0xf]
  %v6938 = vld [vmem:[%s2 + $0x18] sm:$0xf]
  %v6939 = vld [vmem:[%s2 + $0x1c] sm:$0xf]
  %v6940 = vld [vmem:[%s2 + $0x20] sm:$0xf]
  %v6941 = vld [vmem:[%s2 + $0x24] sm:$0xf]
  %v6942 = vld [vmem:[%s2 + $0x28] sm:$0xf]
  %v6943 = vld [vmem:[%s2 + $0x2c] sm:$0xf]
  %v6944 = vld [vmem:[%s2 + $0x30] sm:$0xf]
  %v6945 = vld [vmem:[%s2 + $0x34] sm:$0xf]
  %v6946 = vld [vmem:[%s2 + $0x38] sm:$0xf]
  %v6947 = vld [vmem:[%s2 + $0x3c] sm:$0xf]
  %v6948 = vld [vmem:[%s2 + $0x40] sm:$0xf]
  %v6949 = vld [vmem:[%s2 + $0x44] sm:$0xf]
  %v6950 = vld [vmem:[%s2 + $0x48] sm:$0xf]
  %v6951 = vld [vmem:[%s2 + $0x4c] sm:$0xf]
  %v6952 = vld [vmem:[%s2 + $0x50] sm:$0xf]
  %v6953 = vld [vmem:[%s2 + $0x54] sm:$0xf]
  %v6954 = vld [vmem:[%s2 + $0x58] sm:$0xf]
  %v6955 = vld [vmem:[%s2 + $0x5c] sm:$0xf]
  %v6956 = vld [vmem:[%s2 + $0x60] sm:$0xf]
  %v6957 = vld [vmem:[%s2 + $0x64] sm:$0xf]
  %v6958 = vld [vmem:[%s2 + $0x68] sm:$0xf]
  %v6959 = vld [vmem:[%s2 + $0x6c] sm:$0xf]
  %v6960 = vld [vmem:[%s2 + $0x70] sm:$0xf]
  %v6961 = vld [vmem:[%s2 + $0x74] sm:$0xf]
  %v6962 = vld [vmem:[%s2 + $0x78] sm:$0xf]
  %v6963 = vld [vmem:[%s2 + $0x7c] sm:$0xf]
  %v6964 = vld [vmem:[%s2 + $0x80] sm:$0xf]
  %v6965 = vld [vmem:[%s2 + $0x84] sm:$0xf]
  %v6966 = vld [vmem:[%s2 + $0x88] sm:$0xf]
  %v6967 = vld [vmem:[%s2 + $0x8c] sm:$0xf]
  %v6968 = vld [vmem:[%s2 + $0x90] sm:$0xf]
  %v6969 = vld [vmem:[%s2 + $0x94] sm:$0xf]
  %v6970 = vld [vmem:[%s2 + $0x98] sm:$0xf]
  %v6971 = vld [vmem:[%s2 + $0x9c] sm:$0xf]
  %v6972 = vld [vmem:[%s2 + $0xa0] sm:$0xf]
  %v6973 = vld [vmem:[%s2 + $0xa4] sm:$0xf]
  %v6974 = vld [vmem:[%s2 + $0xa8] sm:$0xf]
  %v6975 = vld [vmem:[%s2 + $0xac] sm:$0xf]
  %v6976 = vld [vmem:[%s2 + $0xb0] sm:$0xf]
  %v6977 = vld [vmem:[%s2 + $0xb4] sm:$0xf]
  %v6978 = vld [vmem:[%s2 + $0xb8] sm:$0xf]
  %v6979 = vld [vmem:[%s2 + $0xbc] sm:$0xf]
  %v6980 = vld [vmem:[%s2 + $0xc0] sm:$0xf]
  %v6981 = vld [vmem:[%s2 + $0xc4] sm:$0xf]
  %v6982 = vld [vmem:[%s2 + $0xc8] sm:$0xf]
  %v6983 = vld [vmem:[%s2 + $0xcc] sm:$0xf]
  %v6984 = vld [vmem:[%s2 + $0xd0] sm:$0xf]
  %v6985 = vld [vmem:[%s2 + $0xd4] sm:$0xf]
  %v6986 = vld [vmem:[%s2 + $0xd8] sm:$0xf]
  %v6987 = vld [vmem:[%s2 + $0xdc] sm:$0xf]
  %v6988 = vld [vmem:[%s2 + $0xe0] sm:$0xf]
  %v6989 = vld [vmem:[%s2 + $0xe4] sm:$0xf]
  %v6990 = vld [vmem:[%s2 + $0xe8] sm:$0xf]
  %v6991 = vld [vmem:[%s2 + $0xec] sm:$0xf]
  %v6992 = vld [vmem:[%s2 + $0xf0] sm:$0xf]
  %v6993 = vld [vmem:[%s2 + $0xf4] sm:$0xf]
  %v6994 = vld [vmem:[%s2 + $0xf8] sm:$0xf]
  %v6995 = vld [vmem:[%s2 + $0xfc] sm:$0xf]
  %v6996 = vld [vmem:[%s2 + $0x100] sm:$0xf]
  %v6997 = vld [vmem:[%s2 + $0x104] sm:$0xf]
  %v6998 = vld [vmem:[%s2 + $0x108] sm:$0xf]
  %v6999 = vld [vmem:[%s2 + $0x10c] sm:$0xf]
  %v7000 = vld [vmem:[%s2 + $0x110] sm:$0xf]
  %v7001 = vld [vmem:[%s2 + $0x114] sm:$0xf]
  %v7002 = vld [vmem:[%s2 + $0x118] sm:$0xf]
  %v7003 = vld [vmem:[%s2 + $0x11c] sm:$0xf]
  %v7004 = vld [vmem:[%s2 + $0x120] sm:$0xf]
  %v7005 = vld [vmem:[%s2 + $0x124] sm:$0xf]
  %v7006 = vld [vmem:[%s2 + $0x128] sm:$0xf]
  %v7007 = vld [vmem:[%s2 + $0x12c] sm:$0xf]
  %v7008 = vld [vmem:[%s2 + $0x130] sm:$0xf]
  %v7009 = vld [vmem:[%s2 + $0x134] sm:$0xf]
  %v7010 = vld [vmem:[%s2 + $0x138] sm:$0xf]
  %v7011 = vld [vmem:[%s2 + $0x13c] sm:$0xf]
  %v7012 = vld [vmem:[%s2 + $0x140] sm:$0xf]
  %v7013 = vld [vmem:[%s2 + $0x144] sm:$0xf]
  %v7014 = vld [vmem:[%s2 + $0x148] sm:$0xf]
  %v7015 = vld [vmem:[%s2 + $0x14c] sm:$0xf]
  %v7016 = vld [vmem:[%s2 + $0x150] sm:$0xf]
  %v7017 = vld [vmem:[%s2 + $0x154] sm:$0xf]
  %v7018 = vld [vmem:[%s2 + $0x158] sm:$0xf]
  %v7019 = vld [vmem:[%s2 + $0x15c] sm:$0xf]
  %v7020 = vld [vmem:[%s2 + $0x160] sm:$0xf]
  %v7021 = vld [vmem:[%s2 + $0x164] sm:$0xf]
  %v7022 = vld [vmem:[%s2 + $0x168] sm:$0xf]
  %v7023 = vld [vmem:[%s2 + $0x16c] sm:$0xf]
  %v7024 = vld [vmem:[%s2 + $0x170] sm:$0xf]
  %v7025 = vld [vmem:[%s2 + $0x174] sm:$0xf]
  %v7026 = vld [vmem:[%s2 + $0x178] sm:$0xf]
  %v7027 = vld [vmem:[%s2 + $0x17c] sm:$0xf]
  %v7028 = vld [vmem:[%s2 + $0x180] sm:$0xf]
  %v7029 = vld [vmem:[%s2 + $0x184] sm:$0xf]
  %v7030 = vld [vmem:[%s2 + $0x188] sm:$0xf]
  %v7031 = vld [vmem:[%s2 + $0x18c] sm:$0xf]
  %v7032 = vld [vmem:[%s2 + $0x190] sm:$0xf]
  %v7033 = vld [vmem:[%s2 + $0x194] sm:$0xf]
  %v7034 = vld [vmem:[%s2 + $0x198] sm:$0xf]
  %v7035 = vld [vmem:[%s2 + $0x19c] sm:$0xf]
  %v7036 = vld [vmem:[%s2 + $0x1a0] sm:$0xf]
  %v7037 = vld [vmem:[%s2 + $0x1a4] sm:$0xf]
  %v7038 = vld [vmem:[%s2 + $0x1a8] sm:$0xf]
  %v7039 = vld [vmem:[%s2 + $0x1ac] sm:$0xf]
  %v7040 = vld [vmem:[%s2 + $0x1b0] sm:$0xf]
  %v7041 = vld [vmem:[%s2 + $0x1b4] sm:$0xf]
  %v7042 = vld [vmem:[%s2 + $0x1b8] sm:$0xf]
  %v7043 = vld [vmem:[%s2 + $0x1bc] sm:$0xf]
  %v7044 = vld [vmem:[%s2 + $0x1c0] sm:$0xf]
  %v7045 = vld [vmem:[%s2 + $0x1c4] sm:$0xf]
  %v7046 = vld [vmem:[%s2 + $0x1c8] sm:$0xf]
  %v7047 = vld [vmem:[%s2 + $0x1cc] sm:$0xf]
  %v7048 = vld [vmem:[%s2 + $0x1d0] sm:$0xf]
  %v7049 = vld [vmem:[%s2 + $0x1d4] sm:$0xf]
  %v7050 = vld [vmem:[%s2 + $0x1d8] sm:$0xf]
  %v7051 = vld [vmem:[%s2 + $0x1dc] sm:$0xf]
  %v7052 = vld [vmem:[%s2 + $0x1e0] sm:$0xf]
  %v7053 = vld [vmem:[%s2 + $0x1e4] sm:$0xf]
  %v7054 = vld [vmem:[%s2 + $0x1e8] sm:$0xf]
  %v7055 = vld [vmem:[%s2 + $0x1ec] sm:$0xf]
  %v7056 = vld [vmem:[%s2 + $0x1f0] sm:$0xf]
  %v7057 = vld [vmem:[%s2 + $0x1f4] sm:$0xf]
  %v7058 = vld [vmem:[%s2 + $0x1f8] sm:$0xf]
  %v7059 = vld [vmem:[%s2 + $0x1fc] sm:$0xf]
  %v7060 = vld [vmem:[%s3] sm:$0x1]
  %v7062 = vlaneseq
  %v7063 = vshrl.u32 %v7062, 7
  %v7064 = vsub.s32 0, %v7063
  %v7065 = vrot.slane %v7060, %v7064
  %v7067 = vpack.c.b16 %v6771, %v6770
  %v7068 = vpack.c.b16 %v6778, %v6771
  %v7069 = vpack.c.b16 %v6773, %v6772
  %v7070 = vpack.c.b16 %v6779, %v6773
  %v7071 = vpack.c.b16 %v6775, %v6774
  %v7072 = vpack.c.b16 %v6780, %v6775
  %v7073 = vpack.c.b16 %v6777, %v6776
  %v7074 = vpack.c.b16 %v6781, %v6777
  %v7075 = vpack.c.b16 %v6782, %v6778
  %v7076 = vpack.c.b16 %v6786, %v6782
  %v7077 = vpack.c.b16 %v6783, %v6779
  %v7078 = vpack.c.b16 %v6787, %v6783
  %v7079 = vpack.c.b16 %v6784, %v6780
  %v7080 = vpack.c.b16 %v6788, %v6784
  %v7081 = vpack.c.b16 %v6785, %v6781
  %v7082 = vpack.c.b16 %v6789, %v6785
  %v7083 = vpack.c.b16 %v6790, %v6786
  %v7084 = vpack.c.b16 %v6794, %v6790
  %v7085 = vpack.c.b16 %v6791, %v6787
  %v7086 = vpack.c.b16 %v6795, %v6791
  %v7087 = vpack.c.b16 %v6792, %v6788
  %v7088 = vpack.c.b16 %v6796, %v6792
  %v7089 = vpack.c.b16 %v6793, %v6789
  %v7090 = vpack.c.b16 %v6797, %v6793
  %v7091 = vpack.c.b16 %v6798, %v6794
  %v7092 = vpack.c.b16 %v6802, %v6798
  %v7093 = vpack.c.b16 %v6799, %v6795
  %v7094 = vpack.c.b16 %v6803, %v6799
  %v7095 = vpack.c.b16 %v6800, %v6796
  %v7096 = vpack.c.b16 %v6804, %v6800
  %v7097 = vpack.c.b16 %v6801, %v6797
  %v7098 = vpack.c.b16 %v6805, %v6801
  %v7099 = vpack.c.b16 %v6807, %v6806
  %v7100 = vpack.c.b16 %v6810, %v6807
  %v7101 = vpack.c.b16 %v6809, %v6808
  %v7102 = vpack.c.b16 %v6811, %v6809
  %v7103 = vpack.c.b16 %v6812, %v6810
  %v7104 = vpack.c.b16 %v6814, %v6812
  %v7105 = vpack.c.b16 %v6813, %v6811
  %v7106 = vpack.c.b16 %v6815, %v6813
  %v7107 = vpack.c.b16 %v6816, %v6814
  %v7108 = vpack.c.b16 %v6818, %v6816
  %v7109 = vpack.c.b16 %v6817, %v6815
  %v7110 = vpack.c.b16 %v6819, %v6817
  %v7111 = vpack.c.b16 %v6820, %v6818
  %v7112 = vpack.c.b16 %v6822, %v6820
  %v7113 = vpack.c.b16 %v6821, %v6819
  %v7114 = vpack.c.b16 %v6823, %v6821
  %v7115 = vpack.c.b16 %v6825, %v6824
  %v7116 = vpack.c.b16 %v6828, %v6825
  %v7117 = vpack.c.b16 %v6827, %v6826
  %v7118 = vpack.c.b16 %v6829, %v6827
  %v7119 = vpack.c.b16 %v6830, %v6828
  %v7120 = vpack.c.b16 %v6832, %v6830
  %v7121 = vpack.c.b16 %v6831, %v6829
  %v7122 = vpack.c.b16 %v6833, %v6831
  %v7123 = vpack.c.b16 %v6834, %v6832
  %v7124 = vpack.c.b16 %v6836, %v6834
  %v7125 = vpack.c.b16 %v6835, %v6833
  %v7126 = vpack.c.b16 %v6837, %v6835
  %v7127 = vpack.c.b16 %v6838, %v6836
  %v7128 = vpack.c.b16 %v6840, %v6838
  %v7129 = vpack.c.b16 %v6839, %v6837
  %v7130 = vpack.c.b16 %v6841, %v6839
  %v7131 = vpack.c.b16 %v6843, %v6842
  %v7132 = vpack.c.b16 %v6846, %v6843
  %v7133 = vpack.c.b16 %v6845, %v6844
  %v7134 = vpack.c.b16 %v6847, %v6845
  %v7135 = vpack.c.b16 %v6848, %v6846
  %v7136 = vpack.c.b16 %v6850, %v6848
  %v7137 = vpack.c.b16 %v6849, %v6847
  %v7138 = vpack.c.b16 %v6851, %v6849
  %v7139 = vpack.c.b16 %v6852, %v6850
  %v7140 = vpack.c.b16 %v6854, %v6852
  %v7141 = vpack.c.b16 %v6853, %v6851
  %v7142 = vpack.c.b16 %v6855, %v6853
  %v7143 = vpack.c.b16 %v6856, %v6854
  %v7144 = vpack.c.b16 %v6858, %v6856
  %v7145 = vpack.c.b16 %v6857, %v6855
  %v7146 = vpack.c.b16 %v6859, %v6857
  %v7147 = vpack.c.b16 %v6861, %v6860
  %v7148 = vpack.c.b16 %v6864, %v6861
  %v7149 = vpack.c.b16 %v6863, %v6862
  %v7150 = vpack.c.b16 %v6865, %v6863
  %v7151 = vpack.c.b16 %v6866, %v6864
  %v7152 = vpack.c.b16 %v6868, %v6866
  %v7153 = vpack.c.b16 %v6867, %v6865
  %v7154 = vpack.c.b16 %v6869, %v6867
  %v7155 = vpack.c.b16 %v6870, %v6868
  %v7156 = vpack.c.b16 %v6872, %v6870
  %v7157 = vpack.c.b16 %v6871, %v6869
  %v7158 = vpack.c.b16 %v6873, %v6871
  %v7159 = vpack.c.b16 %v6874, %v6872
  %v7160 = vpack.c.b16 %v6876, %v6874
  %v7161 = vpack.c.b16 %v6875, %v6873
  %v7162 = vpack.c.b16 %v6877, %v6875
  %v7163 = vpack.c.b16 %v6879, %v6878
  %v7164 = vpack.c.b16 %v6882, %v6879
  %v7165 = vpack.c.b16 %v6881, %v6880
  %v7166 = vpack.c.b16 %v6883, %v6881
  %v7167 = vpack.c.b16 %v6884, %v6882
  %v7168 = vpack.c.b16 %v6886, %v6884
  %v7169 = vpack.c.b16 %v6885, %v6883
  %v7170 = vpack.c.b16 %v6887, %v6885
  %v7171 = vpack.c.b16 %v6888, %v6886
  %v7172 = vpack.c.b16 %v6890, %v6888
  %v7173 = vpack.c.b16 %v6889, %v6887
  %v7174 = vpack.c.b16 %v6891, %v6889
  %v7175 = vpack.c.b16 %v6892, %v6890
  %v7176 = vpack.c.b16 %v6894, %v6892
  %v7177 = vpack.c.b16 %v6893, %v6891
  %v7178 = vpack.c.b16 %v6895, %v6893
  %v7179 = vpack.c.b16 %v6897, %v6896
  %v7180 = vpack.c.b16 %v6900, %v6897
  %v7181 = vpack.c.b16 %v6899, %v6898
  %v7182 = vpack.c.b16 %v6901, %v6899
  %v7183 = vpack.c.b16 %v6902, %v6900
  %v7184 = vpack.c.b16 %v6904, %v6902
  %v7185 = vpack.c.b16 %v6903, %v6901
  %v7186 = vpack.c.b16 %v6905, %v6903
  %v7187 = vpack.c.b16 %v6906, %v6904
  %v7188 = vpack.c.b16 %v6908, %v6906
  %v7189 = vpack.c.b16 %v6907, %v6905
  %v7190 = vpack.c.b16 %v6909, %v6907
  %v7191 = vpack.c.b16 %v6910, %v6908
  %v7192 = vpack.c.b16 %v6912, %v6910
  %v7193 = vpack.c.b16 %v6911, %v6909
  %v7194 = vpack.c.b16 %v6913, %v6911
  %v7195 = vpack.c.b16 %v6915, %v6914
  %v7196 = vpack.c.b16 %v6918, %v6915
  %v7197 = vpack.c.b16 %v6917, %v6916
  %v7198 = vpack.c.b16 %v6919, %v6917
  %v7199 = vpack.c.b16 %v6920, %v6918
  %v7200 = vpack.c.b16 %v6922, %v6920
  %v7201 = vpack.c.b16 %v6921, %v6919
  %v7202 = vpack.c.b16 %v6923, %v6921
  %v7203 = vpack.c.b16 %v6924, %v6922
  %v7204 = vpack.c.b16 %v6926, %v6924
  %v7205 = vpack.c.b16 %v6925, %v6923
  %v7206 = vpack.c.b16 %v6927, %v6925
  %v7207 = vpack.c.b16 %v6928, %v6926
  %v7208 = vpack.c.b16 %v6930, %v6928
  %v7209 = vpack.c.b16 %v6929, %v6927
  %v7210 = vpack.c.b16 %v6931, %v6929
  %v7483 = vunpack.c.l.b16 %v6932
  %v7484 = vunpack.c.l.b16 %v6933
  %v7485 = vunpack.c.l.b16 %v6934
  %v7486 = vunpack.c.l.b16 %v6935
  %v7487 = vunpack.c.l.b16 %v6936
  %v7488 = vunpack.c.l.b16 %v6937
  %v7489 = vunpack.c.l.b16 %v6938
  %v7490 = vunpack.c.l.b16 %v6939
  %v7491 = vunpack.c.l.b16 %v6940
  %v7492 = vunpack.c.l.b16 %v6941
  %v7493 = vunpack.c.l.b16 %v6942
  %v7494 = vunpack.c.l.b16 %v6943
  %v7495 = vunpack.c.l.b16 %v6944
  %v7496 = vunpack.c.l.b16 %v6945
  %v7497 = vunpack.c.l.b16 %v6946
  %v7498 = vunpack.c.l.b16 %v6947
  %v7499 = vunpack.c.l.b16 %v6948
  %v7500 = vunpack.c.l.b16 %v6949
  %v7501 = vunpack.c.l.b16 %v6950
  %v7502 = vunpack.c.l.b16 %v6951
  %v7503 = vunpack.c.l.b16 %v6952
  %v7504 = vunpack.c.l.b16 %v6953
  %v7505 = vunpack.c.l.b16 %v6954
  %v7506 = vunpack.c.l.b16 %v6955
  %v7507 = vunpack.c.l.b16 %v6956
  %v7508 = vunpack.c.l.b16 %v6957
  %v7509 = vunpack.c.l.b16 %v6958
  %v7510 = vunpack.c.l.b16 %v6959
  %v7511 = vunpack.c.l.b16 %v6960
  %v7512 = vunpack.c.l.b16 %v6961
  %v7513 = vunpack.c.l.b16 %v6962
  %v7514 = vunpack.c.l.b16 %v6963
  %v7515 = vunpack.c.l.b16 %v6964
  %v7516 = vunpack.c.l.b16 %v6965
  %v7517 = vunpack.c.l.b16 %v6966
  %v7518 = vunpack.c.l.b16 %v6967
  %v7519 = vunpack.c.l.b16 %v6968
  %v7520 = vunpack.c.l.b16 %v6969
  %v7521 = vunpack.c.l.b16 %v6970
  %v7522 = vunpack.c.l.b16 %v6971
  %v7523 = vunpack.c.l.b16 %v6972
  %v7524 = vunpack.c.l.b16 %v6973
  %v7525 = vunpack.c.l.b16 %v6974
  %v7526 = vunpack.c.l.b16 %v6975
  %v7527 = vunpack.c.l.b16 %v6976
  %v7528 = vunpack.c.l.b16 %v6977
  %v7529 = vunpack.c.l.b16 %v6978
  %v7530 = vunpack.c.l.b16 %v6979
  %v7531 = vunpack.c.l.b16 %v6980
  %v7532 = vunpack.c.l.b16 %v6981
  %v7533 = vunpack.c.l.b16 %v6982
  %v7534 = vunpack.c.l.b16 %v6983
  %v7535 = vunpack.c.l.b16 %v6984
  %v7536 = vunpack.c.l.b16 %v6985
  %v7537 = vunpack.c.l.b16 %v6986
  %v7538 = vunpack.c.l.b16 %v6987
  %v7539 = vunpack.c.l.b16 %v6988
  %v7540 = vunpack.c.l.b16 %v6989
  %v7541 = vunpack.c.l.b16 %v6990
  %v7542 = vunpack.c.l.b16 %v6991
  %v7543 = vunpack.c.l.b16 %v6992
  %v7544 = vunpack.c.l.b16 %v6993
  %v7545 = vunpack.c.l.b16 %v6994
  %v7546 = vunpack.c.l.b16 %v6995
  %v7547 = vunpack.c.l.b16 %v6996
  %v7548 = vunpack.c.l.b16 %v6997
  %v7549 = vunpack.c.l.b16 %v6998
  %v7550 = vunpack.c.l.b16 %v6999
  %v7551 = vunpack.c.l.b16 %v7000
  %v7552 = vunpack.c.l.b16 %v7001
  %v7553 = vunpack.c.l.b16 %v7002
  %v7554 = vunpack.c.l.b16 %v7003
  %v7555 = vunpack.c.l.b16 %v7004
  %v7556 = vunpack.c.l.b16 %v7005
  %v7557 = vunpack.c.l.b16 %v7006
  %v7558 = vunpack.c.l.b16 %v7007
  %v7559 = vunpack.c.l.b16 %v7008
  %v7560 = vunpack.c.l.b16 %v7009
  %v7561 = vunpack.c.l.b16 %v7010
  %v7562 = vunpack.c.l.b16 %v7011
  %v7563 = vunpack.c.l.b16 %v7012
  %v7564 = vunpack.c.l.b16 %v7013
  %v7565 = vunpack.c.l.b16 %v7014
  %v7566 = vunpack.c.l.b16 %v7015
  %v7567 = vunpack.c.l.b16 %v7016
  %v7568 = vunpack.c.l.b16 %v7017
  %v7569 = vunpack.c.l.b16 %v7018
  %v7570 = vunpack.c.l.b16 %v7019
  %v7571 = vunpack.c.l.b16 %v7020
  %v7572 = vunpack.c.l.b16 %v7021
  %v7573 = vunpack.c.l.b16 %v7022
  %v7574 = vunpack.c.l.b16 %v7023
  %v7575 = vunpack.c.l.b16 %v7024
  %v7576 = vunpack.c.l.b16 %v7025
  %v7577 = vunpack.c.l.b16 %v7026
  %v7578 = vunpack.c.l.b16 %v7027
  %v7579 = vunpack.c.l.b16 %v7028
  %v7580 = vunpack.c.l.b16 %v7029
  %v7581 = vunpack.c.l.b16 %v7030
  %v7582 = vunpack.c.l.b16 %v7031
  %v7583 = vunpack.c.l.b16 %v7032
  %v7584 = vunpack.c.l.b16 %v7033
  %v7585 = vunpack.c.l.b16 %v7034
  %v7586 = vunpack.c.l.b16 %v7035
  %v7587 = vunpack.c.l.b16 %v7036
  %v7588 = vunpack.c.l.b16 %v7037
  %v7589 = vunpack.c.l.b16 %v7038
  %v7590 = vunpack.c.l.b16 %v7039
  %v7591 = vunpack.c.l.b16 %v7040
  %v7592 = vunpack.c.l.b16 %v7041
  %v7593 = vunpack.c.l.b16 %v7042
  %v7594 = vunpack.c.l.b16 %v7043
  %v7595 = vunpack.c.l.b16 %v7044
  %v7596 = vunpack.c.l.b16 %v7045
  %v7597 = vunpack.c.l.b16 %v7046
  %v7598 = vunpack.c.l.b16 %v7047
  %v7599 = vunpack.c.l.b16 %v7048
  %v7600 = vunpack.c.l.b16 %v7049
  %v7601 = vunpack.c.l.b16 %v7050
  %v7602 = vunpack.c.l.b16 %v7051
  %v7603 = vunpack.c.l.b16 %v7052
  %v7604 = vunpack.c.l.b16 %v7053
  %v7605 = vunpack.c.l.b16 %v7054
  %v7606 = vunpack.c.l.b16 %v7055
  %v7607 = vunpack.c.l.b16 %v7056
  %v7608 = vunpack.c.l.b16 %v7057
  %v7609 = vunpack.c.l.b16 %v7058
  %v7610 = vunpack.c.l.b16 %v7059
  %v7611 = vpack.c.b16 %v7484, %v7483
  %v7612 = vpack.c.b16 %v7486, %v7485
  %v7613 = vpack.c.b16 %v7488, %v7487
  %v7614 = vpack.c.b16 %v7490, %v7489
  %v7615 = vpack.c.b16 %v7492, %v7491
  %v7616 = vpack.c.b16 %v7494, %v7493
  %v7617 = vpack.c.b16 %v7496, %v7495
  %v7618 = vpack.c.b16 %v7498, %v7497
  %v7619 = vpack.c.b16 %v7500, %v7499
  %v7620 = vpack.c.b16 %v7502, %v7501
  %v7621 = vpack.c.b16 %v7504, %v7503
  %v7622 = vpack.c.b16 %v7506, %v7505
  %v7623 = vpack.c.b16 %v7508, %v7507
  %v7624 = vpack.c.b16 %v7510, %v7509
  %v7625 = vpack.c.b16 %v7512, %v7511
  %v7626 = vpack.c.b16 %v7514, %v7513
  %v7627 = vpack.c.b16 %v7516, %v7515
  %v7628 = vpack.c.b16 %v7518, %v7517
  %v7629 = vpack.c.b16 %v7520, %v7519
  %v7630 = vpack.c.b16 %v7522, %v7521
  %v7631 = vpack.c.b16 %v7524, %v7523
  %v7632 = vpack.c.b16 %v7526, %v7525
  %v7633 = vpack.c.b16 %v7528, %v7527
  %v7634 = vpack.c.b16 %v7530, %v7529
  %v7635 = vpack.c.b16 %v7532, %v7531
  %v7636 = vpack.c.b16 %v7534, %v7533
  %v7637 = vpack.c.b16 %v7536, %v7535
  %v7638 = vpack.c.b16 %v7538, %v7537
  %v7639 = vpack.c.b16 %v7540, %v7539
  %v7640 = vpack.c.b16 %v7542, %v7541
  %v7641 = vpack.c.b16 %v7544, %v7543
  %v7642 = vpack.c.b16 %v7546, %v7545
  %v7643 = vpack.c.b16 %v7548, %v7547
  %v7644 = vpack.c.b16 %v7550, %v7549
  %v7645 = vpack.c.b16 %v7552, %v7551
  %v7646 = vpack.c.b16 %v7554, %v7553
  %v7647 = vpack.c.b16 %v7556, %v7555
  %v7648 = vpack.c.b16 %v7558, %v7557
  %v7649 = vpack.c.b16 %v7560, %v7559
  %v7650 = vpack.c.b16 %v7562, %v7561
  %v7651 = vpack.c.b16 %v7564, %v7563
  %v7652 = vpack.c.b16 %v7566, %v7565
  %v7653 = vpack.c.b16 %v7568, %v7567
  %v7654 = vpack.c.b16 %v7570, %v7569
  %v7655 = vpack.c.b16 %v7572, %v7571
  %v7656 = vpack.c.b16 %v7574, %v7573
  %v7657 = vpack.c.b16 %v7576, %v7575
  %v7658 = vpack.c.b16 %v7578, %v7577
  %v7659 = vpack.c.b16 %v7580, %v7579
  %v7660 = vpack.c.b16 %v7582, %v7581
  %v7661 = vpack.c.b16 %v7584, %v7583
  %v7662 = vpack.c.b16 %v7586, %v7585
  %v7663 = vpack.c.b16 %v7588, %v7587
  %v7664 = vpack.c.b16 %v7590, %v7589
  %v7665 = vpack.c.b16 %v7592, %v7591
  %v7666 = vpack.c.b16 %v7594, %v7593
  %v7667 = vpack.c.b16 %v7596, %v7595
  %v7668 = vpack.c.b16 %v7598, %v7597
  %v7669 = vpack.c.b16 %v7600, %v7599
  %v7670 = vpack.c.b16 %v7602, %v7601
  %v7671 = vpack.c.b16 %v7604, %v7603
  %v7672 = vpack.c.b16 %v7606, %v7605
  %v7673 = vpack.c.b16 %v7608, %v7607
  %v7674 = vpack.c.b16 %v7610, %v7609
  %7739 = vmatprep.subr.bf16.mxu0 0
  %7740 = vmatpush1.bf16.msra.mxu0 %v7611
  %7741 = vmatprep.subr.bf16.mxu0 0
  %7742 = vmatpush1.bf16.msra.mxu0 %v7612
  %7743 = vmatprep.subr.bf16.mxu0 0
  %7744 = vmatpush1.bf16.msra.mxu0 %v7613
  %7745 = vmatprep.subr.bf16.mxu0 0
  %7746 = vmatpush1.bf16.msra.mxu0 %v7614
  %7747 = vmatprep.subr.bf16.mxu0 0
  %7748 = vmatpush1.bf16.msra.mxu0 %v7615
  %7749 = vmatprep.subr.bf16.mxu0 0
  %7750 = vmatpush1.bf16.msra.mxu0 %v7616
  %7751 = vmatprep.subr.bf16.mxu0 0
  %7752 = vmatpush1.bf16.msra.mxu0 %v7617
  %7753 = vmatprep.subr.bf16.mxu0 0
  %7754 = vmatpush1.bf16.msra.mxu0 %v7618
  %7755 = vmatprep.subr.bf16.mxu0 0
  %7756 = vmatpush1.bf16.msra.mxu0 %v7619
  %7757 = vmatprep.subr.bf16.mxu0 0
  %7758 = vmatpush1.bf16.msra.mxu0 %v7620
  %7759 = vmatprep.subr.bf16.mxu0 0
  %7760 = vmatpush1.bf16.msra.mxu0 %v7621
  %7761 = vmatprep.subr.bf16.mxu0 0
  %7762 = vmatpush1.bf16.msra.mxu0 %v7622
  %7763 = vmatprep.subr.bf16.mxu0 0
  %7764 = vmatpush1.bf16.msra.mxu0 %v7623
  %7765 = vmatprep.subr.bf16.mxu0 0
  %7766 = vmatpush1.bf16.msra.mxu0 %v7624
  %7767 = vmatprep.subr.bf16.mxu0 0
  %7768 = vmatpush1.bf16.msra.mxu0 %v7625
  %7769 = vmatprep.subr.bf16.mxu0 0
  %7770 = vmatpush1.bf16.msra.mxu0 %v7626
  %7771 = vmatprep.mubr.bf16.mxu0 %v7068
  %7772 = vmatmul.mubr.bf16.gmra.mrb[0].mxu0 %v7067
  %v7773 = vpop.f32.mrb[0].mxu0
  %v7774 = vadd.f32 %v7065, %v7773
  %v7775 = vpop.f32.mrb[0].mxu0
  %v7776 = vpop.f32.mrb[0].mxu0
  %v7777 = vadd.f32 %v7065, %v7776
  %v7778 = vpop.f32.mrb[0].mxu0
  %7779 = vmatprep.mubr.bf16.mxu0 %v7076
  %7780 = vmatmul.mubr.bf16.gmra.mrb[0].mxu0 %v7075
  %v7781 = vpop.f32.mrb[0].mxu0
  %v7782 = vadd.f32 %v7065, %v7781
  %v7783 = vpop.f32.mrb[0].mxu0
  %v7784 = vpop.f32.mrb[0].mxu0
  %v7785 = vadd.f32 %v7065, %v7784
  %v7786 = vpop.f32.mrb[0].mxu0
  %7787 = vmatprep.mubr.bf16.mxu0 %v7084
  %7788 = vmatmul.mubr.bf16.gmra.mrb[0].mxu0 %v7083
  %v7789 = vpop.f32.mrb[0].mxu0
  %v7790 = vadd.f32 %v7065, %v7789
  %v7791 = vpop.f32.mrb[0].mxu0
  %v7792 = vpop.f32.mrb[0].mxu0
  %v7793 = vadd.f32 %v7065, %v7792
  %v7794 = vpop.f32.mrb[0].mxu0
  %7795 = vmatprep.mubr.bf16.mxu0 %v7092
  %7796 = vmatmul.mubr.bf16.gmra.mrb[0].mxu0 %v7091
  %v7797 = vpop.f32.mrb[0].mxu0
  %v7798 = vadd.f32 %v7065, %v7797
  %v7799 = vpop.f32.mrb[0].mxu0
  %v7800 = vpop.f32.mrb[0].mxu0
  %v7801 = vadd.f32 %v7065, %v7800
  %v7802 = vpop.f32.mrb[0].mxu0
  %7803 = vmatprep.mubr.bf16.mxu0 %v7072
  %7804 = vmatmul.mubr.bf16.gmra.mrb[0].mxu0 %v7071
  %v7805 = vpop.f32.mrb[0].mxu0
  %v7806 = vadd.f32 %v7065, %v7805
  %v7807 = vpop.f32.mrb[0].mxu0
  %v7808 = vpop.f32.mrb[0].mxu0
  %v7809 = vadd.f32 %v7065, %v7808
  %v7810 = vpop.f32.mrb[0].mxu0
  %7811 = vmatprep.mubr.bf16.mxu0 %v7080
  %7812 = vmatmul.mubr.bf16.gmra.mrb[0].mxu0 %v7079
  %v7813 = vpop.f32.mrb[0].mxu0
  %v7814 = vadd.f32 %v7065, %v7813
  %v7815 = vpop.f32.mrb[0].mxu0
  %v7816 = vpop.f32.mrb[0].mxu0
  %v7817 = vadd.f32 %v7065, %v7816
  %v7818 = vpop.f32.mrb[0].mxu0
  %7819 = vmatprep.mubr.bf16.mxu0 %v7088
  %7820 = vmatmul.mubr.bf16.gmra.mrb[0].mxu0 %v7087
  %v7821 = vpop.f32.mrb[0].mxu0
  %v7822 = vadd.f32 %v7065, %v7821
  %v7823 = vpop.f32.mrb[0].mxu0
  %v7824 = vpop.f32.mrb[0].mxu0
  %v7825 = vadd.f32 %v7065, %v7824
  %v7826 = vpop.f32.mrb[0].mxu0
  %7827 = vmatprep.mubr.bf16.mxu0 %v7096
  %7828 = vmatmul.mubr.bf16.gmra.mrb[0].mxu0 %v7095
  %v7829 = vpop.f32.mrb[0].mxu0
  %v7830 = vadd.f32 %v7065, %v7829
  %v7831 = vpop.f32.mrb[0].mxu0
  %v7832 = vpop.f32.mrb[0].mxu0
  %v7833 = vadd.f32 %v7065, %v7832
  %v7834 = vpop.f32.mrb[0].mxu0
  %7835 = vmatprep.mubr.bf16.mxu0 %v7100
  %7836 = vmatmul.mubr.bf16.gmra.mrb[0].mxu0 %v7099
  %v7837 = vpop.f32.mrb[0].mxu0
  %v7838 = vadd.f32 %v7065, %v7837
  %v7839 = vpop.f32.mrb[0].mxu0
  %v7840 = vpop.f32.mrb[0].mxu0
  %v7841 = vadd.f32 %v7065, %v7840
  %v7842 = vpop.f32.mrb[0].mxu0
  %7843 = vmatprep.mubr.bf16.mxu0 %v7104
  %7844 = vmatmul.mubr.bf16.gmra.mrb[0].mxu0 %v7103
  %v7845 = vpop.f32.mrb[0].mxu0
  %v7846 = vadd.f32 %v7065, %v7845
  %v7847 = vpop.f32.mrb[0].mxu0
  %v7848 = vpop.f32.mrb[0].mxu0
  %v7849 = vadd.f32 %v7065, %v7848
  %v7850 = vpop.f32.mrb[0].mxu0
  %7851 = vmatprep.mubr.bf16.mxu0 %v7108
  %7852 = vmatmul.mubr.bf16.gmra.mrb[0].mxu0 %v7107
  %v7853 = vpop.f32.mrb[0].mxu0
  %v7854 = vadd.f32 %v7065, %v7853
  %v7855 = vpop.f32.mrb[0].mxu0
  %v7856 = vpop.f32.mrb[0].mxu0
  %v7857 = vadd.f32 %v7065, %v7856
  %v7858 = vpop.f32.mrb[0].mxu0
  %7859 = vmatprep.mubr.bf16.mxu0 %v7112
  %7860 = vmatmul.mubr.bf16.gmra.mrb[0].mxu0 %v7111
  %v7861 = vpop.f32.mrb[0].mxu0
  %v7862 = vadd.f32 %v7065, %v7861
  %v7863 = vpop.f32.mrb[0].mxu0
  %v7864 = vpop.f32.mrb[0].mxu0
  %v7865 = vadd.f32 %v7065, %v7864
  %v7866 = vpop.f32.mrb[0].mxu0
  %7867 = vmatprep.mubr.bf16.mxu0 %v7116
  %7868 = vmatmul.mubr.bf16.gmra.mrb[0].mxu0 %v7115
  %v7869 = vpop.f32.mrb[0].mxu0
  %v7870 = vadd.f32 %v7065, %v7869
  %v7871 = vpop.f32.mrb[0].mxu0
  %v7872 = vpop.f32.mrb[0].mxu0
  %v7873 = vadd.f32 %v7065, %v7872
  %v7874 = vpop.f32.mrb[0].mxu0
  %7875 = vmatprep.mubr.bf16.mxu0 %v7120
  %7876 = vmatmul.mubr.bf16.gmra.mrb[0].mxu0 %v7119
  %v7877 = vpop.f32.mrb[0].mxu0
  %v7878 = vadd.f32 %v7065, %v7877
  %v7879 = vpop.f32.mrb[0].mxu0
  %v7880 = vpop.f32.mrb[0].mxu0
  %v7881 = vadd.f32 %v7065, %v7880
  %v7882 = vpop.f32.mrb[0].mxu0
  %7883 = vmatprep.mubr.bf16.mxu0 %v7124
  %7884 = vmatmul.mubr.bf16.gmra.mrb[0].mxu0 %v7123
  %v7885 = vpop.f32.mrb[0].mxu0
  %v7886 = vadd.f32 %v7065, %v7885
  %v7887 = vpop.f32.mrb[0].mxu0
  %v7888 = vpop.f32.mrb[0].mxu0
  %v7889 = vadd.f32 %v7065, %v7888
  %v7890 = vpop.f32.mrb[0].mxu0
  %7891 = vmatprep.mubr.bf16.mxu0 %v7128
  %7892 = vmatmul.mubr.bf16.gmra.mrb[0].mxu0 %v7127
  %v7893 = vpop.f32.mrb[0].mxu0
  %v7894 = vadd.f32 %v7065, %v7893
  %v7895 = vpop.f32.mrb[0].mxu0
  %v7896 = vpop.f32.mrb[0].mxu0
  %v7897 = vadd.f32 %v7065, %v7896
  %v7898 = vpop.f32.mrb[0].mxu0
  %7899 = vmatprep.mubr.bf16.mxu0 %v7132
  %7900 = vmatmul.mubr.bf16.gmra.mrb[0].mxu0 %v7131
  %v7901 = vpop.f32.mrb[0].mxu0
  %v7902 = vadd.f32 %v7065, %v7901
  %v7903 = vpop.f32.mrb[0].mxu0
  %v7904 = vpop.f32.mrb[0].mxu0
  %v7905 = vadd.f32 %v7065, %v7904
  %v7906 = vpop.f32.mrb[0].mxu0
  %7907 = vmatprep.mubr.bf16.mxu0 %v7136
  %7908 = vmatmul.mubr.bf16.gmra.mrb[0].mxu0 %v7135
  %v7909 = vpop.f32.mrb[0].mxu0
  %v7910 = vadd.f32 %v7065, %v7909
  %v7911 = vpop.f32.mrb[0].mxu0
  %v7912 = vpop.f32.mrb[0].mxu0
  %v7913 = vadd.f32 %v7065, %v7912
  %v7914 = vpop.f32.mrb[0].mxu0
  %7915 = vmatprep.mubr.bf16.mxu0 %v7140
  %7916 = vmatmul.mubr.bf16.gmra.mrb[0].mxu0 %v7139
  %v7917 = vpop.f32.mrb[0].mxu0
  %v7918 = vadd.f32 %v7065, %v7917
  %v7919 = vpop.f32.mrb[0].mxu0
  %v7920 = vpop.f32.mrb[0].mxu0
  %v7921 = vadd.f32 %v7065, %v7920
  %v7922 = vpop.f32.mrb[0].mxu0
  %7923 = vmatprep.mubr.bf16.mxu0 %v7144
  %7924 = vmatmul.mubr.bf16.gmra.mrb[0].mxu0 %v7143
  %v7925 = vpop.f32.mrb[0].mxu0
  %v7926 = vadd.f32 %v7065, %v7925
  %v7927 = vpop.f32.mrb[0].mxu0
  %v7928 = vpop.f32.mrb[0].mxu0
  %v7929 = vadd.f32 %v7065, %v7928
  %v7930 = vpop.f32.mrb[0].mxu0
  %7931 = vmatprep.mubr.bf16.mxu0 %v7148
  %7932 = vmatmul.mubr.bf16.gmra.mrb[0].mxu0 %v7147
  %v7933 = vpop.f32.mrb[0].mxu0
  %v7934 = vadd.f32 %v7065, %v7933
  %v7935 = vpop.f32.mrb[0].mxu0
  %v7936 = vpop.f32.mrb[0].mxu0
  %v7937 = vadd.f32 %v7065, %v7936
  %v7938 = vpop.f32.mrb[0].mxu0
  %7939 = vmatprep.mubr.bf16.mxu0 %v7152
  %7940 = vmatmul.mubr.bf16.gmra.mrb[0].mxu0 %v7151
  %v7941 = vpop.f32.mrb[0].mxu0
  %v7942 = vadd.f32 %v7065, %v7941
  %v7943 = vpop.f32.mrb[0].mxu0
  %v7944 = vpop.f32.mrb[0].mxu0
  %v7945 = vadd.f32 %v7065, %v7944
  %v7946 = vpop.f32.mrb[0].mxu0
  %7947 = vmatprep.mubr.bf16.mxu0 %v7156
  %7948 = vmatmul.mubr.bf16.gmra.mrb[0].mxu0 %v7155
  %v7949 = vpop.f32.mrb[0].mxu0
  %v7950 = vadd.f32 %v7065, %v7949
  %v7951 = vpop.f32.mrb[0].mxu0
  %v7952 = vpop.f32.mrb[0].mxu0
  %v7953 = vadd.f32 %v7065, %v7952
  %v7954 = vpop.f32.mrb[0].mxu0
  %7955 = vmatprep.mubr.bf16.mxu0 %v7160
  %7956 = vmatmul.mubr.bf16.gmra.mrb[0].mxu0 %v7159
  %v7957 = vpop.f32.mrb[0].mxu0
  %v7958 = vadd.f32 %v7065, %v7957
  %v7959 = vpop.f32.mrb[0].mxu0
  %v7960 = vpop.f32.mrb[0].mxu0
  %v7961 = vadd.f32 %v7065, %v7960
  %v7962 = vpop.f32.mrb[0].mxu0
  %7963 = vmatprep.mubr.bf16.mxu0 %v7164
  %7964 = vmatmul.mubr.bf16.gmra.mrb[0].mxu0 %v7163
  %v7965 = vpop.f32.mrb[0].mxu0
  %v7966 = vadd.f32 %v7065, %v7965
  %v7967 = vpop.f32.mrb[0].mxu0
  %v7968 = vpop.f32.mrb[0].mxu0
  %v7969 = vadd.f32 %v7065, %v7968
  %v7970 = vpop.f32.mrb[0].mxu0
  %7971 = vmatprep.mubr.bf16.mxu0 %v7168
  %7972 = vmatmul.mubr.bf16.gmra.mrb[0].mxu0 %v7167
  %v7973 = vpop.f32.mrb[0].mxu0
  %v7974 = vadd.f32 %v7065, %v7973
  %v7975 = vpop.f32.mrb[0].mxu0
  %v7976 = vpop.f32.mrb[0].mxu0
  %v7977 = vadd.f32 %v7065, %v7976
  %v7978 = vpop.f32.mrb[0].mxu0
  %7979 = vmatprep.mubr.bf16.mxu0 %v7172
  %7980 = vmatmul.mubr.bf16.gmra.mrb[0].mxu0 %v7171
  %v7981 = vpop.f32.mrb[0].mxu0
  %v7982 = vadd.f32 %v7065, %v7981
  %v7983 = vpop.f32.mrb[0].mxu0
  %v7984 = vpop.f32.mrb[0].mxu0
  %v7985 = vadd.f32 %v7065, %v7984
  %v7986 = vpop.f32.mrb[0].mxu0
  %7987 = vmatprep.mubr.bf16.mxu0 %v7176
  %7988 = vmatmul.mubr.bf16.gmra.mrb[0].mxu0 %v7175
  %v7989 = vpop.f32.mrb[0].mxu0
  %v7990 = vadd.f32 %v7065, %v7989
  %v7991 = vpop.f32.mrb[0].mxu0
  %v7992 = vpop.f32.mrb[0].mxu0
  %v7993 = vadd.f32 %v7065, %v7992
  %v7994 = vpop.f32.mrb[0].mxu0
  %7995 = vmatprep.mubr.bf16.mxu0 %v7180
  %7996 = vmatmul.mubr.bf16.gmra.mrb[0].mxu0 %v7179
  %v7997 = vpop.f32.mrb[0].mxu0
  %v7998 = vpop.f32.mrb[0].mxu0
  %v7999 = vpop.f32.mrb[0].mxu0
  %v8000 = vpop.f32.mrb[0].mxu0
  %8001 = vmatprep.mubr.bf16.mxu0 %v7184
  %8002 = vmatmul.mubr.bf16.gmra.mrb[0].mxu0 %v7183
  %v8003 = vpop.f32.mrb[0].mxu0
  %v8004 = vpop.f32.mrb[0].mxu0
  %v8005 = vpop.f32.mrb[0].mxu0
  %v8006 = vpop.f32.mrb[0].mxu0
  %8007 = vmatprep.mubr.bf16.mxu0 %v7188
  %8008 = vmatmul.mubr.bf16.gmra.mrb[0].mxu0 %v7187
  %v8009 = vpop.f32.mrb[0].mxu0
  %v8010 = vpop.f32.mrb[0].mxu0
  %v8011 = vpop.f32.mrb[0].mxu0
  %v8012 = vpop.f32.mrb[0].mxu0
  %8013 = vmatprep.mubr.bf16.mxu0 %v7192
  %8014 = vmatmul.mubr.bf16.gmra.mrb[0].mxu0 %v7191
  %v8015 = vpop.f32.mrb[0].mxu0
  %v8016 = vpop.f32.mrb[0].mxu0
  %v8017 = vpop.f32.mrb[0].mxu0
  %v8018 = vpop.f32.mrb[0].mxu0
  %8019 = vdwg.mxu0
  %8020 = vmatprep.subr.bf16.mxu0 0
  %8021 = vmatpush1.bf16.msra.mxu0 %v7627
  %8022 = vmatprep.subr.bf16.mxu0 0
  %8023 = vmatpush1.bf16.msra.mxu0 %v7628
  %8024 = vmatprep.subr.bf16.mxu0 0
  %8025 = vmatpush1.bf16.msra.mxu0 %v7629
  %8026 = vmatprep.subr.bf16.mxu0 0
  %8027 = vmatpush1.bf16.msra.mxu0 %v7630
  %8028 = vmatprep.subr.bf16.mxu0 0
  %8029 = vmatpush1.bf16.msra.mxu0 %v7631
  %8030 = vmatprep.subr.bf16.mxu0 0
  %8031 = vmatpush1.bf16.msra.mxu0 %v7632
  %8032 = vmatprep.subr.bf16.mxu0 0
  %8033 = vmatpush1.bf16.msra.mxu0 %v7633
  %8034 = vmatprep.subr.bf16.mxu0 0
  %8035 = vmatpush1.bf16.msra.mxu0 %v7634
  %8036 = vmatprep.subr.bf16.mxu0 0
  %8037 = vmatpush1.bf16.msra.mxu0 %v7635
  %8038 = vmatprep.subr.bf16.mxu0 0
  %8039 = vmatpush1.bf16.msra.mxu0 %v7636
  %8040 = vmatprep.subr.bf16.mxu0 0
  %8041 = vmatpush1.bf16.msra.mxu0 %v7637
  %8042 = vmatprep.subr.bf16.mxu0 0
  %8043 = vmatpush1.bf16.msra.mxu0 %v7638
  %8044 = vmatprep.subr.bf16.mxu0 0
  %8045 = vmatpush1.bf16.msra.mxu0 %v7639
  %8046 = vmatprep.subr.bf16.mxu0 0
  %8047 = vmatpush1.bf16.msra.mxu0 %v7640
  %8048 = vmatprep.subr.bf16.mxu0 0
  %8049 = vmatpush1.bf16.msra.mxu0 %v7641
  %8050 = vmatprep.subr.bf16.mxu0 0
  %8051 = vmatpush1.bf16.msra.mxu0 %v7642
  %8052 = vmatprep.mubr.bf16.mxu0 %v7070
  %8053 = vmatmul.mubr.bf16.gmra.mrb[0].mxu0 %v7069
  %v8054 = vpop.f32.mrb[0].mxu0
  %v8055 = vadd.f32 %v7774, %v8054
  %v8056 = vpop.f32.mrb[0].mxu0
  %v8057 = vpop.f32.mrb[0].mxu0
  %v8058 = vadd.f32 %v7777, %v8057
  %v8059 = vpop.f32.mrb[0].mxu0
  %8060 = vmatprep.mubr.bf16.mxu0 %v7078
  %8061 = vmatmul.mubr.bf16.gmra.mrb[0].mxu0 %v7077
  %v8062 = vpop.f32.mrb[0].mxu0
  %v8063 = vadd.f32 %v7782, %v8062
  %v8064 = vpop.f32.mrb[0].mxu0
  %v8065 = vpop.f32.mrb[0].mxu0
  %v8066 = vadd.f32 %v7785, %v8065
  %v8067 = vpop.f32.mrb[0].mxu0
  %8068 = vmatprep.mubr.bf16.mxu0 %v7086
  %8069 = vmatmul.mubr.bf16.gmra.mrb[0].mxu0 %v7085
  %v8070 = vpop.f32.mrb[0].mxu0
  %v8071 = vadd.f32 %v7790, %v8070
  %v8072 = vpop.f32.mrb[0].mxu0
  %v8073 = vpop.f32.mrb[0].mxu0
  %v8074 = vadd.f32 %v7793, %v8073
  %v8075 = vpop.f32.mrb[0].mxu0
  %8076 = vmatprep.mubr.bf16.mxu0 %v7094
  %8077 = vmatmul.mubr.bf16.gmra.mrb[0].mxu0 %v7093
  %v8078 = vpop.f32.mrb[0].mxu0
  %v8079 = vadd.f32 %v7798, %v8078
  %v8080 = vpop.f32.mrb[0].mxu0
  %v8081 = vpop.f32.mrb[0].mxu0
  %v8082 = vadd.f32 %v7801, %v8081
  %v8083 = vpop.f32.mrb[0].mxu0
  %8084 = vmatprep.mubr.bf16.mxu0 %v7074
  %8085 = vmatmul.mubr.bf16.gmra.mrb[0].mxu0 %v7073
  %v8086 = vpop.f32.mrb[0].mxu0
  %v8087 = vadd.f32 %v7806, %v8086
  %v8088 = vpop.f32.mrb[0].mxu0
  %v8089 = vpop.f32.mrb[0].mxu0
  %v8090 = vadd.f32 %v7809, %v8089
  %v8091 = vpop.f32.mrb[0].mxu0
  %8092 = vmatprep.mubr.bf16.mxu0 %v7082
  %8093 = vmatmul.mubr.bf16.gmra.mrb[0].mxu0 %v7081
  %v8094 = vpop.f32.mrb[0].mxu0
  %v8095 = vadd.f32 %v7814, %v8094
  %v8096 = vpop.f32.mrb[0].mxu0
  %v8097 = vpop.f32.mrb[0].mxu0
  %v8098 = vadd.f32 %v7817, %v8097
  %v8099 = vpop.f32.mrb[0].mxu0
  %8100 = vmatprep.mubr.bf16.mxu0 %v7090
  %8101 = vmatmul.mubr.bf16.gmra.mrb[0].mxu0 %v7089
  %v8102 = vpop.f32.mrb[0].mxu0
  %v8103 = vadd.f32 %v7822, %v8102
  %v8104 = vpop.f32.mrb[0].mxu0
  %v8105 = vpop.f32.mrb[0].mxu0
  %v8106 = vadd.f32 %v7825, %v8105
  %v8107 = vpop.f32.mrb[0].mxu0
  %8108 = vmatprep.mubr.bf16.mxu0 %v7098
  %8109 = vmatmul.mubr.bf16.gmra.mrb[0].mxu0 %v7097
  %v8110 = vpop.f32.mrb[0].mxu0
  %v8111 = vadd.f32 %v7830, %v8110
  %v8112 = vpop.f32.mrb[0].mxu0
  %v8113 = vpop.f32.mrb[0].mxu0
  %v8114 = vadd.f32 %v7833, %v8113
  %v8115 = vpop.f32.mrb[0].mxu0
  %8116 = vmatprep.mubr.bf16.mxu0 %v7102
  %8117 = vmatmul.mubr.bf16.gmra.mrb[0].mxu0 %v7101
  %v8118 = vpop.f32.mrb[0].mxu0
  %v8119 = vadd.f32 %v7838, %v8118
  %v8120 = vpop.f32.mrb[0].mxu0
  %v8121 = vpop.f32.mrb[0].mxu0
  %v8122 = vadd.f32 %v7841, %v8121
  %v8123 = vpop.f32.mrb[0].mxu0
  %8124 = vmatprep.mubr.bf16.mxu0 %v7106
  %8125 = vmatmul.mubr.bf16.gmra.mrb[0].mxu0 %v7105
  %v8126 = vpop.f32.mrb[0].mxu0
  %v8127 = vadd.f32 %v7846, %v8126
  %v8128 = vpop.f32.mrb[0].mxu0
  %v8129 = vpop.f32.mrb[0].mxu0
  %v8130 = vadd.f32 %v7849, %v8129
  %v8131 = vpop.f32.mrb[0].mxu0
  %8132 = vmatprep.mubr.bf16.mxu0 %v7110
  %8133 = vmatmul.mubr.bf16.gmra.mrb[0].mxu0 %v7109
  %v8134 = vpop.f32.mrb[0].mxu0
  %v8135 = vadd.f32 %v7854, %v8134
  %v8136 = vpop.f32.mrb[0].mxu0
  %v8137 = vpop.f32.mrb[0].mxu0
  %v8138 = vadd.f32 %v7857, %v8137
  %v8139 = vpop.f32.mrb[0].mxu0
  %8140 = vmatprep.mubr.bf16.mxu0 %v7114
  %8141 = vmatmul.mubr.bf16.gmra.mrb[0].mxu0 %v7113
  %v8142 = vpop.f32.mrb[0].mxu0
  %v8143 = vadd.f32 %v7862, %v8142
  %v8144 = vpop.f32.mrb[0].mxu0
  %v8145 = vpop.f32.mrb[0].mxu0
  %v8146 = vadd.f32 %v7865, %v8145
  %v8147 = vpop.f32.mrb[0].mxu0
  %8148 = vmatprep.mubr.bf16.mxu0 %v7118
  %8149 = vmatmul.mubr.bf16.gmra.mrb[0].mxu0 %v7117
  %v8150 = vpop.f32.mrb[0].mxu0
  %v8151 = vadd.f32 %v7870, %v8150
  %v8152 = vpop.f32.mrb[0].mxu0
  %v8153 = vpop.f32.mrb[0].mxu0
  %v8154 = vadd.f32 %v7873, %v8153
  %v8155 = vpop.f32.mrb[0].mxu0
  %8156 = vmatprep.mubr.bf16.mxu0 %v7122
  %8157 = vmatmul.mubr.bf16.gmra.mrb[0].mxu0 %v7121
  %v8158 = vpop.f32.mrb[0].mxu0
  %v8159 = vadd.f32 %v7878, %v8158
  %v8160 = vpop.f32.mrb[0].mxu0
  %v8161 = vpop.f32.mrb[0].mxu0
  %v8162 = vadd.f32 %v7881, %v8161
  %v8163 = vpop.f32.mrb[0].mxu0
  %8164 = vmatprep.mubr.bf16.mxu0 %v7126
  %8165 = vmatmul.mubr.bf16.gmra.mrb[0].mxu0 %v7125
  %v8166 = vpop.f32.mrb[0].mxu0
  %v8167 = vadd.f32 %v7886, %v8166
  %v8168 = vpop.f32.mrb[0].mxu0
  %v8169 = vpop.f32.mrb[0].mxu0
  %v8170 = vadd.f32 %v7889, %v8169
  %v8171 = vpop.f32.mrb[0].mxu0
  %8172 = vmatprep.mubr.bf16.mxu0 %v7130
  %8173 = vmatmul.mubr.bf16.gmra.mrb[0].mxu0 %v7129
  %v8174 = vpop.f32.mrb[0].mxu0
  %v8175 = vadd.f32 %v7894, %v8174
  %v8176 = vpop.f32.mrb[0].mxu0
  %v8177 = vpop.f32.mrb[0].mxu0
  %v8178 = vadd.f32 %v7897, %v8177
  %v8179 = vpop.f32.mrb[0].mxu0
  %8180 = vmatprep.mubr.bf16.mxu0 %v7134
  %8181 = vmatmul.mubr.bf16.gmra.mrb[0].mxu0 %v7133
  %v8182 = vpop.f32.mrb[0].mxu0
  %v8183 = vadd.f32 %v7902, %v8182
  %v8184 = vpop.f32.mrb[0].mxu0
  %v8185 = vpop.f32.mrb[0].mxu0
  %v8186 = vadd.f32 %v7905, %v8185
  %v8187 = vpop.f32.mrb[0].mxu0
  %8188 = vmatprep.mubr.bf16.mxu0 %v7138
  %8189 = vmatmul.mubr.bf16.gmra.mrb[0].mxu0 %v7137
  %v8190 = vpop.f32.mrb[0].mxu0
  %v8191 = vadd.f32 %v7910, %v8190
  %v8192 = vpop.f32.mrb[0].mxu0
  %v8193 = vpop.f32.mrb[0].mxu0
  %v8194 = vadd.f32 %v7913, %v8193
  %v8195 = vpop.f32.mrb[0].mxu0
  %8196 = vmatprep.mubr.bf16.mxu0 %v7142
  %8197 = vmatmul.mubr.bf16.gmra.mrb[0].mxu0 %v7141
  %v8198 = vpop.f32.mrb[0].mxu0
  %v8199 = vadd.f32 %v7918, %v8198
  %v8200 = vpop.f32.mrb[0].mxu0
  %v8201 = vpop.f32.mrb[0].mxu0
  %v8202 = vadd.f32 %v7921, %v8201
  %v8203 = vpop.f32.mrb[0].mxu0
  %8204 = vmatprep.mubr.bf16.mxu0 %v7146
  %8205 = vmatmul.mubr.bf16.gmra.mrb[0].mxu0 %v7145
  %v8206 = vpop.f32.mrb[0].mxu0
  %v8207 = vadd.f32 %v7926, %v8206
  %v8208 = vpop.f32.mrb[0].mxu0
  %v8209 = vpop.f32.mrb[0].mxu0
  %v8210 = vadd.f32 %v7929, %v8209
  %v8211 = vpop.f32.mrb[0].mxu0
  %8212 = vmatprep.mubr.bf16.mxu0 %v7150
  %8213 = vmatmul.mubr.bf16.gmra.mrb[0].mxu0 %v7149
  %v8214 = vpop.f32.mrb[0].mxu0
  %v8215 = vadd.f32 %v7934, %v8214
  %v8216 = vpop.f32.mrb[0].mxu0
  %v8217 = vpop.f32.mrb[0].mxu0
  %v8218 = vadd.f32 %v7937, %v8217
  %v8219 = vpop.f32.mrb[0].mxu0
  %8220 = vmatprep.mubr.bf16.mxu0 %v7154
  %8221 = vmatmul.mubr.bf16.gmra.mrb[0].mxu0 %v7153
  %v8222 = vpop.f32.mrb[0].mxu0
  %v8223 = vadd.f32 %v7942, %v8222
  %v8224 = vpop.f32.mrb[0].mxu0
  %v8225 = vpop.f32.mrb[0].mxu0
  %v8226 = vadd.f32 %v7945, %v8225
  %v8227 = vpop.f32.mrb[0].mxu0
  %8228 = vmatprep.mubr.bf16.mxu0 %v7158
  %8229 = vmatmul.mubr.bf16.gmra.mrb[0].mxu0 %v7157
  %v8230 = vpop.f32.mrb[0].mxu0
  %v8231 = vadd.f32 %v7950, %v8230
  %v8232 = vpop.f32.mrb[0].mxu0
  %v8233 = vpop.f32.mrb[0].mxu0
  %v8234 = vadd.f32 %v7953, %v8233
  %v8235 = vpop.f32.mrb[0].mxu0
  %8236 = vmatprep.mubr.bf16.mxu0 %v7162
  %8237 = vmatmul.mubr.bf16.gmra.mrb[0].mxu0 %v7161
  %v8238 = vpop.f32.mrb[0].mxu0
  %v8239 = vadd.f32 %v7958, %v8238
  %v8240 = vpop.f32.mrb[0].mxu0
  %v8241 = vpop.f32.mrb[0].mxu0
  %v8242 = vadd.f32 %v7961, %v8241
  %v8243 = vpop.f32.mrb[0].mxu0
  %8244 = vmatprep.mubr.bf16.mxu0 %v7166
  %8245 = vmatmul.mubr.bf16.gmra.mrb[0].mxu0 %v7165
  %v8246 = vpop.f32.mrb[0].mxu0
  %v8247 = vadd.f32 %v7966, %v8246
  %v8248 = vpop.f32.mrb[0].mxu0
  %v8249 = vpop.f32.mrb[0].mxu0
  %v8250 = vadd.f32 %v7969, %v8249
  %v8251 = vpop.f32.mrb[0].mxu0
  %8252 = vmatprep.mubr.bf16.mxu0 %v7170
  %8253 = vmatmul.mubr.bf16.gmra.mrb[0].mxu0 %v7169
  %v8254 = vpop.f32.mrb[0].mxu0
  %v8255 = vadd.f32 %v7974, %v8254
  %v8256 = vpop.f32.mrb[0].mxu0
  %v8257 = vpop.f32.mrb[0].mxu0
  %v8258 = vadd.f32 %v7977, %v8257
  %v8259 = vpop.f32.mrb[0].mxu0
  %8260 = vmatprep.mubr.bf16.mxu0 %v7174
  %8261 = vmatmul.mubr.bf16.gmra.mrb[0].mxu0 %v7173
  %v8262 = vpop.f32.mrb[0].mxu0
  %v8263 = vadd.f32 %v7982, %v8262
  %v8264 = vpop.f32.mrb[0].mxu0
  %v8265 = vpop.f32.mrb[0].mxu0
  %v8266 = vadd.f32 %v7985, %v8265
  %v8267 = vpop.f32.mrb[0].mxu0
  %8268 = vmatprep.mubr.bf16.mxu0 %v7178
  %8269 = vmatmul.mubr.bf16.gmra.mrb[0].mxu0 %v7177
  %v8270 = vpop.f32.mrb[0].mxu0
  %v8271 = vadd.f32 %v7990, %v8270
  %v8272 = vpop.f32.mrb[0].mxu0
  %v8273 = vpop.f32.mrb[0].mxu0
  %v8274 = vadd.f32 %v7993, %v8273
  %v8275 = vpop.f32.mrb[0].mxu0
  %8276 = vmatprep.mubr.bf16.mxu0 %v7182
  %8277 = vmatmul.mubr.bf16.gmra.mrb[0].mxu0 %v7181
  %v8278 = vpop.f32.mrb[0].mxu0
  %v8279 = vpop.f32.mrb[0].mxu0
  %v8280 = vpop.f32.mrb[0].mxu0
  %v8281 = vpop.f32.mrb[0].mxu0
  %8282 = vmatprep.mubr.bf16.mxu0 %v7186
  %8283 = vmatmul.mubr.bf16.gmra.mrb[0].mxu0 %v7185
  %v8284 = vpop.f32.mrb[0].mxu0
  %v8285 = vpop.f32.mrb[0].mxu0
  %v8286 = vpop.f32.mrb[0].mxu0
  %v8287 = vpop.f32.mrb[0].mxu0
  %8288 = vmatprep.mubr.bf16.mxu0 %v7190
  %8289 = vmatmul.mubr.bf16.gmra.mrb[0].mxu0 %v7189
  %v8290 = vpop.f32.mrb[0].mxu0
  %v8291 = vpop.f32.mrb[0].mxu0
  %v8292 = vpop.f32.mrb[0].mxu0
  %v8293 = vpop.f32.mrb[0].mxu0
  %8294 = vmatprep.mubr.bf16.mxu0 %v7194
  %8295 = vmatmul.mubr.bf16.gmra.mrb[0].mxu0 %v7193
  %v8296 = vpop.f32.mrb[0].mxu0
  %v8297 = vpop.f32.mrb[0].mxu0
  %v8298 = vpop.f32.mrb[0].mxu0
  %v8299 = vpop.f32.mrb[0].mxu0
  %8300 = vdwg.mxu0
  %8301 = vmatprep.subr.bf16.mxu0 0
  %8302 = vmatpush1.bf16.msra.mxu0 %v7643
  %8303 = vmatprep.subr.bf16.mxu0 0
  %8304 = vmatpush1.bf16.msra.mxu0 %v7644
  %8305 = vmatprep.subr.bf16.mxu0 0
  %8306 = vmatpush1.bf16.msra.mxu0 %v7645
  %8307 = vmatprep.subr.bf16.mxu0 0
  %8308 = vmatpush1.bf16.msra.mxu0 %v7646
  %8309 = vmatprep.subr.bf16.mxu0 0
  %8310 = vmatpush1.bf16.msra.mxu0 %v7647
  %8311 = vmatprep.subr.bf16.mxu0 0
  %8312 = vmatpush1.bf16.msra.mxu0 %v7648
  %8313 = vmatprep.subr.bf16.mxu0 0
  %8314 = vmatpush1.bf16.msra.mxu0 %v7649
  %8315 = vmatprep.subr.bf16.mxu0 0
  %8316 = vmatpush1.bf16.msra.mxu0 %v7650
  %8317 = vmatprep.subr.bf16.mxu0 0
  %8318 = vmatpush1.bf16.msra.mxu0 %v7651
  %8319 = vmatprep.subr.bf16.mxu0 0
  %8320 = vmatpush1.bf16.msra.mxu0 %v7652
  %8321 = vmatprep.subr.bf16.mxu0 0
  %8322 = vmatpush1.bf16.msra.mxu0 %v7653
  %8323 = vmatprep.subr.bf16.mxu0 0
  %8324 = vmatpush1.bf16.msra.mxu0 %v7654
  %8325 = vmatprep.subr.bf16.mxu0 0
  %8326 = vmatpush1.bf16.msra.mxu0 %v7655
  %8327 = vmatprep.subr.bf16.mxu0 0
  %8328 = vmatpush1.bf16.msra.mxu0 %v7656
  %8329 = vmatprep.subr.bf16.mxu0 0
  %8330 = vmatpush1.bf16.msra.mxu0 %v7657
  %8331 = vmatprep.subr.bf16.mxu0 0
  %8332 = vmatpush1.bf16.msra.mxu0 %v7658
  %8333 = vmatprep.mubr.bf16.mxu0 %v7072
  %8334 = vmatmul.mubr.bf16.gmra.mrb[0].mxu0 %v7071
  %v8335 = vpop.f32.mrb[0].mxu0
  %v8336 = vadd.f32 %v8055, %v8335
  %v8337 = vpop.f32.mrb[0].mxu0
  %v8338 = vpop.f32.mrb[0].mxu0
  %v8339 = vadd.f32 %v8058, %v8338
  %v8340 = vpop.f32.mrb[0].mxu0
  %8341 = vmatprep.mubr.bf16.mxu0 %v7080
  %8342 = vmatmul.mubr.bf16.gmra.mrb[0].mxu0 %v7079
  %v8343 = vpop.f32.mrb[0].mxu0
  %v8344 = vadd.f32 %v8063, %v8343
  %v8345 = vpop.f32.mrb[0].mxu0
  %v8346 = vpop.f32.mrb[0].mxu0
  %v8347 = vadd.f32 %v8066, %v8346
  %v8348 = vpop.f32.mrb[0].mxu0
  %8349 = vmatprep.mubr.bf16.mxu0 %v7088
  %8350 = vmatmul.mubr.bf16.gmra.mrb[0].mxu0 %v7087
  %v8351 = vpop.f32.mrb[0].mxu0
  %v8352 = vadd.f32 %v8071, %v8351
  %v8353 = vpop.f32.mrb[0].mxu0
  %v8354 = vpop.f32.mrb[0].mxu0
  %v8355 = vadd.f32 %v8074, %v8354
  %v8356 = vpop.f32.mrb[0].mxu0
  %8357 = vmatprep.mubr.bf16.mxu0 %v7096
  %8358 = vmatmul.mubr.bf16.gmra.mrb[0].mxu0 %v7095
  %v8359 = vpop.f32.mrb[0].mxu0
  %v8360 = vadd.f32 %v8079, %v8359
  %v8361 = vpop.f32.mrb[0].mxu0
  %v8362 = vpop.f32.mrb[0].mxu0
  %v8363 = vadd.f32 %v8082, %v8362
  %v8364 = vpop.f32.mrb[0].mxu0
  %8365 = vmatprep.mubr.bf16.mxu0 %v7100
  %8366 = vmatmul.mubr.bf16.gmra.mrb[0].mxu0 %v7099
  %v8367 = vpop.f32.mrb[0].mxu0
  %v8368 = vadd.f32 %v8087, %v8367
  %v8369 = vpop.f32.mrb[0].mxu0
  %v8370 = vpop.f32.mrb[0].mxu0
  %v8371 = vadd.f32 %v8090, %v8370
  %v8372 = vpop.f32.mrb[0].mxu0
  %8373 = vmatprep.mubr.bf16.mxu0 %v7104
  %8374 = vmatmul.mubr.bf16.gmra.mrb[0].mxu0 %v7103
  %v8375 = vpop.f32.mrb[0].mxu0
  %v8376 = vadd.f32 %v8095, %v8375
  %v8377 = vpop.f32.mrb[0].mxu0
  %v8378 = vpop.f32.mrb[0].mxu0
  %v8379 = vadd.f32 %v8098, %v8378
  %v8380 = vpop.f32.mrb[0].mxu0
  %8381 = vmatprep.mubr.bf16.mxu0 %v7108
  %8382 = vmatmul.mubr.bf16.gmra.mrb[0].mxu0 %v7107
  %v8383 = vpop.f32.mrb[0].mxu0
  %v8384 = vadd.f32 %v8103, %v8383
  %v8385 = vpop.f32.mrb[0].mxu0
  %v8386 = vpop.f32.mrb[0].mxu0
  %v8387 = vadd.f32 %v8106, %v8386
  %v8388 = vpop.f32.mrb[0].mxu0
  %8389 = vmatprep.mubr.bf16.mxu0 %v7112
  %8390 = vmatmul.mubr.bf16.gmra.mrb[0].mxu0 %v7111
  %v8391 = vpop.f32.mrb[0].mxu0
  %v8392 = vadd.f32 %v8111, %v8391
  %v8393 = vpop.f32.mrb[0].mxu0
  %v8394 = vpop.f32.mrb[0].mxu0
  %v8395 = vadd.f32 %v8114, %v8394
  %v8396 = vpop.f32.mrb[0].mxu0
  %8397 = vmatprep.mubr.bf16.mxu0 %v7116
  %8398 = vmatmul.mubr.bf16.gmra.mrb[0].mxu0 %v7115
  %v8399 = vpop.f32.mrb[0].mxu0
  %v8400 = vadd.f32 %v8119, %v8399
  %v8401 = vpop.f32.mrb[0].mxu0
  %v8402 = vpop.f32.mrb[0].mxu0
  %v8403 = vadd.f32 %v8122, %v8402
  %v8404 = vpop.f32.mrb[0].mxu0
  %8405 = vmatprep.mubr.bf16.mxu0 %v7120
  %8406 = vmatmul.mubr.bf16.gmra.mrb[0].mxu0 %v7119
  %v8407 = vpop.f32.mrb[0].mxu0
  %v8408 = vadd.f32 %v8127, %v8407
  %v8409 = vpop.f32.mrb[0].mxu0
  %v8410 = vpop.f32.mrb[0].mxu0
  %v8411 = vadd.f32 %v8130, %v8410
  %v8412 = vpop.f32.mrb[0].mxu0
  %8413 = vmatprep.mubr.bf16.mxu0 %v7124
  %8414 = vmatmul.mubr.bf16.gmra.mrb[0].mxu0 %v7123
  %v8415 = vpop.f32.mrb[0].mxu0
  %v8416 = vadd.f32 %v8135, %v8415
  %v8417 = vpop.f32.mrb[0].mxu0
  %v8418 = vpop.f32.mrb[0].mxu0
  %v8419 = vadd.f32 %v8138, %v8418
  %v8420 = vpop.f32.mrb[0].mxu0
  %8421 = vmatprep.mubr.bf16.mxu0 %v7128
  %8422 = vmatmul.mubr.bf16.gmra.mrb[0].mxu0 %v7127
  %v8423 = vpop.f32.mrb[0].mxu0
  %v8424 = vadd.f32 %v8143, %v8423
  %v8425 = vpop.f32.mrb[0].mxu0
  %v8426 = vpop.f32.mrb[0].mxu0
  %v8427 = vadd.f32 %v8146, %v8426
  %v8428 = vpop.f32.mrb[0].mxu0
  %8429 = vmatprep.mubr.bf16.mxu0 %v7132
  %8430 = vmatmul.mubr.bf16.gmra.mrb[0].mxu0 %v7131
  %v8431 = vpop.f32.mrb[0].mxu0
  %v8432 = vadd.f32 %v8151, %v8431
  %v8433 = vpop.f32.mrb[0].mxu0
  %v8434 = vpop.f32.mrb[0].mxu0
  %v8435 = vadd.f32 %v8154, %v8434
  %v8436 = vpop.f32.mrb[0].mxu0
  %8437 = vmatprep.mubr.bf16.mxu0 %v7136
  %8438 = vmatmul.mubr.bf16.gmra.mrb[0].mxu0 %v7135
  %v8439 = vpop.f32.mrb[0].mxu0
  %v8440 = vadd.f32 %v8159, %v8439
  %v8441 = vpop.f32.mrb[0].mxu0
  %v8442 = vpop.f32.mrb[0].mxu0
  %v8443 = vadd.f32 %v8162, %v8442
  %v8444 = vpop.f32.mrb[0].mxu0
  %8445 = vmatprep.mubr.bf16.mxu0 %v7140
  %8446 = vmatmul.mubr.bf16.gmra.mrb[0].mxu0 %v7139
  %v8447 = vpop.f32.mrb[0].mxu0
  %v8448 = vadd.f32 %v8167, %v8447
  %v8449 = vpop.f32.mrb[0].mxu0
  %v8450 = vpop.f32.mrb[0].mxu0
  %v8451 = vadd.f32 %v8170, %v8450
  %v8452 = vpop.f32.mrb[0].mxu0
  %8453 = vmatprep.mubr.bf16.mxu0 %v7144
  %8454 = vmatmul.mubr.bf16.gmra.mrb[0].mxu0 %v7143
  %v8455 = vpop.f32.mrb[0].mxu0
  %v8456 = vadd.f32 %v8175, %v8455
  %v8457 = vpop.f32.mrb[0].mxu0
  %v8458 = vpop.f32.mrb[0].mxu0
  %v8459 = vadd.f32 %v8178, %v8458
  %v8460 = vpop.f32.mrb[0].mxu0
  %8461 = vmatprep.mubr.bf16.mxu0 %v7148
  %8462 = vmatmul.mubr.bf16.gmra.mrb[0].mxu0 %v7147
  %v8463 = vpop.f32.mrb[0].mxu0
  %v8464 = vadd.f32 %v8183, %v8463
  %v8465 = vpop.f32.mrb[0].mxu0
  %v8466 = vpop.f32.mrb[0].mxu0
  %v8467 = vadd.f32 %v8186, %v8466
  %v8468 = vpop.f32.mrb[0].mxu0
  %8469 = vmatprep.mubr.bf16.mxu0 %v7152
  %8470 = vmatmul.mubr.bf16.gmra.mrb[0].mxu0 %v7151
  %v8471 = vpop.f32.mrb[0].mxu0
  %v8472 = vadd.f32 %v8191, %v8471
  %v8473 = vpop.f32.mrb[0].mxu0
  %v8474 = vpop.f32.mrb[0].mxu0
  %v8475 = vadd.f32 %v8194, %v8474
  %v8476 = vpop.f32.mrb[0].mxu0
  %8477 = vmatprep.mubr.bf16.mxu0 %v7156
  %8478 = vmatmul.mubr.bf16.gmra.mrb[0].mxu0 %v7155
  %v8479 = vpop.f32.mrb[0].mxu0
  %v8480 = vadd.f32 %v8199, %v8479
  %v8481 = vpop.f32.mrb[0].mxu0
  %v8482 = vpop.f32.mrb[0].mxu0
  %v8483 = vadd.f32 %v8202, %v8482
  %v8484 = vpop.f32.mrb[0].mxu0
  %8485 = vmatprep.mubr.bf16.mxu0 %v7160
  %8486 = vmatmul.mubr.bf16.gmra.mrb[0].mxu0 %v7159
  %v8487 = vpop.f32.mrb[0].mxu0
  %v8488 = vadd.f32 %v8207, %v8487
  %v8489 = vpop.f32.mrb[0].mxu0
  %v8490 = vpop.f32.mrb[0].mxu0
  %v8491 = vadd.f32 %v8210, %v8490
  %v8492 = vpop.f32.mrb[0].mxu0
  %8493 = vmatprep.mubr.bf16.mxu0 %v7164
  %8494 = vmatmul.mubr.bf16.gmra.mrb[0].mxu0 %v7163
  %v8495 = vpop.f32.mrb[0].mxu0
  %v8496 = vadd.f32 %v8215, %v8495
  %v8497 = vpop.f32.mrb[0].mxu0
  %v8498 = vpop.f32.mrb[0].mxu0
  %v8499 = vadd.f32 %v8218, %v8498
  %v8500 = vpop.f32.mrb[0].mxu0
  %8501 = vmatprep.mubr.bf16.mxu0 %v7168
  %8502 = vmatmul.mubr.bf16.gmra.mrb[0].mxu0 %v7167
  %v8503 = vpop.f32.mrb[0].mxu0
  %v8504 = vadd.f32 %v8223, %v8503
  %v8505 = vpop.f32.mrb[0].mxu0
  %v8506 = vpop.f32.mrb[0].mxu0
  %v8507 = vadd.f32 %v8226, %v8506
  %v8508 = vpop.f32.mrb[0].mxu0
  %8509 = vmatprep.mubr.bf16.mxu0 %v7172
  %8510 = vmatmul.mubr.bf16.gmra.mrb[0].mxu0 %v7171
  %v8511 = vpop.f32.mrb[0].mxu0
  %v8512 = vadd.f32 %v8231, %v8511
  %v8513 = vpop.f32.mrb[0].mxu0
  %v8514 = vpop.f32.mrb[0].mxu0
  %v8515 = vadd.f32 %v8234, %v8514
  %v8516 = vpop.f32.mrb[0].mxu0
  %8517 = vmatprep.mubr.bf16.mxu0 %v7176
  %8518 = vmatmul.mubr.bf16.gmra.mrb[0].mxu0 %v7175
  %v8519 = vpop.f32.mrb[0].mxu0
  %v8520 = vadd.f32 %v8239, %v8519
  %v8521 = vpop.f32.mrb[0].mxu0
  %v8522 = vpop.f32.mrb[0].mxu0
  %v8523 = vadd.f32 %v8242, %v8522
  %v8524 = vpop.f32.mrb[0].mxu0
  %8525 = vmatprep.mubr.bf16.mxu0 %v7180
  %8526 = vmatmul.mubr.bf16.gmra.mrb[0].mxu0 %v7179
  %v8527 = vpop.f32.mrb[0].mxu0
  %v8528 = vadd.f32 %v8247, %v8527
  %v8529 = vpop.f32.mrb[0].mxu0
  %v8530 = vpop.f32.mrb[0].mxu0
  %v8531 = vadd.f32 %v8250, %v8530
  %v8532 = vpop.f32.mrb[0].mxu0
  %8533 = vmatprep.mubr.bf16.mxu0 %v7184
  %8534 = vmatmul.mubr.bf16.gmra.mrb[0].mxu0 %v7183
  %v8535 = vpop.f32.mrb[0].mxu0
  %v8536 = vadd.f32 %v8255, %v8535
  %v8537 = vpop.f32.mrb[0].mxu0
  %v8538 = vpop.f32.mrb[0].mxu0
  %v8539 = vadd.f32 %v8258, %v8538
  %v8540 = vpop.f32.mrb[0].mxu0
  %8541 = vmatprep.mubr.bf16.mxu0 %v7188
  %8542 = vmatmul.mubr.bf16.gmra.mrb[0].mxu0 %v7187
  %v8543 = vpop.f32.mrb[0].mxu0
  %v8544 = vadd.f32 %v8263, %v8543
  %v8545 = vpop.f32.mrb[0].mxu0
  %v8546 = vpop.f32.mrb[0].mxu0
  %v8547 = vadd.f32 %v8266, %v8546
  %v8548 = vpop.f32.mrb[0].mxu0
  %8549 = vmatprep.mubr.bf16.mxu0 %v7192
  %8550 = vmatmul.mubr.bf16.gmra.mrb[0].mxu0 %v7191
  %v8551 = vpop.f32.mrb[0].mxu0
  %v8552 = vadd.f32 %v8271, %v8551
  %v8553 = vpop.f32.mrb[0].mxu0
  %v8554 = vpop.f32.mrb[0].mxu0
  %v8555 = vadd.f32 %v8274, %v8554
  %v8556 = vpop.f32.mrb[0].mxu0
  %8557 = vmatprep.mubr.bf16.mxu0 %v7196
  %8558 = vmatmul.mubr.bf16.gmra.mrb[0].mxu0 %v7195
  %v8559 = vpop.f32.mrb[0].mxu0
  %v8560 = vpop.f32.mrb[0].mxu0
  %v8561 = vpop.f32.mrb[0].mxu0
  %v8562 = vpop.f32.mrb[0].mxu0
  %8563 = vmatprep.mubr.bf16.mxu0 %v7200
  %8564 = vmatmul.mubr.bf16.gmra.mrb[0].mxu0 %v7199
  %v8565 = vpop.f32.mrb[0].mxu0
  %v8566 = vpop.f32.mrb[0].mxu0
  %v8567 = vpop.f32.mrb[0].mxu0
  %v8568 = vpop.f32.mrb[0].mxu0
  %8569 = vmatprep.mubr.bf16.mxu0 %v7204
  %8570 = vmatmul.mubr.bf16.gmra.mrb[0].mxu0 %v7203
  %v8571 = vpop.f32.mrb[0].mxu0
  %v8572 = vpop.f32.mrb[0].mxu0
  %v8573 = vpop.f32.mrb[0].mxu0
  %v8574 = vpop.f32.mrb[0].mxu0
  %8575 = vmatprep.mubr.bf16.mxu0 %v7208
  %8576 = vmatmul.mubr.bf16.gmra.mrb[0].mxu0 %v7207
  %v8577 = vpop.f32.mrb[0].mxu0
  %v8578 = vpop.f32.mrb[0].mxu0
  %v8579 = vpop.f32.mrb[0].mxu0
  %v8580 = vpop.f32.mrb[0].mxu0
  %8581 = vdwg.mxu0
  %8582 = vmatprep.subr.bf16.mxu0 0
  %8583 = vmatpush1.bf16.msra.mxu0 %v7659
  %8584 = vmatprep.subr.bf16.mxu0 0
  %8585 = vmatpush1.bf16.msra.mxu0 %v7660
  %8586 = vmatprep.subr.bf16.mxu0 0
  %8587 = vmatpush1.bf16.msra.mxu0 %v7661
  %8588 = vmatprep.subr.bf16.mxu0 0
  %8589 = vmatpush1.bf16.msra.mxu0 %v7662
  %8590 = vmatprep.subr.bf16.mxu0 0
  %8591 = vmatpush1.bf16.msra.mxu0 %v7663
  %8592 = vmatprep.subr.bf16.mxu0 0
  %8593 = vmatpush1.bf16.msra.mxu0 %v7664
  %8594 = vmatprep.subr.bf16.mxu0 0
  %8595 = vmatpush1.bf16.msra.mxu0 %v7665
  %8596 = vmatprep.subr.bf16.mxu0 0
  %8597 = vmatpush1.bf16.msra.mxu0 %v7666
  %8598 = vmatprep.subr.bf16.mxu0 0
  %8599 = vmatpush1.bf16.msra.mxu0 %v7667
  %8600 = vmatprep.subr.bf16.mxu0 0
  %8601 = vmatpush1.bf16.msra.mxu0 %v7668
  %8602 = vmatprep.subr.bf16.mxu0 0
  %8603 = vmatpush1.bf16.msra.mxu0 %v7669
  %8604 = vmatprep.subr.bf16.mxu0 0
  %8605 = vmatpush1.bf16.msra.mxu0 %v7670
  %8606 = vmatprep.subr.bf16.mxu0 0
  %8607 = vmatpush1.bf16.msra.mxu0 %v7671
  %8608 = vmatprep.subr.bf16.mxu0 0
  %8609 = vmatpush1.bf16.msra.mxu0 %v7672
  %8610 = vmatprep.subr.bf16.mxu0 0
  %8611 = vmatpush1.bf16.msra.mxu0 %v7673
  %8612 = vmatprep.subr.bf16.mxu0 0
  %8613 = vmatpush1.bf16.msra.mxu0 %v7674
  %8614 = vmatprep.mubr.bf16.mxu0 %v7074
  %8615 = vmatmul.mubr.bf16.gmra.mrb[0].mxu0 %v7073
  %v8616 = vpop.f32.mrb[0].mxu0
  %v8617 = vadd.f32 %v8336, %v8616
  %v8618 = vpop.f32.mrb[0].mxu0
  %v8619 = vpop.f32.mrb[0].mxu0
  %v8620 = vadd.f32 %v8339, %v8619
  %v8621 = vpop.f32.mrb[0].mxu0
  %8622 = vmatprep.mubr.bf16.mxu0 %v7082
  %8623 = vmatmul.mubr.bf16.gmra.mrb[0].mxu0 %v7081
  %v8624 = vpop.f32.mrb[0].mxu0
  %v8625 = vadd.f32 %v8344, %v8624
  %v8626 = vpop.f32.mrb[0].mxu0
  %v8627 = vpop.f32.mrb[0].mxu0
  %v8628 = vadd.f32 %v8347, %v8627
  %v8629 = vpop.f32.mrb[0].mxu0
  %8630 = vmatprep.mubr.bf16.mxu0 %v7090
  %8631 = vmatmul.mubr.bf16.gmra.mrb[0].mxu0 %v7089
  %v8632 = vpop.f32.mrb[0].mxu0
  %v8633 = vadd.f32 %v8352, %v8632
  %v8634 = vpop.f32.mrb[0].mxu0
  %v8635 = vpop.f32.mrb[0].mxu0
  %v8636 = vadd.f32 %v8355, %v8635
  %v8637 = vpop.f32.mrb[0].mxu0
  %8638 = vmatprep.mubr.bf16.mxu0 %v7098
  %8639 = vmatmul.mubr.bf16.gmra.mrb[0].mxu0 %v7097
  %v8640 = vpop.f32.mrb[0].mxu0
  %v8641 = vadd.f32 %v8360, %v8640
  %v8642 = vpop.f32.mrb[0].mxu0
  %v8643 = vpop.f32.mrb[0].mxu0
  %v8644 = vadd.f32 %v8363, %v8643
  %v8645 = vpop.f32.mrb[0].mxu0
  %8646 = vmatprep.mubr.bf16.mxu0 %v7102
  %8647 = vmatmul.mubr.bf16.gmra.mrb[0].mxu0 %v7101
  %v8648 = vpop.f32.mrb[0].mxu0
  %v8649 = vadd.f32 %v8368, %v8648
  %v8650 = vpop.f32.mrb[0].mxu0
  %v8651 = vpop.f32.mrb[0].mxu0
  %v8652 = vadd.f32 %v8371, %v8651
  %v8653 = vpop.f32.mrb[0].mxu0
  %8654 = vmatprep.mubr.bf16.mxu0 %v7106
  %8655 = vmatmul.mubr.bf16.gmra.mrb[0].mxu0 %v7105
  %v8656 = vpop.f32.mrb[0].mxu0
  %v8657 = vadd.f32 %v8376, %v8656
  %v8658 = vpop.f32.mrb[0].mxu0
  %v8659 = vpop.f32.mrb[0].mxu0
  %v8660 = vadd.f32 %v8379, %v8659
  %v8661 = vpop.f32.mrb[0].mxu0
  %8662 = vmatprep.mubr.bf16.mxu0 %v7110
  %8663 = vmatmul.mubr.bf16.gmra.mrb[0].mxu0 %v7109
  %v8664 = vpop.f32.mrb[0].mxu0
  %v8665 = vadd.f32 %v8384, %v8664
  %v8666 = vpop.f32.mrb[0].mxu0
  %v8667 = vpop.f32.mrb[0].mxu0
  %v8668 = vadd.f32 %v8387, %v8667
  %v8669 = vpop.f32.mrb[0].mxu0
  %8670 = vmatprep.mubr.bf16.mxu0 %v7114
  %8671 = vmatmul.mubr.bf16.gmra.mrb[0].mxu0 %v7113
  %v8672 = vpop.f32.mrb[0].mxu0
  %v8673 = vadd.f32 %v8392, %v8672
  %v8674 = vpop.f32.mrb[0].mxu0
  %v8675 = vpop.f32.mrb[0].mxu0
  %v8676 = vadd.f32 %v8395, %v8675
  %v8677 = vpop.f32.mrb[0].mxu0
  %8678 = vmatprep.mubr.bf16.mxu0 %v7118
  %8679 = vmatmul.mubr.bf16.gmra.mrb[0].mxu0 %v7117
  %v8680 = vpop.f32.mrb[0].mxu0
  %v8681 = vadd.f32 %v8400, %v8680
  %v8682 = vpop.f32.mrb[0].mxu0
  %v8683 = vpop.f32.mrb[0].mxu0
  %v8684 = vadd.f32 %v8403, %v8683
  %v8685 = vpop.f32.mrb[0].mxu0
  %8686 = vmatprep.mubr.bf16.mxu0 %v7122
  %8687 = vmatmul.mubr.bf16.gmra.mrb[0].mxu0 %v7121
  %v8688 = vpop.f32.mrb[0].mxu0
  %v8689 = vadd.f32 %v8408, %v8688
  %v8690 = vpop.f32.mrb[0].mxu0
  %v8691 = vpop.f32.mrb[0].mxu0
  %v8692 = vadd.f32 %v8411, %v8691
  %v8693 = vpop.f32.mrb[0].mxu0
  %8694 = vmatprep.mubr.bf16.mxu0 %v7126
  %8695 = vmatmul.mubr.bf16.gmra.mrb[0].mxu0 %v7125
  %v8696 = vpop.f32.mrb[0].mxu0
  %v8697 = vadd.f32 %v8416, %v8696
  %v8698 = vpop.f32.mrb[0].mxu0
  %v8699 = vpop.f32.mrb[0].mxu0
  %v8700 = vadd.f32 %v8419, %v8699
  %v8701 = vpop.f32.mrb[0].mxu0
  %8702 = vmatprep.mubr.bf16.mxu0 %v7130
  %8703 = vmatmul.mubr.bf16.gmra.mrb[0].mxu0 %v7129
  %v8704 = vpop.f32.mrb[0].mxu0
  %v8705 = vadd.f32 %v8424, %v8704
  %v8706 = vpop.f32.mrb[0].mxu0
  %v8707 = vpop.f32.mrb[0].mxu0
  %v8708 = vadd.f32 %v8427, %v8707
  %v8709 = vpop.f32.mrb[0].mxu0
  %8710 = vmatprep.mubr.bf16.mxu0 %v7134
  %8711 = vmatmul.mubr.bf16.gmra.mrb[0].mxu0 %v7133
  %v8712 = vpop.f32.mrb[0].mxu0
  %v8713 = vadd.f32 %v8432, %v8712
  %v8714 = vpop.f32.mrb[0].mxu0
  %v8715 = vpop.f32.mrb[0].mxu0
  %v8716 = vadd.f32 %v8435, %v8715
  %v8717 = vpop.f32.mrb[0].mxu0
  %8718 = vmatprep.mubr.bf16.mxu0 %v7138
  %8719 = vmatmul.mubr.bf16.gmra.mrb[0].mxu0 %v7137
  %v8720 = vpop.f32.mrb[0].mxu0
  %v8721 = vadd.f32 %v8440, %v8720
  %v8722 = vpop.f32.mrb[0].mxu0
  %v8723 = vpop.f32.mrb[0].mxu0
  %v8724 = vadd.f32 %v8443, %v8723
  %v8725 = vpop.f32.mrb[0].mxu0
  %8726 = vmatprep.mubr.bf16.mxu0 %v7142
  %8727 = vmatmul.mubr.bf16.gmra.mrb[0].mxu0 %v7141
  %v8728 = vpop.f32.mrb[0].mxu0
  %v8729 = vadd.f32 %v8448, %v8728
  %v8730 = vpop.f32.mrb[0].mxu0
  %v8731 = vpop.f32.mrb[0].mxu0
  %v8732 = vadd.f32 %v8451, %v8731
  %v8733 = vpop.f32.mrb[0].mxu0
  %8734 = vmatprep.mubr.bf16.mxu0 %v7146
  %8735 = vmatmul.mubr.bf16.gmra.mrb[0].mxu0 %v7145
  %v8736 = vpop.f32.mrb[0].mxu0
  %v8737 = vadd.f32 %v8456, %v8736
  %v8738 = vpop.f32.mrb[0].mxu0
  %v8739 = vpop.f32.mrb[0].mxu0
  %v8740 = vadd.f32 %v8459, %v8739
  %v8741 = vpop.f32.mrb[0].mxu0
  %8742 = vmatprep.mubr.bf16.mxu0 %v7150
  %8743 = vmatmul.mubr.bf16.gmra.mrb[0].mxu0 %v7149
  %v8744 = vpop.f32.mrb[0].mxu0
  %v8745 = vadd.f32 %v8464, %v8744
  %v8746 = vpop.f32.mrb[0].mxu0
  %v8747 = vpop.f32.mrb[0].mxu0
  %v8748 = vadd.f32 %v8467, %v8747
  %v8749 = vpop.f32.mrb[0].mxu0
  %8750 = vmatprep.mubr.bf16.mxu0 %v7154
  %8751 = vmatmul.mubr.bf16.gmra.mrb[0].mxu0 %v7153
  %v8752 = vpop.f32.mrb[0].mxu0
  %v8753 = vadd.f32 %v8472, %v8752
  %v8754 = vpop.f32.mrb[0].mxu0
  %v8755 = vpop.f32.mrb[0].mxu0
  %v8756 = vadd.f32 %v8475, %v8755
  %v8757 = vpop.f32.mrb[0].mxu0
  %8758 = vmatprep.mubr.bf16.mxu0 %v7158
  %8759 = vmatmul.mubr.bf16.gmra.mrb[0].mxu0 %v7157
  %v8760 = vpop.f32.mrb[0].mxu0
  %v8761 = vadd.f32 %v8480, %v8760
  %v8762 = vpop.f32.mrb[0].mxu0
  %v8763 = vpop.f32.mrb[0].mxu0
  %v8764 = vadd.f32 %v8483, %v8763
  %v8765 = vpop.f32.mrb[0].mxu0
  %8766 = vmatprep.mubr.bf16.mxu0 %v7162
  %8767 = vmatmul.mubr.bf16.gmra.mrb[0].mxu0 %v7161
  %v8768 = vpop.f32.mrb[0].mxu0
  %v8769 = vadd.f32 %v8488, %v8768
  %v8770 = vpop.f32.mrb[0].mxu0
  %v8771 = vpop.f32.mrb[0].mxu0
  %v8772 = vadd.f32 %v8491, %v8771
  %v8773 = vpop.f32.mrb[0].mxu0
  %8774 = vmatprep.mubr.bf16.mxu0 %v7166
  %8775 = vmatmul.mubr.bf16.gmra.mrb[0].mxu0 %v7165
  %v8776 = vpop.f32.mrb[0].mxu0
  %v8777 = vadd.f32 %v8496, %v8776
  %v8778 = vpop.f32.mrb[0].mxu0
  %v8779 = vpop.f32.mrb[0].mxu0
  %v8780 = vadd.f32 %v8499, %v8779
  %v8781 = vpop.f32.mrb[0].mxu0
  %8782 = vmatprep.mubr.bf16.mxu0 %v7170
  %8783 = vmatmul.mubr.bf16.gmra.mrb[0].mxu0 %v7169
  %v8784 = vpop.f32.mrb[0].mxu0
  %v8785 = vadd.f32 %v8504, %v8784
  %v8786 = vpop.f32.mrb[0].mxu0
  %v8787 = vpop.f32.mrb[0].mxu0
  %v8788 = vadd.f32 %v8507, %v8787
  %v8789 = vpop.f32.mrb[0].mxu0
  %8790 = vmatprep.mubr.bf16.mxu0 %v7174
  %8791 = vmatmul.mubr.bf16.gmra.mrb[0].mxu0 %v7173
  %v8792 = vpop.f32.mrb[0].mxu0
  %v8793 = vadd.f32 %v8512, %v8792
  %v8794 = vpop.f32.mrb[0].mxu0
  %v8795 = vpop.f32.mrb[0].mxu0
  %v8796 = vadd.f32 %v8515, %v8795
  %v8797 = vpop.f32.mrb[0].mxu0
  %8798 = vmatprep.mubr.bf16.mxu0 %v7178
  %8799 = vmatmul.mubr.bf16.gmra.mrb[0].mxu0 %v7177
  %v8800 = vpop.f32.mrb[0].mxu0
  %v8801 = vadd.f32 %v8520, %v8800
  %v8802 = vpop.f32.mrb[0].mxu0
  %v8803 = vpop.f32.mrb[0].mxu0
  %v8804 = vadd.f32 %v8523, %v8803
  %v8805 = vpop.f32.mrb[0].mxu0
  %8806 = vmatprep.mubr.bf16.mxu0 %v7182
  %8807 = vmatmul.mubr.bf16.gmra.mrb[0].mxu0 %v7181
  %v8808 = vpop.f32.mrb[0].mxu0
  %v8809 = vadd.f32 %v8528, %v8808
  %v8810 = vpop.f32.mrb[0].mxu0
  %v8811 = vpop.f32.mrb[0].mxu0
  %v8812 = vadd.f32 %v8531, %v8811
  %v8813 = vpop.f32.mrb[0].mxu0
  %8814 = vmatprep.mubr.bf16.mxu0 %v7186
  %8815 = vmatmul.mubr.bf16.gmra.mrb[0].mxu0 %v7185
  %v8816 = vpop.f32.mrb[0].mxu0
  %v8817 = vadd.f32 %v8536, %v8816
  %v8818 = vpop.f32.mrb[0].mxu0
  %v8819 = vpop.f32.mrb[0].mxu0
  %v8820 = vadd.f32 %v8539, %v8819
  %v8821 = vpop.f32.mrb[0].mxu0
  %8822 = vmatprep.mubr.bf16.mxu0 %v7190
  %8823 = vmatmul.mubr.bf16.gmra.mrb[0].mxu0 %v7189
  %v8824 = vpop.f32.mrb[0].mxu0
  %v8825 = vadd.f32 %v8544, %v8824
  %v8826 = vpop.f32.mrb[0].mxu0
  %v8827 = vpop.f32.mrb[0].mxu0
  %v8828 = vadd.f32 %v8547, %v8827
  %v8829 = vpop.f32.mrb[0].mxu0
  %8830 = vmatprep.mubr.bf16.mxu0 %v7194
  %8831 = vmatmul.mubr.bf16.gmra.mrb[0].mxu0 %v7193
  %v8832 = vpop.f32.mrb[0].mxu0
  %v8833 = vadd.f32 %v8552, %v8832
  %v8834 = vpop.f32.mrb[0].mxu0
  %v8835 = vpop.f32.mrb[0].mxu0
  %v8836 = vadd.f32 %v8555, %v8835
  %v8837 = vpop.f32.mrb[0].mxu0
  %8838 = vmatprep.mubr.bf16.mxu0 %v7198
  %8839 = vmatmul.mubr.bf16.gmra.mrb[0].mxu0 %v7197
  %v8840 = vpop.f32.mrb[0].mxu0
  %v8841 = vpop.f32.mrb[0].mxu0
  %v8842 = vpop.f32.mrb[0].mxu0
  %v8843 = vpop.f32.mrb[0].mxu0
  %8844 = vmatprep.mubr.bf16.mxu0 %v7202
  %8845 = vmatmul.mubr.bf16.gmra.mrb[0].mxu0 %v7201
  %v8846 = vpop.f32.mrb[0].mxu0
  %v8847 = vpop.f32.mrb[0].mxu0
  %v8848 = vpop.f32.mrb[0].mxu0
  %v8849 = vpop.f32.mrb[0].mxu0
  %8850 = vmatprep.mubr.bf16.mxu0 %v7206
  %8851 = vmatmul.mubr.bf16.gmra.mrb[0].mxu0 %v7205
  %v8852 = vpop.f32.mrb[0].mxu0
  %v8853 = vpop.f32.mrb[0].mxu0
  %v8854 = vpop.f32.mrb[0].mxu0
  %v8855 = vpop.f32.mrb[0].mxu0
  %8856 = vmatprep.mubr.bf16.mxu0 %v7210
  %8857 = vmatmul.mubr.bf16.gmra.mrb[0].mxu0 %v7209
  %v8858 = vpop.f32.mrb[0].mxu0
  %v8859 = vpop.f32.mrb[0].mxu0
  %v8860 = vpop.f32.mrb[0].mxu0
  %v8861 = vpop.f32.mrb[0].mxu0
  %8862 = vdwg.mxu0
  %vm8863 = vcmp.ge.f32.partialorder %v8617, 0.0
  %vm8864 = vcmp.ge.f32.partialorder %v8620, 0.0
  %vm8865 = vcmp.ge.f32.partialorder %v8625, 0.0
  %vm8866 = vcmp.ge.f32.partialorder %v8628, 0.0
  %vm8867 = vcmp.ge.f32.partialorder %v8633, 0.0
  %vm8868 = vcmp.ge.f32.partialorder %v8636, 0.0
  %vm8869 = vcmp.ge.f32.partialorder %v8641, 0.0
  %vm8870 = vcmp.ge.f32.partialorder %v8644, 0.0
  %vm8871 = vcmp.ge.f32.partialorder %v8649, 0.0
  %vm8872 = vcmp.ge.f32.partialorder %v8652, 0.0
  %vm8873 = vcmp.ge.f32.partialorder %v8657, 0.0
  %vm8874 = vcmp.ge.f32.partialorder %v8660, 0.0
  %vm8875 = vcmp.ge.f32.partialorder %v8665, 0.0
  %vm8876 = vcmp.ge.f32.partialorder %v8668, 0.0
  %vm8877 = vcmp.ge.f32.partialorder %v8673, 0.0
  %vm8878 = vcmp.ge.f32.partialorder %v8676, 0.0
  %vm8879 = vcmp.ge.f32.partialorder %v8681, 0.0
  %vm8880 = vcmp.ge.f32.partialorder %v8684, 0.0
  %vm8881 = vcmp.ge.f32.partialorder %v8689, 0.0
  %vm8882 = vcmp.ge.f32.partialorder %v8692, 0.0
  %vm8883 = vcmp.ge.f32.partialorder %v8697, 0.0
  %vm8884 = vcmp.ge.f32.partialorder %v8700, 0.0
  %vm8885 = vcmp.ge.f32.partialorder %v8705, 0.0
  %vm8886 = vcmp.ge.f32.partialorder %v8708, 0.0
  %vm8887 = vcmp.ge.f32.partialorder %v8713, 0.0
  %vm8888 = vcmp.ge.f32.partialorder %v8716, 0.0
  %vm8889 = vcmp.ge.f32.partialorder %v8721, 0.0
  %vm8890 = vcmp.ge.f32.partialorder %v8724, 0.0
  %vm8891 = vcmp.ge.f32.partialorder %v8729, 0.0
  %vm8892 = vcmp.ge.f32.partialorder %v8732, 0.0
  %vm8893 = vcmp.ge.f32.partialorder %v8737, 0.0
  %vm8894 = vcmp.ge.f32.partialorder %v8740, 0.0
  %vm8895 = vcmp.ge.f32.partialorder %v8745, 0.0
  %vm8896 = vcmp.ge.f32.partialorder %v8748, 0.0
  %vm8897 = vcmp.ge.f32.partialorder %v8753, 0.0
  %vm8898 = vcmp.ge.f32.partialorder %v8756, 0.0
  %vm8899 = vcmp.ge.f32.partialorder %v8761, 0.0
  %vm8900 = vcmp.ge.f32.partialorder %v8764, 0.0
  %vm8901 = vcmp.ge.f32.partialorder %v8769, 0.0
  %vm8902 = vcmp.ge.f32.partialorder %v8772, 0.0
  %vm8903 = vcmp.ge.f32.partialorder %v8777, 0.0
  %vm8904 = vcmp.ge.f32.partialorder %v8780, 0.0
  %vm8905 = vcmp.ge.f32.partialorder %v8785, 0.0
  %vm8906 = vcmp.ge.f32.partialorder %v8788, 0.0
  %vm8907 = vcmp.ge.f32.partialorder %v8793, 0.0
  %vm8908 = vcmp.ge.f32.partialorder %v8796, 0.0
  %vm8909 = vcmp.ge.f32.partialorder %v8801, 0.0
  %vm8910 = vcmp.ge.f32.partialorder %v8804, 0.0
  %vm8911 = vcmp.ge.f32.partialorder %v8809, 0.0
  %vm8912 = vcmp.ge.f32.partialorder %v8812, 0.0
  %vm8913 = vcmp.ge.f32.partialorder %v8817, 0.0
  %vm8914 = vcmp.ge.f32.partialorder %v8820, 0.0
  %vm8915 = vcmp.ge.f32.partialorder %v8825, 0.0
  %vm8916 = vcmp.ge.f32.partialorder %v8828, 0.0
  %vm8917 = vcmp.ge.f32.partialorder %v8833, 0.0
  %vm8918 = vcmp.ge.f32.partialorder %v8836, 0.0
  %v8919 = vmul.f32 %v8617, 0.2
  %v8920 = vmul.f32 %v8620, 0.2
  %v8921 = vmul.f32 %v8625, 0.2
  %v8922 = vmul.f32 %v8628, 0.2
  %v8923 = vmul.f32 %v8633, 0.2
  %v8924 = vmul.f32 %v8636, 0.2
  %v8925 = vmul.f32 %v8641, 0.2
  %v8926 = vmul.f32 %v8644, 0.2
  %v8927 = vmul.f32 %v8649, 0.2
  %v8928 = vmul.f32 %v8652, 0.2
  %v8929 = vmul.f32 %v8657, 0.2
  %v8930 = vmul.f32 %v8660, 0.2
  %v8931 = vmul.f32 %v8665, 0.2
  %v8932 = vmul.f32 %v8668, 0.2
  %v8933 = vmul.f32 %v8673, 0.2
  %v8934 = vmul.f32 %v8676, 0.2
  %v8935 = vmul.f32 %v8681, 0.2
  %v8936 = vmul.f32 %v8684, 0.2
  %v8937 = vmul.f32 %v8689, 0.2
  %v8938 = vmul.f32 %v8692, 0.2
  %v8939 = vmul.f32 %v8697, 0.2
  %v8940 = vmul.f32 %v8700, 0.2
  %v8941 = vmul.f32 %v8705, 0.2
  %v8942 = vmul.f32 %v8708, 0.2
  %v8943 = vmul.f32 %v8713, 0.2
  %v8944 = vmul.f32 %v8716, 0.2
  %v8945 = vmul.f32 %v8721, 0.2
  %v8946 = vmul.f32 %v8724, 0.2
  %v8947 = vmul.f32 %v8729, 0.2
  %v8948 = vmul.f32 %v8732, 0.2
  %v8949 = vmul.f32 %v8737, 0.2
  %v8950 = vmul.f32 %v8740, 0.2
  %v8951 = vmul.f32 %v8745, 0.2
  %v8952 = vmul.f32 %v8748, 0.2
  %v8953 = vmul.f32 %v8753, 0.2
  %v8954 = vmul.f32 %v8756, 0.2
  %v8955 = vmul.f32 %v8761, 0.2
  %v8956 = vmul.f32 %v8764, 0.2
  %v8957 = vmul.f32 %v8769, 0.2
  %v8958 = vmul.f32 %v8772, 0.2
  %v8959 = vmul.f32 %v8777, 0.2
  %v8960 = vmul.f32 %v8780, 0.2
  %v8961 = vmul.f32 %v8785, 0.2
  %v8962 = vmul.f32 %v8788, 0.2
  %v8963 = vmul.f32 %v8793, 0.2
  %v8964 = vmul.f32 %v8796, 0.2
  %v8965 = vmul.f32 %v8801, 0.2
  %v8966 = vmul.f32 %v8804, 0.2
  %v8967 = vmul.f32 %v8809, 0.2
  %v8968 = vmul.f32 %v8812, 0.2
  %v8969 = vmul.f32 %v8817, 0.2
  %v8970 = vmul.f32 %v8820, 0.2
  %v8971 = vmul.f32 %v8825, 0.2
  %v8972 = vmul.f32 %v8828, 0.2
  %v8973 = vmul.f32 %v8833, 0.2
  %v8974 = vmul.f32 %v8836, 0.2
  %v8975 = vsel %vm8863, %v8617, %v8919
  %v8976 = vsel %vm8864, %v8620, %v8920
  %v8977 = vsel %vm8865, %v8625, %v8921
  %v8978 = vsel %vm8866, %v8628, %v8922
  %v8979 = vsel %vm8867, %v8633, %v8923
  %v8980 = vsel %vm8868, %v8636, %v8924
  %v8981 = vsel %vm8869, %v8641, %v8925
  %v8982 = vsel %vm8870, %v8644, %v8926
  %v8983 = vsel %vm8871, %v8649, %v8927
  %v8984 = vsel %vm8872, %v8652, %v8928
  %v8985 = vsel %vm8873, %v8657, %v8929
  %v8986 = vsel %vm8874, %v8660, %v8930
  %v8987 = vsel %vm8875, %v8665, %v8931
  %v8988 = vsel %vm8876, %v8668, %v8932
  %v8989 = vsel %vm8877, %v8673, %v8933
  %v8990 = vsel %vm8878, %v8676, %v8934
  %v8991 = vsel %vm8879, %v8681, %v8935
  %v8992 = vsel %vm8880, %v8684, %v8936
  %v8993 = vsel %vm8881, %v8689, %v8937
  %v8994 = vsel %vm8882, %v8692, %v8938
  %v8995 = vsel %vm8883, %v8697, %v8939
  %v8996 = vsel %vm8884, %v8700, %v8940
  %v8997 = vsel %vm8885, %v8705, %v8941
  %v8998 = vsel %vm8886, %v8708, %v8942
  %v8999 = vsel %vm8887, %v8713, %v8943
  %v9000 = vsel %vm8888, %v8716, %v8944
  %v9001 = vsel %vm8889, %v8721, %v8945
  %v9002 = vsel %vm8890, %v8724, %v8946
  %v9003 = vsel %vm8891, %v8729, %v8947
  %v9004 = vsel %vm8892, %v8732, %v8948
  %v9005 = vsel %vm8893, %v8737, %v8949
  %v9006 = vsel %vm8894, %v8740, %v8950
  %v9007 = vsel %vm8895, %v8745, %v8951
  %v9008 = vsel %vm8896, %v8748, %v8952
  %v9009 = vsel %vm8897, %v8753, %v8953
  %v9010 = vsel %vm8898, %v8756, %v8954
  %v9011 = vsel %vm8899, %v8761, %v8955
  %v9012 = vsel %vm8900, %v8764, %v8956
  %v9013 = vsel %vm8901, %v8769, %v8957
  %v9014 = vsel %vm8902, %v8772, %v8958
  %v9015 = vsel %vm8903, %v8777, %v8959
  %v9016 = vsel %vm8904, %v8780, %v8960
  %v9017 = vsel %vm8905, %v8785, %v8961
  %v9018 = vsel %vm8906, %v8788, %v8962
  %v9019 = vsel %vm8907, %v8793, %v8963
  %v9020 = vsel %vm8908, %v8796, %v8964
  %v9021 = vsel %vm8909, %v8801, %v8965
  %v9022 = vsel %vm8910, %v8804, %v8966
  %v9023 = vsel %vm8911, %v8809, %v8967
  %v9024 = vsel %vm8912, %v8812, %v8968
  %v9025 = vsel %vm8913, %v8817, %v8969
  %v9026 = vsel %vm8914, %v8820, %v8970
  %v9027 = vsel %vm8915, %v8825, %v8971
  %v9028 = vsel %vm8916, %v8828, %v8972
  %v9029 = vsel %vm8917, %v8833, %v8973
  %v9030 = vsel %vm8918, %v8836, %v8974
  %v9031 = vpack.c.bf16 %v8976, %v8975
  %v9032 = vpack.c.bf16 %v8978, %v8977
  %v9033 = vpack.c.bf16 %v8980, %v8979
  %v9034 = vpack.c.bf16 %v8982, %v8981
  %v9035 = vpack.c.bf16 %v8984, %v8983
  %v9036 = vpack.c.bf16 %v8986, %v8985
  %v9037 = vpack.c.bf16 %v8988, %v8987
  %v9038 = vpack.c.bf16 %v8990, %v8989
  %v9039 = vpack.c.bf16 %v8992, %v8991
  %v9040 = vpack.c.bf16 %v8994, %v8993
  %v9041 = vpack.c.bf16 %v8996, %v8995
  %v9042 = vpack.c.bf16 %v8998, %v8997
  %v9043 = vpack.c.bf16 %v9000, %v8999
  %v9044 = vpack.c.bf16 %v9002, %v9001
  %v9045 = vpack.c.bf16 %v9004, %v9003
  %v9046 = vpack.c.bf16 %v9006, %v9005
  %v9047 = vpack.c.bf16 %v9008, %v9007
  %v9048 = vpack.c.bf16 %v9010, %v9009
  %v9049 = vpack.c.bf16 %v9012, %v9011
  %v9050 = vpack.c.bf16 %v9014, %v9013
  %v9051 = vpack.c.bf16 %v9016, %v9015
  %v9052 = vpack.c.bf16 %v9018, %v9017
  %v9053 = vpack.c.bf16 %v9020, %v9019
  %v9054 = vpack.c.bf16 %v9022, %v9021
  %v9055 = vpack.c.bf16 %v9024, %v9023
  %v9056 = vpack.c.bf16 %v9026, %v9025
  %v9057 = vpack.c.bf16 %v9028, %v9027
  %v9058 = vpack.c.bf16 %v9030, %v9029
  %v9087 = vunpack.c.l.b16 %v9031
  %v9088 = vunpack.c.h.b16 %v9031
  %v9089 = vunpack.c.l.b16 %v9032
  %v9090 = vunpack.c.h.b16 %v9032
  %v9091 = vunpack.c.l.b16 %v9033
  %v9092 = vunpack.c.h.b16 %v9033
  %v9093 = vunpack.c.l.b16 %v9034
  %v9094 = vunpack.c.l.b16 %v9035
  %v9095 = vunpack.c.h.b16 %v9035
  %v9096 = vunpack.c.l.b16 %v9036
  %v9097 = vunpack.c.h.b16 %v9036
  %v9098 = vunpack.c.l.b16 %v9037
  %v9099 = vunpack.c.h.b16 %v9037
  %v9100 = vunpack.c.l.b16 %v9038
  %v9101 = vunpack.c.l.b16 %v9039
  %v9102 = vunpack.c.h.b16 %v9039
  %v9103 = vunpack.c.l.b16 %v9040
  %v9104 = vunpack.c.h.b16 %v9040
  %v9105 = vunpack.c.l.b16 %v9041
  %v9106 = vunpack.c.h.b16 %v9041
  %v9107 = vunpack.c.l.b16 %v9042
  %v9108 = vunpack.c.l.b16 %v9043
  %v9109 = vunpack.c.h.b16 %v9043
  %v9110 = vunpack.c.l.b16 %v9044
  %v9111 = vunpack.c.h.b16 %v9044
  %v9112 = vunpack.c.l.b16 %v9045
  %v9113 = vunpack.c.h.b16 %v9045
  %v9114 = vunpack.c.l.b16 %v9046
  %v9115 = vunpack.c.l.b16 %v9047
  %v9116 = vunpack.c.h.b16 %v9047
  %v9117 = vunpack.c.l.b16 %v9048
  %v9118 = vunpack.c.h.b16 %v9048
  %v9119 = vunpack.c.l.b16 %v9049
  %v9120 = vunpack.c.h.b16 %v9049
  %v9121 = vunpack.c.l.b16 %v9050
  %v9122 = vunpack.c.l.b16 %v9051
  %v9123 = vunpack.c.h.b16 %v9051
  %v9124 = vunpack.c.l.b16 %v9052
  %v9125 = vunpack.c.h.b16 %v9052
  %v9126 = vunpack.c.l.b16 %v9053
  %v9127 = vunpack.c.h.b16 %v9053
  %v9128 = vunpack.c.l.b16 %v9054
  %v9129 = vunpack.c.l.b16 %v9055
  %v9130 = vunpack.c.h.b16 %v9055
  %v9131 = vunpack.c.l.b16 %v9056
  %v9132 = vunpack.c.h.b16 %v9056
  %v9133 = vunpack.c.l.b16 %v9057
  %v9134 = vunpack.c.h.b16 %v9057
  %v9135 = vunpack.c.l.b16 %v9058
  %v9136 = vpack.c.b16 %v9087, %v9087
  %v9137 = vpack.c.b16 %v9088, %v9088
  %v9138 = vpack.c.b16 %v9089, %v9089
  %v9139 = vpack.c.b16 %v9090, %v9090
  %v9140 = vpack.c.b16 %v9091, %v9091
  %v9141 = vpack.c.b16 %v9092, %v9092
  %v9142 = vpack.c.b16 %v9093, %v9093
  %v9143 = vpack.c.b16 %v9094, %v9094
  %v9144 = vpack.c.b16 %v9095, %v9095
  %v9145 = vpack.c.b16 %v9096, %v9096
  %v9146 = vpack.c.b16 %v9097, %v9097
  %v9147 = vpack.c.b16 %v9098, %v9098
  %v9148 = vpack.c.b16 %v9099, %v9099
  %v9149 = vpack.c.b16 %v9100, %v9100
  %v9150 = vpack.c.b16 %v9101, %v9101
  %v9151 = vpack.c.b16 %v9102, %v9102
  %v9152 = vpack.c.b16 %v9103, %v9103
  %v9153 = vpack.c.b16 %v9104, %v9104
  %v9154 = vpack.c.b16 %v9105, %v9105
  %v9155 = vpack.c.b16 %v9106, %v9106
  %v9156 = vpack.c.b16 %v9107, %v9107
  %v9157 = vpack.c.b16 %v9108, %v9108
  %v9158 = vpack.c.b16 %v9109, %v9109
  %v9159 = vpack.c.b16 %v9110, %v9110
  %v9160 = vpack.c.b16 %v9111, %v9111
  %v9161 = vpack.c.b16 %v9112, %v9112
  %v9162 = vpack.c.b16 %v9113, %v9113
  %v9163 = vpack.c.b16 %v9114, %v9114
  %v9164 = vpack.c.b16 %v9115, %v9115
  %v9165 = vpack.c.b16 %v9116, %v9116
  %v9166 = vpack.c.b16 %v9117, %v9117
  %v9167 = vpack.c.b16 %v9118, %v9118
  %v9168 = vpack.c.b16 %v9119, %v9119
  %v9169 = vpack.c.b16 %v9120, %v9120
  %v9170 = vpack.c.b16 %v9121, %v9121
  %v9171 = vpack.c.b16 %v9122, %v9122
  %v9172 = vpack.c.b16 %v9123, %v9123
  %v9173 = vpack.c.b16 %v9124, %v9124
  %v9174 = vpack.c.b16 %v9125, %v9125
  %v9175 = vpack.c.b16 %v9126, %v9126
  %v9176 = vpack.c.b16 %v9127, %v9127
  %v9177 = vpack.c.b16 %v9128, %v9128
  %v9178 = vpack.c.b16 %v9129, %v9129
  %v9179 = vpack.c.b16 %v9130, %v9130
  %v9180 = vpack.c.b16 %v9131, %v9131
  %v9181 = vpack.c.b16 %v9132, %v9132
  %v9182 = vpack.c.b16 %v9133, %v9133
  %v9183 = vpack.c.b16 %v9134, %v9134
  %v9184 = vpack.c.b16 %v9135, %v9135
  %v9234 = vld [vmem:[%s4] sm:$0xf]
  %v9235 = vld [vmem:[%s4 + $0x4] sm:$0xf]
  %v9236 = vld [vmem:[%s4 + $0x8] sm:$0xf]
  %v9237 = vld [vmem:[%s4 + $0xc] sm:$0xf]
  %v9238 = vld [vmem:[%s4 + $0x10] sm:$0xf]
  %v9239 = vld [vmem:[%s4 + $0x14] sm:$0xf]
  %v9240 = vld [vmem:[%s4 + $0x18] sm:$0xf]
  %v9241 = vld [vmem:[%s4 + $0x1c] sm:$0xf]
  %v9242 = vld [vmem:[%s4 + $0x20] sm:$0xf]
  %v9243 = vld [vmem:[%s4 + $0x24] sm:$0xf]
  %v9244 = vld [vmem:[%s4 + $0x28] sm:$0xf]
  %v9245 = vld [vmem:[%s4 + $0x2c] sm:$0xf]
  %v9246 = vld [vmem:[%s4 + $0x30] sm:$0xf]
  %v9247 = vld [vmem:[%s4 + $0x34] sm:$0xf]
  %v9248 = vld [vmem:[%s4 + $0x38] sm:$0xf]
  %v9249 = vld [vmem:[%s4 + $0x3c] sm:$0xf]
  %v9250 = vld [vmem:[%s4 + $0x40] sm:$0xf]
  %v9251 = vld [vmem:[%s4 + $0x44] sm:$0xf]
  %v9252 = vld [vmem:[%s4 + $0x48] sm:$0xf]
  %v9253 = vld [vmem:[%s4 + $0x4c] sm:$0xf]
  %v9254 = vld [vmem:[%s4 + $0x50] sm:$0xf]
  %v9255 = vld [vmem:[%s4 + $0x54] sm:$0xf]
  %v9256 = vld [vmem:[%s4 + $0x58] sm:$0xf]
  %v9257 = vld [vmem:[%s4 + $0x5c] sm:$0xf]
  %v9258 = vld [vmem:[%s4 + $0x60] sm:$0xf]
  %v9259 = vld [vmem:[%s4 + $0x64] sm:$0xf]
  %v9260 = vld [vmem:[%s4 + $0x68] sm:$0xf]
  %v9261 = vld [vmem:[%s4 + $0x6c] sm:$0xf]
  %v9262 = vld [vmem:[%s4 + $0x70] sm:$0xf]
  %v9263 = vld [vmem:[%s4 + $0x74] sm:$0xf]
  %v9264 = vld [vmem:[%s4 + $0x78] sm:$0xf]
  %v9265 = vld [vmem:[%s4 + $0x7c] sm:$0xf]
  %v9266 = vld [vmem:[%s4 + $0x80] sm:$0xf]
  %v9267 = vld [vmem:[%s4 + $0x84] sm:$0xf]
  %v9268 = vld [vmem:[%s4 + $0x88] sm:$0xf]
  %v9269 = vld [vmem:[%s4 + $0x8c] sm:$0xf]
  %v9270 = vld [vmem:[%s4 + $0x90] sm:$0xf]
  %v9271 = vld [vmem:[%s4 + $0x94] sm:$0xf]
  %v9272 = vld [vmem:[%s4 + $0x98] sm:$0xf]
  %v9273 = vld [vmem:[%s4 + $0x9c] sm:$0xf]
  %v9274 = vld [vmem:[%s4 + $0xa0] sm:$0xf]
  %v9275 = vld [vmem:[%s4 + $0xa4] sm:$0xf]
  %v9276 = vld [vmem:[%s4 + $0xa8] sm:$0xf]
  %v9277 = vld [vmem:[%s4 + $0xac] sm:$0xf]
  %v9278 = vld [vmem:[%s4 + $0xb0] sm:$0xf]
  %v9279 = vld [vmem:[%s4 + $0xb4] sm:$0xf]
  %v9280 = vld [vmem:[%s4 + $0xb8] sm:$0xf]
  %v9281 = vld [vmem:[%s4 + $0xbc] sm:$0xf]
  %v9282 = vld [vmem:[%s4 + $0xc0] sm:$0xf]
  %v9283 = vld [vmem:[%s4 + $0xc4] sm:$0xf]
  %v9284 = vld [vmem:[%s4 + $0xc8] sm:$0xf]
  %v9285 = vld [vmem:[%s4 + $0xcc] sm:$0xf]
  %v9286 = vld [vmem:[%s4 + $0xd0] sm:$0xf]
  %v9287 = vld [vmem:[%s4 + $0xd4] sm:$0xf]
  %v9288 = vld [vmem:[%s4 + $0xd8] sm:$0xf]
  %v9289 = vld [vmem:[%s4 + $0xdc] sm:$0xf]
  %v9290 = vld [vmem:[%s4 + $0xe0] sm:$0xf]
  %v9291 = vld [vmem:[%s4 + $0xe4] sm:$0xf]
  %v9292 = vld [vmem:[%s4 + $0xe8] sm:$0xf]
  %v9293 = vld [vmem:[%s4 + $0xec] sm:$0xf]
  %v9294 = vld [vmem:[%s4 + $0xf0] sm:$0xf]
  %v9295 = vld [vmem:[%s4 + $0xf4] sm:$0xf]
  %v9296 = vld [vmem:[%s4 + $0xf8] sm:$0xf]
  %v9297 = vld [vmem:[%s4 + $0xfc] sm:$0xf]
  %v9298 = vld [vmem:[%s4 + $0x100] sm:$0xf]
  %v9299 = vld [vmem:[%s4 + $0x104] sm:$0xf]
  %v9300 = vld [vmem:[%s4 + $0x108] sm:$0xf]
  %v9301 = vld [vmem:[%s4 + $0x10c] sm:$0xf]
  %v9302 = vld [vmem:[%s4 + $0x110] sm:$0xf]
  %v9303 = vld [vmem:[%s4 + $0x114] sm:$0xf]
  %v9304 = vld [vmem:[%s4 + $0x118] sm:$0xf]
  %v9305 = vld [vmem:[%s4 + $0x11c] sm:$0xf]
  %v9306 = vld [vmem:[%s4 + $0x120] sm:$0xf]
  %v9307 = vld [vmem:[%s4 + $0x124] sm:$0xf]
  %v9308 = vld [vmem:[%s4 + $0x128] sm:$0xf]
  %v9309 = vld [vmem:[%s4 + $0x12c] sm:$0xf]
  %v9310 = vld [vmem:[%s4 + $0x130] sm:$0xf]
  %v9311 = vld [vmem:[%s4 + $0x134] sm:$0xf]
  %v9312 = vld [vmem:[%s4 + $0x138] sm:$0xf]
  %v9313 = vld [vmem:[%s4 + $0x13c] sm:$0xf]
  %v9314 = vld [vmem:[%s4 + $0x140] sm:$0xf]
  %v9315 = vld [vmem:[%s4 + $0x144] sm:$0xf]
  %v9316 = vld [vmem:[%s4 + $0x148] sm:$0xf]
  %v9317 = vld [vmem:[%s4 + $0x14c] sm:$0xf]
  %v9318 = vld [vmem:[%s4 + $0x150] sm:$0xf]
  %v9319 = vld [vmem:[%s4 + $0x154] sm:$0xf]
  %v9320 = vld [vmem:[%s4 + $0x158] sm:$0xf]
  %v9321 = vld [vmem:[%s4 + $0x15c] sm:$0xf]
  %v9322 = vld [vmem:[%s4 + $0x160] sm:$0xf]
  %v9323 = vld [vmem:[%s4 + $0x164] sm:$0xf]
  %v9324 = vld [vmem:[%s4 + $0x168] sm:$0xf]
  %v9325 = vld [vmem:[%s4 + $0x16c] sm:$0xf]
  %v9326 = vld [vmem:[%s4 + $0x170] sm:$0xf]
  %v9327 = vld [vmem:[%s4 + $0x174] sm:$0xf]
  %v9328 = vld [vmem:[%s4 + $0x178] sm:$0xf]
  %v9329 = vld [vmem:[%s4 + $0x17c] sm:$0xf]
  %v9330 = vld [vmem:[%s4 + $0x180] sm:$0xf]
  %v9331 = vld [vmem:[%s4 + $0x184] sm:$0xf]
  %v9332 = vld [vmem:[%s4 + $0x188] sm:$0xf]
  %v9333 = vld [vmem:[%s4 + $0x18c] sm:$0xf]
  %v9334 = vld [vmem:[%s4 + $0x190] sm:$0xf]
  %v9335 = vld [vmem:[%s4 + $0x194] sm:$0xf]
  %v9336 = vld [vmem:[%s4 + $0x198] sm:$0xf]
  %v9337 = vld [vmem:[%s4 + $0x19c] sm:$0xf]
  %v9338 = vld [vmem:[%s4 + $0x1a0] sm:$0xf]
  %v9339 = vld [vmem:[%s4 + $0x1a4] sm:$0xf]
  %v9340 = vld [vmem:[%s4 + $0x1a8] sm:$0xf]
  %v9341 = vld [vmem:[%s4 + $0x1ac] sm:$0xf]
  %v9342 = vld [vmem:[%s4 + $0x1b0] sm:$0xf]
  %v9343 = vld [vmem:[%s4 + $0x1b4] sm:$0xf]
  %v9344 = vld [vmem:[%s4 + $0x1b8] sm:$0xf]
  %v9345 = vld [vmem:[%s4 + $0x1bc] sm:$0xf]
  %v9346 = vld [vmem:[%s4 + $0x1c0] sm:$0xf]
  %v9347 = vld [vmem:[%s4 + $0x1c4] sm:$0xf]
  %v9348 = vld [vmem:[%s4 + $0x1c8] sm:$0xf]
  %v9349 = vld [vmem:[%s4 + $0x1cc] sm:$0xf]
  %v9350 = vld [vmem:[%s4 + $0x1d0] sm:$0xf]
  %v9351 = vld [vmem:[%s4 + $0x1d4] sm:$0xf]
  %v9352 = vld [vmem:[%s4 + $0x1d8] sm:$0xf]
  %v9353 = vld [vmem:[%s4 + $0x1dc] sm:$0xf]
  %v9354 = vld [vmem:[%s4 + $0x1e0] sm:$0xf]
  %v9355 = vld [vmem:[%s4 + $0x1e4] sm:$0xf]
  %v9356 = vld [vmem:[%s4 + $0x1e8] sm:$0xf]
  %v9357 = vld [vmem:[%s4 + $0x1ec] sm:$0xf]
  %v9358 = vld [vmem:[%s4 + $0x1f0] sm:$0xf]
  %v9359 = vld [vmem:[%s4 + $0x1f4] sm:$0xf]
  %v9360 = vld [vmem:[%s4 + $0x1f8] sm:$0xf]
  %v9361 = vld [vmem:[%s4 + $0x1fc] sm:$0xf]
  %v9362 = vld [vmem:[%s4 + $0x200] sm:$0xf]
  %v9363 = vld [vmem:[%s4 + $0x204] sm:$0xf]
  %v9364 = vld [vmem:[%s4 + $0x208] sm:$0xf]
  %v9365 = vld [vmem:[%s4 + $0x20c] sm:$0xf]
  %v9366 = vld [vmem:[%s4 + $0x210] sm:$0xf]
  %v9367 = vld [vmem:[%s4 + $0x214] sm:$0xf]
  %v9368 = vld [vmem:[%s4 + $0x218] sm:$0xf]
  %v9369 = vld [vmem:[%s4 + $0x21c] sm:$0xf]
  %v9370 = vld [vmem:[%s4 + $0x220] sm:$0xf]
  %v9371 = vld [vmem:[%s4 + $0x224] sm:$0xf]
  %v9372 = vld [vmem:[%s4 + $0x228] sm:$0xf]
  %v9373 = vld [vmem:[%s4 + $0x22c] sm:$0xf]
  %v9374 = vld [vmem:[%s4 + $0x230] sm:$0xf]
  %v9375 = vld [vmem:[%s4 + $0x234] sm:$0xf]
  %v9376 = vld [vmem:[%s4 + $0x238] sm:$0xf]
  %v9377 = vld [vmem:[%s4 + $0x23c] sm:$0xf]
  %v9378 = vld [vmem:[%s4 + $0x240] sm:$0xf]
  %v9379 = vld [vmem:[%s4 + $0x244] sm:$0xf]
  %v9380 = vld [vmem:[%s4 + $0x248] sm:$0xf]
  %v9381 = vld [vmem:[%s4 + $0x24c] sm:$0xf]
  %v9382 = vld [vmem:[%s4 + $0x250] sm:$0xf]
  %v9383 = vld [vmem:[%s4 + $0x254] sm:$0xf]
  %v9384 = vld [vmem:[%s4 + $0x258] sm:$0xf]
  %v9385 = vld [vmem:[%s4 + $0x25c] sm:$0xf]
  %v9386 = vld [vmem:[%s4 + $0x260] sm:$0xf]
  %v9387 = vld [vmem:[%s4 + $0x264] sm:$0xf]
  %v9388 = vld [vmem:[%s4 + $0x268] sm:$0xf]
  %v9389 = vld [vmem:[%s4 + $0x26c] sm:$0xf]
  %v9390 = vld [vmem:[%s4 + $0x270] sm:$0xf]
  %v9391 = vld [vmem:[%s4 + $0x274] sm:$0xf]
  %v9392 = vld [vmem:[%s4 + $0x278] sm:$0xf]
  %v9393 = vld [vmem:[%s4 + $0x27c] sm:$0xf]
  %v9394 = vld [vmem:[%s4 + $0x280] sm:$0xf]
  %v9395 = vld [vmem:[%s4 + $0x284] sm:$0xf]
  %v9396 = vld [vmem:[%s4 + $0x288] sm:$0xf]
  %v9397 = vld [vmem:[%s4 + $0x28c] sm:$0xf]
  %v9398 = vld [vmem:[%s4 + $0x290] sm:$0xf]
  %v9399 = vld [vmem:[%s4 + $0x294] sm:$0xf]
  %v9400 = vld [vmem:[%s4 + $0x298] sm:$0xf]
  %v9401 = vld [vmem:[%s4 + $0x29c] sm:$0xf]
  %v9402 = vld [vmem:[%s4 + $0x2a0] sm:$0xf]
  %v9403 = vld [vmem:[%s4 + $0x2a4] sm:$0xf]
  %v9404 = vld [vmem:[%s4 + $0x2a8] sm:$0xf]
  %v9405 = vld [vmem:[%s4 + $0x2ac] sm:$0xf]
  %v9406 = vld [vmem:[%s4 + $0x2b0] sm:$0xf]
  %v9407 = vld [vmem:[%s4 + $0x2b4] sm:$0xf]
  %v9408 = vld [vmem:[%s4 + $0x2b8] sm:$0xf]
  %v9409 = vld [vmem:[%s4 + $0x2bc] sm:$0xf]
  %v9410 = vld [vmem:[%s4 + $0x2c0] sm:$0xf]
  %v9411 = vld [vmem:[%s4 + $0x2c4] sm:$0xf]
  %v9412 = vld [vmem:[%s4 + $0x2c8] sm:$0xf]
  %v9413 = vld [vmem:[%s4 + $0x2cc] sm:$0xf]
  %v9414 = vld [vmem:[%s4 + $0x2d0] sm:$0xf]
  %v9415 = vld [vmem:[%s4 + $0x2d4] sm:$0xf]
  %v9416 = vld [vmem:[%s4 + $0x2d8] sm:$0xf]
  %v9417 = vld [vmem:[%s4 + $0x2dc] sm:$0xf]
  %v9418 = vld [vmem:[%s4 + $0x2e0] sm:$0xf]
  %v9419 = vld [vmem:[%s4 + $0x2e4] sm:$0xf]
  %v9420 = vld [vmem:[%s4 + $0x2e8] sm:$0xf]
  %v9421 = vld [vmem:[%s4 + $0x2ec] sm:$0xf]
  %v9422 = vld [vmem:[%s4 + $0x2f0] sm:$0xf]
  %v9423 = vld [vmem:[%s4 + $0x2f4] sm:$0xf]
  %v9424 = vld [vmem:[%s4 + $0x2f8] sm:$0xf]
  %v9425 = vld [vmem:[%s4 + $0x2fc] sm:$0xf]
  %v9426 = vld [vmem:[%s4 + $0x300] sm:$0xf]
  %v9427 = vld [vmem:[%s4 + $0x304] sm:$0xf]
  %v9428 = vld [vmem:[%s4 + $0x308] sm:$0xf]
  %v9429 = vld [vmem:[%s4 + $0x30c] sm:$0xf]
  %v9430 = vld [vmem:[%s4 + $0x310] sm:$0xf]
  %v9431 = vld [vmem:[%s4 + $0x314] sm:$0xf]
  %v9432 = vld [vmem:[%s4 + $0x318] sm:$0xf]
  %v9433 = vld [vmem:[%s4 + $0x31c] sm:$0xf]
  %v9434 = vld [vmem:[%s4 + $0x320] sm:$0xf]
  %v9435 = vld [vmem:[%s4 + $0x324] sm:$0xf]
  %v9436 = vld [vmem:[%s4 + $0x328] sm:$0xf]
  %v9437 = vld [vmem:[%s4 + $0x32c] sm:$0xf]
  %v9438 = vld [vmem:[%s4 + $0x330] sm:$0xf]
  %v9439 = vld [vmem:[%s4 + $0x334] sm:$0xf]
  %v9440 = vld [vmem:[%s4 + $0x338] sm:$0xf]
  %v9441 = vld [vmem:[%s4 + $0x33c] sm:$0xf]
  %v9442 = vld [vmem:[%s4 + $0x340] sm:$0xf]
  %v9443 = vld [vmem:[%s4 + $0x344] sm:$0xf]
  %v9444 = vld [vmem:[%s4 + $0x348] sm:$0xf]
  %v9445 = vld [vmem:[%s4 + $0x34c] sm:$0xf]
  %v9446 = vld [vmem:[%s4 + $0x350] sm:$0xf]
  %v9447 = vld [vmem:[%s4 + $0x354] sm:$0xf]
  %v9448 = vld [vmem:[%s4 + $0x358] sm:$0xf]
  %v9449 = vld [vmem:[%s4 + $0x35c] sm:$0xf]
  %v9450 = vld [vmem:[%s4 + $0x360] sm:$0xf]
  %v9451 = vld [vmem:[%s4 + $0x364] sm:$0xf]
  %v9452 = vld [vmem:[%s4 + $0x368] sm:$0xf]
  %v9453 = vld [vmem:[%s4 + $0x36c] sm:$0xf]
  %v9454 = vld [vmem:[%s4 + $0x370] sm:$0xf]
  %v9455 = vld [vmem:[%s4 + $0x374] sm:$0xf]
  %v9456 = vld [vmem:[%s4 + $0x378] sm:$0xf]
  %v9457 = vld [vmem:[%s4 + $0x37c] sm:$0xf]
  %v9458 = vld [vmem:[%s4 + $0x380] sm:$0xf]
  %v9459 = vld [vmem:[%s4 + $0x384] sm:$0xf]
  %v9460 = vld [vmem:[%s4 + $0x388] sm:$0xf]
  %v9461 = vld [vmem:[%s4 + $0x38c] sm:$0xf]
  %v9462 = vld [vmem:[%s4 + $0x390] sm:$0xf]
  %v9463 = vld [vmem:[%s4 + $0x394] sm:$0xf]
  %v9464 = vld [vmem:[%s4 + $0x398] sm:$0xf]
  %v9465 = vld [vmem:[%s4 + $0x39c] sm:$0xf]
  %v9466 = vld [vmem:[%s4 + $0x3a0] sm:$0xf]
  %v9467 = vld [vmem:[%s4 + $0x3a4] sm:$0xf]
  %v9468 = vld [vmem:[%s4 + $0x3a8] sm:$0xf]
  %v9469 = vld [vmem:[%s4 + $0x3ac] sm:$0xf]
  %v9470 = vld [vmem:[%s4 + $0x3b0] sm:$0xf]
  %v9471 = vld [vmem:[%s4 + $0x3b4] sm:$0xf]
  %v9472 = vld [vmem:[%s4 + $0x3b8] sm:$0xf]
  %v9473 = vld [vmem:[%s4 + $0x3bc] sm:$0xf]
  %v9474 = vld [vmem:[%s4 + $0x3c0] sm:$0xf]
  %v9475 = vld [vmem:[%s4 + $0x3c4] sm:$0xf]
  %v9476 = vld [vmem:[%s4 + $0x3c8] sm:$0xf]
  %v9477 = vld [vmem:[%s4 + $0x3cc] sm:$0xf]
  %v9478 = vld [vmem:[%s4 + $0x3d0] sm:$0xf]
  %v9479 = vld [vmem:[%s4 + $0x3d4] sm:$0xf]
  %v9480 = vld [vmem:[%s4 + $0x3d8] sm:$0xf]
  %v9481 = vld [vmem:[%s4 + $0x3dc] sm:$0xf]
  %v9482 = vld [vmem:[%s4 + $0x3e0] sm:$0xf]
  %v9483 = vld [vmem:[%s4 + $0x3e4] sm:$0xf]
  %v9484 = vld [vmem:[%s4 + $0x3e8] sm:$0xf]
  %v9485 = vld [vmem:[%s4 + $0x3ec] sm:$0xf]
  %v9486 = vld [vmem:[%s4 + $0x3f0] sm:$0xf]
  %v9487 = vld [vmem:[%s4 + $0x3f4] sm:$0xf]
  %v9488 = vld [vmem:[%s4 + $0x3f8] sm:$0xf]
  %v9489 = vld [vmem:[%s4 + $0x3fc] sm:$0xf]
  %v9490 = vld [vmem:[%s4 + $0x400] sm:$0xf]
  %v9491 = vld [vmem:[%s4 + $0x404] sm:$0xf]
  %v9492 = vld [vmem:[%s4 + $0x408] sm:$0xf]
  %v9493 = vld [vmem:[%s4 + $0x40c] sm:$0xf]
  %v9494 = vld [vmem:[%s4 + $0x410] sm:$0xf]
  %v9495 = vld [vmem:[%s4 + $0x414] sm:$0xf]
  %v9496 = vld [vmem:[%s4 + $0x418] sm:$0xf]
  %v9497 = vld [vmem:[%s4 + $0x41c] sm:$0xf]
  %v9498 = vld [vmem:[%s4 + $0x420] sm:$0xf]
  %v9499 = vld [vmem:[%s4 + $0x424] sm:$0xf]
  %v9500 = vld [vmem:[%s4 + $0x428] sm:$0xf]
  %v9501 = vld [vmem:[%s4 + $0x42c] sm:$0xf]
  %v9502 = vld [vmem:[%s4 + $0x430] sm:$0xf]
  %v9503 = vld [vmem:[%s4 + $0x434] sm:$0xf]
  %v9504 = vld [vmem:[%s4 + $0x438] sm:$0xf]
  %v9505 = vld [vmem:[%s4 + $0x43c] sm:$0xf]
  %v9506 = vld [vmem:[%s4 + $0x440] sm:$0xf]
  %v9507 = vld [vmem:[%s4 + $0x444] sm:$0xf]
  %v9508 = vld [vmem:[%s4 + $0x448] sm:$0xf]
  %v9509 = vld [vmem:[%s4 + $0x44c] sm:$0xf]
  %v9510 = vld [vmem:[%s4 + $0x450] sm:$0xf]
  %v9511 = vld [vmem:[%s4 + $0x454] sm:$0xf]
  %v9512 = vld [vmem:[%s4 + $0x458] sm:$0xf]
  %v9513 = vld [vmem:[%s4 + $0x45c] sm:$0xf]
  %v9514 = vld [vmem:[%s4 + $0x460] sm:$0xf]
  %v9515 = vld [vmem:[%s4 + $0x464] sm:$0xf]
  %v9516 = vld [vmem:[%s4 + $0x468] sm:$0xf]
  %v9517 = vld [vmem:[%s4 + $0x46c] sm:$0xf]
  %v9518 = vld [vmem:[%s4 + $0x470] sm:$0xf]
  %v9519 = vld [vmem:[%s4 + $0x474] sm:$0xf]
  %v9520 = vld [vmem:[%s4 + $0x478] sm:$0xf]
  %v9521 = vld [vmem:[%s4 + $0x47c] sm:$0xf]
  %v9522 = vld [vmem:[%s4 + $0x480] sm:$0xf]
  %v9523 = vld [vmem:[%s4 + $0x484] sm:$0xf]
  %v9524 = vld [vmem:[%s4 + $0x488] sm:$0xf]
  %v9525 = vld [vmem:[%s4 + $0x48c] sm:$0xf]
  %v9526 = vld [vmem:[%s4 + $0x490] sm:$0xf]
  %v9527 = vld [vmem:[%s4 + $0x494] sm:$0xf]
  %v9528 = vld [vmem:[%s4 + $0x498] sm:$0xf]
  %v9529 = vld [vmem:[%s4 + $0x49c] sm:$0xf]
  %v9530 = vld [vmem:[%s4 + $0x4a0] sm:$0xf]
  %v9531 = vld [vmem:[%s4 + $0x4a4] sm:$0xf]
  %v9532 = vld [vmem:[%s4 + $0x4a8] sm:$0xf]
  %v9533 = vld [vmem:[%s4 + $0x4ac] sm:$0xf]
  %v9534 = vld [vmem:[%s4 + $0x4b0] sm:$0xf]
  %v9535 = vld [vmem:[%s4 + $0x4b4] sm:$0xf]
  %v9536 = vld [vmem:[%s4 + $0x4b8] sm:$0xf]
  %v9537 = vld [vmem:[%s4 + $0x4bc] sm:$0xf]
  %v9538 = vld [vmem:[%s4 + $0x4c0] sm:$0xf]
  %v9539 = vld [vmem:[%s4 + $0x4c4] sm:$0xf]
  %v9540 = vld [vmem:[%s4 + $0x4c8] sm:$0xf]
  %v9541 = vld [vmem:[%s4 + $0x4cc] sm:$0xf]
  %v9542 = vld [vmem:[%s4 + $0x4d0] sm:$0xf]
  %v9543 = vld [vmem:[%s4 + $0x4d4] sm:$0xf]
  %v9544 = vld [vmem:[%s4 + $0x4d8] sm:$0xf]
  %v9545 = vld [vmem:[%s4 + $0x4dc] sm:$0xf]
  %v9546 = vld [vmem:[%s4 + $0x4e0] sm:$0xf]
  %v9547 = vld [vmem:[%s4 + $0x4e4] sm:$0xf]
  %v9548 = vld [vmem:[%s4 + $0x4e8] sm:$0xf]
  %v9549 = vld [vmem:[%s4 + $0x4ec] sm:$0xf]
  %v9550 = vld [vmem:[%s4 + $0x4f0] sm:$0xf]
  %v9551 = vld [vmem:[%s4 + $0x4f4] sm:$0xf]
  %v9552 = vld [vmem:[%s4 + $0x4f8] sm:$0xf]
  %v9553 = vld [vmem:[%s4 + $0x4fc] sm:$0xf]
  %v9554 = vld [vmem:[%s4 + $0x500] sm:$0xf]
  %v9555 = vld [vmem:[%s4 + $0x504] sm:$0xf]
  %v9556 = vld [vmem:[%s4 + $0x508] sm:$0xf]
  %v9557 = vld [vmem:[%s4 + $0x50c] sm:$0xf]
  %v9558 = vld [vmem:[%s4 + $0x510] sm:$0xf]
  %v9559 = vld [vmem:[%s4 + $0x514] sm:$0xf]
  %v9560 = vld [vmem:[%s4 + $0x518] sm:$0xf]
  %v9561 = vld [vmem:[%s4 + $0x51c] sm:$0xf]
  %v9562 = vld [vmem:[%s4 + $0x520] sm:$0xf]
  %v9563 = vld [vmem:[%s4 + $0x524] sm:$0xf]
  %v9564 = vld [vmem:[%s4 + $0x528] sm:$0xf]
  %v9565 = vld [vmem:[%s4 + $0x52c] sm:$0xf]
  %v9566 = vld [vmem:[%s4 + $0x530] sm:$0xf]
  %v9567 = vld [vmem:[%s4 + $0x534] sm:$0xf]
  %v9568 = vld [vmem:[%s4 + $0x538] sm:$0xf]
  %v9569 = vld [vmem:[%s4 + $0x53c] sm:$0xf]
  %v9570 = vld [vmem:[%s4 + $0x540] sm:$0xf]
  %v9571 = vld [vmem:[%s4 + $0x544] sm:$0xf]
  %v9572 = vld [vmem:[%s4 + $0x548] sm:$0xf]
  %v9573 = vld [vmem:[%s4 + $0x54c] sm:$0xf]
  %v9574 = vld [vmem:[%s4 + $0x550] sm:$0xf]
  %v9575 = vld [vmem:[%s4 + $0x554] sm:$0xf]
  %v9576 = vld [vmem:[%s4 + $0x558] sm:$0xf]
  %v9577 = vld [vmem:[%s4 + $0x55c] sm:$0xf]
  %v9578 = vld [vmem:[%s4 + $0x560] sm:$0xf]
  %v9579 = vld [vmem:[%s4 + $0x564] sm:$0xf]
  %v9580 = vld [vmem:[%s4 + $0x568] sm:$0xf]
  %v9581 = vld [vmem:[%s4 + $0x56c] sm:$0xf]
  %v9582 = vld [vmem:[%s4 + $0x570] sm:$0xf]
  %v9583 = vld [vmem:[%s4 + $0x574] sm:$0xf]
  %v9584 = vld [vmem:[%s4 + $0x578] sm:$0xf]
  %v9585 = vld [vmem:[%s4 + $0x57c] sm:$0xf]
  %v9586 = vld [vmem:[%s4 + $0x580] sm:$0xf]
  %v9587 = vld [vmem:[%s4 + $0x584] sm:$0xf]
  %v9588 = vld [vmem:[%s4 + $0x588] sm:$0xf]
  %v9589 = vld [vmem:[%s4 + $0x58c] sm:$0xf]
  %v9590 = vld [vmem:[%s4 + $0x590] sm:$0xf]
  %v9591 = vld [vmem:[%s4 + $0x594] sm:$0xf]
  %v9592 = vld [vmem:[%s4 + $0x598] sm:$0xf]
  %v9593 = vld [vmem:[%s4 + $0x59c] sm:$0xf]
  %v9594 = vld [vmem:[%s4 + $0x5a0] sm:$0xf]
  %v9595 = vld [vmem:[%s4 + $0x5a4] sm:$0xf]
  %v9596 = vld [vmem:[%s4 + $0x5a8] sm:$0xf]
  %v9597 = vld [vmem:[%s4 + $0x5ac] sm:$0xf]
  %v9598 = vld [vmem:[%s4 + $0x5b0] sm:$0xf]
  %v9599 = vld [vmem:[%s4 + $0x5b4] sm:$0xf]
  %v9600 = vld [vmem:[%s4 + $0x5b8] sm:$0xf]
  %v9601 = vld [vmem:[%s4 + $0x5bc] sm:$0xf]
  %v9602 = vld [vmem:[%s4 + $0x5c0] sm:$0xf]
  %v9603 = vld [vmem:[%s4 + $0x5c4] sm:$0xf]
  %v9604 = vld [vmem:[%s4 + $0x5c8] sm:$0xf]
  %v9605 = vld [vmem:[%s4 + $0x5cc] sm:$0xf]
  %v9606 = vld [vmem:[%s4 + $0x5d0] sm:$0xf]
  %v9607 = vld [vmem:[%s4 + $0x5d4] sm:$0xf]
  %v9608 = vld [vmem:[%s4 + $0x5d8] sm:$0xf]
  %v9609 = vld [vmem:[%s4 + $0x5dc] sm:$0xf]
  %v9610 = vld [vmem:[%s4 + $0x5e0] sm:$0xf]
  %v9611 = vld [vmem:[%s4 + $0x5e4] sm:$0xf]
  %v9612 = vld [vmem:[%s4 + $0x5e8] sm:$0xf]
  %v9613 = vld [vmem:[%s4 + $0x5ec] sm:$0xf]
  %v9614 = vld [vmem:[%s4 + $0x5f0] sm:$0xf]
  %v9615 = vld [vmem:[%s4 + $0x5f4] sm:$0xf]
  %v9616 = vld [vmem:[%s4 + $0x5f8] sm:$0xf]
  %v9617 = vld [vmem:[%s4 + $0x5fc] sm:$0xf]
  %v9618 = vld [vmem:[%s4 + $0x600] sm:$0xf]
  %v9619 = vld [vmem:[%s4 + $0x604] sm:$0xf]
  %v9620 = vld [vmem:[%s4 + $0x608] sm:$0xf]
  %v9621 = vld [vmem:[%s4 + $0x60c] sm:$0xf]
  %v9622 = vld [vmem:[%s4 + $0x610] sm:$0xf]
  %v9623 = vld [vmem:[%s4 + $0x614] sm:$0xf]
  %v9624 = vld [vmem:[%s4 + $0x618] sm:$0xf]
  %v9625 = vld [vmem:[%s4 + $0x61c] sm:$0xf]
  %v9626 = vld [vmem:[%s4 + $0x620] sm:$0xf]
  %v9627 = vld [vmem:[%s4 + $0x624] sm:$0xf]
  %v9628 = vld [vmem:[%s4 + $0x628] sm:$0xf]
  %v9629 = vld [vmem:[%s4 + $0x62c] sm:$0xf]
  %v9630 = vld [vmem:[%s4 + $0x630] sm:$0xf]
  %v9631 = vld [vmem:[%s4 + $0x634] sm:$0xf]
  %v9632 = vld [vmem:[%s4 + $0x638] sm:$0xf]
  %v9633 = vld [vmem:[%s4 + $0x63c] sm:$0xf]
  %v9634 = vld [vmem:[%s4 + $0x640] sm:$0xf]
  %v9635 = vld [vmem:[%s4 + $0x644] sm:$0xf]
  %v9636 = vld [vmem:[%s4 + $0x648] sm:$0xf]
  %v9637 = vld [vmem:[%s4 + $0x64c] sm:$0xf]
  %v9638 = vld [vmem:[%s4 + $0x650] sm:$0xf]
  %v9639 = vld [vmem:[%s4 + $0x654] sm:$0xf]
  %v9640 = vld [vmem:[%s4 + $0x658] sm:$0xf]
  %v9641 = vld [vmem:[%s4 + $0x65c] sm:$0xf]
  %v9642 = vld [vmem:[%s4 + $0x660] sm:$0xf]
  %v9643 = vld [vmem:[%s4 + $0x664] sm:$0xf]
  %v9644 = vld [vmem:[%s4 + $0x668] sm:$0xf]
  %v9645 = vld [vmem:[%s4 + $0x66c] sm:$0xf]
  %v9646 = vld [vmem:[%s4 + $0x670] sm:$0xf]
  %v9647 = vld [vmem:[%s4 + $0x674] sm:$0xf]
  %v9648 = vld [vmem:[%s4 + $0x678] sm:$0xf]
  %v9649 = vld [vmem:[%s4 + $0x67c] sm:$0xf]
  %v9650 = vld [vmem:[%s4 + $0x680] sm:$0xf]
  %v9651 = vld [vmem:[%s4 + $0x684] sm:$0xf]
  %v9652 = vld [vmem:[%s4 + $0x688] sm:$0xf]
  %v9653 = vld [vmem:[%s4 + $0x68c] sm:$0xf]
  %v9654 = vld [vmem:[%s4 + $0x690] sm:$0xf]
  %v9655 = vld [vmem:[%s4 + $0x694] sm:$0xf]
  %v9656 = vld [vmem:[%s4 + $0x698] sm:$0xf]
  %v9657 = vld [vmem:[%s4 + $0x69c] sm:$0xf]
  %v9658 = vld [vmem:[%s4 + $0x6a0] sm:$0xf]
  %v9659 = vld [vmem:[%s4 + $0x6a4] sm:$0xf]
  %v9660 = vld [vmem:[%s4 + $0x6a8] sm:$0xf]
  %v9661 = vld [vmem:[%s4 + $0x6ac] sm:$0xf]
  %v9662 = vld [vmem:[%s4 + $0x6b0] sm:$0xf]
  %v9663 = vld [vmem:[%s4 + $0x6b4] sm:$0xf]
  %v9664 = vld [vmem:[%s4 + $0x6b8] sm:$0xf]
  %v9665 = vld [vmem:[%s4 + $0x6bc] sm:$0xf]
  %v9666 = vld [vmem:[%s4 + $0x6c0] sm:$0xf]
  %v9667 = vld [vmem:[%s4 + $0x6c4] sm:$0xf]
  %v9668 = vld [vmem:[%s4 + $0x6c8] sm:$0xf]
  %v9669 = vld [vmem:[%s4 + $0x6cc] sm:$0xf]
  %v9670 = vld [vmem:[%s4 + $0x6d0] sm:$0xf]
  %v9671 = vld [vmem:[%s4 + $0x6d4] sm:$0xf]
  %v9672 = vld [vmem:[%s4 + $0x6d8] sm:$0xf]
  %v9673 = vld [vmem:[%s4 + $0x6dc] sm:$0xf]
  %v9674 = vld [vmem:[%s4 + $0x6e0] sm:$0xf]
  %v9675 = vld [vmem:[%s4 + $0x6e4] sm:$0xf]
  %v9676 = vld [vmem:[%s4 + $0x6e8] sm:$0xf]
  %v9677 = vld [vmem:[%s4 + $0x6ec] sm:$0xf]
  %v9678 = vld [vmem:[%s4 + $0x6f0] sm:$0xf]
  %v9679 = vld [vmem:[%s4 + $0x6f4] sm:$0xf]
  %v9680 = vld [vmem:[%s4 + $0x6f8] sm:$0xf]
  %v9681 = vld [vmem:[%s4 + $0x6fc] sm:$0xf]
  %v9682 = vld [vmem:[%s4 + $0x700] sm:$0xf]
  %v9683 = vld [vmem:[%s4 + $0x704] sm:$0xf]
  %v9684 = vld [vmem:[%s4 + $0x708] sm:$0xf]
  %v9685 = vld [vmem:[%s4 + $0x70c] sm:$0xf]
  %v9686 = vld [vmem:[%s4 + $0x710] sm:$0xf]
  %v9687 = vld [vmem:[%s4 + $0x714] sm:$0xf]
  %v9688 = vld [vmem:[%s4 + $0x718] sm:$0xf]
  %v9689 = vld [vmem:[%s4 + $0x71c] sm:$0xf]
  %v9690 = vld [vmem:[%s4 + $0x720] sm:$0xf]
  %v9691 = vld [vmem:[%s4 + $0x724] sm:$0xf]
  %v9692 = vld [vmem:[%s4 + $0x728] sm:$0xf]
  %v9693 = vld [vmem:[%s4 + $0x72c] sm:$0xf]
  %v9694 = vld [vmem:[%s4 + $0x730] sm:$0xf]
  %v9695 = vld [vmem:[%s4 + $0x734] sm:$0xf]
  %v9696 = vld [vmem:[%s4 + $0x738] sm:$0xf]
  %v9697 = vld [vmem:[%s4 + $0x73c] sm:$0xf]
  %v9698 = vld [vmem:[%s4 + $0x740] sm:$0xf]
  %v9699 = vld [vmem:[%s4 + $0x744] sm:$0xf]
  %v9700 = vld [vmem:[%s4 + $0x748] sm:$0xf]
  %v9701 = vld [vmem:[%s4 + $0x74c] sm:$0xf]
  %v9702 = vld [vmem:[%s4 + $0x750] sm:$0xf]
  %v9703 = vld [vmem:[%s4 + $0x754] sm:$0xf]
  %v9704 = vld [vmem:[%s4 + $0x758] sm:$0xf]
  %v9705 = vld [vmem:[%s4 + $0x75c] sm:$0xf]
  %v9706 = vld [vmem:[%s4 + $0x760] sm:$0xf]
  %v9707 = vld [vmem:[%s4 + $0x764] sm:$0xf]
  %v9708 = vld [vmem:[%s4 + $0x768] sm:$0xf]
  %v9709 = vld [vmem:[%s4 + $0x76c] sm:$0xf]
  %v9710 = vld [vmem:[%s4 + $0x770] sm:$0xf]
  %v9711 = vld [vmem:[%s4 + $0x774] sm:$0xf]
  %v9712 = vld [vmem:[%s4 + $0x778] sm:$0xf]
  %v9713 = vld [vmem:[%s4 + $0x77c] sm:$0xf]
  %v9714 = vld [vmem:[%s4 + $0x780] sm:$0xf]
  %v9715 = vld [vmem:[%s4 + $0x784] sm:$0xf]
  %v9716 = vld [vmem:[%s4 + $0x788] sm:$0xf]
  %v9717 = vld [vmem:[%s4 + $0x78c] sm:$0xf]
  %v9718 = vld [vmem:[%s4 + $0x790] sm:$0xf]
  %v9719 = vld [vmem:[%s4 + $0x794] sm:$0xf]
  %v9720 = vld [vmem:[%s4 + $0x798] sm:$0xf]
  %v9721 = vld [vmem:[%s4 + $0x79c] sm:$0xf]
  %v9722 = vld [vmem:[%s4 + $0x7a0] sm:$0xf]
  %v9723 = vld [vmem:[%s4 + $0x7a4] sm:$0xf]
  %v9724 = vld [vmem:[%s4 + $0x7a8] sm:$0xf]
  %v9725 = vld [vmem:[%s4 + $0x7ac] sm:$0xf]
  %v9726 = vld [vmem:[%s4 + $0x7b0] sm:$0xf]
  %v9727 = vld [vmem:[%s4 + $0x7b4] sm:$0xf]
  %v9728 = vld [vmem:[%s4 + $0x7b8] sm:$0xf]
  %v9729 = vld [vmem:[%s4 + $0x7bc] sm:$0xf]
  %v9730 = vld [vmem:[%s4 + $0x7c0] sm:$0xf]
  %v9731 = vld [vmem:[%s4 + $0x7c4] sm:$0xf]
  %v9732 = vld [vmem:[%s4 + $0x7c8] sm:$0xf]
  %v9733 = vld [vmem:[%s4 + $0x7cc] sm:$0xf]
  %v9734 = vld [vmem:[%s4 + $0x7d0] sm:$0xf]
  %v9735 = vld [vmem:[%s4 + $0x7d4] sm:$0xf]
  %v9736 = vld [vmem:[%s4 + $0x7d8] sm:$0xf]
  %v9737 = vld [vmem:[%s4 + $0x7dc] sm:$0xf]
  %v9738 = vld [vmem:[%s4 + $0x7e0] sm:$0xf]
  %v9739 = vld [vmem:[%s4 + $0x7e4] sm:$0xf]
  %v9740 = vld [vmem:[%s4 + $0x7e8] sm:$0xf]
  %v9741 = vld [vmem:[%s4 + $0x7ec] sm:$0xf]
  %v9742 = vld [vmem:[%s4 + $0x7f0] sm:$0xf]
  %v9743 = vld [vmem:[%s4 + $0x7f4] sm:$0xf]
  %v9744 = vld [vmem:[%s4 + $0x7f8] sm:$0xf]
  %v9745 = vld [vmem:[%s4 + $0x7fc] sm:$0xf]
  %v9746 = vld [vmem:[%s4 + $0x800] sm:$0xf]
  %v9747 = vld [vmem:[%s4 + $0x804] sm:$0xf]
  %v9748 = vld [vmem:[%s4 + $0x808] sm:$0xf]
  %v9749 = vld [vmem:[%s4 + $0x80c] sm:$0xf]
  %v9750 = vld [vmem:[%s4 + $0x810] sm:$0xf]
  %v9751 = vld [vmem:[%s4 + $0x814] sm:$0xf]
  %v9752 = vld [vmem:[%s4 + $0x818] sm:$0xf]
  %v9753 = vld [vmem:[%s4 + $0x81c] sm:$0xf]
  %v9754 = vld [vmem:[%s4 + $0x820] sm:$0xf]
  %v9755 = vld [vmem:[%s4 + $0x824] sm:$0xf]
  %v9756 = vld [vmem:[%s4 + $0x828] sm:$0xf]
  %v9757 = vld [vmem:[%s4 + $0x82c] sm:$0xf]
  %v9758 = vld [vmem:[%s4 + $0x830] sm:$0xf]
  %v9759 = vld [vmem:[%s4 + $0x834] sm:$0xf]
  %v9760 = vld [vmem:[%s4 + $0x838] sm:$0xf]
  %v9761 = vld [vmem:[%s4 + $0x83c] sm:$0xf]
  %v9762 = vld [vmem:[%s4 + $0x840] sm:$0xf]
  %v9763 = vld [vmem:[%s4 + $0x844] sm:$0xf]
  %v9764 = vld [vmem:[%s4 + $0x848] sm:$0xf]
  %v9765 = vld [vmem:[%s4 + $0x84c] sm:$0xf]
  %v9766 = vld [vmem:[%s4 + $0x850] sm:$0xf]
  %v9767 = vld [vmem:[%s4 + $0x854] sm:$0xf]
  %v9768 = vld [vmem:[%s4 + $0x858] sm:$0xf]
  %v9769 = vld [vmem:[%s4 + $0x85c] sm:$0xf]
  %v9770 = vld [vmem:[%s4 + $0x860] sm:$0xf]
  %v9771 = vld [vmem:[%s4 + $0x864] sm:$0xf]
  %v9772 = vld [vmem:[%s4 + $0x868] sm:$0xf]
  %v9773 = vld [vmem:[%s4 + $0x86c] sm:$0xf]
  %v9774 = vld [vmem:[%s4 + $0x870] sm:$0xf]
  %v9775 = vld [vmem:[%s4 + $0x874] sm:$0xf]
  %v9776 = vld [vmem:[%s4 + $0x878] sm:$0xf]
  %v9777 = vld [vmem:[%s4 + $0x87c] sm:$0xf]
  %v9778 = vld [vmem:[%s4 + $0x880] sm:$0xf]
  %v9779 = vld [vmem:[%s4 + $0x884] sm:$0xf]
  %v9780 = vld [vmem:[%s4 + $0x888] sm:$0xf]
  %v9781 = vld [vmem:[%s4 + $0x88c] sm:$0xf]
  %v9782 = vld [vmem:[%s4 + $0x890] sm:$0xf]
  %v9783 = vld [vmem:[%s4 + $0x894] sm:$0xf]
  %v9784 = vld [vmem:[%s4 + $0x898] sm:$0xf]
  %v9785 = vld [vmem:[%s4 + $0x89c] sm:$0xf]
  %v9786 = vld [vmem:[%s4 + $0x8a0] sm:$0xf]
  %v9787 = vld [vmem:[%s4 + $0x8a4] sm:$0xf]
  %v9788 = vld [vmem:[%s4 + $0x8a8] sm:$0xf]
  %v9789 = vld [vmem:[%s4 + $0x8ac] sm:$0xf]
  %v9790 = vld [vmem:[%s4 + $0x8b0] sm:$0xf]
  %v9791 = vld [vmem:[%s4 + $0x8b4] sm:$0xf]
  %v9792 = vld [vmem:[%s4 + $0x8b8] sm:$0xf]
  %v9793 = vld [vmem:[%s4 + $0x8bc] sm:$0xf]
  %v9794 = vld [vmem:[%s4 + $0x8c0] sm:$0xf]
  %v9795 = vld [vmem:[%s4 + $0x8c4] sm:$0xf]
  %v9796 = vld [vmem:[%s4 + $0x8c8] sm:$0xf]
  %v9797 = vld [vmem:[%s4 + $0x8cc] sm:$0xf]
  %v9798 = vld [vmem:[%s4 + $0x8d0] sm:$0xf]
  %v9799 = vld [vmem:[%s4 + $0x8d4] sm:$0xf]
  %v9800 = vld [vmem:[%s4 + $0x8d8] sm:$0xf]
  %v9801 = vld [vmem:[%s4 + $0x8dc] sm:$0xf]
  %v9802 = vld [vmem:[%s4 + $0x8e0] sm:$0xf]
  %v9803 = vld [vmem:[%s4 + $0x8e4] sm:$0xf]
  %v9804 = vld [vmem:[%s4 + $0x8e8] sm:$0xf]
  %v9805 = vld [vmem:[%s4 + $0x8ec] sm:$0xf]
  %v9806 = vld [vmem:[%s4 + $0x8f0] sm:$0xf]
  %v9807 = vld [vmem:[%s4 + $0x8f4] sm:$0xf]
  %v9808 = vld [vmem:[%s4 + $0x8f8] sm:$0xf]
  %v9809 = vld [vmem:[%s4 + $0x8fc] sm:$0xf]
  %v9810 = vld [vmem:[%s4 + $0x900] sm:$0xf]
  %v9811 = vld [vmem:[%s4 + $0x904] sm:$0xf]
  %v9812 = vld [vmem:[%s4 + $0x908] sm:$0xf]
  %v9813 = vld [vmem:[%s4 + $0x90c] sm:$0xf]
  %v9814 = vld [vmem:[%s4 + $0x910] sm:$0xf]
  %v9815 = vld [vmem:[%s4 + $0x914] sm:$0xf]
  %v9816 = vld [vmem:[%s4 + $0x918] sm:$0xf]
  %v9817 = vld [vmem:[%s4 + $0x91c] sm:$0xf]
  %v9818 = vld [vmem:[%s4 + $0x920] sm:$0xf]
  %v9819 = vld [vmem:[%s4 + $0x924] sm:$0xf]
  %v9820 = vld [vmem:[%s4 + $0x928] sm:$0xf]
  %v9821 = vld [vmem:[%s4 + $0x92c] sm:$0xf]
  %v9822 = vld [vmem:[%s4 + $0x930] sm:$0xf]
  %v9823 = vld [vmem:[%s4 + $0x934] sm:$0xf]
  %v9824 = vld [vmem:[%s4 + $0x938] sm:$0xf]
  %v9825 = vld [vmem:[%s4 + $0x93c] sm:$0xf]
  %v9826 = vld [vmem:[%s4 + $0x940] sm:$0xf]
  %v9827 = vld [vmem:[%s4 + $0x944] sm:$0xf]
  %v9828 = vld [vmem:[%s4 + $0x948] sm:$0xf]
  %v9829 = vld [vmem:[%s4 + $0x94c] sm:$0xf]
  %v9830 = vld [vmem:[%s4 + $0x950] sm:$0xf]
  %v9831 = vld [vmem:[%s4 + $0x954] sm:$0xf]
  %v9832 = vld [vmem:[%s4 + $0x958] sm:$0xf]
  %v9833 = vld [vmem:[%s4 + $0x95c] sm:$0xf]
  %v9834 = vld [vmem:[%s4 + $0x960] sm:$0xf]
  %v9835 = vld [vmem:[%s4 + $0x964] sm:$0xf]
  %v9836 = vld [vmem:[%s4 + $0x968] sm:$0xf]
  %v9837 = vld [vmem:[%s4 + $0x96c] sm:$0xf]
  %v9838 = vld [vmem:[%s4 + $0x970] sm:$0xf]
  %v9839 = vld [vmem:[%s4 + $0x974] sm:$0xf]
  %v9840 = vld [vmem:[%s4 + $0x978] sm:$0xf]
  %v9841 = vld [vmem:[%s4 + $0x97c] sm:$0xf]
  %v9842 = vld [vmem:[%s4 + $0x980] sm:$0xf]
  %v9843 = vld [vmem:[%s4 + $0x984] sm:$0xf]
  %v9844 = vld [vmem:[%s4 + $0x988] sm:$0xf]
  %v9845 = vld [vmem:[%s4 + $0x98c] sm:$0xf]
  %v9846 = vld [vmem:[%s4 + $0x990] sm:$0xf]
  %v9847 = vld [vmem:[%s4 + $0x994] sm:$0xf]
  %v9848 = vld [vmem:[%s4 + $0x998] sm:$0xf]
  %v9849 = vld [vmem:[%s4 + $0x99c] sm:$0xf]
  %v9850 = vld [vmem:[%s4 + $0x9a0] sm:$0xf]
  %v9851 = vld [vmem:[%s4 + $0x9a4] sm:$0xf]
  %v9852 = vld [vmem:[%s4 + $0x9a8] sm:$0xf]
  %v9853 = vld [vmem:[%s4 + $0x9ac] sm:$0xf]
  %v9854 = vld [vmem:[%s4 + $0x9b0] sm:$0xf]
  %v9855 = vld [vmem:[%s4 + $0x9b4] sm:$0xf]
  %v9856 = vld [vmem:[%s4 + $0x9b8] sm:$0xf]
  %v9857 = vld [vmem:[%s4 + $0x9bc] sm:$0xf]
  %v9858 = vld [vmem:[%s4 + $0x9c0] sm:$0xf]
  %v9859 = vld [vmem:[%s4 + $0x9c4] sm:$0xf]
  %v9860 = vld [vmem:[%s4 + $0x9c8] sm:$0xf]
  %v9861 = vld [vmem:[%s4 + $0x9cc] sm:$0xf]
  %v9862 = vld [vmem:[%s4 + $0x9d0] sm:$0xf]
  %v9863 = vld [vmem:[%s4 + $0x9d4] sm:$0xf]
  %v9864 = vld [vmem:[%s4 + $0x9d8] sm:$0xf]
  %v9865 = vld [vmem:[%s4 + $0x9dc] sm:$0xf]
  %v9866 = vld [vmem:[%s4 + $0x9e0] sm:$0xf]
  %v9867 = vld [vmem:[%s4 + $0x9e4] sm:$0xf]
  %v9868 = vld [vmem:[%s4 + $0x9e8] sm:$0xf]
  %v9869 = vld [vmem:[%s4 + $0x9ec] sm:$0xf]
  %v9870 = vld [vmem:[%s4 + $0x9f0] sm:$0xf]
  %v9871 = vld [vmem:[%s4 + $0x9f4] sm:$0xf]
  %v9872 = vld [vmem:[%s4 + $0x9f8] sm:$0xf]
  %v9873 = vld [vmem:[%s4 + $0x9fc] sm:$0xf]
  %v9874 = vld [vmem:[%s4 + $0xa00] sm:$0xf]
  %v9875 = vld [vmem:[%s4 + $0xa04] sm:$0xf]
  %v9876 = vld [vmem:[%s4 + $0xa08] sm:$0xf]
  %v9877 = vld [vmem:[%s4 + $0xa0c] sm:$0xf]
  %v9878 = vld [vmem:[%s4 + $0xa10] sm:$0xf]
  %v9879 = vld [vmem:[%s4 + $0xa14] sm:$0xf]
  %v9880 = vld [vmem:[%s4 + $0xa18] sm:$0xf]
  %v9881 = vld [vmem:[%s4 + $0xa1c] sm:$0xf]
  %v9882 = vld [vmem:[%s4 + $0xa20] sm:$0xf]
  %v9883 = vld [vmem:[%s4 + $0xa24] sm:$0xf]
  %v9884 = vld [vmem:[%s4 + $0xa28] sm:$0xf]
  %v9885 = vld [vmem:[%s4 + $0xa2c] sm:$0xf]
  %v9886 = vld [vmem:[%s4 + $0xa30] sm:$0xf]
  %v9887 = vld [vmem:[%s4 + $0xa34] sm:$0xf]
  %v9888 = vld [vmem:[%s4 + $0xa38] sm:$0xf]
  %v9889 = vld [vmem:[%s4 + $0xa3c] sm:$0xf]
  %v9890 = vld [vmem:[%s4 + $0xa40] sm:$0xf]
  %v9891 = vld [vmem:[%s4 + $0xa44] sm:$0xf]
  %v9892 = vld [vmem:[%s4 + $0xa48] sm:$0xf]
  %v9893 = vld [vmem:[%s4 + $0xa4c] sm:$0xf]
  %v9894 = vld [vmem:[%s4 + $0xa50] sm:$0xf]
  %v9895 = vld [vmem:[%s4 + $0xa54] sm:$0xf]
  %v9896 = vld [vmem:[%s4 + $0xa58] sm:$0xf]
  %v9897 = vld [vmem:[%s4 + $0xa5c] sm:$0xf]
  %v9898 = vld [vmem:[%s4 + $0xa60] sm:$0xf]
  %v9899 = vld [vmem:[%s4 + $0xa64] sm:$0xf]
  %v9900 = vld [vmem:[%s4 + $0xa68] sm:$0xf]
  %v9901 = vld [vmem:[%s4 + $0xa6c] sm:$0xf]
  %v9902 = vld [vmem:[%s4 + $0xa70] sm:$0xf]
  %v9903 = vld [vmem:[%s4 + $0xa74] sm:$0xf]
  %v9904 = vld [vmem:[%s4 + $0xa78] sm:$0xf]
  %v9905 = vld [vmem:[%s4 + $0xa7c] sm:$0xf]
  %v9906 = vld [vmem:[%s4 + $0xa80] sm:$0xf]
  %v9907 = vld [vmem:[%s4 + $0xa84] sm:$0xf]
  %v9908 = vld [vmem:[%s4 + $0xa88] sm:$0xf]
  %v9909 = vld [vmem:[%s4 + $0xa8c] sm:$0xf]
  %v9910 = vld [vmem:[%s4 + $0xa90] sm:$0xf]
  %v9911 = vld [vmem:[%s4 + $0xa94] sm:$0xf]
  %v9912 = vld [vmem:[%s4 + $0xa98] sm:$0xf]
  %v9913 = vld [vmem:[%s4 + $0xa9c] sm:$0xf]
  %v9914 = vld [vmem:[%s4 + $0xaa0] sm:$0xf]
  %v9915 = vld [vmem:[%s4 + $0xaa4] sm:$0xf]
  %v9916 = vld [vmem:[%s4 + $0xaa8] sm:$0xf]
  %v9917 = vld [vmem:[%s4 + $0xaac] sm:$0xf]
  %v9918 = vld [vmem:[%s4 + $0xab0] sm:$0xf]
  %v9919 = vld [vmem:[%s4 + $0xab4] sm:$0xf]
  %v9920 = vld [vmem:[%s4 + $0xab8] sm:$0xf]
  %v9921 = vld [vmem:[%s4 + $0xabc] sm:$0xf]
  %v9922 = vld [vmem:[%s4 + $0xac0] sm:$0xf]
  %v9923 = vld [vmem:[%s4 + $0xac4] sm:$0xf]
  %v9924 = vld [vmem:[%s4 + $0xac8] sm:$0xf]
  %v9925 = vld [vmem:[%s4 + $0xacc] sm:$0xf]
  %v9926 = vld [vmem:[%s4 + $0xad0] sm:$0xf]
  %v9927 = vld [vmem:[%s4 + $0xad4] sm:$0xf]
  %v9928 = vld [vmem:[%s4 + $0xad8] sm:$0xf]
  %v9929 = vld [vmem:[%s4 + $0xadc] sm:$0xf]
  %v9930 = vld [vmem:[%s4 + $0xae0] sm:$0xf]
  %v9931 = vld [vmem:[%s4 + $0xae4] sm:$0xf]
  %v9932 = vld [vmem:[%s4 + $0xae8] sm:$0xf]
  %v9933 = vld [vmem:[%s4 + $0xaec] sm:$0xf]
  %v9934 = vld [vmem:[%s4 + $0xaf0] sm:$0xf]
  %v9935 = vld [vmem:[%s4 + $0xaf4] sm:$0xf]
  %v9936 = vld [vmem:[%s4 + $0xaf8] sm:$0xf]
  %v9937 = vld [vmem:[%s4 + $0xafc] sm:$0xf]
  %v9938 = vld [vmem:[%s4 + $0xb00] sm:$0xf]
  %v9939 = vld [vmem:[%s4 + $0xb04] sm:$0xf]
  %v9940 = vld [vmem:[%s4 + $0xb08] sm:$0xf]
  %v9941 = vld [vmem:[%s4 + $0xb0c] sm:$0xf]
  %v9942 = vld [vmem:[%s4 + $0xb10] sm:$0xf]
  %v9943 = vld [vmem:[%s4 + $0xb14] sm:$0xf]
  %v9944 = vld [vmem:[%s4 + $0xb18] sm:$0xf]
  %v9945 = vld [vmem:[%s4 + $0xb1c] sm:$0xf]
  %v9946 = vld [vmem:[%s4 + $0xb20] sm:$0xf]
  %v9947 = vld [vmem:[%s4 + $0xb24] sm:$0xf]
  %v9948 = vld [vmem:[%s4 + $0xb28] sm:$0xf]
  %v9949 = vld [vmem:[%s4 + $0xb2c] sm:$0xf]
  %v9950 = vld [vmem:[%s4 + $0xb30] sm:$0xf]
  %v9951 = vld [vmem:[%s4 + $0xb34] sm:$0xf]
  %v9952 = vld [vmem:[%s4 + $0xb38] sm:$0xf]
  %v9953 = vld [vmem:[%s4 + $0xb3c] sm:$0xf]
  %v9954 = vld [vmem:[%s4 + $0xb40] sm:$0xf]
  %v9955 = vld [vmem:[%s4 + $0xb44] sm:$0xf]
  %v9956 = vld [vmem:[%s4 + $0xb48] sm:$0xf]
  %v9957 = vld [vmem:[%s4 + $0xb4c] sm:$0xf]
  %v9958 = vld [vmem:[%s4 + $0xb50] sm:$0xf]
  %v9959 = vld [vmem:[%s4 + $0xb54] sm:$0xf]
  %v9960 = vld [vmem:[%s4 + $0xb58] sm:$0xf]
  %v9961 = vld [vmem:[%s4 + $0xb5c] sm:$0xf]
  %v9962 = vld [vmem:[%s4 + $0xb60] sm:$0xf]
  %v9963 = vld [vmem:[%s4 + $0xb64] sm:$0xf]
  %v9964 = vld [vmem:[%s4 + $0xb68] sm:$0xf]
  %v9965 = vld [vmem:[%s4 + $0xb6c] sm:$0xf]
  %v9966 = vld [vmem:[%s4 + $0xb70] sm:$0xf]
  %v9967 = vld [vmem:[%s4 + $0xb74] sm:$0xf]
  %v9968 = vld [vmem:[%s4 + $0xb78] sm:$0xf]
  %v9969 = vld [vmem:[%s4 + $0xb7c] sm:$0xf]
  %v9970 = vld [vmem:[%s4 + $0xb80] sm:$0xf]
  %v9971 = vld [vmem:[%s4 + $0xb84] sm:$0xf]
  %v9972 = vld [vmem:[%s4 + $0xb88] sm:$0xf]
  %v9973 = vld [vmem:[%s4 + $0xb8c] sm:$0xf]
  %v9974 = vld [vmem:[%s4 + $0xb90] sm:$0xf]
  %v9975 = vld [vmem:[%s4 + $0xb94] sm:$0xf]
  %v9976 = vld [vmem:[%s4 + $0xb98] sm:$0xf]
  %v9977 = vld [vmem:[%s4 + $0xb9c] sm:$0xf]
  %v9978 = vld [vmem:[%s4 + $0xba0] sm:$0xf]
  %v9979 = vld [vmem:[%s4 + $0xba4] sm:$0xf]
  %v9980 = vld [vmem:[%s4 + $0xba8] sm:$0xf]
  %v9981 = vld [vmem:[%s4 + $0xbac] sm:$0xf]
  %v9982 = vld [vmem:[%s4 + $0xbb0] sm:$0xf]
  %v9983 = vld [vmem:[%s4 + $0xbb4] sm:$0xf]
  %v9984 = vld [vmem:[%s4 + $0xbb8] sm:$0xf]
  %v9985 = vld [vmem:[%s4 + $0xbbc] sm:$0xf]
  %v9986 = vld [vmem:[%s4 + $0xbc0] sm:$0xf]
  %v9987 = vld [vmem:[%s4 + $0xbc4] sm:$0xf]
  %v9988 = vld [vmem:[%s4 + $0xbc8] sm:$0xf]
  %v9989 = vld [vmem:[%s4 + $0xbcc] sm:$0xf]
  %v9990 = vld [vmem:[%s4 + $0xbd0] sm:$0xf]
  %v9991 = vld [vmem:[%s4 + $0xbd4] sm:$0xf]
  %v9992 = vld [vmem:[%s4 + $0xbd8] sm:$0xf]
  %v9993 = vld [vmem:[%s4 + $0xbdc] sm:$0xf]
  %v9994 = vld [vmem:[%s4 + $0xbe0] sm:$0xf]
  %v9995 = vld [vmem:[%s4 + $0xbe4] sm:$0xf]
  %v9996 = vld [vmem:[%s4 + $0xbe8] sm:$0xf]
  %v9997 = vld [vmem:[%s4 + $0xbec] sm:$0xf]
  %v9998 = vld [vmem:[%s4 + $0xbf0] sm:$0xf]
  %v9999 = vld [vmem:[%s4 + $0xbf4] sm:$0xf]
  %v10000 = vld [vmem:[%s4 + $0xbf8] sm:$0xf]
  %v10001 = vld [vmem:[%s4 + $0xbfc] sm:$0xf]
  %v10002 = vld [vmem:[%s4 + $0xc00] sm:$0xf]
  %v10003 = vld [vmem:[%s4 + $0xc04] sm:$0xf]
  %v10004 = vld [vmem:[%s4 + $0xc08] sm:$0xf]
  %v10005 = vld [vmem:[%s4 + $0xc0c] sm:$0xf]
  %v10006 = vld [vmem:[%s4 + $0xc10] sm:$0xf]
  %v10007 = vld [vmem:[%s4 + $0xc14] sm:$0xf]
  %v10008 = vld [vmem:[%s4 + $0xc18] sm:$0xf]
  %v10009 = vld [vmem:[%s4 + $0xc1c] sm:$0xf]
  %v10010 = vld [vmem:[%s4 + $0xc20] sm:$0xf]
  %v10011 = vld [vmem:[%s4 + $0xc24] sm:$0xf]
  %v10012 = vld [vmem:[%s4 + $0xc28] sm:$0xf]
  %v10013 = vld [vmem:[%s4 + $0xc2c] sm:$0xf]
  %v10014 = vld [vmem:[%s4 + $0xc30] sm:$0xf]
  %v10015 = vld [vmem:[%s4 + $0xc34] sm:$0xf]
  %v10016 = vld [vmem:[%s4 + $0xc38] sm:$0xf]
  %v10017 = vld [vmem:[%s4 + $0xc3c] sm:$0xf]
  %v10802 = vunpack.c.l.b16 %v9234
  %v10803 = vunpack.c.l.b16 %v9235
  %v10804 = vunpack.c.l.b16 %v9236
  %v10805 = vunpack.c.l.b16 %v9237
  %v10806 = vunpack.c.l.b16 %v9238
  %v10807 = vunpack.c.l.b16 %v9239
  %v10808 = vunpack.c.l.b16 %v9240
  %v10809 = vunpack.c.l.b16 %v9241
  %v10810 = vunpack.c.l.b16 %v9242
  %v10811 = vunpack.c.l.b16 %v9243
  %v10812 = vunpack.c.l.b16 %v9244
  %v10813 = vunpack.c.l.b16 %v9245
  %v10814 = vunpack.c.l.b16 %v9246
  %v10815 = vunpack.c.l.b16 %v9247
  %v10816 = vunpack.c.l.b16 %v9248
  %v10817 = vunpack.c.l.b16 %v9249
  %v10818 = vunpack.c.l.b16 %v9250
  %v10819 = vunpack.c.l.b16 %v9251
  %v10820 = vunpack.c.l.b16 %v9252
  %v10821 = vunpack.c.l.b16 %v9253
  %v10822 = vunpack.c.l.b16 %v9254
  %v10823 = vunpack.c.l.b16 %v9255
  %v10824 = vunpack.c.l.b16 %v9256
  %v10825 = vunpack.c.l.b16 %v9257
  %v10826 = vunpack.c.l.b16 %v9258
  %v10827 = vunpack.c.l.b16 %v9259
  %v10828 = vunpack.c.l.b16 %v9260
  %v10829 = vunpack.c.l.b16 %v9261
  %v10830 = vunpack.c.l.b16 %v9262
  %v10831 = vunpack.c.l.b16 %v9263
  %v10832 = vunpack.c.l.b16 %v9264
  %v10833 = vunpack.c.l.b16 %v9265
  %v10834 = vunpack.c.l.b16 %v9266
  %v10835 = vunpack.c.l.b16 %v9267
  %v10836 = vunpack.c.l.b16 %v9268
  %v10837 = vunpack.c.l.b16 %v9269
  %v10838 = vunpack.c.l.b16 %v9270
  %v10839 = vunpack.c.l.b16 %v9271
  %v10840 = vunpack.c.l.b16 %v9272
  %v10841 = vunpack.c.l.b16 %v9273
  %v10842 = vunpack.c.l.b16 %v9274
  %v10843 = vunpack.c.l.b16 %v9275
  %v10844 = vunpack.c.l.b16 %v9276
  %v10845 = vunpack.c.l.b16 %v9277
  %v10846 = vunpack.c.l.b16 %v9278
  %v10847 = vunpack.c.l.b16 %v9279
  %v10848 = vunpack.c.l.b16 %v9280
  %v10849 = vunpack.c.l.b16 %v9281
  %v10850 = vunpack.c.l.b16 %v9282
  %v10851 = vunpack.c.l.b16 %v9283
  %v10852 = vunpack.c.l.b16 %v9284
  %v10853 = vunpack.c.l.b16 %v9285
  %v10854 = vunpack.c.l.b16 %v9286
  %v10855 = vunpack.c.l.b16 %v9287
  %v10856 = vunpack.c.l.b16 %v9288
  %v10857 = vunpack.c.l.b16 %v9289
  %v10858 = vunpack.c.l.b16 %v9290
  %v10859 = vunpack.c.l.b16 %v9291
  %v10860 = vunpack.c.l.b16 %v9292
  %v10861 = vunpack.c.l.b16 %v9293
  %v10862 = vunpack.c.l.b16 %v9294
  %v10863 = vunpack.c.l.b16 %v9295
  %v10864 = vunpack.c.l.b16 %v9296
  %v10865 = vunpack.c.l.b16 %v9297
  %v10866 = vunpack.c.l.b16 %v9298
  %v10867 = vunpack.c.l.b16 %v9299
  %v10868 = vunpack.c.l.b16 %v9300
  %v10869 = vunpack.c.l.b16 %v9301
  %v10870 = vunpack.c.l.b16 %v9302
  %v10871 = vunpack.c.l.b16 %v9303
  %v10872 = vunpack.c.l.b16 %v9304
  %v10873 = vunpack.c.l.b16 %v9305
  %v10874 = vunpack.c.l.b16 %v9306
  %v10875 = vunpack.c.l.b16 %v9307
  %v10876 = vunpack.c.l.b16 %v9308
  %v10877 = vunpack.c.l.b16 %v9309
  %v10878 = vunpack.c.l.b16 %v9310
  %v10879 = vunpack.c.l.b16 %v9311
  %v10880 = vunpack.c.l.b16 %v9312
  %v10881 = vunpack.c.l.b16 %v9313
  %v10882 = vunpack.c.l.b16 %v9314
  %v10883 = vunpack.c.l.b16 %v9315
  %v10884 = vunpack.c.l.b16 %v9316
  %v10885 = vunpack.c.l.b16 %v9317
  %v10886 = vunpack.c.l.b16 %v9318
  %v10887 = vunpack.c.l.b16 %v9319
  %v10888 = vunpack.c.l.b16 %v9320
  %v10889 = vunpack.c.l.b16 %v9321
  %v10890 = vunpack.c.l.b16 %v9322
  %v10891 = vunpack.c.l.b16 %v9323
  %v10892 = vunpack.c.l.b16 %v9324
  %v10893 = vunpack.c.l.b16 %v9325
  %v10894 = vunpack.c.l.b16 %v9326
  %v10895 = vunpack.c.l.b16 %v9327
  %v10896 = vunpack.c.l.b16 %v9328
  %v10897 = vunpack.c.l.b16 %v9329
  %v10898 = vunpack.c.l.b16 %v9330
  %v10899 = vunpack.c.l.b16 %v9331
  %v10900 = vunpack.c.l.b16 %v9332
  %v10901 = vunpack.c.l.b16 %v9333
  %v10902 = vunpack.c.l.b16 %v9334
  %v10903 = vunpack.c.l.b16 %v9335
  %v10904 = vunpack.c.l.b16 %v9336
  %v10905 = vunpack.c.l.b16 %v9337
  %v10906 = vunpack.c.l.b16 %v9338
  %v10907 = vunpack.c.l.b16 %v9339
  %v10908 = vunpack.c.l.b16 %v9340
  %v10909 = vunpack.c.l.b16 %v9341
  %v10910 = vunpack.c.l.b16 %v9342
  %v10911 = vunpack.c.l.b16 %v9343
  %v10912 = vunpack.c.l.b16 %v9344
  %v10913 = vunpack.c.l.b16 %v9345
  %v10914 = vunpack.c.l.b16 %v9346
  %v10915 = vunpack.c.l.b16 %v9347
  %v10916 = vunpack.c.l.b16 %v9348
  %v10917 = vunpack.c.l.b16 %v9349
  %v10918 = vunpack.c.l.b16 %v9350
  %v10919 = vunpack.c.l.b16 %v9351
  %v10920 = vunpack.c.l.b16 %v9352
  %v10921 = vunpack.c.l.b16 %v9353
  %v10922 = vunpack.c.l.b16 %v9354
  %v10923 = vunpack.c.l.b16 %v9355
  %v10924 = vunpack.c.l.b16 %v9356
  %v10925 = vunpack.c.l.b16 %v9357
  %v10926 = vunpack.c.l.b16 %v9358
  %v10927 = vunpack.c.l.b16 %v9359
  %v10928 = vunpack.c.l.b16 %v9360
  %v10929 = vunpack.c.l.b16 %v9361
  %v10930 = vunpack.c.l.b16 %v9362
  %v10931 = vunpack.c.l.b16 %v9363
  %v10932 = vunpack.c.l.b16 %v9364
  %v10933 = vunpack.c.l.b16 %v9365
  %v10934 = vunpack.c.l.b16 %v9366
  %v10935 = vunpack.c.l.b16 %v9367
  %v10936 = vunpack.c.l.b16 %v9368
  %v10937 = vunpack.c.l.b16 %v9369
  %v10938 = vunpack.c.l.b16 %v9370
  %v10939 = vunpack.c.l.b16 %v9371
  %v10940 = vunpack.c.l.b16 %v9372
  %v10941 = vunpack.c.l.b16 %v9373
  %v10942 = vunpack.c.l.b16 %v9374
  %v10943 = vunpack.c.l.b16 %v9375
  %v10944 = vunpack.c.l.b16 %v9376
  %v10945 = vunpack.c.l.b16 %v9377
  %v10946 = vunpack.c.l.b16 %v9378
  %v10947 = vunpack.c.l.b16 %v9379
  %v10948 = vunpack.c.l.b16 %v9380
  %v10949 = vunpack.c.l.b16 %v9381
  %v10950 = vunpack.c.l.b16 %v9382
  %v10951 = vunpack.c.l.b16 %v9383
  %v10952 = vunpack.c.l.b16 %v9384
  %v10953 = vunpack.c.l.b16 %v9385
  %v10954 = vunpack.c.l.b16 %v9386
  %v10955 = vunpack.c.l.b16 %v9387
  %v10956 = vunpack.c.l.b16 %v9388
  %v10957 = vunpack.c.l.b16 %v9389
  %v10958 = vunpack.c.l.b16 %v9390
  %v10959 = vunpack.c.l.b16 %v9391
  %v10960 = vunpack.c.l.b16 %v9392
  %v10961 = vunpack.c.l.b16 %v9393
  %v10962 = vunpack.c.l.b16 %v9394
  %v10963 = vunpack.c.l.b16 %v9395
  %v10964 = vunpack.c.l.b16 %v9396
  %v10965 = vunpack.c.l.b16 %v9397
  %v10966 = vunpack.c.l.b16 %v9398
  %v10967 = vunpack.c.l.b16 %v9399
  %v10968 = vunpack.c.l.b16 %v9400
  %v10969 = vunpack.c.l.b16 %v9401
  %v10970 = vunpack.c.l.b16 %v9402
  %v10971 = vunpack.c.l.b16 %v9403
  %v10972 = vunpack.c.l.b16 %v9404
  %v10973 = vunpack.c.l.b16 %v9405
  %v10974 = vunpack.c.l.b16 %v9406
  %v10975 = vunpack.c.l.b16 %v9407
  %v10976 = vunpack.c.l.b16 %v9408
  %v10977 = vunpack.c.l.b16 %v9409
  %v10978 = vunpack.c.l.b16 %v9410
  %v10979 = vunpack.c.l.b16 %v9411
  %v10980 = vunpack.c.l.b16 %v9412
  %v10981 = vunpack.c.l.b16 %v9413
  %v10982 = vunpack.c.l.b16 %v9414
  %v10983 = vunpack.c.l.b16 %v9415
  %v10984 = vunpack.c.l.b16 %v9416
  %v10985 = vunpack.c.l.b16 %v9417
  %v10986 = vunpack.c.l.b16 %v9418
  %v10987 = vunpack.c.l.b16 %v9419
  %v10988 = vunpack.c.l.b16 %v9420
  %v10989 = vunpack.c.l.b16 %v9421
  %v10990 = vunpack.c.l.b16 %v9422
  %v10991 = vunpack.c.l.b16 %v9423
  %v10992 = vunpack.c.l.b16 %v9424
  %v10993 = vunpack.c.l.b16 %v9425
  %v10994 = vunpack.c.l.b16 %v9426
  %v10995 = vunpack.c.l.b16 %v9427
  %v10996 = vunpack.c.l.b16 %v9428
  %v10997 = vunpack.c.l.b16 %v9429
  %v10998 = vunpack.c.l.b16 %v9430
  %v10999 = vunpack.c.l.b16 %v9431
  %v11000 = vunpack.c.l.b16 %v9432
  %v11001 = vunpack.c.l.b16 %v9433
  %v11002 = vunpack.c.l.b16 %v9434
  %v11003 = vunpack.c.l.b16 %v9435
  %v11004 = vunpack.c.l.b16 %v9436
  %v11005 = vunpack.c.l.b16 %v9437
  %v11006 = vunpack.c.l.b16 %v9438
  %v11007 = vunpack.c.l.b16 %v9439
  %v11008 = vunpack.c.l.b16 %v9440
  %v11009 = vunpack.c.l.b16 %v9441
  %v11010 = vunpack.c.l.b16 %v9442
  %v11011 = vunpack.c.l.b16 %v9443
  %v11012 = vunpack.c.l.b16 %v9444
  %v11013 = vunpack.c.l.b16 %v9445
  %v11014 = vunpack.c.l.b16 %v9446
  %v11015 = vunpack.c.l.b16 %v9447
  %v11016 = vunpack.c.l.b16 %v9448
  %v11017 = vunpack.c.l.b16 %v9449
  %v11018 = vunpack.c.l.b16 %v9450
  %v11019 = vunpack.c.l.b16 %v9451
  %v11020 = vunpack.c.l.b16 %v9452
  %v11021 = vunpack.c.l.b16 %v9453
  %v11022 = vunpack.c.l.b16 %v9454
  %v11023 = vunpack.c.l.b16 %v9455
  %v11024 = vunpack.c.l.b16 %v9456
  %v11025 = vunpack.c.l.b16 %v9457
  %v11026 = vunpack.c.l.b16 %v9458
  %v11027 = vunpack.c.l.b16 %v9459
  %v11028 = vunpack.c.l.b16 %v9460
  %v11029 = vunpack.c.l.b16 %v9461
  %v11030 = vunpack.c.l.b16 %v9462
  %v11031 = vunpack.c.l.b16 %v9463
  %v11032 = vunpack.c.l.b16 %v9464
  %v11033 = vunpack.c.l.b16 %v9465
  %v11034 = vunpack.c.l.b16 %v9466
  %v11035 = vunpack.c.l.b16 %v9467
  %v11036 = vunpack.c.l.b16 %v9468
  %v11037 = vunpack.c.l.b16 %v9469
  %v11038 = vunpack.c.l.b16 %v9470
  %v11039 = vunpack.c.l.b16 %v9471
  %v11040 = vunpack.c.l.b16 %v9472
  %v11041 = vunpack.c.l.b16 %v9473
  %v11042 = vunpack.c.l.b16 %v9474
  %v11043 = vunpack.c.l.b16 %v9475
  %v11044 = vunpack.c.l.b16 %v9476
  %v11045 = vunpack.c.l.b16 %v9477
  %v11046 = vunpack.c.l.b16 %v9478
  %v11047 = vunpack.c.l.b16 %v9479
  %v11048 = vunpack.c.l.b16 %v9480
  %v11049 = vunpack.c.l.b16 %v9481
  %v11050 = vunpack.c.l.b16 %v9482
  %v11051 = vunpack.c.l.b16 %v9483
  %v11052 = vunpack.c.l.b16 %v9484
  %v11053 = vunpack.c.l.b16 %v9485
  %v11054 = vunpack.c.l.b16 %v9486
  %v11055 = vunpack.c.l.b16 %v9487
  %v11056 = vunpack.c.l.b16 %v9488
  %v11057 = vunpack.c.l.b16 %v9489
  %v11058 = vunpack.c.l.b16 %v9490
  %v11059 = vunpack.c.l.b16 %v9491
  %v11060 = vunpack.c.l.b16 %v9492
  %v11061 = vunpack.c.l.b16 %v9493
  %v11062 = vunpack.c.l.b16 %v9494
  %v11063 = vunpack.c.l.b16 %v9495
  %v11064 = vunpack.c.l.b16 %v9496
  %v11065 = vunpack.c.l.b16 %v9497
  %v11066 = vunpack.c.l.b16 %v9498
  %v11067 = vunpack.c.l.b16 %v9499
  %v11068 = vunpack.c.l.b16 %v9500
  %v11069 = vunpack.c.l.b16 %v9501
  %v11070 = vunpack.c.l.b16 %v9502
  %v11071 = vunpack.c.l.b16 %v9503
  %v11072 = vunpack.c.l.b16 %v9504
  %v11073 = vunpack.c.l.b16 %v9505
  %v11074 = vunpack.c.l.b16 %v9506
  %v11075 = vunpack.c.l.b16 %v9507
  %v11076 = vunpack.c.l.b16 %v9508
  %v11077 = vunpack.c.l.b16 %v9509
  %v11078 = vunpack.c.l.b16 %v9510
  %v11079 = vunpack.c.l.b16 %v9511
  %v11080 = vunpack.c.l.b16 %v9512
  %v11081 = vunpack.c.l.b16 %v9513
  %v11082 = vunpack.c.l.b16 %v9514
  %v11083 = vunpack.c.l.b16 %v9515
  %v11084 = vunpack.c.l.b16 %v9516
  %v11085 = vunpack.c.l.b16 %v9517
  %v11086 = vunpack.c.l.b16 %v9518
  %v11087 = vunpack.c.l.b16 %v9519
  %v11088 = vunpack.c.l.b16 %v9520
  %v11089 = vunpack.c.l.b16 %v9521
  %v11090 = vunpack.c.l.b16 %v9522
  %v11091 = vunpack.c.l.b16 %v9523
  %v11092 = vunpack.c.l.b16 %v9524
  %v11093 = vunpack.c.l.b16 %v9525
  %v11094 = vunpack.c.l.b16 %v9526
  %v11095 = vunpack.c.l.b16 %v9527
  %v11096 = vunpack.c.l.b16 %v9528
  %v11097 = vunpack.c.l.b16 %v9529
  %v11098 = vunpack.c.l.b16 %v9530
  %v11099 = vunpack.c.l.b16 %v9531
  %v11100 = vunpack.c.l.b16 %v9532
  %v11101 = vunpack.c.l.b16 %v9533
  %v11102 = vunpack.c.l.b16 %v9534
  %v11103 = vunpack.c.l.b16 %v9535
  %v11104 = vunpack.c.l.b16 %v9536
  %v11105 = vunpack.c.l.b16 %v9537
  %v11106 = vunpack.c.l.b16 %v9538
  %v11107 = vunpack.c.l.b16 %v9539
  %v11108 = vunpack.c.l.b16 %v9540
  %v11109 = vunpack.c.l.b16 %v9541
  %v11110 = vunpack.c.l.b16 %v9542
  %v11111 = vunpack.c.l.b16 %v9543
  %v11112 = vunpack.c.l.b16 %v9544
  %v11113 = vunpack.c.l.b16 %v9545
  %v11114 = vunpack.c.l.b16 %v9546
  %v11115 = vunpack.c.l.b16 %v9547
  %v11116 = vunpack.c.l.b16 %v9548
  %v11117 = vunpack.c.l.b16 %v9549
  %v11118 = vunpack.c.l.b16 %v9550
  %v11119 = vunpack.c.l.b16 %v9551
  %v11120 = vunpack.c.l.b16 %v9552
  %v11121 = vunpack.c.l.b16 %v9553
  %v11122 = vunpack.c.l.b16 %v9554
  %v11123 = vunpack.c.l.b16 %v9555
  %v11124 = vunpack.c.l.b16 %v9556
  %v11125 = vunpack.c.l.b16 %v9557
  %v11126 = vunpack.c.l.b16 %v9558
  %v11127 = vunpack.c.l.b16 %v9559
  %v11128 = vunpack.c.l.b16 %v9560
  %v11129 = vunpack.c.l.b16 %v9561
  %v11130 = vunpack.c.l.b16 %v9562
  %v11131 = vunpack.c.l.b16 %v9563
  %v11132 = vunpack.c.l.b16 %v9564
  %v11133 = vunpack.c.l.b16 %v9565
  %v11134 = vunpack.c.l.b16 %v9566
  %v11135 = vunpack.c.l.b16 %v9567
  %v11136 = vunpack.c.l.b16 %v9568
  %v11137 = vunpack.c.l.b16 %v9569
  %v11138 = vunpack.c.l.b16 %v9570
  %v11139 = vunpack.c.l.b16 %v9571
  %v11140 = vunpack.c.l.b16 %v9572
  %v11141 = vunpack.c.l.b16 %v9573
  %v11142 = vunpack.c.l.b16 %v9574
  %v11143 = vunpack.c.l.b16 %v9575
  %v11144 = vunpack.c.l.b16 %v9576
  %v11145 = vunpack.c.l.b16 %v9577
  %v11146 = vunpack.c.l.b16 %v9578
  %v11147 = vunpack.c.l.b16 %v9579
  %v11148 = vunpack.c.l.b16 %v9580
  %v11149 = vunpack.c.l.b16 %v9581
  %v11150 = vunpack.c.l.b16 %v9582
  %v11151 = vunpack.c.l.b16 %v9583
  %v11152 = vunpack.c.l.b16 %v9584
  %v11153 = vunpack.c.l.b16 %v9585
  %v11154 = vunpack.c.l.b16 %v9586
  %v11155 = vunpack.c.l.b16 %v9587
  %v11156 = vunpack.c.l.b16 %v9588
  %v11157 = vunpack.c.l.b16 %v9589
  %v11158 = vunpack.c.l.b16 %v9590
  %v11159 = vunpack.c.l.b16 %v9591
  %v11160 = vunpack.c.l.b16 %v9592
  %v11161 = vunpack.c.l.b16 %v9593
  %v11162 = vunpack.c.l.b16 %v9594
  %v11163 = vunpack.c.l.b16 %v9595
  %v11164 = vunpack.c.l.b16 %v9596
  %v11165 = vunpack.c.l.b16 %v9597
  %v11166 = vunpack.c.l.b16 %v9598
  %v11167 = vunpack.c.l.b16 %v9599
  %v11168 = vunpack.c.l.b16 %v9600
  %v11169 = vunpack.c.l.b16 %v9601
  %v11170 = vunpack.c.l.b16 %v9602
  %v11171 = vunpack.c.l.b16 %v9603
  %v11172 = vunpack.c.l.b16 %v9604
  %v11173 = vunpack.c.l.b16 %v9605
  %v11174 = vunpack.c.l.b16 %v9606
  %v11175 = vunpack.c.l.b16 %v9607
  %v11176 = vunpack.c.l.b16 %v9608
  %v11177 = vunpack.c.l.b16 %v9609
  %v11178 = vunpack.c.l.b16 %v9610
  %v11179 = vunpack.c.l.b16 %v9611
  %v11180 = vunpack.c.l.b16 %v9612
  %v11181 = vunpack.c.l.b16 %v9613
  %v11182 = vunpack.c.l.b16 %v9614
  %v11183 = vunpack.c.l.b16 %v9615
  %v11184 = vunpack.c.l.b16 %v9616
  %v11185 = vunpack.c.l.b16 %v9617
  %v11186 = vunpack.c.l.b16 %v9618
  %v11187 = vunpack.c.l.b16 %v9619
  %v11188 = vunpack.c.l.b16 %v9620
  %v11189 = vunpack.c.l.b16 %v9621
  %v11190 = vunpack.c.l.b16 %v9622
  %v11191 = vunpack.c.l.b16 %v9623
  %v11192 = vunpack.c.l.b16 %v9624
  %v11193 = vunpack.c.l.b16 %v9625
  %v11194 = vunpack.c.l.b16 %v9626
  %v11195 = vunpack.c.l.b16 %v9627
  %v11196 = vunpack.c.l.b16 %v9628
  %v11197 = vunpack.c.l.b16 %v9629
  %v11198 = vunpack.c.l.b16 %v9630
  %v11199 = vunpack.c.l.b16 %v9631
  %v11200 = vunpack.c.l.b16 %v9632
  %v11201 = vunpack.c.l.b16 %v9633
  %v11202 = vunpack.c.l.b16 %v9634
  %v11203 = vunpack.c.l.b16 %v9635
  %v11204 = vunpack.c.l.b16 %v9636
  %v11205 = vunpack.c.l.b16 %v9637
  %v11206 = vunpack.c.l.b16 %v9638
  %v11207 = vunpack.c.l.b16 %v9639
  %v11208 = vunpack.c.l.b16 %v9640
  %v11209 = vunpack.c.l.b16 %v9641
  %v11210 = vunpack.c.l.b16 %v9642
  %v11211 = vunpack.c.l.b16 %v9643
  %v11212 = vunpack.c.l.b16 %v9644
  %v11213 = vunpack.c.l.b16 %v9645
  %v11214 = vunpack.c.l.b16 %v9646
  %v11215 = vunpack.c.l.b16 %v9647
  %v11216 = vunpack.c.l.b16 %v9648
  %v11217 = vunpack.c.l.b16 %v9649
  %v11218 = vunpack.c.l.b16 %v9650
  %v11219 = vunpack.c.l.b16 %v9651
  %v11220 = vunpack.c.l.b16 %v9652
  %v11221 = vunpack.c.l.b16 %v9653
  %v11222 = vunpack.c.l.b16 %v9654
  %v11223 = vunpack.c.l.b16 %v9655
  %v11224 = vunpack.c.l.b16 %v9656
  %v11225 = vunpack.c.l.b16 %v9657
  %v11226 = vunpack.c.l.b16 %v9658
  %v11227 = vunpack.c.l.b16 %v9659
  %v11228 = vunpack.c.l.b16 %v9660
  %v11229 = vunpack.c.l.b16 %v9661
  %v11230 = vunpack.c.l.b16 %v9662
  %v11231 = vunpack.c.l.b16 %v9663
  %v11232 = vunpack.c.l.b16 %v9664
  %v11233 = vunpack.c.l.b16 %v9665
  %v11234 = vunpack.c.l.b16 %v9666
  %v11235 = vunpack.c.l.b16 %v9667
  %v11236 = vunpack.c.l.b16 %v9668
  %v11237 = vunpack.c.l.b16 %v9669
  %v11238 = vunpack.c.l.b16 %v9670
  %v11239 = vunpack.c.l.b16 %v9671
  %v11240 = vunpack.c.l.b16 %v9672
  %v11241 = vunpack.c.l.b16 %v9673
  %v11242 = vunpack.c.l.b16 %v9674
  %v11243 = vunpack.c.l.b16 %v9675
  %v11244 = vunpack.c.l.b16 %v9676
  %v11245 = vunpack.c.l.b16 %v9677
  %v11246 = vunpack.c.l.b16 %v9678
  %v11247 = vunpack.c.l.b16 %v9679
  %v11248 = vunpack.c.l.b16 %v9680
  %v11249 = vunpack.c.l.b16 %v9681
  %v11250 = vunpack.c.l.b16 %v9682
  %v11251 = vunpack.c.l.b16 %v9683
  %v11252 = vunpack.c.l.b16 %v9684
  %v11253 = vunpack.c.l.b16 %v9685
  %v11254 = vunpack.c.l.b16 %v9686
  %v11255 = vunpack.c.l.b16 %v9687
  %v11256 = vunpack.c.l.b16 %v9688
  %v11257 = vunpack.c.l.b16 %v9689
  %v11258 = vunpack.c.l.b16 %v9690
  %v11259 = vunpack.c.l.b16 %v9691
  %v11260 = vunpack.c.l.b16 %v9692
  %v11261 = vunpack.c.l.b16 %v9693
  %v11262 = vunpack.c.l.b16 %v9694
  %v11263 = vunpack.c.l.b16 %v9695
  %v11264 = vunpack.c.l.b16 %v9696
  %v11265 = vunpack.c.l.b16 %v9697
  %v11266 = vunpack.c.l.b16 %v9698
  %v11267 = vunpack.c.l.b16 %v9699
  %v11268 = vunpack.c.l.b16 %v9700
  %v11269 = vunpack.c.l.b16 %v9701
  %v11270 = vunpack.c.l.b16 %v9702
  %v11271 = vunpack.c.l.b16 %v9703
  %v11272 = vunpack.c.l.b16 %v9704
  %v11273 = vunpack.c.l.b16 %v9705
  %v11274 = vunpack.c.l.b16 %v9706
  %v11275 = vunpack.c.l.b16 %v9707
  %v11276 = vunpack.c.l.b16 %v9708
  %v11277 = vunpack.c.l.b16 %v9709
  %v11278 = vunpack.c.l.b16 %v9710
  %v11279 = vunpack.c.l.b16 %v9711
  %v11280 = vunpack.c.l.b16 %v9712
  %v11281 = vunpack.c.l.b16 %v9713
  %v11282 = vunpack.c.l.b16 %v9714
  %v11283 = vunpack.c.l.b16 %v9715
  %v11284 = vunpack.c.l.b16 %v9716
  %v11285 = vunpack.c.l.b16 %v9717
  %v11286 = vunpack.c.l.b16 %v9718
  %v11287 = vunpack.c.l.b16 %v9719
  %v11288 = vunpack.c.l.b16 %v9720
  %v11289 = vunpack.c.l.b16 %v9721
  %v11290 = vunpack.c.l.b16 %v9722
  %v11291 = vunpack.c.l.b16 %v9723
  %v11292 = vunpack.c.l.b16 %v9724
  %v11293 = vunpack.c.l.b16 %v9725
  %v11294 = vunpack.c.l.b16 %v9726
  %v11295 = vunpack.c.l.b16 %v9727
  %v11296 = vunpack.c.l.b16 %v9728
  %v11297 = vunpack.c.l.b16 %v9729
  %v11298 = vunpack.c.l.b16 %v9730
  %v11299 = vunpack.c.l.b16 %v9731
  %v11300 = vunpack.c.l.b16 %v9732
  %v11301 = vunpack.c.l.b16 %v9733
  %v11302 = vunpack.c.l.b16 %v9734
  %v11303 = vunpack.c.l.b16 %v9735
  %v11304 = vunpack.c.l.b16 %v9736
  %v11305 = vunpack.c.l.b16 %v9737
  %v11306 = vunpack.c.l.b16 %v9738
  %v11307 = vunpack.c.l.b16 %v9739
  %v11308 = vunpack.c.l.b16 %v9740
  %v11309 = vunpack.c.l.b16 %v9741
  %v11310 = vunpack.c.l.b16 %v9742
  %v11311 = vunpack.c.l.b16 %v9743
  %v11312 = vunpack.c.l.b16 %v9744
  %v11313 = vunpack.c.l.b16 %v9745
  %v11314 = vunpack.c.l.b16 %v9746
  %v11315 = vunpack.c.l.b16 %v9747
  %v11316 = vunpack.c.l.b16 %v9748
  %v11317 = vunpack.c.l.b16 %v9749
  %v11318 = vunpack.c.l.b16 %v9750
  %v11319 = vunpack.c.l.b16 %v9751
  %v11320 = vunpack.c.l.b16 %v9752
  %v11321 = vunpack.c.l.b16 %v9753
  %v11322 = vunpack.c.l.b16 %v9754
  %v11323 = vunpack.c.l.b16 %v9755
  %v11324 = vunpack.c.l.b16 %v9756
  %v11325 = vunpack.c.l.b16 %v9757
  %v11326 = vunpack.c.l.b16 %v9758
  %v11327 = vunpack.c.l.b16 %v9759
  %v11328 = vunpack.c.l.b16 %v9760
  %v11329 = vunpack.c.l.b16 %v9761
  %v11330 = vunpack.c.l.b16 %v9762
  %v11331 = vunpack.c.l.b16 %v9763
  %v11332 = vunpack.c.l.b16 %v9764
  %v11333 = vunpack.c.l.b16 %v9765
  %v11334 = vunpack.c.l.b16 %v9766
  %v11335 = vunpack.c.l.b16 %v9767
  %v11336 = vunpack.c.l.b16 %v9768
  %v11337 = vunpack.c.l.b16 %v9769
  %v11338 = vunpack.c.l.b16 %v9770
  %v11339 = vunpack.c.l.b16 %v9771
  %v11340 = vunpack.c.l.b16 %v9772
  %v11341 = vunpack.c.l.b16 %v9773
  %v11342 = vunpack.c.l.b16 %v9774
  %v11343 = vunpack.c.l.b16 %v9775
  %v11344 = vunpack.c.l.b16 %v9776
  %v11345 = vunpack.c.l.b16 %v9777
  %v11346 = vunpack.c.l.b16 %v9778
  %v11347 = vunpack.c.l.b16 %v9779
  %v11348 = vunpack.c.l.b16 %v9780
  %v11349 = vunpack.c.l.b16 %v9781
  %v11350 = vunpack.c.l.b16 %v9782
  %v11351 = vunpack.c.l.b16 %v9783
  %v11352 = vunpack.c.l.b16 %v9784
  %v11353 = vunpack.c.l.b16 %v9785
  %v11354 = vunpack.c.l.b16 %v9786
  %v11355 = vunpack.c.l.b16 %v9787
  %v11356 = vunpack.c.l.b16 %v9788
  %v11357 = vunpack.c.l.b16 %v9789
  %v11358 = vunpack.c.l.b16 %v9790
  %v11359 = vunpack.c.l.b16 %v9791
  %v11360 = vunpack.c.l.b16 %v9792
  %v11361 = vunpack.c.l.b16 %v9793
  %v11362 = vunpack.c.l.b16 %v9794
  %v11363 = vunpack.c.l.b16 %v9795
  %v11364 = vunpack.c.l.b16 %v9796
  %v11365 = vunpack.c.l.b16 %v9797
  %v11366 = vunpack.c.l.b16 %v9798
  %v11367 = vunpack.c.l.b16 %v9799
  %v11368 = vunpack.c.l.b16 %v9800
  %v11369 = vunpack.c.l.b16 %v9801
  %v11370 = vunpack.c.l.b16 %v9802
  %v11371 = vunpack.c.l.b16 %v9803
  %v11372 = vunpack.c.l.b16 %v9804
  %v11373 = vunpack.c.l.b16 %v9805
  %v11374 = vunpack.c.l.b16 %v9806
  %v11375 = vunpack.c.l.b16 %v9807
  %v11376 = vunpack.c.l.b16 %v9808
  %v11377 = vunpack.c.l.b16 %v9809
  %v11378 = vunpack.c.l.b16 %v9810
  %v11379 = vunpack.c.l.b16 %v9811
  %v11380 = vunpack.c.l.b16 %v9812
  %v11381 = vunpack.c.l.b16 %v9813
  %v11382 = vunpack.c.l.b16 %v9814
  %v11383 = vunpack.c.l.b16 %v9815
  %v11384 = vunpack.c.l.b16 %v9816
  %v11385 = vunpack.c.l.b16 %v9817
  %v11386 = vunpack.c.l.b16 %v9818
  %v11387 = vunpack.c.l.b16 %v9819
  %v11388 = vunpack.c.l.b16 %v9820
  %v11389 = vunpack.c.l.b16 %v9821
  %v11390 = vunpack.c.l.b16 %v9822
  %v11391 = vunpack.c.l.b16 %v9823
  %v11392 = vunpack.c.l.b16 %v9824
  %v11393 = vunpack.c.l.b16 %v9825
  %v11394 = vunpack.c.l.b16 %v9826
  %v11395 = vunpack.c.l.b16 %v9827
  %v11396 = vunpack.c.l.b16 %v9828
  %v11397 = vunpack.c.l.b16 %v9829
  %v11398 = vunpack.c.l.b16 %v9830
  %v11399 = vunpack.c.l.b16 %v9831
  %v11400 = vunpack.c.l.b16 %v9832
  %v11401 = vunpack.c.l.b16 %v9833
  %v11402 = vunpack.c.l.b16 %v9834
  %v11403 = vunpack.c.l.b16 %v9835
  %v11404 = vunpack.c.l.b16 %v9836
  %v11405 = vunpack.c.l.b16 %v9837
  %v11406 = vunpack.c.l.b16 %v9838
  %v11407 = vunpack.c.l.b16 %v9839
  %v11408 = vunpack.c.l.b16 %v9840
  %v11409 = vunpack.c.l.b16 %v9841
  %v11410 = vunpack.c.l.b16 %v9842
  %v11411 = vunpack.c.l.b16 %v9843
  %v11412 = vunpack.c.l.b16 %v9844
  %v11413 = vunpack.c.l.b16 %v9845
  %v11414 = vunpack.c.l.b16 %v9846
  %v11415 = vunpack.c.l.b16 %v9847
  %v11416 = vunpack.c.l.b16 %v9848
  %v11417 = vunpack.c.l.b16 %v9849
  %v11418 = vunpack.c.l.b16 %v9850
  %v11419 = vunpack.c.l.b16 %v9851
  %v11420 = vunpack.c.l.b16 %v9852
  %v11421 = vunpack.c.l.b16 %v9853
  %v11422 = vunpack.c.l.b16 %v9854
  %v11423 = vunpack.c.l.b16 %v9855
  %v11424 = vunpack.c.l.b16 %v9856
  %v11425 = vunpack.c.l.b16 %v9857
  %v11426 = vunpack.c.l.b16 %v9858
  %v11427 = vunpack.c.l.b16 %v9859
  %v11428 = vunpack.c.l.b16 %v9860
  %v11429 = vunpack.c.l.b16 %v9861
  %v11430 = vunpack.c.l.b16 %v9862
  %v11431 = vunpack.c.l.b16 %v9863
  %v11432 = vunpack.c.l.b16 %v9864
  %v11433 = vunpack.c.l.b16 %v9865
  %v11434 = vunpack.c.l.b16 %v9866
  %v11435 = vunpack.c.l.b16 %v9867
  %v11436 = vunpack.c.l.b16 %v9868
  %v11437 = vunpack.c.l.b16 %v9869
  %v11438 = vunpack.c.l.b16 %v9870
  %v11439 = vunpack.c.l.b16 %v9871
  %v11440 = vunpack.c.l.b16 %v9872
  %v11441 = vunpack.c.l.b16 %v9873
  %v11442 = vunpack.c.l.b16 %v9874
  %v11443 = vunpack.c.l.b16 %v9875
  %v11444 = vunpack.c.l.b16 %v9876
  %v11445 = vunpack.c.l.b16 %v9877
  %v11446 = vunpack.c.l.b16 %v9878
  %v11447 = vunpack.c.l.b16 %v9879
  %v11448 = vunpack.c.l.b16 %v9880
  %v11449 = vunpack.c.l.b16 %v9881
  %v11450 = vunpack.c.l.b16 %v9882
  %v11451 = vunpack.c.l.b16 %v9883
  %v11452 = vunpack.c.l.b16 %v9884
  %v11453 = vunpack.c.l.b16 %v9885
  %v11454 = vunpack.c.l.b16 %v9886
  %v11455 = vunpack.c.l.b16 %v9887
  %v11456 = vunpack.c.l.b16 %v9888
  %v11457 = vunpack.c.l.b16 %v9889
  %v11458 = vunpack.c.l.b16 %v9890
  %v11459 = vunpack.c.l.b16 %v9891
  %v11460 = vunpack.c.l.b16 %v9892
  %v11461 = vunpack.c.l.b16 %v9893
  %v11462 = vunpack.c.l.b16 %v9894
  %v11463 = vunpack.c.l.b16 %v9895
  %v11464 = vunpack.c.l.b16 %v9896
  %v11465 = vunpack.c.l.b16 %v9897
  %v11466 = vunpack.c.l.b16 %v9898
  %v11467 = vunpack.c.l.b16 %v9899
  %v11468 = vunpack.c.l.b16 %v9900
  %v11469 = vunpack.c.l.b16 %v9901
  %v11470 = vunpack.c.l.b16 %v9902
  %v11471 = vunpack.c.l.b16 %v9903
  %v11472 = vunpack.c.l.b16 %v9904
  %v11473 = vunpack.c.l.b16 %v9905
  %v11474 = vunpack.c.l.b16 %v9906
  %v11475 = vunpack.c.l.b16 %v9907
  %v11476 = vunpack.c.l.b16 %v9908
  %v11477 = vunpack.c.l.b16 %v9909
  %v11478 = vunpack.c.l.b16 %v9910
  %v11479 = vunpack.c.l.b16 %v9911
  %v11480 = vunpack.c.l.b16 %v9912
  %v11481 = vunpack.c.l.b16 %v9913
  %v11482 = vunpack.c.l.b16 %v9914
  %v11483 = vunpack.c.l.b16 %v9915
  %v11484 = vunpack.c.l.b16 %v9916
  %v11485 = vunpack.c.l.b16 %v9917
  %v11486 = vunpack.c.l.b16 %v9918
  %v11487 = vunpack.c.l.b16 %v9919
  %v11488 = vunpack.c.l.b16 %v9920
  %v11489 = vunpack.c.l.b16 %v9921
  %v11490 = vunpack.c.l.b16 %v9922
  %v11491 = vunpack.c.l.b16 %v9923
  %v11492 = vunpack.c.l.b16 %v9924
  %v11493 = vunpack.c.l.b16 %v9925
  %v11494 = vunpack.c.l.b16 %v9926
  %v11495 = vunpack.c.l.b16 %v9927
  %v11496 = vunpack.c.l.b16 %v9928
  %v11497 = vunpack.c.l.b16 %v9929
  %v11498 = vunpack.c.l.b16 %v9930
  %v11499 = vunpack.c.l.b16 %v9931
  %v11500 = vunpack.c.l.b16 %v9932
  %v11501 = vunpack.c.l.b16 %v9933
  %v11502 = vunpack.c.l.b16 %v9934
  %v11503 = vunpack.c.l.b16 %v9935
  %v11504 = vunpack.c.l.b16 %v9936
  %v11505 = vunpack.c.l.b16 %v9937
  %v11506 = vunpack.c.l.b16 %v9938
  %v11507 = vunpack.c.l.b16 %v9939
  %v11508 = vunpack.c.l.b16 %v9940
  %v11509 = vunpack.c.l.b16 %v9941
  %v11510 = vunpack.c.l.b16 %v9942
  %v11511 = vunpack.c.l.b16 %v9943
  %v11512 = vunpack.c.l.b16 %v9944
  %v11513 = vunpack.c.l.b16 %v9945
  %v11514 = vunpack.c.l.b16 %v9946
  %v11515 = vunpack.c.l.b16 %v9947
  %v11516 = vunpack.c.l.b16 %v9948
  %v11517 = vunpack.c.l.b16 %v9949
  %v11518 = vunpack.c.l.b16 %v9950
  %v11519 = vunpack.c.l.b16 %v9951
  %v11520 = vunpack.c.l.b16 %v9952
  %v11521 = vunpack.c.l.b16 %v9953
  %v11522 = vunpack.c.l.b16 %v9954
  %v11523 = vunpack.c.l.b16 %v9955
  %v11524 = vunpack.c.l.b16 %v9956
  %v11525 = vunpack.c.l.b16 %v9957
  %v11526 = vunpack.c.l.b16 %v9958
  %v11527 = vunpack.c.l.b16 %v9959
  %v11528 = vunpack.c.l.b16 %v9960
  %v11529 = vunpack.c.l.b16 %v9961
  %v11530 = vunpack.c.l.b16 %v9962
  %v11531 = vunpack.c.l.b16 %v9963
  %v11532 = vunpack.c.l.b16 %v9964
  %v11533 = vunpack.c.l.b16 %v9965
  %v11534 = vunpack.c.l.b16 %v9966
  %v11535 = vunpack.c.l.b16 %v9967
  %v11536 = vunpack.c.l.b16 %v9968
  %v11537 = vunpack.c.l.b16 %v9969
  %v11538 = vunpack.c.l.b16 %v9970
  %v11539 = vunpack.c.l.b16 %v9971
  %v11540 = vunpack.c.l.b16 %v9972
  %v11541 = vunpack.c.l.b16 %v9973
  %v11542 = vunpack.c.l.b16 %v9974
  %v11543 = vunpack.c.l.b16 %v9975
  %v11544 = vunpack.c.l.b16 %v9976
  %v11545 = vunpack.c.l.b16 %v9977
  %v11546 = vunpack.c.l.b16 %v9978
  %v11547 = vunpack.c.l.b16 %v9979
  %v11548 = vunpack.c.l.b16 %v9980
  %v11549 = vunpack.c.l.b16 %v9981
  %v11550 = vunpack.c.l.b16 %v9982
  %v11551 = vunpack.c.l.b16 %v9983
  %v11552 = vunpack.c.l.b16 %v9984
  %v11553 = vunpack.c.l.b16 %v9985
  %v11554 = vunpack.c.l.b16 %v9986
  %v11555 = vunpack.c.l.b16 %v9987
  %v11556 = vunpack.c.l.b16 %v9988
  %v11557 = vunpack.c.l.b16 %v9989
  %v11558 = vunpack.c.l.b16 %v9990
  %v11559 = vunpack.c.l.b16 %v9991
  %v11560 = vunpack.c.l.b16 %v9992
  %v11561 = vunpack.c.l.b16 %v9993
  %v11562 = vunpack.c.l.b16 %v9994
  %v11563 = vunpack.c.l.b16 %v9995
  %v11564 = vunpack.c.l.b16 %v9996
  %v11565 = vunpack.c.l.b16 %v9997
  %v11566 = vunpack.c.l.b16 %v9998
  %v11567 = vunpack.c.l.b16 %v9999
  %v11568 = vunpack.c.l.b16 %v10000
  %v11569 = vunpack.c.l.b16 %v10001
  %v11570 = vunpack.c.l.b16 %v10002
  %v11571 = vunpack.c.l.b16 %v10003
  %v11572 = vunpack.c.l.b16 %v10004
  %v11573 = vunpack.c.l.b16 %v10005
  %v11574 = vunpack.c.l.b16 %v10006
  %v11575 = vunpack.c.l.b16 %v10007
  %v11576 = vunpack.c.l.b16 %v10008
  %v11577 = vunpack.c.l.b16 %v10009
  %v11578 = vunpack.c.l.b16 %v10010
  %v11579 = vunpack.c.l.b16 %v10011
  %v11580 = vunpack.c.l.b16 %v10012
  %v11581 = vunpack.c.l.b16 %v10013
  %v11582 = vunpack.c.l.b16 %v10014
  %v11583 = vunpack.c.l.b16 %v10015
  %v11584 = vunpack.c.l.b16 %v10016
  %v11585 = vunpack.c.l.b16 %v10017
  %v11586 = vpack.c.b16 %v10803, %v10802
  %v11587 = vpack.c.b16 %v10805, %v10804
  %v11588 = vpack.c.b16 %v10807, %v10806
  %v11589 = vpack.c.b16 %v10809, %v10808
  %v11590 = vpack.c.b16 %v10811, %v10810
  %v11591 = vpack.c.b16 %v10813, %v10812
  %v11592 = vpack.c.b16 %v10815, %v10814
  %v11593 = vpack.c.b16 %v10817, %v10816
  %v11594 = vpack.c.b16 %v10819, %v10818
  %v11595 = vpack.c.b16 %v10821, %v10820
  %v11596 = vpack.c.b16 %v10823, %v10822
  %v11597 = vpack.c.b16 %v10825, %v10824
  %v11598 = vpack.c.b16 %v10827, %v10826
  %v11599 = vpack.c.b16 %v10829, %v10828
  %v11600 = vpack.c.b16 %v10831, %v10830
  %v11601 = vpack.c.b16 %v10833, %v10832
  %v11602 = vpack.c.b16 %v10835, %v10834
  %v11603 = vpack.c.b16 %v10837, %v10836
  %v11604 = vpack.c.b16 %v10839, %v10838
  %v11605 = vpack.c.b16 %v10841, %v10840
  %v11606 = vpack.c.b16 %v10843, %v10842
  %v11607 = vpack.c.b16 %v10845, %v10844
  %v11608 = vpack.c.b16 %v10847, %v10846
  %v11609 = vpack.c.b16 %v10849, %v10848
  %v11610 = vpack.c.b16 %v10851, %v10850
  %v11611 = vpack.c.b16 %v10853, %v10852
  %v11612 = vpack.c.b16 %v10855, %v10854
  %v11613 = vpack.c.b16 %v10857, %v10856
  %v11614 = vpack.c.b16 %v10859, %v10858
  %v11615 = vpack.c.b16 %v10861, %v10860
  %v11616 = vpack.c.b16 %v10863, %v10862
  %v11617 = vpack.c.b16 %v10865, %v10864
  %v11618 = vpack.c.b16 %v10867, %v10866
  %v11619 = vpack.c.b16 %v10869, %v10868
  %v11620 = vpack.c.b16 %v10871, %v10870
  %v11621 = vpack.c.b16 %v10873, %v10872
  %v11622 = vpack.c.b16 %v10875, %v10874
  %v11623 = vpack.c.b16 %v10877, %v10876
  %v11624 = vpack.c.b16 %v10879, %v10878
  %v11625 = vpack.c.b16 %v10881, %v10880
  %v11626 = vpack.c.b16 %v10883, %v10882
  %v11627 = vpack.c.b16 %v10885, %v10884
  %v11628 = vpack.c.b16 %v10887, %v10886
  %v11629 = vpack.c.b16 %v10889, %v10888
  %v11630 = vpack.c.b16 %v10891, %v10890
  %v11631 = vpack.c.b16 %v10893, %v10892
  %v11632 = vpack.c.b16 %v10895, %v10894
  %v11633 = vpack.c.b16 %v10897, %v10896
  %v11634 = vpack.c.b16 %v10899, %v10898
  %v11635 = vpack.c.b16 %v10901, %v10900
  %v11636 = vpack.c.b16 %v10903, %v10902
  %v11637 = vpack.c.b16 %v10905, %v10904
  %v11638 = vpack.c.b16 %v10907, %v10906
  %v11639 = vpack.c.b16 %v10909, %v10908
  %v11640 = vpack.c.b16 %v10911, %v10910
  %v11641 = vpack.c.b16 %v10913, %v10912
  %v11642 = vpack.c.b16 %v10915, %v10914
  %v11643 = vpack.c.b16 %v10917, %v10916
  %v11644 = vpack.c.b16 %v10919, %v10918
  %v11645 = vpack.c.b16 %v10921, %v10920
  %v11646 = vpack.c.b16 %v10923, %v10922
  %v11647 = vpack.c.b16 %v10925, %v10924
  %v11648 = vpack.c.b16 %v10927, %v10926
  %v11649 = vpack.c.b16 %v10929, %v10928
  %v11650 = vpack.c.b16 %v10931, %v10930
  %v11651 = vpack.c.b16 %v10933, %v10932
  %v11652 = vpack.c.b16 %v10935, %v10934
  %v11653 = vpack.c.b16 %v10937, %v10936
  %v11654 = vpack.c.b16 %v10939, %v10938
  %v11655 = vpack.c.b16 %v10941, %v10940
  %v11656 = vpack.c.b16 %v10943, %v10942
  %v11657 = vpack.c.b16 %v10945, %v10944
  %v11658 = vpack.c.b16 %v10947, %v10946
  %v11659 = vpack.c.b16 %v10949, %v10948
  %v11660 = vpack.c.b16 %v10951, %v10950
  %v11661 = vpack.c.b16 %v10953, %v10952
  %v11662 = vpack.c.b16 %v10955, %v10954
  %v11663 = vpack.c.b16 %v10957, %v10956
  %v11664 = vpack.c.b16 %v10959, %v10958
  %v11665 = vpack.c.b16 %v10961, %v10960
  %v11666 = vpack.c.b16 %v10963, %v10962
  %v11667 = vpack.c.b16 %v10965, %v10964
  %v11668 = vpack.c.b16 %v10967, %v10966
  %v11669 = vpack.c.b16 %v10969, %v10968
  %v11670 = vpack.c.b16 %v10971, %v10970
  %v11671 = vpack.c.b16 %v10973, %v10972
  %v11672 = vpack.c.b16 %v10975, %v10974
  %v11673 = vpack.c.b16 %v10977, %v10976
  %v11674 = vpack.c.b16 %v10979, %v10978
  %v11675 = vpack.c.b16 %v10981, %v10980
  %v11676 = vpack.c.b16 %v10983, %v10982
  %v11677 = vpack.c.b16 %v10985, %v10984
  %v11678 = vpack.c.b16 %v10987, %v10986
  %v11679 = vpack.c.b16 %v10989, %v10988
  %v11680 = vpack.c.b16 %v10991, %v10990
  %v11681 = vpack.c.b16 %v10993, %v10992
  %v11682 = vpack.c.b16 %v10995, %v10994
  %v11683 = vpack.c.b16 %v10997, %v10996
  %v11684 = vpack.c.b16 %v10999, %v10998
  %v11685 = vpack.c.b16 %v11001, %v11000
  %v11686 = vpack.c.b16 %v11003, %v11002
  %v11687 = vpack.c.b16 %v11005, %v11004
  %v11688 = vpack.c.b16 %v11007, %v11006
  %v11689 = vpack.c.b16 %v11009, %v11008
  %v11690 = vpack.c.b16 %v11011, %v11010
  %v11691 = vpack.c.b16 %v11013, %v11012
  %v11692 = vpack.c.b16 %v11015, %v11014
  %v11693 = vpack.c.b16 %v11017, %v11016
  %v11694 = vpack.c.b16 %v11019, %v11018
  %v11695 = vpack.c.b16 %v11021, %v11020
  %v11696 = vpack.c.b16 %v11023, %v11022
  %v11697 = vpack.c.b16 %v11025, %v11024
  %v11698 = vpack.c.b16 %v11027, %v11026
  %v11699 = vpack.c.b16 %v11029, %v11028
  %v11700 = vpack.c.b16 %v11031, %v11030
  %v11701 = vpack.c.b16 %v11033, %v11032
  %v11702 = vpack.c.b16 %v11035, %v11034
  %v11703 = vpack.c.b16 %v11037, %v11036
  %v11704 = vpack.c.b16 %v11039, %v11038
  %v11705 = vpack.c.b16 %v11041, %v11040
  %v11706 = vpack.c.b16 %v11043, %v11042
  %v11707 = vpack.c.b16 %v11045, %v11044
  %v11708 = vpack.c.b16 %v11047, %v11046
  %v11709 = vpack.c.b16 %v11049, %v11048
  %v11710 = vpack.c.b16 %v11051, %v11050
  %v11711 = vpack.c.b16 %v11053, %v11052
  %v11712 = vpack.c.b16 %v11055, %v11054
  %v11713 = vpack.c.b16 %v11057, %v11056
  %v11714 = vpack.c.b16 %v11059, %v11058
  %v11715 = vpack.c.b16 %v11061, %v11060
  %v11716 = vpack.c.b16 %v11063, %v11062
  %v11717 = vpack.c.b16 %v11065, %v11064
  %v11718 = vpack.c.b16 %v11067, %v11066
  %v11719 = vpack.c.b16 %v11069, %v11068
  %v11720 = vpack.c.b16 %v11071, %v11070
  %v11721 = vpack.c.b16 %v11073, %v11072
  %v11722 = vpack.c.b16 %v11075, %v11074
  %v11723 = vpack.c.b16 %v11077, %v11076
  %v11724 = vpack.c.b16 %v11079, %v11078
  %v11725 = vpack.c.b16 %v11081, %v11080
  %v11726 = vpack.c.b16 %v11083, %v11082
  %v11727 = vpack.c.b16 %v11085, %v11084
  %v11728 = vpack.c.b16 %v11087, %v11086
  %v11729 = vpack.c.b16 %v11089, %v11088
  %v11730 = vpack.c.b16 %v11091, %v11090
  %v11731 = vpack.c.b16 %v11093, %v11092
  %v11732 = vpack.c.b16 %v11095, %v11094
  %v11733 = vpack.c.b16 %v11097, %v11096
  %v11734 = vpack.c.b16 %v11099, %v11098
  %v11735 = vpack.c.b16 %v11101, %v11100
  %v11736 = vpack.c.b16 %v11103, %v11102
  %v11737 = vpack.c.b16 %v11105, %v11104
  %v11738 = vpack.c.b16 %v11107, %v11106
  %v11739 = vpack.c.b16 %v11109, %v11108
  %v11740 = vpack.c.b16 %v11111, %v11110
  %v11741 = vpack.c.b16 %v11113, %v11112
  %v11742 = vpack.c.b16 %v11115, %v11114
  %v11743 = vpack.c.b16 %v11117, %v11116
  %v11744 = vpack.c.b16 %v11119, %v11118
  %v11745 = vpack.c.b16 %v11121, %v11120
  %v11746 = vpack.c.b16 %v11123, %v11122
  %v11747 = vpack.c.b16 %v11125, %v11124
  %v11748 = vpack.c.b16 %v11127, %v11126
  %v11749 = vpack.c.b16 %v11129, %v11128
  %v11750 = vpack.c.b16 %v11131, %v11130
  %v11751 = vpack.c.b16 %v11133, %v11132
  %v11752 = vpack.c.b16 %v11135, %v11134
  %v11753 = vpack.c.b16 %v11137, %v11136
  %v11754 = vpack.c.b16 %v11139, %v11138
  %v11755 = vpack.c.b16 %v11141, %v11140
  %v11756 = vpack.c.b16 %v11143, %v11142
  %v11757 = vpack.c.b16 %v11145, %v11144
  %v11758 = vpack.c.b16 %v11147, %v11146
  %v11759 = vpack.c.b16 %v11149, %v11148
  %v11760 = vpack.c.b16 %v11151, %v11150
  %v11761 = vpack.c.b16 %v11153, %v11152
  %v11762 = vpack.c.b16 %v11155, %v11154
  %v11763 = vpack.c.b16 %v11157, %v11156
  %v11764 = vpack.c.b16 %v11159, %v11158
  %v11765 = vpack.c.b16 %v11161, %v11160
  %v11766 = vpack.c.b16 %v11163, %v11162
  %v11767 = vpack.c.b16 %v11165, %v11164
  %v11768 = vpack.c.b16 %v11167, %v11166
  %v11769 = vpack.c.b16 %v11169, %v11168
  %v11770 = vpack.c.b16 %v11171, %v11170
  %v11771 = vpack.c.b16 %v11173, %v11172
  %v11772 = vpack.c.b16 %v11175, %v11174
  %v11773 = vpack.c.b16 %v11177, %v11176
  %v11774 = vpack.c.b16 %v11179, %v11178
  %v11775 = vpack.c.b16 %v11181, %v11180
  %v11776 = vpack.c.b16 %v11183, %v11182
  %v11777 = vpack.c.b16 %v11185, %v11184
  %v11778 = vpack.c.b16 %v11187, %v11186
  %v11779 = vpack.c.b16 %v11189, %v11188
  %v11780 = vpack.c.b16 %v11191, %v11190
  %v11781 = vpack.c.b16 %v11193, %v11192
  %v11782 = vpack.c.b16 %v11195, %v11194
  %v11783 = vpack.c.b16 %v11197, %v11196
  %v11784 = vpack.c.b16 %v11199, %v11198
  %v11785 = vpack.c.b16 %v11201, %v11200
  %v11786 = vpack.c.b16 %v11203, %v11202
  %v11787 = vpack.c.b16 %v11205, %v11204
  %v11788 = vpack.c.b16 %v11207, %v11206
  %v11789 = vpack.c.b16 %v11209, %v11208
  %v11790 = vpack.c.b16 %v11211, %v11210
  %v11791 = vpack.c.b16 %v11213, %v11212
  %v11792 = vpack.c.b16 %v11215, %v11214
  %v11793 = vpack.c.b16 %v11217, %v11216
  %v11794 = vpack.c.b16 %v11219, %v11218
  %v11795 = vpack.c.b16 %v11221, %v11220
  %v11796 = vpack.c.b16 %v11223, %v11222
  %v11797 = vpack.c.b16 %v11225, %v11224
  %v11798 = vpack.c.b16 %v11227, %v11226
  %v11799 = vpack.c.b16 %v11229, %v11228
  %v11800 = vpack.c.b16 %v11231, %v11230
  %v11801 = vpack.c.b16 %v11233, %v11232
  %v11802 = vpack.c.b16 %v11235, %v11234
  %v11803 = vpack.c.b16 %v11237, %v11236
  %v11804 = vpack.c.b16 %v11239, %v11238
  %v11805 = vpack.c.b16 %v11241, %v11240
  %v11806 = vpack.c.b16 %v11243, %v11242
  %v11807 = vpack.c.b16 %v11245, %v11244
  %v11808 = vpack.c.b16 %v11247, %v11246
  %v11809 = vpack.c.b16 %v11249, %v11248
  %v11810 = vpack.c.b16 %v11251, %v11250
  %v11811 = vpack.c.b16 %v11253, %v11252
  %v11812 = vpack.c.b16 %v11255, %v11254
  %v11813 = vpack.c.b16 %v11257, %v11256
  %v11814 = vpack.c.b16 %v11259, %v11258
  %v11815 = vpack.c.b16 %v11261, %v11260
  %v11816 = vpack.c.b16 %v11263, %v11262
  %v11817 = vpack.c.b16 %v11265, %v11264
  %v11818 = vpack.c.b16 %v11267, %v11266
  %v11819 = vpack.c.b16 %v11269, %v11268
  %v11820 = vpack.c.b16 %v11271, %v11270
  %v11821 = vpack.c.b16 %v11273, %v11272
  %v11822 = vpack.c.b16 %v11275, %v11274
  %v11823 = vpack.c.b16 %v11277, %v11276
  %v11824 = vpack.c.b16 %v11279, %v11278
  %v11825 = vpack.c.b16 %v11281, %v11280
  %v11826 = vpack.c.b16 %v11283, %v11282
  %v11827 = vpack.c.b16 %v11285, %v11284
  %v11828 = vpack.c.b16 %v11287, %v11286
  %v11829 = vpack.c.b16 %v11289, %v11288
  %v11830 = vpack.c.b16 %v11291, %v11290
  %v11831 = vpack.c.b16 %v11293, %v11292
  %v11832 = vpack.c.b16 %v11295, %v11294
  %v11833 = vpack.c.b16 %v11297, %v11296
  %v11834 = vpack.c.b16 %v11299, %v11298
  %v11835 = vpack.c.b16 %v11301, %v11300
  %v11836 = vpack.c.b16 %v11303, %v11302
  %v11837 = vpack.c.b16 %v11305, %v11304
  %v11838 = vpack.c.b16 %v11307, %v11306
  %v11839 = vpack.c.b16 %v11309, %v11308
  %v11840 = vpack.c.b16 %v11311, %v11310
  %v11841 = vpack.c.b16 %v11313, %v11312
  %v11842 = vpack.c.b16 %v11315, %v11314
  %v11843 = vpack.c.b16 %v11317, %v11316
  %v11844 = vpack.c.b16 %v11319, %v11318
  %v11845 = vpack.c.b16 %v11321, %v11320
  %v11846 = vpack.c.b16 %v11323, %v11322
  %v11847 = vpack.c.b16 %v11325, %v11324
  %v11848 = vpack.c.b16 %v11327, %v11326
  %v11849 = vpack.c.b16 %v11329, %v11328
  %v11850 = vpack.c.b16 %v11331, %v11330
  %v11851 = vpack.c.b16 %v11333, %v11332
  %v11852 = vpack.c.b16 %v11335, %v11334
  %v11853 = vpack.c.b16 %v11337, %v11336
  %v11854 = vpack.c.b16 %v11339, %v11338
  %v11855 = vpack.c.b16 %v11341, %v11340
  %v11856 = vpack.c.b16 %v11343, %v11342
  %v11857 = vpack.c.b16 %v11345, %v11344
  %v11858 = vpack.c.b16 %v11347, %v11346
  %v11859 = vpack.c.b16 %v11349, %v11348
  %v11860 = vpack.c.b16 %v11351, %v11350
  %v11861 = vpack.c.b16 %v11353, %v11352
  %v11862 = vpack.c.b16 %v11355, %v11354
  %v11863 = vpack.c.b16 %v11357, %v11356
  %v11864 = vpack.c.b16 %v11359, %v11358
  %v11865 = vpack.c.b16 %v11361, %v11360
  %v11866 = vpack.c.b16 %v11363, %v11362
  %v11867 = vpack.c.b16 %v11365, %v11364
  %v11868 = vpack.c.b16 %v11367, %v11366
  %v11869 = vpack.c.b16 %v11369, %v11368
  %v11870 = vpack.c.b16 %v11371, %v11370
  %v11871 = vpack.c.b16 %v11373, %v11372
  %v11872 = vpack.c.b16 %v11375, %v11374
  %v11873 = vpack.c.b16 %v11377, %v11376
  %v11874 = vpack.c.b16 %v11379, %v11378
  %v11875 = vpack.c.b16 %v11381, %v11380
  %v11876 = vpack.c.b16 %v11383, %v11382
  %v11877 = vpack.c.b16 %v11385, %v11384
  %v11878 = vpack.c.b16 %v11387, %v11386
  %v11879 = vpack.c.b16 %v11389, %v11388
  %v11880 = vpack.c.b16 %v11391, %v11390
  %v11881 = vpack.c.b16 %v11393, %v11392
  %v11882 = vpack.c.b16 %v11395, %v11394
  %v11883 = vpack.c.b16 %v11397, %v11396
  %v11884 = vpack.c.b16 %v11399, %v11398
  %v11885 = vpack.c.b16 %v11401, %v11400
  %v11886 = vpack.c.b16 %v11403, %v11402
  %v11887 = vpack.c.b16 %v11405, %v11404
  %v11888 = vpack.c.b16 %v11407, %v11406
  %v11889 = vpack.c.b16 %v11409, %v11408
  %v11890 = vpack.c.b16 %v11411, %v11410
  %v11891 = vpack.c.b16 %v11413, %v11412
  %v11892 = vpack.c.b16 %v11415, %v11414
  %v11893 = vpack.c.b16 %v11417, %v11416
  %v11894 = vpack.c.b16 %v11419, %v11418
  %v11895 = vpack.c.b16 %v11421, %v11420
  %v11896 = vpack.c.b16 %v11423, %v11422
  %v11897 = vpack.c.b16 %v11425, %v11424
  %v11898 = vpack.c.b16 %v11427, %v11426
  %v11899 = vpack.c.b16 %v11429, %v11428
  %v11900 = vpack.c.b16 %v11431, %v11430
  %v11901 = vpack.c.b16 %v11433, %v11432
  %v11902 = vpack.c.b16 %v11435, %v11434
  %v11903 = vpack.c.b16 %v11437, %v11436
  %v11904 = vpack.c.b16 %v11439, %v11438
  %v11905 = vpack.c.b16 %v11441, %v11440
  %v11906 = vpack.c.b16 %v11443, %v11442
  %v11907 = vpack.c.b16 %v11445, %v11444
  %v11908 = vpack.c.b16 %v11447, %v11446
  %v11909 = vpack.c.b16 %v11449, %v11448
  %v11910 = vpack.c.b16 %v11451, %v11450
  %v11911 = vpack.c.b16 %v11453, %v11452
  %v11912 = vpack.c.b16 %v11455, %v11454
  %v11913 = vpack.c.b16 %v11457, %v11456
  %v11914 = vpack.c.b16 %v11459, %v11458
  %v11915 = vpack.c.b16 %v11461, %v11460
  %v11916 = vpack.c.b16 %v11463, %v11462
  %v11917 = vpack.c.b16 %v11465, %v11464
  %v11918 = vpack.c.b16 %v11467, %v11466
  %v11919 = vpack.c.b16 %v11469, %v11468
  %v11920 = vpack.c.b16 %v11471, %v11470
  %v11921 = vpack.c.b16 %v11473, %v11472
  %v11922 = vpack.c.b16 %v11475, %v11474
  %v11923 = vpack.c.b16 %v11477, %v11476
  %v11924 = vpack.c.b16 %v11479, %v11478
  %v11925 = vpack.c.b16 %v11481, %v11480
  %v11926 = vpack.c.b16 %v11483, %v11482
  %v11927 = vpack.c.b16 %v11485, %v11484
  %v11928 = vpack.c.b16 %v11487, %v11486
  %v11929 = vpack.c.b16 %v11489, %v11488
  %v11930 = vpack.c.b16 %v11491, %v11490
  %v11931 = vpack.c.b16 %v11493, %v11492
  %v11932 = vpack.c.b16 %v11495, %v11494
  %v11933 = vpack.c.b16 %v11497, %v11496
  %v11934 = vpack.c.b16 %v11499, %v11498
  %v11935 = vpack.c.b16 %v11501, %v11500
  %v11936 = vpack.c.b16 %v11503, %v11502
  %v11937 = vpack.c.b16 %v11505, %v11504
  %v11938 = vpack.c.b16 %v11507, %v11506
  %v11939 = vpack.c.b16 %v11509, %v11508
  %v11940 = vpack.c.b16 %v11511, %v11510
  %v11941 = vpack.c.b16 %v11513, %v11512
  %v11942 = vpack.c.b16 %v11515, %v11514
  %v11943 = vpack.c.b16 %v11517, %v11516
  %v11944 = vpack.c.b16 %v11519, %v11518
  %v11945 = vpack.c.b16 %v11521, %v11520
  %v11946 = vpack.c.b16 %v11523, %v11522
  %v11947 = vpack.c.b16 %v11525, %v11524
  %v11948 = vpack.c.b16 %v11527, %v11526
  %v11949 = vpack.c.b16 %v11529, %v11528
  %v11950 = vpack.c.b16 %v11531, %v11530
  %v11951 = vpack.c.b16 %v11533, %v11532
  %v11952 = vpack.c.b16 %v11535, %v11534
  %v11953 = vpack.c.b16 %v11537, %v11536
  %v11954 = vpack.c.b16 %v11539, %v11538
  %v11955 = vpack.c.b16 %v11541, %v11540
  %v11956 = vpack.c.b16 %v11543, %v11542
  %v11957 = vpack.c.b16 %v11545, %v11544
  %v11958 = vpack.c.b16 %v11547, %v11546
  %v11959 = vpack.c.b16 %v11549, %v11548
  %v11960 = vpack.c.b16 %v11551, %v11550
  %v11961 = vpack.c.b16 %v11553, %v11552
  %v11962 = vpack.c.b16 %v11555, %v11554
  %v11963 = vpack.c.b16 %v11557, %v11556
  %v11964 = vpack.c.b16 %v11559, %v11558
  %v11965 = vpack.c.b16 %v11561, %v11560
  %v11966 = vpack.c.b16 %v11563, %v11562
  %v11967 = vpack.c.b16 %v11565, %v11564
  %v11968 = vpack.c.b16 %v11567, %v11566
  %v11969 = vpack.c.b16 %v11569, %v11568
  %v11970 = vpack.c.b16 %v11571, %v11570
  %v11971 = vpack.c.b16 %v11573, %v11572
  %v11972 = vpack.c.b16 %v11575, %v11574
  %v11973 = vpack.c.b16 %v11577, %v11576
  %v11974 = vpack.c.b16 %v11579, %v11578
  %v11975 = vpack.c.b16 %v11581, %v11580
  %v11976 = vpack.c.b16 %v11583, %v11582
  %v11977 = vpack.c.b16 %v11585, %v11584
  %12370 = vmatprep.subr.bf16.mxu0 0
  %12371 = vmatpush1.bf16.msra.mxu0 %v11586
  %12372 = vmatprep.subr.bf16.mxu0 0
  %12373 = vmatpush1.bf16.msra.mxu0 %v11587
  %12374 = vmatprep.subr.bf16.mxu0 0
  %12375 = vmatpush1.bf16.msra.mxu0 %v11588
  %12376 = vmatprep.subr.bf16.mxu0 0
  %12377 = vmatpush1.bf16.msra.mxu0 %v11589
  %12378 = vmatprep.subr.bf16.mxu0 0
  %12379 = vmatpush1.bf16.msra.mxu0 %v11590
  %12380 = vmatprep.subr.bf16.mxu0 0
  %12381 = vmatpush1.bf16.msra.mxu0 %v11591
  %12382 = vmatprep.subr.bf16.mxu0 0
  %12383 = vmatpush1.bf16.msra.mxu0 %v11592
  %12384 = vmatprep.subr.bf16.mxu0 0
  %12385 = vmatpush1.bf16.msra.mxu0 %v11593
  %12386 = vmatprep.subr.bf16.mxu0 0
  %12387 = vmatpush1.bf16.msra.mxu0 %v11594
  %12388 = vmatprep.subr.bf16.mxu0 0
  %12389 = vmatpush1.bf16.msra.mxu0 %v11595
  %12390 = vmatprep.subr.bf16.mxu0 0
  %12391 = vmatpush1.bf16.msra.mxu0 %v11596
  %12392 = vmatprep.subr.bf16.mxu0 0
  %12393 = vmatpush1.bf16.msra.mxu0 %v11597
  %12394 = vmatprep.subr.bf16.mxu0 0
  %12395 = vmatpush1.bf16.msra.mxu0 %v11598
  %12396 = vmatprep.subr.bf16.mxu0 0
  %12397 = vmatpush1.bf16.msra.mxu0 %v11599
  %12398 = vmatprep.subr.bf16.mxu0 0
  %12399 = vmatpush1.bf16.msra.mxu0 %v11600
  %12400 = vmatprep.subr.bf16.mxu0 0
  %12401 = vmatpush1.bf16.msra.mxu0 %v11601
  %12402 = vmatprep.mubr.bf16.mxu0 %v9137
  %12403 = vmatmul.mubr.bf16.gmra.mrb[0].mxu0 %v9136
  %v12404 = vpop.f32.mrb[0].mxu0
  %v12405 = vadd.f32 0.0, %v12404
  %v12406 = vpop.f32.mrb[0].mxu0
  %v12407 = vpop.f32.mrb[0].mxu0
  %v12408 = vpop.f32.mrb[0].mxu0
  %12409 = vdwg.mxu0
  %12410 = vmatprep.subr.bf16.mxu0 0
  %12411 = vmatpush1.bf16.msra.mxu0 %v11602
  %12412 = vmatprep.subr.bf16.mxu0 0
  %12413 = vmatpush1.bf16.msra.mxu0 %v11603
  %12414 = vmatprep.subr.bf16.mxu0 0
  %12415 = vmatpush1.bf16.msra.mxu0 %v11604
  %12416 = vmatprep.subr.bf16.mxu0 0
  %12417 = vmatpush1.bf16.msra.mxu0 %v11605
  %12418 = vmatprep.subr.bf16.mxu0 0
  %12419 = vmatpush1.bf16.msra.mxu0 %v11606
  %12420 = vmatprep.subr.bf16.mxu0 0
  %12421 = vmatpush1.bf16.msra.mxu0 %v11607
  %12422 = vmatprep.subr.bf16.mxu0 0
  %12423 = vmatpush1.bf16.msra.mxu0 %v11608
  %12424 = vmatprep.subr.bf16.mxu0 0
  %12425 = vmatpush1.bf16.msra.mxu0 %v11609
  %12426 = vmatprep.subr.bf16.mxu0 0
  %12427 = vmatpush1.bf16.msra.mxu0 %v11610
  %12428 = vmatprep.subr.bf16.mxu0 0
  %12429 = vmatpush1.bf16.msra.mxu0 %v11611
  %12430 = vmatprep.subr.bf16.mxu0 0
  %12431 = vmatpush1.bf16.msra.mxu0 %v11612
  %12432 = vmatprep.subr.bf16.mxu0 0
  %12433 = vmatpush1.bf16.msra.mxu0 %v11613
  %12434 = vmatprep.subr.bf16.mxu0 0
  %12435 = vmatpush1.bf16.msra.mxu0 %v11614
  %12436 = vmatprep.subr.bf16.mxu0 0
  %12437 = vmatpush1.bf16.msra.mxu0 %v11615
  %12438 = vmatprep.subr.bf16.mxu0 0
  %12439 = vmatpush1.bf16.msra.mxu0 %v11616
  %12440 = vmatprep.subr.bf16.mxu0 0
  %12441 = vmatpush1.bf16.msra.mxu0 %v11617
  %12442 = vmatprep.mubr.bf16.mxu0 %v9139
  %12443 = vmatmul.mubr.bf16.gmra.mrb[0].mxu0 %v9138
  %v12444 = vpop.f32.mrb[0].mxu0
  %v12445 = vadd.f32 %v12405, %v12444
  %v12446 = vpop.f32.mrb[0].mxu0
  %v12447 = vpop.f32.mrb[0].mxu0
  %v12448 = vpop.f32.mrb[0].mxu0
  %12449 = vdwg.mxu0
  %12450 = vmatprep.subr.bf16.mxu0 0
  %12451 = vmatpush1.bf16.msra.mxu0 %v11618
  %12452 = vmatprep.subr.bf16.mxu0 0
  %12453 = vmatpush1.bf16.msra.mxu0 %v11619
  %12454 = vmatprep.subr.bf16.mxu0 0
  %12455 = vmatpush1.bf16.msra.mxu0 %v11620
  %12456 = vmatprep.subr.bf16.mxu0 0
  %12457 = vmatpush1.bf16.msra.mxu0 %v11621
  %12458 = vmatprep.subr.bf16.mxu0 0
  %12459 = vmatpush1.bf16.msra.mxu0 %v11622
  %12460 = vmatprep.subr.bf16.mxu0 0
  %12461 = vmatpush1.bf16.msra.mxu0 %v11623
  %12462 = vmatprep.subr.bf16.mxu0 0
  %12463 = vmatpush1.bf16.msra.mxu0 %v11624
  %12464 = vmatprep.subr.bf16.mxu0 0
  %12465 = vmatpush1.bf16.msra.mxu0 %v11625
  %12466 = vmatprep.subr.bf16.mxu0 0
  %12467 = vmatpush1.bf16.msra.mxu0 %v11626
  %12468 = vmatprep.subr.bf16.mxu0 0
  %12469 = vmatpush1.bf16.msra.mxu0 %v11627
  %12470 = vmatprep.subr.bf16.mxu0 0
  %12471 = vmatpush1.bf16.msra.mxu0 %v11628
  %12472 = vmatprep.subr.bf16.mxu0 0
  %12473 = vmatpush1.bf16.msra.mxu0 %v11629
  %12474 = vmatprep.subr.bf16.mxu0 0
  %12475 = vmatpush1.bf16.msra.mxu0 %v11630
  %12476 = vmatprep.subr.bf16.mxu0 0
  %12477 = vmatpush1.bf16.msra.mxu0 %v11631
  %12478 = vmatprep.subr.bf16.mxu0 0
  %12479 = vmatpush1.bf16.msra.mxu0 %v11632
  %12480 = vmatprep.subr.bf16.mxu0 0
  %12481 = vmatpush1.bf16.msra.mxu0 %v11633
  %12482 = vmatprep.mubr.bf16.mxu0 %v9141
  %12483 = vmatmul.mubr.bf16.gmra.mrb[0].mxu0 %v9140
  %v12484 = vpop.f32.mrb[0].mxu0
  %v12485 = vadd.f32 %v12445, %v12484
  %v12486 = vpop.f32.mrb[0].mxu0
  %v12487 = vpop.f32.mrb[0].mxu0
  %v12488 = vpop.f32.mrb[0].mxu0
  %12489 = vdwg.mxu0
  %12490 = vmatprep.subr.bf16.mxu0 0
  %12491 = vmatpush1.bf16.msra.mxu0 %v11634
  %12492 = vmatprep.subr.bf16.mxu0 0
  %12493 = vmatpush1.bf16.msra.mxu0 %v11635
  %12494 = vmatprep.subr.bf16.mxu0 0
  %12495 = vmatpush1.bf16.msra.mxu0 %v11636
  %12496 = vmatprep.subr.bf16.mxu0 0
  %12497 = vmatpush1.bf16.msra.mxu0 %v11637
  %12498 = vmatprep.subr.bf16.mxu0 0
  %12499 = vmatpush1.bf16.msra.mxu0 %v11638
  %12500 = vmatprep.subr.bf16.mxu0 0
  %12501 = vmatpush1.bf16.msra.mxu0 %v11639
  %12502 = vmatprep.subr.bf16.mxu0 0
  %12503 = vmatpush1.bf16.msra.mxu0 %v11640
  %12504 = vmatprep.subr.bf16.mxu0 0
  %12505 = vmatpush1.bf16.msra.mxu0 %v11641
  %12506 = vmatprep.subr.bf16.mxu0 0
  %12507 = vmatpush1.bf16.msra.mxu0 %v11642
  %12508 = vmatprep.subr.bf16.mxu0 0
  %12509 = vmatpush1.bf16.msra.mxu0 %v11643
  %12510 = vmatprep.subr.bf16.mxu0 0
  %12511 = vmatpush1.bf16.msra.mxu0 %v11644
  %12512 = vmatprep.subr.bf16.mxu0 0
  %12513 = vmatpush1.bf16.msra.mxu0 %v11645
  %12514 = vmatprep.subr.bf16.mxu0 0
  %12515 = vmatpush1.bf16.msra.mxu0 %v11646
  %12516 = vmatprep.subr.bf16.mxu0 0
  %12517 = vmatpush1.bf16.msra.mxu0 %v11647
  %12518 = vmatprep.subr.bf16.mxu0 0
  %12519 = vmatpush1.bf16.msra.mxu0 %v11648
  %12520 = vmatprep.subr.bf16.mxu0 0
  %12521 = vmatpush1.bf16.msra.mxu0 %v11649
  %12522 = vmatprep.mubr.bf16.mxu0 %v9143
  %12523 = vmatmul.mubr.bf16.gmra.mrb[0].mxu0 %v9142
  %v12524 = vpop.f32.mrb[0].mxu0
  %v12525 = vadd.f32 %v12485, %v12524
  %v12526 = vpop.f32.mrb[0].mxu0
  %v12527 = vpop.f32.mrb[0].mxu0
  %v12528 = vpop.f32.mrb[0].mxu0
  %12529 = vdwg.mxu0
  %12530 = vmatprep.subr.bf16.mxu0 0
  %12531 = vmatpush1.bf16.msra.mxu0 %v11650
  %12532 = vmatprep.subr.bf16.mxu0 0
  %12533 = vmatpush1.bf16.msra.mxu0 %v11651
  %12534 = vmatprep.subr.bf16.mxu0 0
  %12535 = vmatpush1.bf16.msra.mxu0 %v11652
  %12536 = vmatprep.subr.bf16.mxu0 0
  %12537 = vmatpush1.bf16.msra.mxu0 %v11653
  %12538 = vmatprep.subr.bf16.mxu0 0
  %12539 = vmatpush1.bf16.msra.mxu0 %v11654
  %12540 = vmatprep.subr.bf16.mxu0 0
  %12541 = vmatpush1.bf16.msra.mxu0 %v11655
  %12542 = vmatprep.subr.bf16.mxu0 0
  %12543 = vmatpush1.bf16.msra.mxu0 %v11656
  %12544 = vmatprep.subr.bf16.mxu0 0
  %12545 = vmatpush1.bf16.msra.mxu0 %v11657
  %12546 = vmatprep.subr.bf16.mxu0 0
  %12547 = vmatpush1.bf16.msra.mxu0 %v11658
  %12548 = vmatprep.subr.bf16.mxu0 0
  %12549 = vmatpush1.bf16.msra.mxu0 %v11659
  %12550 = vmatprep.subr.bf16.mxu0 0
  %12551 = vmatpush1.bf16.msra.mxu0 %v11660
  %12552 = vmatprep.subr.bf16.mxu0 0
  %12553 = vmatpush1.bf16.msra.mxu0 %v11661
  %12554 = vmatprep.subr.bf16.mxu0 0
  %12555 = vmatpush1.bf16.msra.mxu0 %v11662
  %12556 = vmatprep.subr.bf16.mxu0 0
  %12557 = vmatpush1.bf16.msra.mxu0 %v11663
  %12558 = vmatprep.subr.bf16.mxu0 0
  %12559 = vmatpush1.bf16.msra.mxu0 %v11664
  %12560 = vmatprep.subr.bf16.mxu0 0
  %12561 = vmatpush1.bf16.msra.mxu0 %v11665
  %12562 = vmatprep.mubr.bf16.mxu0 %v9145
  %12563 = vmatmul.mubr.bf16.gmra.mrb[0].mxu0 %v9144
  %v12564 = vpop.f32.mrb[0].mxu0
  %v12565 = vadd.f32 %v12525, %v12564
  %v12566 = vpop.f32.mrb[0].mxu0
  %v12567 = vpop.f32.mrb[0].mxu0
  %v12568 = vpop.f32.mrb[0].mxu0
  %12569 = vdwg.mxu0
  %12570 = vmatprep.subr.bf16.mxu0 0
  %12571 = vmatpush1.bf16.msra.mxu0 %v11666
  %12572 = vmatprep.subr.bf16.mxu0 0
  %12573 = vmatpush1.bf16.msra.mxu0 %v11667
  %12574 = vmatprep.subr.bf16.mxu0 0
  %12575 = vmatpush1.bf16.msra.mxu0 %v11668
  %12576 = vmatprep.subr.bf16.mxu0 0
  %12577 = vmatpush1.bf16.msra.mxu0 %v11669
  %12578 = vmatprep.subr.bf16.mxu0 0
  %12579 = vmatpush1.bf16.msra.mxu0 %v11670
  %12580 = vmatprep.subr.bf16.mxu0 0
  %12581 = vmatpush1.bf16.msra.mxu0 %v11671
  %12582 = vmatprep.subr.bf16.mxu0 0
  %12583 = vmatpush1.bf16.msra.mxu0 %v11672
  %12584 = vmatprep.subr.bf16.mxu0 0
  %12585 = vmatpush1.bf16.msra.mxu0 %v11673
  %12586 = vmatprep.subr.bf16.mxu0 0
  %12587 = vmatpush1.bf16.msra.mxu0 %v11674
  %12588 = vmatprep.subr.bf16.mxu0 0
  %12589 = vmatpush1.bf16.msra.mxu0 %v11675
  %12590 = vmatprep.subr.bf16.mxu0 0
  %12591 = vmatpush1.bf16.msra.mxu0 %v11676
  %12592 = vmatprep.subr.bf16.mxu0 0
  %12593 = vmatpush1.bf16.msra.mxu0 %v11677
  %12594 = vmatprep.subr.bf16.mxu0 0
  %12595 = vmatpush1.bf16.msra.mxu0 %v11678
  %12596 = vmatprep.subr.bf16.mxu0 0
  %12597 = vmatpush1.bf16.msra.mxu0 %v11679
  %12598 = vmatprep.subr.bf16.mxu0 0
  %12599 = vmatpush1.bf16.msra.mxu0 %v11680
  %12600 = vmatprep.subr.bf16.mxu0 0
  %12601 = vmatpush1.bf16.msra.mxu0 %v11681
  %12602 = vmatprep.mubr.bf16.mxu0 %v9147
  %12603 = vmatmul.mubr.bf16.gmra.mrb[0].mxu0 %v9146
  %v12604 = vpop.f32.mrb[0].mxu0
  %v12605 = vadd.f32 %v12565, %v12604
  %v12606 = vpop.f32.mrb[0].mxu0
  %v12607 = vpop.f32.mrb[0].mxu0
  %v12608 = vpop.f32.mrb[0].mxu0
  %12609 = vdwg.mxu0
  %12610 = vmatprep.subr.bf16.mxu0 0
  %12611 = vmatpush1.bf16.msra.mxu0 %v11682
  %12612 = vmatprep.subr.bf16.mxu0 0
  %12613 = vmatpush1.bf16.msra.mxu0 %v11683
  %12614 = vmatprep.subr.bf16.mxu0 0
  %12615 = vmatpush1.bf16.msra.mxu0 %v11684
  %12616 = vmatprep.subr.bf16.mxu0 0
  %12617 = vmatpush1.bf16.msra.mxu0 %v11685
  %12618 = vmatprep.subr.bf16.mxu0 0
  %12619 = vmatpush1.bf16.msra.mxu0 %v11686
  %12620 = vmatprep.subr.bf16.mxu0 0
  %12621 = vmatpush1.bf16.msra.mxu0 %v11687
  %12622 = vmatprep.subr.bf16.mxu0 0
  %12623 = vmatpush1.bf16.msra.mxu0 %v11688
  %12624 = vmatprep.subr.bf16.mxu0 0
  %12625 = vmatpush1.bf16.msra.mxu0 %v11689
  %12626 = vmatprep.subr.bf16.mxu0 0
  %12627 = vmatpush1.bf16.msra.mxu0 %v11690
  %12628 = vmatprep.subr.bf16.mxu0 0
  %12629 = vmatpush1.bf16.msra.mxu0 %v11691
  %12630 = vmatprep.subr.bf16.mxu0 0
  %12631 = vmatpush1.bf16.msra.mxu0 %v11692
  %12632 = vmatprep.subr.bf16.mxu0 0
  %12633 = vmatpush1.bf16.msra.mxu0 %v11693
  %12634 = vmatprep.subr.bf16.mxu0 0
  %12635 = vmatpush1.bf16.msra.mxu0 %v11694
  %12636 = vmatprep.subr.bf16.mxu0 0
  %12637 = vmatpush1.bf16.msra.mxu0 %v11695
  %12638 = vmatprep.subr.bf16.mxu0 0
  %12639 = vmatpush1.bf16.msra.mxu0 %v11696
  %12640 = vmatprep.subr.bf16.mxu0 0
  %12641 = vmatpush1.bf16.msra.mxu0 %v11697
  %12642 = vmatprep.mubr.bf16.mxu0 %v9149
  %12643 = vmatmul.mubr.bf16.gmra.mrb[0].mxu0 %v9148
  %v12644 = vpop.f32.mrb[0].mxu0
  %v12645 = vadd.f32 %v12605, %v12644
  %v12646 = vpop.f32.mrb[0].mxu0
  %v12647 = vpop.f32.mrb[0].mxu0
  %v12648 = vpop.f32.mrb[0].mxu0
  %12649 = vdwg.mxu0
  %12650 = vmatprep.subr.bf16.mxu0 0
  %12651 = vmatpush1.bf16.msra.mxu0 %v11698
  %12652 = vmatprep.subr.bf16.mxu0 0
  %12653 = vmatpush1.bf16.msra.mxu0 %v11699
  %12654 = vmatprep.subr.bf16.mxu0 0
  %12655 = vmatpush1.bf16.msra.mxu0 %v11700
  %12656 = vmatprep.subr.bf16.mxu0 0
  %12657 = vmatpush1.bf16.msra.mxu0 %v11701
  %12658 = vmatprep.subr.bf16.mxu0 0
  %12659 = vmatpush1.bf16.msra.mxu0 %v11702
  %12660 = vmatprep.subr.bf16.mxu0 0
  %12661 = vmatpush1.bf16.msra.mxu0 %v11703
  %12662 = vmatprep.subr.bf16.mxu0 0
  %12663 = vmatpush1.bf16.msra.mxu0 %v11704
  %12664 = vmatprep.subr.bf16.mxu0 0
  %12665 = vmatpush1.bf16.msra.mxu0 %v11705
  %12666 = vmatprep.subr.bf16.mxu0 0
  %12667 = vmatpush1.bf16.msra.mxu0 %v11706
  %12668 = vmatprep.subr.bf16.mxu0 0
  %12669 = vmatpush1.bf16.msra.mxu0 %v11707
  %12670 = vmatprep.subr.bf16.mxu0 0
  %12671 = vmatpush1.bf16.msra.mxu0 %v11708
  %12672 = vmatprep.subr.bf16.mxu0 0
  %12673 = vmatpush1.bf16.msra.mxu0 %v11709
  %12674 = vmatprep.subr.bf16.mxu0 0
  %12675 = vmatpush1.bf16.msra.mxu0 %v11710
  %12676 = vmatprep.subr.bf16.mxu0 0
  %12677 = vmatpush1.bf16.msra.mxu0 %v11711
  %12678 = vmatprep.subr.bf16.mxu0 0
  %12679 = vmatpush1.bf16.msra.mxu0 %v11712
  %12680 = vmatprep.subr.bf16.mxu0 0
  %12681 = vmatpush1.bf16.msra.mxu0 %v11713
  %12682 = vmatprep.mubr.bf16.mxu0 %v9151
  %12683 = vmatmul.mubr.bf16.gmra.mrb[0].mxu0 %v9150
  %v12684 = vpop.f32.mrb[0].mxu0
  %v12685 = vadd.f32 %v12645, %v12684
  %v12686 = vpop.f32.mrb[0].mxu0
  %v12687 = vpop.f32.mrb[0].mxu0
  %v12688 = vpop.f32.mrb[0].mxu0
  %12689 = vdwg.mxu0
  %12690 = vmatprep.subr.bf16.mxu0 0
  %12691 = vmatpush1.bf16.msra.mxu0 %v11714
  %12692 = vmatprep.subr.bf16.mxu0 0
  %12693 = vmatpush1.bf16.msra.mxu0 %v11715
  %12694 = vmatprep.subr.bf16.mxu0 0
  %12695 = vmatpush1.bf16.msra.mxu0 %v11716
  %12696 = vmatprep.subr.bf16.mxu0 0
  %12697 = vmatpush1.bf16.msra.mxu0 %v11717
  %12698 = vmatprep.subr.bf16.mxu0 0
  %12699 = vmatpush1.bf16.msra.mxu0 %v11718
  %12700 = vmatprep.subr.bf16.mxu0 0
  %12701 = vmatpush1.bf16.msra.mxu0 %v11719
  %12702 = vmatprep.subr.bf16.mxu0 0
  %12703 = vmatpush1.bf16.msra.mxu0 %v11720
  %12704 = vmatprep.subr.bf16.mxu0 0
  %12705 = vmatpush1.bf16.msra.mxu0 %v11721
  %12706 = vmatprep.subr.bf16.mxu0 0
  %12707 = vmatpush1.bf16.msra.mxu0 %v11722
  %12708 = vmatprep.subr.bf16.mxu0 0
  %12709 = vmatpush1.bf16.msra.mxu0 %v11723
  %12710 = vmatprep.subr.bf16.mxu0 0
  %12711 = vmatpush1.bf16.msra.mxu0 %v11724
  %12712 = vmatprep.subr.bf16.mxu0 0
  %12713 = vmatpush1.bf16.msra.mxu0 %v11725
  %12714 = vmatprep.subr.bf16.mxu0 0
  %12715 = vmatpush1.bf16.msra.mxu0 %v11726
  %12716 = vmatprep.subr.bf16.mxu0 0
  %12717 = vmatpush1.bf16.msra.mxu0 %v11727
  %12718 = vmatprep.subr.bf16.mxu0 0
  %12719 = vmatpush1.bf16.msra.mxu0 %v11728
  %12720 = vmatprep.subr.bf16.mxu0 0
  %12721 = vmatpush1.bf16.msra.mxu0 %v11729
  %12722 = vmatprep.mubr.bf16.mxu0 %v9153
  %12723 = vmatmul.mubr.bf16.gmra.mrb[0].mxu0 %v9152
  %v12724 = vpop.f32.mrb[0].mxu0
  %v12725 = vadd.f32 %v12685, %v12724
  %v12726 = vpop.f32.mrb[0].mxu0
  %v12727 = vpop.f32.mrb[0].mxu0
  %v12728 = vpop.f32.mrb[0].mxu0
  %12729 = vdwg.mxu0
  %12730 = vmatprep.subr.bf16.mxu0 0
  %12731 = vmatpush1.bf16.msra.mxu0 %v11730
  %12732 = vmatprep.subr.bf16.mxu0 0
  %12733 = vmatpush1.bf16.msra.mxu0 %v11731
  %12734 = vmatprep.subr.bf16.mxu0 0
  %12735 = vmatpush1.bf16.msra.mxu0 %v11732
  %12736 = vmatprep.subr.bf16.mxu0 0
  %12737 = vmatpush1.bf16.msra.mxu0 %v11733
  %12738 = vmatprep.subr.bf16.mxu0 0
  %12739 = vmatpush1.bf16.msra.mxu0 %v11734
  %12740 = vmatprep.subr.bf16.mxu0 0
  %12741 = vmatpush1.bf16.msra.mxu0 %v11735
  %12742 = vmatprep.subr.bf16.mxu0 0
  %12743 = vmatpush1.bf16.msra.mxu0 %v11736
  %12744 = vmatprep.subr.bf16.mxu0 0
  %12745 = vmatpush1.bf16.msra.mxu0 %v11737
  %12746 = vmatprep.subr.bf16.mxu0 0
  %12747 = vmatpush1.bf16.msra.mxu0 %v11738
  %12748 = vmatprep.subr.bf16.mxu0 0
  %12749 = vmatpush1.bf16.msra.mxu0 %v11739
  %12750 = vmatprep.subr.bf16.mxu0 0
  %12751 = vmatpush1.bf16.msra.mxu0 %v11740
  %12752 = vmatprep.subr.bf16.mxu0 0
  %12753 = vmatpush1.bf16.msra.mxu0 %v11741
  %12754 = vmatprep.subr.bf16.mxu0 0
  %12755 = vmatpush1.bf16.msra.mxu0 %v11742
  %12756 = vmatprep.subr.bf16.mxu0 0
  %12757 = vmatpush1.bf16.msra.mxu0 %v11743
  %12758 = vmatprep.subr.bf16.mxu0 0
  %12759 = vmatpush1.bf16.msra.mxu0 %v11744
  %12760 = vmatprep.subr.bf16.mxu0 0
  %12761 = vmatpush1.bf16.msra.mxu0 %v11745
  %12762 = vmatprep.mubr.bf16.mxu0 %v9155
  %12763 = vmatmul.mubr.bf16.gmra.mrb[0].mxu0 %v9154
  %v12764 = vpop.f32.mrb[0].mxu0
  %v12765 = vadd.f32 %v12725, %v12764
  %v12766 = vpop.f32.mrb[0].mxu0
  %v12767 = vpop.f32.mrb[0].mxu0
  %v12768 = vpop.f32.mrb[0].mxu0
  %12769 = vdwg.mxu0
  %12770 = vmatprep.subr.bf16.mxu0 0
  %12771 = vmatpush1.bf16.msra.mxu0 %v11746
  %12772 = vmatprep.subr.bf16.mxu0 0
  %12773 = vmatpush1.bf16.msra.mxu0 %v11747
  %12774 = vmatprep.subr.bf16.mxu0 0
  %12775 = vmatpush1.bf16.msra.mxu0 %v11748
  %12776 = vmatprep.subr.bf16.mxu0 0
  %12777 = vmatpush1.bf16.msra.mxu0 %v11749
  %12778 = vmatprep.subr.bf16.mxu0 0
  %12779 = vmatpush1.bf16.msra.mxu0 %v11750
  %12780 = vmatprep.subr.bf16.mxu0 0
  %12781 = vmatpush1.bf16.msra.mxu0 %v11751
  %12782 = vmatprep.subr.bf16.mxu0 0
  %12783 = vmatpush1.bf16.msra.mxu0 %v11752
  %12784 = vmatprep.subr.bf16.mxu0 0
  %12785 = vmatpush1.bf16.msra.mxu0 %v11753
  %12786 = vmatprep.subr.bf16.mxu0 0
  %12787 = vmatpush1.bf16.msra.mxu0 %v11754
  %12788 = vmatprep.subr.bf16.mxu0 0
  %12789 = vmatpush1.bf16.msra.mxu0 %v11755
  %12790 = vmatprep.subr.bf16.mxu0 0
  %12791 = vmatpush1.bf16.msra.mxu0 %v11756
  %12792 = vmatprep.subr.bf16.mxu0 0
  %12793 = vmatpush1.bf16.msra.mxu0 %v11757
  %12794 = vmatprep.subr.bf16.mxu0 0
  %12795 = vmatpush1.bf16.msra.mxu0 %v11758
  %12796 = vmatprep.subr.bf16.mxu0 0
  %12797 = vmatpush1.bf16.msra.mxu0 %v11759
  %12798 = vmatprep.subr.bf16.mxu0 0
  %12799 = vmatpush1.bf16.msra.mxu0 %v11760
  %12800 = vmatprep.subr.bf16.mxu0 0
  %12801 = vmatpush1.bf16.msra.mxu0 %v11761
  %12802 = vmatprep.mubr.bf16.mxu0 %v9157
  %12803 = vmatmul.mubr.bf16.gmra.mrb[0].mxu0 %v9156
  %v12804 = vpop.f32.mrb[0].mxu0
  %v12805 = vadd.f32 %v12765, %v12804
  %v12806 = vpop.f32.mrb[0].mxu0
  %v12807 = vpop.f32.mrb[0].mxu0
  %v12808 = vpop.f32.mrb[0].mxu0
  %12809 = vdwg.mxu0
  %12810 = vmatprep.subr.bf16.mxu0 0
  %12811 = vmatpush1.bf16.msra.mxu0 %v11762
  %12812 = vmatprep.subr.bf16.mxu0 0
  %12813 = vmatpush1.bf16.msra.mxu0 %v11763
  %12814 = vmatprep.subr.bf16.mxu0 0
  %12815 = vmatpush1.bf16.msra.mxu0 %v11764
  %12816 = vmatprep.subr.bf16.mxu0 0
  %12817 = vmatpush1.bf16.msra.mxu0 %v11765
  %12818 = vmatprep.subr.bf16.mxu0 0
  %12819 = vmatpush1.bf16.msra.mxu0 %v11766
  %12820 = vmatprep.subr.bf16.mxu0 0
  %12821 = vmatpush1.bf16.msra.mxu0 %v11767
  %12822 = vmatprep.subr.bf16.mxu0 0
  %12823 = vmatpush1.bf16.msra.mxu0 %v11768
  %12824 = vmatprep.subr.bf16.mxu0 0
  %12825 = vmatpush1.bf16.msra.mxu0 %v11769
  %12826 = vmatprep.subr.bf16.mxu0 0
  %12827 = vmatpush1.bf16.msra.mxu0 %v11770
  %12828 = vmatprep.subr.bf16.mxu0 0
  %12829 = vmatpush1.bf16.msra.mxu0 %v11771
  %12830 = vmatprep.subr.bf16.mxu0 0
  %12831 = vmatpush1.bf16.msra.mxu0 %v11772
  %12832 = vmatprep.subr.bf16.mxu0 0
  %12833 = vmatpush1.bf16.msra.mxu0 %v11773
  %12834 = vmatprep.subr.bf16.mxu0 0
  %12835 = vmatpush1.bf16.msra.mxu0 %v11774
  %12836 = vmatprep.subr.bf16.mxu0 0
  %12837 = vmatpush1.bf16.msra.mxu0 %v11775
  %12838 = vmatprep.subr.bf16.mxu0 0
  %12839 = vmatpush1.bf16.msra.mxu0 %v11776
  %12840 = vmatprep.subr.bf16.mxu0 0
  %12841 = vmatpush1.bf16.msra.mxu0 %v11777
  %12842 = vmatprep.mubr.bf16.mxu0 %v9159
  %12843 = vmatmul.mubr.bf16.gmra.mrb[0].mxu0 %v9158
  %v12844 = vpop.f32.mrb[0].mxu0
  %v12845 = vadd.f32 %v12805, %v12844
  %v12846 = vpop.f32.mrb[0].mxu0
  %v12847 = vpop.f32.mrb[0].mxu0
  %v12848 = vpop.f32.mrb[0].mxu0
  %12849 = vdwg.mxu0
  %12850 = vmatprep.subr.bf16.mxu0 0
  %12851 = vmatpush1.bf16.msra.mxu0 %v11778
  %12852 = vmatprep.subr.bf16.mxu0 0
  %12853 = vmatpush1.bf16.msra.mxu0 %v11779
  %12854 = vmatprep.subr.bf16.mxu0 0
  %12855 = vmatpush1.bf16.msra.mxu0 %v11780
  %12856 = vmatprep.subr.bf16.mxu0 0
  %12857 = vmatpush1.bf16.msra.mxu0 %v11781
  %12858 = vmatprep.subr.bf16.mxu0 0
  %12859 = vmatpush1.bf16.msra.mxu0 %v11782
  %12860 = vmatprep.subr.bf16.mxu0 0
  %12861 = vmatpush1.bf16.msra.mxu0 %v11783
  %12862 = vmatprep.subr.bf16.mxu0 0
  %12863 = vmatpush1.bf16.msra.mxu0 %v11784
  %12864 = vmatprep.subr.bf16.mxu0 0
  %12865 = vmatpush1.bf16.msra.mxu0 %v11785
  %12866 = vmatprep.subr.bf16.mxu0 0
  %12867 = vmatpush1.bf16.msra.mxu0 %v11786
  %12868 = vmatprep.subr.bf16.mxu0 0
  %12869 = vmatpush1.bf16.msra.mxu0 %v11787
  %12870 = vmatprep.subr.bf16.mxu0 0
  %12871 = vmatpush1.bf16.msra.mxu0 %v11788
  %12872 = vmatprep.subr.bf16.mxu0 0
  %12873 = vmatpush1.bf16.msra.mxu0 %v11789
  %12874 = vmatprep.subr.bf16.mxu0 0
  %12875 = vmatpush1.bf16.msra.mxu0 %v11790
  %12876 = vmatprep.subr.bf16.mxu0 0
  %12877 = vmatpush1.bf16.msra.mxu0 %v11791
  %12878 = vmatprep.subr.bf16.mxu0 0
  %12879 = vmatpush1.bf16.msra.mxu0 %v11792
  %12880 = vmatprep.subr.bf16.mxu0 0
  %12881 = vmatpush1.bf16.msra.mxu0 %v11793
  %12882 = vmatprep.mubr.bf16.mxu0 %v9161
  %12883 = vmatmul.mubr.bf16.gmra.mrb[0].mxu0 %v9160
  %v12884 = vpop.f32.mrb[0].mxu0
  %v12885 = vadd.f32 %v12845, %v12884
  %v12886 = vpop.f32.mrb[0].mxu0
  %v12887 = vpop.f32.mrb[0].mxu0
  %v12888 = vpop.f32.mrb[0].mxu0
  %12889 = vdwg.mxu0
  %12890 = vmatprep.subr.bf16.mxu0 0
  %12891 = vmatpush1.bf16.msra.mxu0 %v11794
  %12892 = vmatprep.subr.bf16.mxu0 0
  %12893 = vmatpush1.bf16.msra.mxu0 %v11795
  %12894 = vmatprep.subr.bf16.mxu0 0
  %12895 = vmatpush1.bf16.msra.mxu0 %v11796
  %12896 = vmatprep.subr.bf16.mxu0 0
  %12897 = vmatpush1.bf16.msra.mxu0 %v11797
  %12898 = vmatprep.subr.bf16.mxu0 0
  %12899 = vmatpush1.bf16.msra.mxu0 %v11798
  %12900 = vmatprep.subr.bf16.mxu0 0
  %12901 = vmatpush1.bf16.msra.mxu0 %v11799
  %12902 = vmatprep.subr.bf16.mxu0 0
  %12903 = vmatpush1.bf16.msra.mxu0 %v11800
  %12904 = vmatprep.subr.bf16.mxu0 0
  %12905 = vmatpush1.bf16.msra.mxu0 %v11801
  %12906 = vmatprep.subr.bf16.mxu0 0
  %12907 = vmatpush1.bf16.msra.mxu0 %v11802
  %12908 = vmatprep.subr.bf16.mxu0 0
  %12909 = vmatpush1.bf16.msra.mxu0 %v11803
  %12910 = vmatprep.subr.bf16.mxu0 0
  %12911 = vmatpush1.bf16.msra.mxu0 %v11804
  %12912 = vmatprep.subr.bf16.mxu0 0
  %12913 = vmatpush1.bf16.msra.mxu0 %v11805
  %12914 = vmatprep.subr.bf16.mxu0 0
  %12915 = vmatpush1.bf16.msra.mxu0 %v11806
  %12916 = vmatprep.subr.bf16.mxu0 0
  %12917 = vmatpush1.bf16.msra.mxu0 %v11807
  %12918 = vmatprep.subr.bf16.mxu0 0
  %12919 = vmatpush1.bf16.msra.mxu0 %v11808
  %12920 = vmatprep.subr.bf16.mxu0 0
  %12921 = vmatpush1.bf16.msra.mxu0 %v11809
  %12922 = vmatprep.mubr.bf16.mxu0 %v9163
  %12923 = vmatmul.mubr.bf16.gmra.mrb[0].mxu0 %v9162
  %v12924 = vpop.f32.mrb[0].mxu0
  %v12925 = vadd.f32 %v12885, %v12924
  %v12926 = vpop.f32.mrb[0].mxu0
  %v12927 = vpop.f32.mrb[0].mxu0
  %v12928 = vpop.f32.mrb[0].mxu0
  %12929 = vdwg.mxu0
  %12930 = vmatprep.subr.bf16.mxu0 0
  %12931 = vmatpush1.bf16.msra.mxu0 %v11810
  %12932 = vmatprep.subr.bf16.mxu0 0
  %12933 = vmatpush1.bf16.msra.mxu0 %v11811
  %12934 = vmatprep.subr.bf16.mxu0 0
  %12935 = vmatpush1.bf16.msra.mxu0 %v11812
  %12936 = vmatprep.subr.bf16.mxu0 0
  %12937 = vmatpush1.bf16.msra.mxu0 %v11813
  %12938 = vmatprep.subr.bf16.mxu0 0
  %12939 = vmatpush1.bf16.msra.mxu0 %v11814
  %12940 = vmatprep.subr.bf16.mxu0 0
  %12941 = vmatpush1.bf16.msra.mxu0 %v11815
  %12942 = vmatprep.subr.bf16.mxu0 0
  %12943 = vmatpush1.bf16.msra.mxu0 %v11816
  %12944 = vmatprep.subr.bf16.mxu0 0
  %12945 = vmatpush1.bf16.msra.mxu0 %v11817
  %12946 = vmatprep.subr.bf16.mxu0 0
  %12947 = vmatpush1.bf16.msra.mxu0 %v11818
  %12948 = vmatprep.subr.bf16.mxu0 0
  %12949 = vmatpush1.bf16.msra.mxu0 %v11819
  %12950 = vmatprep.subr.bf16.mxu0 0
  %12951 = vmatpush1.bf16.msra.mxu0 %v11820
  %12952 = vmatprep.subr.bf16.mxu0 0
  %12953 = vmatpush1.bf16.msra.mxu0 %v11821
  %12954 = vmatprep.subr.bf16.mxu0 0
  %12955 = vmatpush1.bf16.msra.mxu0 %v11822
  %12956 = vmatprep.subr.bf16.mxu0 0
  %12957 = vmatpush1.bf16.msra.mxu0 %v11823
  %12958 = vmatprep.subr.bf16.mxu0 0
  %12959 = vmatpush1.bf16.msra.mxu0 %v11824
  %12960 = vmatprep.subr.bf16.mxu0 0
  %12961 = vmatpush1.bf16.msra.mxu0 %v11825
  %12962 = vmatprep.mubr.bf16.mxu0 %v9165
  %12963 = vmatmul.mubr.bf16.gmra.mrb[0].mxu0 %v9164
  %v12964 = vpop.f32.mrb[0].mxu0
  %v12965 = vadd.f32 %v12925, %v12964
  %v12966 = vpop.f32.mrb[0].mxu0
  %v12967 = vpop.f32.mrb[0].mxu0
  %v12968 = vpop.f32.mrb[0].mxu0
  %12969 = vdwg.mxu0
  %12970 = vmatprep.subr.bf16.mxu0 0
  %12971 = vmatpush1.bf16.msra.mxu0 %v11826
  %12972 = vmatprep.subr.bf16.mxu0 0
  %12973 = vmatpush1.bf16.msra.mxu0 %v11827
  %12974 = vmatprep.subr.bf16.mxu0 0
  %12975 = vmatpush1.bf16.msra.mxu0 %v11828
  %12976 = vmatprep.subr.bf16.mxu0 0
  %12977 = vmatpush1.bf16.msra.mxu0 %v11829
  %12978 = vmatprep.subr.bf16.mxu0 0
  %12979 = vmatpush1.bf16.msra.mxu0 %v11830
  %12980 = vmatprep.subr.bf16.mxu0 0
  %12981 = vmatpush1.bf16.msra.mxu0 %v11831
  %12982 = vmatprep.subr.bf16.mxu0 0
  %12983 = vmatpush1.bf16.msra.mxu0 %v11832
  %12984 = vmatprep.subr.bf16.mxu0 0
  %12985 = vmatpush1.bf16.msra.mxu0 %v11833
  %12986 = vmatprep.subr.bf16.mxu0 0
  %12987 = vmatpush1.bf16.msra.mxu0 %v11834
  %12988 = vmatprep.subr.bf16.mxu0 0
  %12989 = vmatpush1.bf16.msra.mxu0 %v11835
  %12990 = vmatprep.subr.bf16.mxu0 0
  %12991 = vmatpush1.bf16.msra.mxu0 %v11836
  %12992 = vmatprep.subr.bf16.mxu0 0
  %12993 = vmatpush1.bf16.msra.mxu0 %v11837
  %12994 = vmatprep.subr.bf16.mxu0 0
  %12995 = vmatpush1.bf16.msra.mxu0 %v11838
  %12996 = vmatprep.subr.bf16.mxu0 0
  %12997 = vmatpush1.bf16.msra.mxu0 %v11839
  %12998 = vmatprep.subr.bf16.mxu0 0
  %12999 = vmatpush1.bf16.msra.mxu0 %v11840
  %13000 = vmatprep.subr.bf16.mxu0 0
  %13001 = vmatpush1.bf16.msra.mxu0 %v11841
  %13002 = vmatprep.mubr.bf16.mxu0 %v9167
  %13003 = vmatmul.mubr.bf16.gmra.mrb[0].mxu0 %v9166
  %v13004 = vpop.f32.mrb[0].mxu0
  %v13005 = vadd.f32 %v12965, %v13004
  %v13006 = vpop.f32.mrb[0].mxu0
  %v13007 = vpop.f32.mrb[0].mxu0
  %v13008 = vpop.f32.mrb[0].mxu0
  %13009 = vdwg.mxu0
  %13010 = vmatprep.subr.bf16.mxu0 0
  %13011 = vmatpush1.bf16.msra.mxu0 %v11842
  %13012 = vmatprep.subr.bf16.mxu0 0
  %13013 = vmatpush1.bf16.msra.mxu0 %v11843
  %13014 = vmatprep.subr.bf16.mxu0 0
  %13015 = vmatpush1.bf16.msra.mxu0 %v11844
  %13016 = vmatprep.subr.bf16.mxu0 0
  %13017 = vmatpush1.bf16.msra.mxu0 %v11845
  %13018 = vmatprep.subr.bf16.mxu0 0
  %13019 = vmatpush1.bf16.msra.mxu0 %v11846
  %13020 = vmatprep.subr.bf16.mxu0 0
  %13021 = vmatpush1.bf16.msra.mxu0 %v11847
  %13022 = vmatprep.subr.bf16.mxu0 0
  %13023 = vmatpush1.bf16.msra.mxu0 %v11848
  %13024 = vmatprep.subr.bf16.mxu0 0
  %13025 = vmatpush1.bf16.msra.mxu0 %v11849
  %13026 = vmatprep.subr.bf16.mxu0 0
  %13027 = vmatpush1.bf16.msra.mxu0 %v11850
  %13028 = vmatprep.subr.bf16.mxu0 0
  %13029 = vmatpush1.bf16.msra.mxu0 %v11851
  %13030 = vmatprep.subr.bf16.mxu0 0
  %13031 = vmatpush1.bf16.msra.mxu0 %v11852
  %13032 = vmatprep.subr.bf16.mxu0 0
  %13033 = vmatpush1.bf16.msra.mxu0 %v11853
  %13034 = vmatprep.subr.bf16.mxu0 0
  %13035 = vmatpush1.bf16.msra.mxu0 %v11854
  %13036 = vmatprep.subr.bf16.mxu0 0
  %13037 = vmatpush1.bf16.msra.mxu0 %v11855
  %13038 = vmatprep.subr.bf16.mxu0 0
  %13039 = vmatpush1.bf16.msra.mxu0 %v11856
  %13040 = vmatprep.subr.bf16.mxu0 0
  %13041 = vmatpush1.bf16.msra.mxu0 %v11857
  %13042 = vmatprep.mubr.bf16.mxu0 %v9169
  %13043 = vmatmul.mubr.bf16.gmra.mrb[0].mxu0 %v9168
  %v13044 = vpop.f32.mrb[0].mxu0
  %v13045 = vadd.f32 %v13005, %v13044
  %v13046 = vpop.f32.mrb[0].mxu0
  %v13047 = vpop.f32.mrb[0].mxu0
  %v13048 = vpop.f32.mrb[0].mxu0
  %13049 = vdwg.mxu0
  %13050 = vmatprep.subr.bf16.mxu0 0
  %13051 = vmatpush1.bf16.msra.mxu0 %v11858
  %13052 = vmatprep.subr.bf16.mxu0 0
  %13053 = vmatpush1.bf16.msra.mxu0 %v11859
  %13054 = vmatprep.subr.bf16.mxu0 0
  %13055 = vmatpush1.bf16.msra.mxu0 %v11860
  %13056 = vmatprep.subr.bf16.mxu0 0
  %13057 = vmatpush1.bf16.msra.mxu0 %v11861
  %13058 = vmatprep.subr.bf16.mxu0 0
  %13059 = vmatpush1.bf16.msra.mxu0 %v11862
  %13060 = vmatprep.subr.bf16.mxu0 0
  %13061 = vmatpush1.bf16.msra.mxu0 %v11863
  %13062 = vmatprep.subr.bf16.mxu0 0
  %13063 = vmatpush1.bf16.msra.mxu0 %v11864
  %13064 = vmatprep.subr.bf16.mxu0 0
  %13065 = vmatpush1.bf16.msra.mxu0 %v11865
  %13066 = vmatprep.subr.bf16.mxu0 0
  %13067 = vmatpush1.bf16.msra.mxu0 %v11866
  %13068 = vmatprep.subr.bf16.mxu0 0
  %13069 = vmatpush1.bf16.msra.mxu0 %v11867
  %13070 = vmatprep.subr.bf16.mxu0 0
  %13071 = vmatpush1.bf16.msra.mxu0 %v11868
  %13072 = vmatprep.subr.bf16.mxu0 0
  %13073 = vmatpush1.bf16.msra.mxu0 %v11869
  %13074 = vmatprep.subr.bf16.mxu0 0
  %13075 = vmatpush1.bf16.msra.mxu0 %v11870
  %13076 = vmatprep.subr.bf16.mxu0 0
  %13077 = vmatpush1.bf16.msra.mxu0 %v11871
  %13078 = vmatprep.subr.bf16.mxu0 0
  %13079 = vmatpush1.bf16.msra.mxu0 %v11872
  %13080 = vmatprep.subr.bf16.mxu0 0
  %13081 = vmatpush1.bf16.msra.mxu0 %v11873
  %13082 = vmatprep.mubr.bf16.mxu0 %v9171
  %13083 = vmatmul.mubr.bf16.gmra.mrb[0].mxu0 %v9170
  %v13084 = vpop.f32.mrb[0].mxu0
  %v13085 = vadd.f32 %v13045, %v13084
  %v13086 = vpop.f32.mrb[0].mxu0
  %v13087 = vpop.f32.mrb[0].mxu0
  %v13088 = vpop.f32.mrb[0].mxu0
  %13089 = vdwg.mxu0
  %13090 = vmatprep.subr.bf16.mxu0 0
  %13091 = vmatpush1.bf16.msra.mxu0 %v11874
  %13092 = vmatprep.subr.bf16.mxu0 0
  %13093 = vmatpush1.bf16.msra.mxu0 %v11875
  %13094 = vmatprep.subr.bf16.mxu0 0
  %13095 = vmatpush1.bf16.msra.mxu0 %v11876
  %13096 = vmatprep.subr.bf16.mxu0 0
  %13097 = vmatpush1.bf16.msra.mxu0 %v11877
  %13098 = vmatprep.subr.bf16.mxu0 0
  %13099 = vmatpush1.bf16.msra.mxu0 %v11878
  %13100 = vmatprep.subr.bf16.mxu0 0
  %13101 = vmatpush1.bf16.msra.mxu0 %v11879
  %13102 = vmatprep.subr.bf16.mxu0 0
  %13103 = vmatpush1.bf16.msra.mxu0 %v11880
  %13104 = vmatprep.subr.bf16.mxu0 0
  %13105 = vmatpush1.bf16.msra.mxu0 %v11881
  %13106 = vmatprep.subr.bf16.mxu0 0
  %13107 = vmatpush1.bf16.msra.mxu0 %v11882
  %13108 = vmatprep.subr.bf16.mxu0 0
  %13109 = vmatpush1.bf16.msra.mxu0 %v11883
  %13110 = vmatprep.subr.bf16.mxu0 0
  %13111 = vmatpush1.bf16.msra.mxu0 %v11884
  %13112 = vmatprep.subr.bf16.mxu0 0
  %13113 = vmatpush1.bf16.msra.mxu0 %v11885
  %13114 = vmatprep.subr.bf16.mxu0 0
  %13115 = vmatpush1.bf16.msra.mxu0 %v11886
  %13116 = vmatprep.subr.bf16.mxu0 0
  %13117 = vmatpush1.bf16.msra.mxu0 %v11887
  %13118 = vmatprep.subr.bf16.mxu0 0
  %13119 = vmatpush1.bf16.msra.mxu0 %v11888
  %13120 = vmatprep.subr.bf16.mxu0 0
  %13121 = vmatpush1.bf16.msra.mxu0 %v11889
  %13122 = vmatprep.mubr.bf16.mxu0 %v9173
  %13123 = vmatmul.mubr.bf16.gmra.mrb[0].mxu0 %v9172
  %v13124 = vpop.f32.mrb[0].mxu0
  %v13125 = vadd.f32 %v13085, %v13124
  %v13126 = vpop.f32.mrb[0].mxu0
  %v13127 = vpop.f32.mrb[0].mxu0
  %v13128 = vpop.f32.mrb[0].mxu0
  %13129 = vdwg.mxu0
  %13130 = vmatprep.subr.bf16.mxu0 0
  %13131 = vmatpush1.bf16.msra.mxu0 %v11890
  %13132 = vmatprep.subr.bf16.mxu0 0
  %13133 = vmatpush1.bf16.msra.mxu0 %v11891
  %13134 = vmatprep.subr.bf16.mxu0 0
  %13135 = vmatpush1.bf16.msra.mxu0 %v11892
  %13136 = vmatprep.subr.bf16.mxu0 0
  %13137 = vmatpush1.bf16.msra.mxu0 %v11893
  %13138 = vmatprep.subr.bf16.mxu0 0
  %13139 = vmatpush1.bf16.msra.mxu0 %v11894
  %13140 = vmatprep.subr.bf16.mxu0 0
  %13141 = vmatpush1.bf16.msra.mxu0 %v11895
  %13142 = vmatprep.subr.bf16.mxu0 0
  %13143 = vmatpush1.bf16.msra.mxu0 %v11896
  %13144 = vmatprep.subr.bf16.mxu0 0
  %13145 = vmatpush1.bf16.msra.mxu0 %v11897
  %13146 = vmatprep.subr.bf16.mxu0 0
  %13147 = vmatpush1.bf16.msra.mxu0 %v11898
  %13148 = vmatprep.subr.bf16.mxu0 0
  %13149 = vmatpush1.bf16.msra.mxu0 %v11899
  %13150 = vmatprep.subr.bf16.mxu0 0
  %13151 = vmatpush1.bf16.msra.mxu0 %v11900
  %13152 = vmatprep.subr.bf16.mxu0 0
  %13153 = vmatpush1.bf16.msra.mxu0 %v11901
  %13154 = vmatprep.subr.bf16.mxu0 0
  %13155 = vmatpush1.bf16.msra.mxu0 %v11902
  %13156 = vmatprep.subr.bf16.mxu0 0
  %13157 = vmatpush1.bf16.msra.mxu0 %v11903
  %13158 = vmatprep.subr.bf16.mxu0 0
  %13159 = vmatpush1.bf16.msra.mxu0 %v11904
  %13160 = vmatprep.subr.bf16.mxu0 0
  %13161 = vmatpush1.bf16.msra.mxu0 %v11905
  %13162 = vmatprep.mubr.bf16.mxu0 %v9175
  %13163 = vmatmul.mubr.bf16.gmra.mrb[0].mxu0 %v9174
  %v13164 = vpop.f32.mrb[0].mxu0
  %v13165 = vadd.f32 %v13125, %v13164
  %v13166 = vpop.f32.mrb[0].mxu0
  %v13167 = vpop.f32.mrb[0].mxu0
  %v13168 = vpop.f32.mrb[0].mxu0
  %13169 = vdwg.mxu0
  %13170 = vmatprep.subr.bf16.mxu0 0
  %13171 = vmatpush1.bf16.msra.mxu0 %v11906
  %13172 = vmatprep.subr.bf16.mxu0 0
  %13173 = vmatpush1.bf16.msra.mxu0 %v11907
  %13174 = vmatprep.subr.bf16.mxu0 0
  %13175 = vmatpush1.bf16.msra.mxu0 %v11908
  %13176 = vmatprep.subr.bf16.mxu0 0
  %13177 = vmatpush1.bf16.msra.mxu0 %v11909
  %13178 = vmatprep.subr.bf16.mxu0 0
  %13179 = vmatpush1.bf16.msra.mxu0 %v11910
  %13180 = vmatprep.subr.bf16.mxu0 0
  %13181 = vmatpush1.bf16.msra.mxu0 %v11911
  %13182 = vmatprep.subr.bf16.mxu0 0
  %13183 = vmatpush1.bf16.msra.mxu0 %v11912
  %13184 = vmatprep.subr.bf16.mxu0 0
  %13185 = vmatpush1.bf16.msra.mxu0 %v11913
  %13186 = vmatprep.subr.bf16.mxu0 0
  %13187 = vmatpush1.bf16.msra.mxu0 %v11914
  %13188 = vmatprep.subr.bf16.mxu0 0
  %13189 = vmatpush1.bf16.msra.mxu0 %v11915
  %13190 = vmatprep.subr.bf16.mxu0 0
  %13191 = vmatpush1.bf16.msra.mxu0 %v11916
  %13192 = vmatprep.subr.bf16.mxu0 0
  %13193 = vmatpush1.bf16.msra.mxu0 %v11917
  %13194 = vmatprep.subr.bf16.mxu0 0
  %13195 = vmatpush1.bf16.msra.mxu0 %v11918
  %13196 = vmatprep.subr.bf16.mxu0 0
  %13197 = vmatpush1.bf16.msra.mxu0 %v11919
  %13198 = vmatprep.subr.bf16.mxu0 0
  %13199 = vmatpush1.bf16.msra.mxu0 %v11920
  %13200 = vmatprep.subr.bf16.mxu0 0
  %13201 = vmatpush1.bf16.msra.mxu0 %v11921
  %13202 = vmatprep.mubr.bf16.mxu0 %v9177
  %13203 = vmatmul.mubr.bf16.gmra.mrb[0].mxu0 %v9176
  %v13204 = vpop.f32.mrb[0].mxu0
  %v13205 = vadd.f32 %v13165, %v13204
  %v13206 = vpop.f32.mrb[0].mxu0
  %v13207 = vpop.f32.mrb[0].mxu0
  %v13208 = vpop.f32.mrb[0].mxu0
  %13209 = vdwg.mxu0
  %13210 = vmatprep.subr.bf16.mxu0 0
  %13211 = vmatpush1.bf16.msra.mxu0 %v11922
  %13212 = vmatprep.subr.bf16.mxu0 0
  %13213 = vmatpush1.bf16.msra.mxu0 %v11923
  %13214 = vmatprep.subr.bf16.mxu0 0
  %13215 = vmatpush1.bf16.msra.mxu0 %v11924
  %13216 = vmatprep.subr.bf16.mxu0 0
  %13217 = vmatpush1.bf16.msra.mxu0 %v11925
  %13218 = vmatprep.subr.bf16.mxu0 0
  %13219 = vmatpush1.bf16.msra.mxu0 %v11926
  %13220 = vmatprep.subr.bf16.mxu0 0
  %13221 = vmatpush1.bf16.msra.mxu0 %v11927
  %13222 = vmatprep.subr.bf16.mxu0 0
  %13223 = vmatpush1.bf16.msra.mxu0 %v11928
  %13224 = vmatprep.subr.bf16.mxu0 0
  %13225 = vmatpush1.bf16.msra.mxu0 %v11929
  %13226 = vmatprep.subr.bf16.mxu0 0
  %13227 = vmatpush1.bf16.msra.mxu0 %v11930
  %13228 = vmatprep.subr.bf16.mxu0 0
  %13229 = vmatpush1.bf16.msra.mxu0 %v11931
  %13230 = vmatprep.subr.bf16.mxu0 0
  %13231 = vmatpush1.bf16.msra.mxu0 %v11932
  %13232 = vmatprep.subr.bf16.mxu0 0
  %13233 = vmatpush1.bf16.msra.mxu0 %v11933
  %13234 = vmatprep.subr.bf16.mxu0 0
  %13235 = vmatpush1.bf16.msra.mxu0 %v11934
  %13236 = vmatprep.subr.bf16.mxu0 0
  %13237 = vmatpush1.bf16.msra.mxu0 %v11935
  %13238 = vmatprep.subr.bf16.mxu0 0
  %13239 = vmatpush1.bf16.msra.mxu0 %v11936
  %13240 = vmatprep.subr.bf16.mxu0 0
  %13241 = vmatpush1.bf16.msra.mxu0 %v11937
  %13242 = vmatprep.mubr.bf16.mxu0 %v9179
  %13243 = vmatmul.mubr.bf16.gmra.mrb[0].mxu0 %v9178
  %v13244 = vpop.f32.mrb[0].mxu0
  %v13245 = vadd.f32 %v13205, %v13244
  %v13246 = vpop.f32.mrb[0].mxu0
  %v13247 = vpop.f32.mrb[0].mxu0
  %v13248 = vpop.f32.mrb[0].mxu0
  %13249 = vdwg.mxu0
  %13250 = vmatprep.subr.bf16.mxu0 0
  %13251 = vmatpush1.bf16.msra.mxu0 %v11938
  %13252 = vmatprep.subr.bf16.mxu0 0
  %13253 = vmatpush1.bf16.msra.mxu0 %v11939
  %13254 = vmatprep.subr.bf16.mxu0 0
  %13255 = vmatpush1.bf16.msra.mxu0 %v11940
  %13256 = vmatprep.subr.bf16.mxu0 0
  %13257 = vmatpush1.bf16.msra.mxu0 %v11941
  %13258 = vmatprep.subr.bf16.mxu0 0
  %13259 = vmatpush1.bf16.msra.mxu0 %v11942
  %13260 = vmatprep.subr.bf16.mxu0 0
  %13261 = vmatpush1.bf16.msra.mxu0 %v11943
  %13262 = vmatprep.subr.bf16.mxu0 0
  %13263 = vmatpush1.bf16.msra.mxu0 %v11944
  %13264 = vmatprep.subr.bf16.mxu0 0
  %13265 = vmatpush1.bf16.msra.mxu0 %v11945
  %13266 = vmatprep.subr.bf16.mxu0 0
  %13267 = vmatpush1.bf16.msra.mxu0 %v11946
  %13268 = vmatprep.subr.bf16.mxu0 0
  %13269 = vmatpush1.bf16.msra.mxu0 %v11947
  %13270 = vmatprep.subr.bf16.mxu0 0
  %13271 = vmatpush1.bf16.msra.mxu0 %v11948
  %13272 = vmatprep.subr.bf16.mxu0 0
  %13273 = vmatpush1.bf16.msra.mxu0 %v11949
  %13274 = vmatprep.subr.bf16.mxu0 0
  %13275 = vmatpush1.bf16.msra.mxu0 %v11950
  %13276 = vmatprep.subr.bf16.mxu0 0
  %13277 = vmatpush1.bf16.msra.mxu0 %v11951
  %13278 = vmatprep.subr.bf16.mxu0 0
  %13279 = vmatpush1.bf16.msra.mxu0 %v11952
  %13280 = vmatprep.subr.bf16.mxu0 0
  %13281 = vmatpush1.bf16.msra.mxu0 %v11953
  %13282 = vmatprep.mubr.bf16.mxu0 %v9181
  %13283 = vmatmul.mubr.bf16.gmra.mrb[0].mxu0 %v9180
  %v13284 = vpop.f32.mrb[0].mxu0
  %v13285 = vadd.f32 %v13245, %v13284
  %v13286 = vpop.f32.mrb[0].mxu0
  %v13287 = vpop.f32.mrb[0].mxu0
  %v13288 = vpop.f32.mrb[0].mxu0
  %13289 = vdwg.mxu0
  %13290 = vmatprep.subr.bf16.mxu0 0
  %13291 = vmatpush1.bf16.msra.mxu0 %v11954
  %13292 = vmatprep.subr.bf16.mxu0 0
  %13293 = vmatpush1.bf16.msra.mxu0 %v11955
  %13294 = vmatprep.subr.bf16.mxu0 0
  %13295 = vmatpush1.bf16.msra.mxu0 %v11956
  %13296 = vmatprep.subr.bf16.mxu0 0
  %13297 = vmatpush1.bf16.msra.mxu0 %v11957
  %13298 = vmatprep.subr.bf16.mxu0 0
  %13299 = vmatpush1.bf16.msra.mxu0 %v11958
  %13300 = vmatprep.subr.bf16.mxu0 0
  %13301 = vmatpush1.bf16.msra.mxu0 %v11959
  %13302 = vmatprep.subr.bf16.mxu0 0
  %13303 = vmatpush1.bf16.msra.mxu0 %v11960
  %13304 = vmatprep.subr.bf16.mxu0 0
  %13305 = vmatpush1.bf16.msra.mxu0 %v11961
  %13306 = vmatprep.subr.bf16.mxu0 0
  %13307 = vmatpush1.bf16.msra.mxu0 %v11962
  %13308 = vmatprep.subr.bf16.mxu0 0
  %13309 = vmatpush1.bf16.msra.mxu0 %v11963
  %13310 = vmatprep.subr.bf16.mxu0 0
  %13311 = vmatpush1.bf16.msra.mxu0 %v11964
  %13312 = vmatprep.subr.bf16.mxu0 0
  %13313 = vmatpush1.bf16.msra.mxu0 %v11965
  %13314 = vmatprep.subr.bf16.mxu0 0
  %13315 = vmatpush1.bf16.msra.mxu0 %v11966
  %13316 = vmatprep.subr.bf16.mxu0 0
  %13317 = vmatpush1.bf16.msra.mxu0 %v11967
  %13318 = vmatprep.subr.bf16.mxu0 0
  %13319 = vmatpush1.bf16.msra.mxu0 %v11968
  %13320 = vmatprep.subr.bf16.mxu0 0
  %13321 = vmatpush1.bf16.msra.mxu0 %v11969
  %13322 = vmatprep.mubr.bf16.mxu0 %v9183
  %13323 = vmatmul.mubr.bf16.gmra.mrb[0].mxu0 %v9182
  %v13324 = vpop.f32.mrb[0].mxu0
  %v13325 = vadd.f32 %v13285, %v13324
  %v13326 = vpop.f32.mrb[0].mxu0
  %v13327 = vpop.f32.mrb[0].mxu0
  %v13328 = vpop.f32.mrb[0].mxu0
  %13329 = vdwg.mxu0
  %13330 = vmatprep.subr.bf16.mxu0 0
  %13331 = vmatpush1.bf16.msra.mxu0 %v11970
  %13332 = vmatprep.subr.bf16.mxu0 0
  %13333 = vmatpush1.bf16.msra.mxu0 %v11971
  %13334 = vmatprep.subr.bf16.mxu0 0
  %13335 = vmatpush1.bf16.msra.mxu0 %v11972
  %13336 = vmatprep.subr.bf16.mxu0 0
  %13337 = vmatpush1.bf16.msra.mxu0 %v11973
  %13338 = vmatprep.subr.bf16.mxu0 0
  %13339 = vmatpush1.bf16.msra.mxu0 %v11974
  %13340 = vmatprep.subr.bf16.mxu0 0
  %13341 = vmatpush1.bf16.msra.mxu0 %v11975
  %13342 = vmatprep.subr.bf16.mxu0 0
  %13343 = vmatpush1.bf16.msra.mxu0 %v11976
  %13344 = vmatprep.subr.bf16.mxu0 0
  %13345 = vmatpush1.bf16.msra.mxu0 %v11977
  %13346 = vmatprep.subr.bf16.mxu0 0
  %13347 = vmatpush1.bf16.msra.mxu0 0
  %13348 = vmatprep.subr.bf16.mxu0 0
  %13349 = vmatpush1.bf16.msra.mxu0 0
  %13350 = vmatprep.subr.bf16.mxu0 0
  %13351 = vmatpush1.bf16.msra.mxu0 0
  %13352 = vmatprep.subr.bf16.mxu0 0
  %13353 = vmatpush1.bf16.msra.mxu0 0
  %13354 = vmatprep.subr.bf16.mxu0 0
  %13355 = vmatpush1.bf16.msra.mxu0 0
  %13356 = vmatprep.subr.bf16.mxu0 0
  %13357 = vmatpush1.bf16.msra.mxu0 0
  %13358 = vmatprep.subr.bf16.mxu0 0
  %13359 = vmatpush1.bf16.msra.mxu0 0
  %13360 = vmatprep.subr.bf16.mxu0 0
  %13361 = vmatpush1.bf16.msra.mxu0 0
  %13362 = vmatprep.mubr.bf16.mxu0 0
  %13363 = vmatmul.mubr.bf16.gmra.mrb[0].mxu0 %v9184
  %v13364 = vpop.f32.mrb[0].mxu0
  %v13365 = vadd.f32 %v13325, %v13364
  %v13366 = vpop.f32.mrb[0].mxu0
  %v13367 = vpop.f32.mrb[0].mxu0
  %v13368 = vpop.f32.mrb[0].mxu0
  %13369 = vdwg.mxu0
  %v13370 = vlaneseq
  %v13371 = vand.u32 %v13370, 127
  %vm13372 = vcmp.ge.s32.totalorder %v13371, 1
  %vm13373 = vcmp.le.s32.totalorder %v13371, 11
  %vm13374 = vmand %vm13372, %vm13373
  %v13375 = vsel %vm13374, %v13365, -1e+30
  %13376 = vmax.xlane.f32.xlu0 %v13375
  %v13377 = vpop.xlane.xlu0 %13376
  %v13378 = vsub.f32 %v13375, %v13377
  %v13379 = vmul.f32 %v13378, 1.442695
  %v13380 = vpow.pop %v13379
  %v13381 = vsel %vm13374, %v13380, 0.0
  %13382 = vadd.xlane.f32.xlu0 %v13381
  %v13383 = vpop.xlane.xlu0 %13382
  %v13384 = vlog2.pop %v13383
  %v13385 = vmul.f32 %v13384, 0.6931472
  %v13386 = vadd.f32 %v13385, %v13377
  %v13387 = vsub.f32 0.0, %v13365
  %v13388 = vmul.f32 %v13387, 1.442695
  %v13389 = vpow.pop %v13388
  %v13390 = vadd.f32 %v13389, 1.0
  %v13391 = vrcp.pop %v13390
  %v13392 = vmul.f32 1.0, %v13391
  %vm13393 = vcmp.eq.s32.totalorder %v13371, 0
  %v13394 = vsub.f32 %v13365, %v13386
  %v13395 = vsel %vm13374, %v13394, 0.0
  %v13396 = vsel %vm13393, %v13392, %v13395
  %13397 = vst [vmem:[%s5] sm:$0xff] %v13396
  // Predicated region
  $region22: #{discriminator_forward.1} parent=0 // pred_check
    _
  $region23: #{discriminator_forward.1} parent=0 // pred_check_branch
    %13399 = sbr.rel (0) target = $region25
  $region24: #{discriminator_forward.1} parent=0 // pred_region
    _
  $region25: #{discriminator_forward.1} parent=0 // pred_fallthru
    _
  // Predicated region
  $region26: #{discriminator_forward.1} parent=0 // pred_check
    _
  $region27: #{discriminator_forward.1} parent=0 // pred_check_branch
    %13401 = sbr.rel (0) target = $region29
  $region28: #{discriminator_forward.1} parent=0 // pred_region
    _
  $region29: #{discriminator_forward.1} parent=0 // pred_fallthru
    _

</llo_original>
